<compile_context>
chip_gen: v7x
topology: tpu7x:2x2x1
jax: 0.10.0
libtpu: 0.0.40
codegen_flags: <defaults>
</compile_context>

<pallas_src>
import functools

import jax
import jax.numpy as jnp
import numpy as np
from jax.experimental import pallas as pl
from jax.experimental.pallas import tpu as pltpu

# ----------------------------- configuration ------------------------------
B = 2            # batch
C_IN = 4         # in_chans
IMG = 16         # img_size
PATCH = 4        # patch_size
EMBED = 32       # embed_dim
DEPTH = 2        # depth
HEADS = 4        # num_heads
MLP_RATIO = 4.0
NUM_CLASSES = 10
LN_EPS = 1e-6

N_PATCHES = (IMG // PATCH) ** 2          # 16
SEQ = N_PATCHES + 1                      # 17 (cls token)
PATCH_DIM = C_IN * PATCH * PATCH         # 64
HID = int(EMBED * MLP_RATIO)             # 128
HEAD_DIM = EMBED // HEADS                # 8
SCALE = HEAD_DIM ** -0.5
C_PAD = 128                              # head output padded to full lane width

_SQRT_2_OVER_PI = 0.7978845608028654


def _gelu_tanh(x):
  return 0.5 * x * (1.0 + jnp.tanh(_SQRT_2_OVER_PI * (x + 0.044715 * x * x * x)))


def _layernorm(x, w, b):
  mu = jnp.mean(x, axis=-1, keepdims=True)
  var = jnp.mean((x - mu) ** 2, axis=-1, keepdims=True)
  return (x - mu) * jax.lax.rsqrt(var + LN_EPS) * w + b


# ------------------------------ fused kernel -------------------------------
def vit_kernel(patches_ref, pw_ref, pb_ref, clspos_ref, posr_ref,
               ln1w_ref, ln1b_ref, qkvw_ref, qkvb_ref, projw_ref, projb_ref,
               ln2w_ref, ln2b_ref, fc1w_ref, fc1b_ref, fc2w_ref, fc2b_ref,
               nw_ref, nb_ref, hw_ref, hb_ref, o_ref, *, num_heads):
  n_patches = posr_ref.shape[0]
  bs = patches_ref.shape[0] // n_patches        # batch elements in this step
  depth = qkvw_ref.shape[0]
  d_model = qkvw_ref.shape[1]
  dh = d_model // num_heads

  # Patch embedding for the whole batch chunk: (bs*N, P) @ (P, D) + b.
  pe = (jnp.dot(patches_ref[...], pw_ref[...],
                preferred_element_type=jnp.float32) + pb_ref[...])

  cls_row = clspos_ref[...]                     # (1, D)  = cls_token + pos[0]
  pos_rest = posr_ref[...]                      # (N, D)  = pos[1:]

  logits_rows = []
  for b in range(bs):
    # Token sequence for image b (cls token + positional embedding, in-kernel).
    x = jnp.concatenate(
        [cls_row, pe[b * n_patches:(b + 1) * n_patches] + pos_rest], axis=0)

    for li in range(depth):
      # ---- attention branch ----
      h = _layernorm(x, ln1w_ref[li], ln1b_ref[li])
      # qkv_w / qkv_b already carry the attention scale on the q columns.
      qkv = (jnp.dot(h, qkvw_ref[li], preferred_element_type=jnp.float32)
             + qkvb_ref[li])                    # (SEQ, 3D); layout q|k|v
      heads = []
      for hh in range(num_heads):
        q = qkv[:, hh * dh:(hh + 1) * dh]
        k = qkv[:, d_model + hh * dh:d_model + (hh + 1) * dh]
        v = qkv[:, 2 * d_model + hh * dh:2 * d_model + (hh + 1) * dh]
        s = jax.lax.dot_general(q, k, (((1,), (1,)), ((), ())),
                                preferred_element_type=jnp.float32)  # (SEQ,SEQ)
        s = s - jnp.max(s, axis=-1, keepdims=True)
        e = jnp.exp(s)
        p = e * pl.reciprocal(jnp.sum(e, axis=-1, keepdims=True), approx=True)
        heads.append(jnp.dot(p, v, preferred_element_type=jnp.float32))
      # Lane-concat per-head contexts -> one K=32 projection matmul.
      ctx = jnp.concatenate(heads, axis=-1)     # (SEQ, D)
      x = x + (jnp.dot(ctx, projw_ref[li], preferred_element_type=jnp.float32)
               + projb_ref[li])

      # ---- MLP branch ----
      h2 = _layernorm(x, ln2w_ref[li], ln2b_ref[li])
      f = (jnp.dot(h2, fc1w_ref[li], preferred_element_type=jnp.float32)
           + fc1b_ref[li])
      f = _gelu_tanh(f)
      x = x + (jnp.dot(f, fc2w_ref[li], preferred_element_type=jnp.float32)
               + fc2b_ref[li])

    # Final LayerNorm on the cls token + lane-padded classification head.
    xn = _layernorm(x[0:1, :], nw_ref[...], nb_ref[...])
    logits_rows.append(
        jnp.dot(xn, hw_ref[...], preferred_element_type=jnp.float32)
        + hb_ref[...])

  o_ref[...] = jnp.concatenate(logits_rows, axis=0)    # (bs, C_PAD)


# ------------------------------ wrappers ------------------------------------
def _full_spec(shape):
  n = len(shape)
  return pl.BlockSpec(shape, lambda i, _n=n: (0,) * _n)


def extract_patches(x_nchw):
  b, c, h, w = x_nchw.shape
  hn, wn = h // PATCH, w // PATCH
  x = x_nchw.reshape(b, c, hn, PATCH, wn, PATCH)
  x = x.transpose(0, 2, 4, 1, 3, 5)              # (B, Hn, Wn, C, ph, pw)
  return x.reshape(b, hn * wn, c * PATCH * PATCH)


@functools.partial(jax.jit, static_argnames=("batch_grid",))
def vit_forward(x_nchw, packed, *, batch_grid=False):
  """Full ViT forward in a single pallas_call.

  batch_grid=False : grid=(1,) — whole batch in one kernel step (preferred on
                     v5e/v6e: no per-step grid overhead).
  batch_grid=True  : grid=(B,) with 'parallel' semantics — on v7x each of the
                     two TensorCores processes one image.
  """
  bsz = x_nchw.shape[0]
  patches = extract_patches(x_nchw).reshape(bsz * N_PATCHES, PATCH_DIM)
  g = bsz if batch_grid else 1
  bs = bsz // g

  kern = functools.partial(vit_kernel, num_heads=HEADS)
  out = pl.pallas_call(
      kern,
      out_shape=jax.ShapeDtypeStruct((bsz, C_PAD), jnp.float32),
      grid=(g,),
      in_specs=[
          pl.BlockSpec((bs * N_PATCHES, PATCH_DIM), lambda i: (i, 0)),
          _full_spec((PATCH_DIM, EMBED)), _full_spec((1, EMBED)),        # patch w/b
          _full_spec((1, EMBED)), _full_spec((N_PATCHES, EMBED)),        # cls+pos0, pos[1:]
          _full_spec((DEPTH, 1, EMBED)), _full_spec((DEPTH, 1, EMBED)),  # ln1
          _full_spec((DEPTH, EMBED, 3 * EMBED)),
          _full_spec((DEPTH, 1, 3 * EMBED)),                             # qkv
          _full_spec((DEPTH, EMBED, EMBED)), _full_spec((DEPTH, 1, EMBED)),  # proj
          _full_spec((DEPTH, 1, EMBED)), _full_spec((DEPTH, 1, EMBED)),  # ln2
          _full_spec((DEPTH, EMBED, HID)), _full_spec((DEPTH, 1, HID)),  # fc1
          _full_spec((DEPTH, HID, EMBED)), _full_spec((DEPTH, 1, EMBED)),  # fc2
          _full_spec((1, EMBED)), _full_spec((1, EMBED)),                # final norm
          _full_spec((EMBED, C_PAD)), _full_spec((1, C_PAD)),            # padded head
      ],
      out_specs=pl.BlockSpec((bs, C_PAD), lambda i: (i, 0)),
      compiler_params=pltpu.CompilerParams(dimension_semantics=("parallel",)),
  )(patches,
    packed["patch_w"], packed["patch_b"], packed["cls_pos0"], packed["pos_rest"],
    packed["ln1_w"], packed["ln1_b"], packed["qkv_w"], packed["qkv_b"],
    packed["proj_w"], packed["proj_b"], packed["ln2_w"], packed["ln2_b"],
    packed["fc1_w"], packed["fc1_b"], packed["fc2_w"], packed["fc2_b"],
    packed["norm_w"], packed["norm_b"], packed["head_w"], packed["head_b"])
  return out[:, :NUM_CLASSES]


# --------------------------- parameter init / pack --------------------------
def init_params(key):
  keys = iter(jax.random.split(key, 64))

  def tn(shape, std=0.02):
    return (std * jax.random.truncated_normal(next(keys), -2.0, 2.0, shape)
            ).astype(jnp.float32)

  params = {
      # Conv2d(in_chans, embed_dim, k=patch, s=patch) as (P, D) matmul weight.
      "patch_w": tn((EMBED, PATCH_DIM)).T.reshape(PATCH_DIM, EMBED),
      "patch_b": tn((1, EMBED)),
      "cls_token": tn((1, 1, EMBED)),
      "pos_embed": tn((1, SEQ, EMBED)),
      "norm_w": jnp.ones((1, EMBED), jnp.float32),
      "norm_b": jnp.zeros((1, EMBED), jnp.float32),
      "head_w": tn((NUM_CLASSES, EMBED)).T.reshape(EMBED, NUM_CLASSES),
      "head_b": jnp.zeros((1, NUM_CLASSES), jnp.float32),
      "blocks": [],
  }
  for _ in range(DEPTH):
    params["blocks"].append({
        "ln1_w": jnp.ones((1, EMBED), jnp.float32),
        "ln1_b": jnp.zeros((1, EMBED), jnp.float32),
        "qkv_w": tn((3 * EMBED, EMBED)).T.reshape(EMBED, 3 * EMBED),
        "qkv_b": jnp.zeros((1, 3 * EMBED), jnp.float32),
        "proj_w": tn((EMBED, EMBED)).T.reshape(EMBED, EMBED),
        "proj_b": jnp.zeros((1, EMBED), jnp.float32),
        "ln2_w": jnp.ones((1, EMBED), jnp.float32),
        "ln2_b": jnp.zeros((1, EMBED), jnp.float32),
        "fc1_w": tn((HID, EMBED)).T.reshape(EMBED, HID),
        "fc1_b": jnp.zeros((1, HID), jnp.float32),
        "fc2_w": tn((EMBED, HID)).T.reshape(HID, EMBED),
        "fc2_b": jnp.zeros((1, EMBED), jnp.float32),
    })
  return params


def pack_params(params):
  """One-time packing: stack per-block weights over depth, fold the attention
  scale into the q columns, pad the head to 128 lanes, pre-add cls+pos[0]."""
  blocks = params["blocks"]

  def stack(name):
    return jnp.stack([bp[name] for bp in blocks], axis=0)

  # Fold head_dim**-0.5 into the q third of qkv (done once, not per step).
  scale_vec = jnp.concatenate([jnp.full((EMBED,), SCALE, jnp.float32),
                               jnp.ones((2 * EMBED,), jnp.float32)])
  qkv_w = stack("qkv_w") * scale_vec
  qkv_b = stack("qkv_b") * scale_vec

  head_w = jnp.zeros((EMBED, C_PAD), jnp.float32).at[:, :NUM_CLASSES].set(
      params["head_w"])
  head_b = jnp.zeros((1, C_PAD), jnp.float32).at[:, :NUM_CLASSES].set(
      params["head_b"])

  return {
      "patch_w": params["patch_w"], "patch_b": params["patch_b"],
      "cls_pos0": params["cls_token"].reshape(1, EMBED)
                  + params["pos_embed"][0, 0:1, :],
      "pos_rest": params["pos_embed"][0, 1:, :],
      "ln1_w": stack("ln1_w"), "ln1_b": stack("ln1_b"),
      "qkv_w": qkv_w, "qkv_b": qkv_b,
      "proj_w": stack("proj_w"), "proj_b": stack("proj_b"),
      "ln2_w": stack("ln2_w"), "ln2_b": stack("ln2_b"),
      "fc1_w": stack("fc1_w"), "fc1_b": stack("fc1_b"),
      "fc2_w": stack("fc2_w"), "fc2_b": stack("fc2_b"),
      "norm_w": params["norm_w"], "norm_b": params["norm_b"],
      "head_w": head_w, "head_b": head_b,
  }


# --------------------------- pure-JAX reference -----------------------------
def _layernorm_ref(x, w, b):
  mu = x.mean(-1, keepdims=True)
  var = ((x - mu) ** 2).mean(-1, keepdims=True)
  return (x - mu) / jnp.sqrt(var + LN_EPS) * w + b


def ref_forward(x_nchw, params):
  bsz = x_nchw.shape[0]
  x = extract_patches(x_nchw) @ params["patch_w"] + params["patch_b"]
  cls = jnp.broadcast_to(params["cls_token"], (bsz, 1, EMBED))
  x = jnp.concatenate([cls, x], axis=1) + params["pos_embed"]
  for bp in params["blocks"]:
    h = _layernorm_ref(x, bp["ln1_w"][0], bp["ln1_b"][0])
    qkv = h @ bp["qkv_w"] + bp["qkv_b"]
    q, k, v = jnp.split(qkv, 3, axis=-1)
    n1 = x.shape[1]
    q = q.reshape(bsz, n1, HEADS, HEAD_DIM).transpose(0, 2, 1, 3)
    k = k.reshape(bsz, n1, HEADS, HEAD_DIM).transpose(0, 2, 1, 3)
    v = v.reshape(bsz, n1, HEADS, HEAD_DIM).transpose(0, 2, 1, 3)
    attn = jax.nn.softmax(jnp.einsum("bhqd,bhkd->bhqk", q, k) * SCALE, axis=-1)
    o = jnp.einsum("bhqk,bhkd->bhqd", attn, v)
    o = o.transpose(0, 2, 1, 3).reshape(bsz, n1, EMBED)
    x = x + o @ bp["proj_w"] + bp["proj_b"]
    h2 = _layernorm_ref(x, bp["ln2_w"][0], bp["ln2_b"][0])
    f = _gelu_tanh(h2 @ bp["fc1_w"] + bp["fc1_b"])
    x = x + f @ bp["fc2_w"] + bp["fc2_b"]
  x0 = _layernorm_ref(x[:, 0], params["norm_w"][0], params["norm_b"][0])
  return x0 @ params["head_w"] + params["head_b"][0]


# --------------------------------- main -------------------------------------
if __name__ == "__main__":
  key = jax.random.PRNGKey(0)
  pkey, xkey = jax.random.split(key)
  params = init_params(pkey)
  packed = pack_params(params)
  x = jax.random.normal(xkey, (B, C_IN, IMG, IMG), dtype=jnp.float32)

  out = jax.block_until_ready(vit_forward(x, packed))
  assert out.shape == (B, NUM_CLASSES), out.shape

  ref = jax.block_until_ready(ref_forward(x, params))
  np.testing.assert_allclose(np.asarray(out), np.asarray(ref),
                             rtol=2e-2, atol=2e-3)

  # v7x option: shard the batch across the two TensorCores (harmless — just
  # serial — on single-TensorCore v5e/v6e).
  out_mc = jax.block_until_ready(vit_forward(x, packed, batch_grid=True))
  np.testing.assert_allclose(np.asarray(out_mc), np.asarray(ref),
                             rtol=2e-2, atol=2e-3)

  print("KERNEL_OK")
</pallas_src>

<mosaic_0001>
module attributes {stable_mosaic.version = 11 : i64} {
  func.func @vit_kernel(%arg0: i32, %arg1: memref<32x64xf32, #tpu.memory_space<vmem>>, %arg2: memref<64x32xf32, #tpu.memory_space<vmem>>, %arg3: memref<1x32xf32, #tpu.memory_space<vmem>>, %arg4: memref<1x32xf32, #tpu.memory_space<vmem>>, %arg5: memref<16x32xf32, #tpu.memory_space<vmem>>, %arg6: memref<2x1x32xf32, #tpu.memory_space<vmem>>, %arg7: memref<2x1x32xf32, #tpu.memory_space<vmem>>, %arg8: memref<2x32x96xf32, #tpu.memory_space<vmem>>, %arg9: memref<2x1x96xf32, #tpu.memory_space<vmem>>, %arg10: memref<2x32x32xf32, #tpu.memory_space<vmem>>, %arg11: memref<2x1x32xf32, #tpu.memory_space<vmem>>, %arg12: memref<2x1x32xf32, #tpu.memory_space<vmem>>, %arg13: memref<2x1x32xf32, #tpu.memory_space<vmem>>, %arg14: memref<2x32x128xf32, #tpu.memory_space<vmem>>, %arg15: memref<2x1x128xf32, #tpu.memory_space<vmem>>, %arg16: memref<2x128x32xf32, #tpu.memory_space<vmem>>, %arg17: memref<2x1x32xf32, #tpu.memory_space<vmem>>, %arg18: memref<1x32xf32, #tpu.memory_space<vmem>>, %arg19: memref<1x32xf32, #tpu.memory_space<vmem>>, %arg20: memref<32x128xf32, #tpu.memory_space<vmem>>, %arg21: memref<1x128xf32, #tpu.memory_space<vmem>>, %arg22: memref<2x128xf32, #tpu.memory_space<vmem>>) attributes {dimension_semantics = [#tpu.dimension_semantics<parallel>], iteration_bounds = array<i64: 1>, scalar_prefetch = 0 : i64, scratch_operands = 0 : i64, tpu.core_type = #tpu.core_type<tc>, window_params = [{transform_indices = @transform_0, window_bounds = array<i64: 32, 64>}, {pipeline_mode = #tpu.pipeline_mode<synchronous>, transform_indices = @transform_1, window_bounds = array<i64: 64, 32>}, {pipeline_mode = #tpu.pipeline_mode<synchronous>, transform_indices = @transform_2, window_bounds = array<i64: 1, 32>}, {pipeline_mode = #tpu.pipeline_mode<synchronous>, transform_indices = @transform_3, window_bounds = array<i64: 1, 32>}, {pipeline_mode = #tpu.pipeline_mode<synchronous>, transform_indices = @transform_4, window_bounds = array<i64: 16, 32>}, {pipeline_mode = #tpu.pipeline_mode<synchronous>, transform_indices = @transform_5, window_bounds = array<i64: 2, 1, 32>}, {pipeline_mode = #tpu.pipeline_mode<synchronous>, transform_indices = @transform_6, window_bounds = array<i64: 2, 1, 32>}, {pipeline_mode = #tpu.pipeline_mode<synchronous>, transform_indices = @transform_7, window_bounds = array<i64: 2, 32, 96>}, {pipeline_mode = #tpu.pipeline_mode<synchronous>, transform_indices = @transform_8, window_bounds = array<i64: 2, 1, 96>}, {pipeline_mode = #tpu.pipeline_mode<synchronous>, transform_indices = @transform_9, window_bounds = array<i64: 2, 32, 32>}, {pipeline_mode = #tpu.pipeline_mode<synchronous>, transform_indices = @transform_10, window_bounds = array<i64: 2, 1, 32>}, {pipeline_mode = #tpu.pipeline_mode<synchronous>, transform_indices = @transform_11, window_bounds = array<i64: 2, 1, 32>}, {pipeline_mode = #tpu.pipeline_mode<synchronous>, transform_indices = @transform_12, window_bounds = array<i64: 2, 1, 32>}, {pipeline_mode = #tpu.pipeline_mode<synchronous>, transform_indices = @transform_13, window_bounds = array<i64: 2, 32, 128>}, {pipeline_mode = #tpu.pipeline_mode<synchronous>, transform_indices = @transform_14, window_bounds = array<i64: 2, 1, 128>}, {pipeline_mode = #tpu.pipeline_mode<synchronous>, transform_indices = @transform_15, window_bounds = array<i64: 2, 128, 32>}, {pipeline_mode = #tpu.pipeline_mode<synchronous>, transform_indices = @transform_16, window_bounds = array<i64: 2, 1, 32>}, {pipeline_mode = #tpu.pipeline_mode<synchronous>, transform_indices = @transform_17, window_bounds = array<i64: 1, 32>}, {pipeline_mode = #tpu.pipeline_mode<synchronous>, transform_indices = @transform_18, window_bounds = array<i64: 1, 32>}, {pipeline_mode = #tpu.pipeline_mode<synchronous>, transform_indices = @transform_19, window_bounds = array<i64: 32, 128>}, {pipeline_mode = #tpu.pipeline_mode<synchronous>, transform_indices = @transform_20, window_bounds = array<i64: 1, 128>}, {transform_indices = @transform_21, window_bounds = array<i64: 2, 128>}]} {
    %c0 = arith.constant 0 : index
    %c0_0 = arith.constant 0 : index
    %0 = vector.load %arg1[%c0, %c0_0] : memref<32x64xf32, #tpu.memory_space<vmem>>, vector<32x64xf32>
    %c0_1 = arith.constant 0 : index
    %c0_2 = arith.constant 0 : index
    %1 = vector.load %arg2[%c0_1, %c0_2] : memref<64x32xf32, #tpu.memory_space<vmem>>, vector<64x32xf32>
    %cst = arith.constant dense<0.000000e+00> : vector<32x32xf32>
    %2 = tpu.matmul %0, %1, %cst {dimension_numbers = #tpu.dot_dimension_numbers<[1], [0], [0], [1], [0, 0, 1, 1], [], []>} : vector<32x64xf32>, vector<64x32xf32>, vector<32x32xf32> -> vector<32x32xf32>
    %c0_3 = arith.constant 0 : index
    %c0_4 = arith.constant 0 : index
    %3 = vector.load %arg3[%c0_3, %c0_4] : memref<1x32xf32, #tpu.memory_space<vmem>>, vector<1x32xf32>
    %4 = vector.broadcast %3 : vector<1x32xf32> to vector<32x32xf32>
    %5 = arith.addf %2, %4 : vector<32x32xf32>
    %c0_5 = arith.constant 0 : index
    %c0_6 = arith.constant 0 : index
    %6 = vector.load %arg4[%c0_5, %c0_6] : memref<1x32xf32, #tpu.memory_space<vmem>>, vector<1x32xf32>
    %c0_7 = arith.constant 0 : index
    %c0_8 = arith.constant 0 : index
    %7 = vector.load %arg5[%c0_7, %c0_8] : memref<16x32xf32, #tpu.memory_space<vmem>>, vector<16x32xf32>
    %8 = vector.extract_strided_slice %5 {offsets = [0, 0], sizes = [16, 32], strides = [1, 1]} : vector<32x32xf32> to vector<16x32xf32>
    %9 = arith.addf %8, %7 : vector<16x32xf32>
    %10 = tpu.concatenate %6, %9 in 0 : vector<1x32xf32>, vector<16x32xf32> -> vector<17x32xf32>
    %c0_9 = arith.constant 0 : index
    %c0_10 = arith.constant 0 : index
    %c0_11 = arith.constant 0 : index
    %11 = vector.load %arg6[%c0_9, %c0_10, %c0_11] : memref<2x1x32xf32, #tpu.memory_space<vmem>>, vector<1x1x32xf32>
    %12 = vector.shape_cast %11 : vector<1x1x32xf32> to vector<1x32xf32>
    %c0_12 = arith.constant 0 : index
    %c0_13 = arith.constant 0 : index
    %c0_14 = arith.constant 0 : index
    %13 = vector.load %arg7[%c0_12, %c0_13, %c0_14] : memref<2x1x32xf32, #tpu.memory_space<vmem>>, vector<1x1x32xf32>
    %14 = vector.shape_cast %13 : vector<1x1x32xf32> to vector<1x32xf32>
    %cst_15 = arith.constant dense<0.000000e+00> : vector<17xf32>
    %15 = vector.multi_reduction <add>, %10, %cst_15 [1] : vector<17x32xf32> to vector<17xf32>
    %16 = vector.shape_cast %15 : vector<17xf32> to vector<17x1xf32>
    %cst_16 = arith.constant 3.200000e+01 : f32
    %17 = vector.broadcast %cst_16 : f32 to vector<17x1xf32>
    %18 = arith.divf %16, %17 : vector<17x1xf32>
    %19 = vector.broadcast %18 : vector<17x1xf32> to vector<17x32xf32>
    %20 = arith.subf %10, %19 : vector<17x32xf32>
    %21 = arith.mulf %20, %20 : vector<17x32xf32>
    %cst_17 = arith.constant dense<0.000000e+00> : vector<17xf32>
    %22 = vector.multi_reduction <add>, %21, %cst_17 [1] : vector<17x32xf32> to vector<17xf32>
    %23 = vector.shape_cast %22 : vector<17xf32> to vector<17x1xf32>
    %cst_18 = arith.constant 3.200000e+01 : f32
    %24 = vector.broadcast %cst_18 : f32 to vector<17x1xf32>
    %25 = arith.divf %23, %24 : vector<17x1xf32>
    %26 = vector.broadcast %18 : vector<17x1xf32> to vector<17x32xf32>
    %27 = arith.subf %10, %26 : vector<17x32xf32>
    %cst_19 = arith.constant 9.99999997E-7 : f32
    %28 = vector.broadcast %cst_19 : f32 to vector<17x1xf32>
    %29 = arith.addf %25, %28 : vector<17x1xf32>
    %30 = math.rsqrt %29 : vector<17x1xf32>
    %31 = vector.broadcast %30 : vector<17x1xf32> to vector<17x32xf32>
    %32 = arith.mulf %27, %31 : vector<17x32xf32>
    %33 = vector.broadcast %12 : vector<1x32xf32> to vector<17x32xf32>
    %34 = arith.mulf %32, %33 : vector<17x32xf32>
    %35 = vector.broadcast %14 : vector<1x32xf32> to vector<17x32xf32>
    %36 = arith.addf %34, %35 : vector<17x32xf32>
    %c0_20 = arith.constant 0 : index
    %c0_21 = arith.constant 0 : index
    %c0_22 = arith.constant 0 : index
    %37 = vector.load %arg8[%c0_20, %c0_21, %c0_22] : memref<2x32x96xf32, #tpu.memory_space<vmem>>, vector<1x32x96xf32>
    %38 = vector.shape_cast %37 : vector<1x32x96xf32> to vector<32x96xf32>
    %cst_23 = arith.constant dense<0.000000e+00> : vector<17x96xf32>
    %39 = tpu.matmul %36, %38, %cst_23 {dimension_numbers = #tpu.dot_dimension_numbers<[1], [0], [0], [1], [0, 0, 1, 1], [], []>} : vector<17x32xf32>, vector<32x96xf32>, vector<17x96xf32> -> vector<17x96xf32>
    %c0_24 = arith.constant 0 : index
    %c0_25 = arith.constant 0 : index
    %c0_26 = arith.constant 0 : index
    %40 = vector.load %arg9[%c0_24, %c0_25, %c0_26] : memref<2x1x96xf32, #tpu.memory_space<vmem>>, vector<1x1x96xf32>
    %41 = vector.shape_cast %40 : vector<1x1x96xf32> to vector<1x96xf32>
    %42 = vector.broadcast %41 : vector<1x96xf32> to vector<17x96xf32>
    %43 = arith.addf %39, %42 : vector<17x96xf32>
    %44 = vector.extract_strided_slice %43 {offsets = [0, 0], sizes = [17, 8], strides = [1, 1]} : vector<17x96xf32> to vector<17x8xf32>
    %45 = vector.extract_strided_slice %43 {offsets = [0, 32], sizes = [17, 8], strides = [1, 1]} : vector<17x96xf32> to vector<17x8xf32>
    %46 = vector.extract_strided_slice %43 {offsets = [0, 64], sizes = [17, 8], strides = [1, 1]} : vector<17x96xf32> to vector<17x8xf32>
    %cst_27 = arith.constant dense<0.000000e+00> : vector<17x17xf32>
    %47 = tpu.matmul %44, %45, %cst_27 {dimension_numbers = #tpu.dot_dimension_numbers<[1], [1], [0], [0], [0, 0, 1, 0], [], []>} : vector<17x8xf32>, vector<17x8xf32>, vector<17x17xf32> -> vector<17x17xf32>
    %cst_28 = arith.constant dense<0xFF800000> : vector<17xf32>
    %48 = vector.multi_reduction <maximumf>, %47, %cst_28 [1] : vector<17x17xf32> to vector<17xf32>
    %49 = vector.shape_cast %48 : vector<17xf32> to vector<17x1xf32>
    %50 = vector.broadcast %49 : vector<17x1xf32> to vector<17x17xf32>
    %51 = arith.subf %47, %50 : vector<17x17xf32>
    %52 = math.exp %51 : vector<17x17xf32>
    %cst_29 = arith.constant dense<0.000000e+00> : vector<17xf32>
    %53 = vector.multi_reduction <add>, %52, %cst_29 [1] : vector<17x17xf32> to vector<17xf32>
    %54 = vector.shape_cast %53 : vector<17xf32> to vector<17x1xf32>
    %55 = tpu.reciprocal %54 {approx = true} : vector<17x1xf32> -> vector<17x1xf32>
    %56 = vector.broadcast %55 : vector<17x1xf32> to vector<17x17xf32>
    %57 = arith.mulf %52, %56 : vector<17x17xf32>
    %cst_30 = arith.constant dense<0.000000e+00> : vector<17x8xf32>
    %58 = tpu.matmul %57, %46, %cst_30 {dimension_numbers = #tpu.dot_dimension_numbers<[1], [0], [0], [1], [0, 0, 1, 1], [], []>} : vector<17x17xf32>, vector<17x8xf32>, vector<17x8xf32> -> vector<17x8xf32>
    %59 = vector.extract_strided_slice %43 {offsets = [0, 8], sizes = [17, 8], strides = [1, 1]} : vector<17x96xf32> to vector<17x8xf32>
    %60 = vector.extract_strided_slice %43 {offsets = [0, 40], sizes = [17, 8], strides = [1, 1]} : vector<17x96xf32> to vector<17x8xf32>
    %61 = vector.extract_strided_slice %43 {offsets = [0, 72], sizes = [17, 8], strides = [1, 1]} : vector<17x96xf32> to vector<17x8xf32>
    %cst_31 = arith.constant dense<0.000000e+00> : vector<17x17xf32>
    %62 = tpu.matmul %59, %60, %cst_31 {dimension_numbers = #tpu.dot_dimension_numbers<[1], [1], [0], [0], [0, 0, 1, 0], [], []>} : vector<17x8xf32>, vector<17x8xf32>, vector<17x17xf32> -> vector<17x17xf32>
    %cst_32 = arith.constant dense<0xFF800000> : vector<17xf32>
    %63 = vector.multi_reduction <maximumf>, %62, %cst_32 [1] : vector<17x17xf32> to vector<17xf32>
    %64 = vector.shape_cast %63 : vector<17xf32> to vector<17x1xf32>
    %65 = vector.broadcast %64 : vector<17x1xf32> to vector<17x17xf32>
    %66 = arith.subf %62, %65 : vector<17x17xf32>
    %67 = math.exp %66 : vector<17x17xf32>
    %cst_33 = arith.constant dense<0.000000e+00> : vector<17xf32>
    %68 = vector.multi_reduction <add>, %67, %cst_33 [1] : vector<17x17xf32> to vector<17xf32>
    %69 = vector.shape_cast %68 : vector<17xf32> to vector<17x1xf32>
    %70 = tpu.reciprocal %69 {approx = true} : vector<17x1xf32> -> vector<17x1xf32>
    %71 = vector.broadcast %70 : vector<17x1xf32> to vector<17x17xf32>
    %72 = arith.mulf %67, %71 : vector<17x17xf32>
    %cst_34 = arith.constant dense<0.000000e+00> : vector<17x8xf32>
    %73 = tpu.matmul %72, %61, %cst_34 {dimension_numbers = #tpu.dot_dimension_numbers<[1], [0], [0], [1], [0, 0, 1, 1], [], []>} : vector<17x17xf32>, vector<17x8xf32>, vector<17x8xf32> -> vector<17x8xf32>
    %74 = vector.extract_strided_slice %43 {offsets = [0, 16], sizes = [17, 8], strides = [1, 1]} : vector<17x96xf32> to vector<17x8xf32>
    %75 = vector.extract_strided_slice %43 {offsets = [0, 48], sizes = [17, 8], strides = [1, 1]} : vector<17x96xf32> to vector<17x8xf32>
    %76 = vector.extract_strided_slice %43 {offsets = [0, 80], sizes = [17, 8], strides = [1, 1]} : vector<17x96xf32> to vector<17x8xf32>
    %cst_35 = arith.constant dense<0.000000e+00> : vector<17x17xf32>
    %77 = tpu.matmul %74, %75, %cst_35 {dimension_numbers = #tpu.dot_dimension_numbers<[1], [1], [0], [0], [0, 0, 1, 0], [], []>} : vector<17x8xf32>, vector<17x8xf32>, vector<17x17xf32> -> vector<17x17xf32>
    %cst_36 = arith.constant dense<0xFF800000> : vector<17xf32>
    %78 = vector.multi_reduction <maximumf>, %77, %cst_36 [1] : vector<17x17xf32> to vector<17xf32>
    %79 = vector.shape_cast %78 : vector<17xf32> to vector<17x1xf32>
    %80 = vector.broadcast %79 : vector<17x1xf32> to vector<17x17xf32>
    %81 = arith.subf %77, %80 : vector<17x17xf32>
    %82 = math.exp %81 : vector<17x17xf32>
    %cst_37 = arith.constant dense<0.000000e+00> : vector<17xf32>
    %83 = vector.multi_reduction <add>, %82, %cst_37 [1] : vector<17x17xf32> to vector<17xf32>
    %84 = vector.shape_cast %83 : vector<17xf32> to vector<17x1xf32>
    %85 = tpu.reciprocal %84 {approx = true} : vector<17x1xf32> -> vector<17x1xf32>
    %86 = vector.broadcast %85 : vector<17x1xf32> to vector<17x17xf32>
    %87 = arith.mulf %82, %86 : vector<17x17xf32>
    %cst_38 = arith.constant dense<0.000000e+00> : vector<17x8xf32>
    %88 = tpu.matmul %87, %76, %cst_38 {dimension_numbers = #tpu.dot_dimension_numbers<[1], [0], [0], [1], [0, 0, 1, 1], [], []>} : vector<17x17xf32>, vector<17x8xf32>, vector<17x8xf32> -> vector<17x8xf32>
    %89 = vector.extract_strided_slice %43 {offsets = [0, 24], sizes = [17, 8], strides = [1, 1]} : vector<17x96xf32> to vector<17x8xf32>
    %90 = vector.extract_strided_slice %43 {offsets = [0, 56], sizes = [17, 8], strides = [1, 1]} : vector<17x96xf32> to vector<17x8xf32>
    %91 = vector.extract_strided_slice %43 {offsets = [0, 88], sizes = [17, 8], strides = [1, 1]} : vector<17x96xf32> to vector<17x8xf32>
    %cst_39 = arith.constant dense<0.000000e+00> : vector<17x17xf32>
    %92 = tpu.matmul %89, %90, %cst_39 {dimension_numbers = #tpu.dot_dimension_numbers<[1], [1], [0], [0], [0, 0, 1, 0], [], []>} : vector<17x8xf32>, vector<17x8xf32>, vector<17x17xf32> -> vector<17x17xf32>
    %cst_40 = arith.constant dense<0xFF800000> : vector<17xf32>
    %93 = vector.multi_reduction <maximumf>, %92, %cst_40 [1] : vector<17x17xf32> to vector<17xf32>
    %94 = vector.shape_cast %93 : vector<17xf32> to vector<17x1xf32>
    %95 = vector.broadcast %94 : vector<17x1xf32> to vector<17x17xf32>
    %96 = arith.subf %92, %95 : vector<17x17xf32>
    %97 = math.exp %96 : vector<17x17xf32>
    %cst_41 = arith.constant dense<0.000000e+00> : vector<17xf32>
    %98 = vector.multi_reduction <add>, %97, %cst_41 [1] : vector<17x17xf32> to vector<17xf32>
    %99 = vector.shape_cast %98 : vector<17xf32> to vector<17x1xf32>
    %100 = tpu.reciprocal %99 {approx = true} : vector<17x1xf32> -> vector<17x1xf32>
    %101 = vector.broadcast %100 : vector<17x1xf32> to vector<17x17xf32>
    %102 = arith.mulf %97, %101 : vector<17x17xf32>
    %cst_42 = arith.constant dense<0.000000e+00> : vector<17x8xf32>
    %103 = tpu.matmul %102, %91, %cst_42 {dimension_numbers = #tpu.dot_dimension_numbers<[1], [0], [0], [1], [0, 0, 1, 1], [], []>} : vector<17x17xf32>, vector<17x8xf32>, vector<17x8xf32> -> vector<17x8xf32>
    %104 = tpu.concatenate %58, %73, %88, %103 in 1 : vector<17x8xf32>, vector<17x8xf32>, vector<17x8xf32>, vector<17x8xf32> -> vector<17x32xf32>
    %c0_43 = arith.constant 0 : index
    %c0_44 = arith.constant 0 : index
    %c0_45 = arith.constant 0 : index
    %105 = vector.load %arg10[%c0_43, %c0_44, %c0_45] : memref<2x32x32xf32, #tpu.memory_space<vmem>>, vector<1x32x32xf32>
    %106 = vector.shape_cast %105 : vector<1x32x32xf32> to vector<32x32xf32>
    %cst_46 = arith.constant dense<0.000000e+00> : vector<17x32xf32>
    %107 = tpu.matmul %104, %106, %cst_46 {dimension_numbers = #tpu.dot_dimension_numbers<[1], [0], [0], [1], [0, 0, 1, 1], [], []>} : vector<17x32xf32>, vector<32x32xf32>, vector<17x32xf32> -> vector<17x32xf32>
    %c0_47 = arith.constant 0 : index
    %c0_48 = arith.constant 0 : index
    %c0_49 = arith.constant 0 : index
    %108 = vector.load %arg11[%c0_47, %c0_48, %c0_49] : memref<2x1x32xf32, #tpu.memory_space<vmem>>, vector<1x1x32xf32>
    %109 = vector.shape_cast %108 : vector<1x1x32xf32> to vector<1x32xf32>
    %110 = vector.broadcast %109 : vector<1x32xf32> to vector<17x32xf32>
    %111 = arith.addf %107, %110 : vector<17x32xf32>
    %112 = arith.addf %10, %111 : vector<17x32xf32>
    %c0_50 = arith.constant 0 : index
    %c0_51 = arith.constant 0 : index
    %c0_52 = arith.constant 0 : index
    %113 = vector.load %arg12[%c0_50, %c0_51, %c0_52] : memref<2x1x32xf32, #tpu.memory_space<vmem>>, vector<1x1x32xf32>
    %114 = vector.shape_cast %113 : vector<1x1x32xf32> to vector<1x32xf32>
    %c0_53 = arith.constant 0 : index
    %c0_54 = arith.constant 0 : index
    %c0_55 = arith.constant 0 : index
    %115 = vector.load %arg13[%c0_53, %c0_54, %c0_55] : memref<2x1x32xf32, #tpu.memory_space<vmem>>, vector<1x1x32xf32>
    %116 = vector.shape_cast %115 : vector<1x1x32xf32> to vector<1x32xf32>
    %cst_56 = arith.constant dense<0.000000e+00> : vector<17xf32>
    %117 = vector.multi_reduction <add>, %112, %cst_56 [1] : vector<17x32xf32> to vector<17xf32>
    %118 = vector.shape_cast %117 : vector<17xf32> to vector<17x1xf32>
    %cst_57 = arith.constant 3.200000e+01 : f32
    %119 = vector.broadcast %cst_57 : f32 to vector<17x1xf32>
    %120 = arith.divf %118, %119 : vector<17x1xf32>
    %121 = vector.broadcast %120 : vector<17x1xf32> to vector<17x32xf32>
    %122 = arith.subf %112, %121 : vector<17x32xf32>
    %123 = arith.mulf %122, %122 : vector<17x32xf32>
    %cst_58 = arith.constant dense<0.000000e+00> : vector<17xf32>
    %124 = vector.multi_reduction <add>, %123, %cst_58 [1] : vector<17x32xf32> to vector<17xf32>
    %125 = vector.shape_cast %124 : vector<17xf32> to vector<17x1xf32>
    %cst_59 = arith.constant 3.200000e+01 : f32
    %126 = vector.broadcast %cst_59 : f32 to vector<17x1xf32>
    %127 = arith.divf %125, %126 : vector<17x1xf32>
    %128 = vector.broadcast %120 : vector<17x1xf32> to vector<17x32xf32>
    %129 = arith.subf %112, %128 : vector<17x32xf32>
    %cst_60 = arith.constant 9.99999997E-7 : f32
    %130 = vector.broadcast %cst_60 : f32 to vector<17x1xf32>
    %131 = arith.addf %127, %130 : vector<17x1xf32>
    %132 = math.rsqrt %131 : vector<17x1xf32>
    %133 = vector.broadcast %132 : vector<17x1xf32> to vector<17x32xf32>
    %134 = arith.mulf %129, %133 : vector<17x32xf32>
    %135 = vector.broadcast %114 : vector<1x32xf32> to vector<17x32xf32>
    %136 = arith.mulf %134, %135 : vector<17x32xf32>
    %137 = vector.broadcast %116 : vector<1x32xf32> to vector<17x32xf32>
    %138 = arith.addf %136, %137 : vector<17x32xf32>
    %c0_61 = arith.constant 0 : index
    %c0_62 = arith.constant 0 : index
    %c0_63 = arith.constant 0 : index
    %139 = vector.load %arg14[%c0_61, %c0_62, %c0_63] : memref<2x32x128xf32, #tpu.memory_space<vmem>>, vector<1x32x128xf32>
    %140 = vector.shape_cast %139 : vector<1x32x128xf32> to vector<32x128xf32>
    %cst_64 = arith.constant dense<0.000000e+00> : vector<17x128xf32>
    %141 = tpu.matmul %138, %140, %cst_64 {dimension_numbers = #tpu.dot_dimension_numbers<[1], [0], [0], [1], [0, 0, 1, 1], [], []>} : vector<17x32xf32>, vector<32x128xf32>, vector<17x128xf32> -> vector<17x128xf32>
    %c0_65 = arith.constant 0 : index
    %c0_66 = arith.constant 0 : index
    %c0_67 = arith.constant 0 : index
    %142 = vector.load %arg15[%c0_65, %c0_66, %c0_67] : memref<2x1x128xf32, #tpu.memory_space<vmem>>, vector<1x1x128xf32>
    %143 = vector.shape_cast %142 : vector<1x1x128xf32> to vector<1x128xf32>
    %144 = vector.broadcast %143 : vector<1x128xf32> to vector<17x128xf32>
    %145 = arith.addf %141, %144 : vector<17x128xf32>
    %cst_68 = arith.constant 5.000000e-01 : f32
    %146 = vector.broadcast %cst_68 : f32 to vector<17x128xf32>
    %147 = arith.mulf %146, %145 : vector<17x128xf32>
    %cst_69 = arith.constant 4.471500e-02 : f32
    %148 = vector.broadcast %cst_69 : f32 to vector<17x128xf32>
    %149 = arith.mulf %148, %145 : vector<17x128xf32>
    %150 = arith.mulf %149, %145 : vector<17x128xf32>
    %151 = arith.mulf %150, %145 : vector<17x128xf32>
    %152 = arith.addf %145, %151 : vector<17x128xf32>
    %cst_70 = arith.constant 0.797884583 : f32
    %153 = vector.broadcast %cst_70 : f32 to vector<17x128xf32>
    %154 = arith.mulf %153, %152 : vector<17x128xf32>
    %155 = math.tanh %154 : vector<17x128xf32>
    %cst_71 = arith.constant 1.000000e+00 : f32
    %156 = vector.broadcast %cst_71 : f32 to vector<17x128xf32>
    %157 = arith.addf %156, %155 : vector<17x128xf32>
    %158 = arith.mulf %147, %157 : vector<17x128xf32>
    %c0_72 = arith.constant 0 : index
    %c0_73 = arith.constant 0 : index
    %c0_74 = arith.constant 0 : index
    %159 = vector.load %arg16[%c0_72, %c0_73, %c0_74] : memref<2x128x32xf32, #tpu.memory_space<vmem>>, vector<1x128x32xf32>
    %160 = vector.shape_cast %159 : vector<1x128x32xf32> to vector<128x32xf32>
    %cst_75 = arith.constant dense<0.000000e+00> : vector<17x32xf32>
    %161 = tpu.matmul %158, %160, %cst_75 {dimension_numbers = #tpu.dot_dimension_numbers<[1], [0], [0], [1], [0, 0, 1, 1], [], []>} : vector<17x128xf32>, vector<128x32xf32>, vector<17x32xf32> -> vector<17x32xf32>
    %c0_76 = arith.constant 0 : index
    %c0_77 = arith.constant 0 : index
    %c0_78 = arith.constant 0 : index
    %162 = vector.load %arg17[%c0_76, %c0_77, %c0_78] : memref<2x1x32xf32, #tpu.memory_space<vmem>>, vector<1x1x32xf32>
    %163 = vector.shape_cast %162 : vector<1x1x32xf32> to vector<1x32xf32>
    %164 = vector.broadcast %163 : vector<1x32xf32> to vector<17x32xf32>
    %165 = arith.addf %161, %164 : vector<17x32xf32>
    %166 = arith.addf %112, %165 : vector<17x32xf32>
    %c1 = arith.constant 1 : index
    %c0_79 = arith.constant 0 : index
    %c0_80 = arith.constant 0 : index
    %167 = vector.load %arg6[%c1, %c0_79, %c0_80] : memref<2x1x32xf32, #tpu.memory_space<vmem>>, vector<1x1x32xf32>
    %168 = vector.shape_cast %167 : vector<1x1x32xf32> to vector<1x32xf32>
    %c1_81 = arith.constant 1 : index
    %c0_82 = arith.constant 0 : index
    %c0_83 = arith.constant 0 : index
    %169 = vector.load %arg7[%c1_81, %c0_82, %c0_83] : memref<2x1x32xf32, #tpu.memory_space<vmem>>, vector<1x1x32xf32>
    %170 = vector.shape_cast %169 : vector<1x1x32xf32> to vector<1x32xf32>
    %cst_84 = arith.constant dense<0.000000e+00> : vector<17xf32>
    %171 = vector.multi_reduction <add>, %166, %cst_84 [1] : vector<17x32xf32> to vector<17xf32>
    %172 = vector.shape_cast %171 : vector<17xf32> to vector<17x1xf32>
    %cst_85 = arith.constant 3.200000e+01 : f32
    %173 = vector.broadcast %cst_85 : f32 to vector<17x1xf32>
    %174 = arith.divf %172, %173 : vector<17x1xf32>
    %175 = vector.broadcast %174 : vector<17x1xf32> to vector<17x32xf32>
    %176 = arith.subf %166, %175 : vector<17x32xf32>
    %177 = arith.mulf %176, %176 : vector<17x32xf32>
    %cst_86 = arith.constant dense<0.000000e+00> : vector<17xf32>
    %178 = vector.multi_reduction <add>, %177, %cst_86 [1] : vector<17x32xf32> to vector<17xf32>
    %179 = vector.shape_cast %178 : vector<17xf32> to vector<17x1xf32>
    %cst_87 = arith.constant 3.200000e+01 : f32
    %180 = vector.broadcast %cst_87 : f32 to vector<17x1xf32>
    %181 = arith.divf %179, %180 : vector<17x1xf32>
    %182 = vector.broadcast %174 : vector<17x1xf32> to vector<17x32xf32>
    %183 = arith.subf %166, %182 : vector<17x32xf32>
    %cst_88 = arith.constant 9.99999997E-7 : f32
    %184 = vector.broadcast %cst_88 : f32 to vector<17x1xf32>
    %185 = arith.addf %181, %184 : vector<17x1xf32>
    %186 = math.rsqrt %185 : vector<17x1xf32>
    %187 = vector.broadcast %186 : vector<17x1xf32> to vector<17x32xf32>
    %188 = arith.mulf %183, %187 : vector<17x32xf32>
    %189 = vector.broadcast %168 : vector<1x32xf32> to vector<17x32xf32>
    %190 = arith.mulf %188, %189 : vector<17x32xf32>
    %191 = vector.broadcast %170 : vector<1x32xf32> to vector<17x32xf32>
    %192 = arith.addf %190, %191 : vector<17x32xf32>
    %c1_89 = arith.constant 1 : index
    %c0_90 = arith.constant 0 : index
    %c0_91 = arith.constant 0 : index
    %193 = vector.load %arg8[%c1_89, %c0_90, %c0_91] : memref<2x32x96xf32, #tpu.memory_space<vmem>>, vector<1x32x96xf32>
    %194 = vector.shape_cast %193 : vector<1x32x96xf32> to vector<32x96xf32>
    %cst_92 = arith.constant dense<0.000000e+00> : vector<17x96xf32>
    %195 = tpu.matmul %192, %194, %cst_92 {dimension_numbers = #tpu.dot_dimension_numbers<[1], [0], [0], [1], [0, 0, 1, 1], [], []>} : vector<17x32xf32>, vector<32x96xf32>, vector<17x96xf32> -> vector<17x96xf32>
    %c1_93 = arith.constant 1 : index
    %c0_94 = arith.constant 0 : index
    %c0_95 = arith.constant 0 : index
    %196 = vector.load %arg9[%c1_93, %c0_94, %c0_95] : memref<2x1x96xf32, #tpu.memory_space<vmem>>, vector<1x1x96xf32>
    %197 = vector.shape_cast %196 : vector<1x1x96xf32> to vector<1x96xf32>
    %198 = vector.broadcast %197 : vector<1x96xf32> to vector<17x96xf32>
    %199 = arith.addf %195, %198 : vector<17x96xf32>
    %200 = vector.extract_strided_slice %199 {offsets = [0, 0], sizes = [17, 8], strides = [1, 1]} : vector<17x96xf32> to vector<17x8xf32>
    %201 = vector.extract_strided_slice %199 {offsets = [0, 32], sizes = [17, 8], strides = [1, 1]} : vector<17x96xf32> to vector<17x8xf32>
    %202 = vector.extract_strided_slice %199 {offsets = [0, 64], sizes = [17, 8], strides = [1, 1]} : vector<17x96xf32> to vector<17x8xf32>
    %cst_96 = arith.constant dense<0.000000e+00> : vector<17x17xf32>
    %203 = tpu.matmul %200, %201, %cst_96 {dimension_numbers = #tpu.dot_dimension_numbers<[1], [1], [0], [0], [0, 0, 1, 0], [], []>} : vector<17x8xf32>, vector<17x8xf32>, vector<17x17xf32> -> vector<17x17xf32>
    %cst_97 = arith.constant dense<0xFF800000> : vector<17xf32>
    %204 = vector.multi_reduction <maximumf>, %203, %cst_97 [1] : vector<17x17xf32> to vector<17xf32>
    %205 = vector.shape_cast %204 : vector<17xf32> to vector<17x1xf32>
    %206 = vector.broadcast %205 : vector<17x1xf32> to vector<17x17xf32>
    %207 = arith.subf %203, %206 : vector<17x17xf32>
    %208 = math.exp %207 : vector<17x17xf32>
    %cst_98 = arith.constant dense<0.000000e+00> : vector<17xf32>
    %209 = vector.multi_reduction <add>, %208, %cst_98 [1] : vector<17x17xf32> to vector<17xf32>
    %210 = vector.shape_cast %209 : vector<17xf32> to vector<17x1xf32>
    %211 = tpu.reciprocal %210 {approx = true} : vector<17x1xf32> -> vector<17x1xf32>
    %212 = vector.broadcast %211 : vector<17x1xf32> to vector<17x17xf32>
    %213 = arith.mulf %208, %212 : vector<17x17xf32>
    %cst_99 = arith.constant dense<0.000000e+00> : vector<17x8xf32>
    %214 = tpu.matmul %213, %202, %cst_99 {dimension_numbers = #tpu.dot_dimension_numbers<[1], [0], [0], [1], [0, 0, 1, 1], [], []>} : vector<17x17xf32>, vector<17x8xf32>, vector<17x8xf32> -> vector<17x8xf32>
    %215 = vector.extract_strided_slice %199 {offsets = [0, 8], sizes = [17, 8], strides = [1, 1]} : vector<17x96xf32> to vector<17x8xf32>
    %216 = vector.extract_strided_slice %199 {offsets = [0, 40], sizes = [17, 8], strides = [1, 1]} : vector<17x96xf32> to vector<17x8xf32>
    %217 = vector.extract_strided_slice %199 {offsets = [0, 72], sizes = [17, 8], strides = [1, 1]} : vector<17x96xf32> to vector<17x8xf32>
    %cst_100 = arith.constant dense<0.000000e+00> : vector<17x17xf32>
    %218 = tpu.matmul %215, %216, %cst_100 {dimension_numbers = #tpu.dot_dimension_numbers<[1], [1], [0], [0], [0, 0, 1, 0], [], []>} : vector<17x8xf32>, vector<17x8xf32>, vector<17x17xf32> -> vector<17x17xf32>
    %cst_101 = arith.constant dense<0xFF800000> : vector<17xf32>
    %219 = vector.multi_reduction <maximumf>, %218, %cst_101 [1] : vector<17x17xf32> to vector<17xf32>
    %220 = vector.shape_cast %219 : vector<17xf32> to vector<17x1xf32>
    %221 = vector.broadcast %220 : vector<17x1xf32> to vector<17x17xf32>
    %222 = arith.subf %218, %221 : vector<17x17xf32>
    %223 = math.exp %222 : vector<17x17xf32>
    %cst_102 = arith.constant dense<0.000000e+00> : vector<17xf32>
    %224 = vector.multi_reduction <add>, %223, %cst_102 [1] : vector<17x17xf32> to vector<17xf32>
    %225 = vector.shape_cast %224 : vector<17xf32> to vector<17x1xf32>
    %226 = tpu.reciprocal %225 {approx = true} : vector<17x1xf32> -> vector<17x1xf32>
    %227 = vector.broadcast %226 : vector<17x1xf32> to vector<17x17xf32>
    %228 = arith.mulf %223, %227 : vector<17x17xf32>
    %cst_103 = arith.constant dense<0.000000e+00> : vector<17x8xf32>
    %229 = tpu.matmul %228, %217, %cst_103 {dimension_numbers = #tpu.dot_dimension_numbers<[1], [0], [0], [1], [0, 0, 1, 1], [], []>} : vector<17x17xf32>, vector<17x8xf32>, vector<17x8xf32> -> vector<17x8xf32>
    %230 = vector.extract_strided_slice %199 {offsets = [0, 16], sizes = [17, 8], strides = [1, 1]} : vector<17x96xf32> to vector<17x8xf32>
    %231 = vector.extract_strided_slice %199 {offsets = [0, 48], sizes = [17, 8], strides = [1, 1]} : vector<17x96xf32> to vector<17x8xf32>
    %232 = vector.extract_strided_slice %199 {offsets = [0, 80], sizes = [17, 8], strides = [1, 1]} : vector<17x96xf32> to vector<17x8xf32>
    %cst_104 = arith.constant dense<0.000000e+00> : vector<17x17xf32>
    %233 = tpu.matmul %230, %231, %cst_104 {dimension_numbers = #tpu.dot_dimension_numbers<[1], [1], [0], [0], [0, 0, 1, 0], [], []>} : vector<17x8xf32>, vector<17x8xf32>, vector<17x17xf32> -> vector<17x17xf32>
    %cst_105 = arith.constant dense<0xFF800000> : vector<17xf32>
    %234 = vector.multi_reduction <maximumf>, %233, %cst_105 [1] : vector<17x17xf32> to vector<17xf32>
    %235 = vector.shape_cast %234 : vector<17xf32> to vector<17x1xf32>
    %236 = vector.broadcast %235 : vector<17x1xf32> to vector<17x17xf32>
    %237 = arith.subf %233, %236 : vector<17x17xf32>
    %238 = math.exp %237 : vector<17x17xf32>
    %cst_106 = arith.constant dense<0.000000e+00> : vector<17xf32>
    %239 = vector.multi_reduction <add>, %238, %cst_106 [1] : vector<17x17xf32> to vector<17xf32>
    %240 = vector.shape_cast %239 : vector<17xf32> to vector<17x1xf32>
    %241 = tpu.reciprocal %240 {approx = true} : vector<17x1xf32> -> vector<17x1xf32>
    %242 = vector.broadcast %241 : vector<17x1xf32> to vector<17x17xf32>
    %243 = arith.mulf %238, %242 : vector<17x17xf32>
    %cst_107 = arith.constant dense<0.000000e+00> : vector<17x8xf32>
    %244 = tpu.matmul %243, %232, %cst_107 {dimension_numbers = #tpu.dot_dimension_numbers<[1], [0], [0], [1], [0, 0, 1, 1], [], []>} : vector<17x17xf32>, vector<17x8xf32>, vector<17x8xf32> -> vector<17x8xf32>
    %245 = vector.extract_strided_slice %199 {offsets = [0, 24], sizes = [17, 8], strides = [1, 1]} : vector<17x96xf32> to vector<17x8xf32>
    %246 = vector.extract_strided_slice %199 {offsets = [0, 56], sizes = [17, 8], strides = [1, 1]} : vector<17x96xf32> to vector<17x8xf32>
    %247 = vector.extract_strided_slice %199 {offsets = [0, 88], sizes = [17, 8], strides = [1, 1]} : vector<17x96xf32> to vector<17x8xf32>
    %cst_108 = arith.constant dense<0.000000e+00> : vector<17x17xf32>
    %248 = tpu.matmul %245, %246, %cst_108 {dimension_numbers = #tpu.dot_dimension_numbers<[1], [1], [0], [0], [0, 0, 1, 0], [], []>} : vector<17x8xf32>, vector<17x8xf32>, vector<17x17xf32> -> vector<17x17xf32>
    %cst_109 = arith.constant dense<0xFF800000> : vector<17xf32>
    %249 = vector.multi_reduction <maximumf>, %248, %cst_109 [1] : vector<17x17xf32> to vector<17xf32>
    %250 = vector.shape_cast %249 : vector<17xf32> to vector<17x1xf32>
    %251 = vector.broadcast %250 : vector<17x1xf32> to vector<17x17xf32>
    %252 = arith.subf %248, %251 : vector<17x17xf32>
    %253 = math.exp %252 : vector<17x17xf32>
    %cst_110 = arith.constant dense<0.000000e+00> : vector<17xf32>
    %254 = vector.multi_reduction <add>, %253, %cst_110 [1] : vector<17x17xf32> to vector<17xf32>
    %255 = vector.shape_cast %254 : vector<17xf32> to vector<17x1xf32>
    %256 = tpu.reciprocal %255 {approx = true} : vector<17x1xf32> -> vector<17x1xf32>
    %257 = vector.broadcast %256 : vector<17x1xf32> to vector<17x17xf32>
    %258 = arith.mulf %253, %257 : vector<17x17xf32>
    %cst_111 = arith.constant dense<0.000000e+00> : vector<17x8xf32>
    %259 = tpu.matmul %258, %247, %cst_111 {dimension_numbers = #tpu.dot_dimension_numbers<[1], [0], [0], [1], [0, 0, 1, 1], [], []>} : vector<17x17xf32>, vector<17x8xf32>, vector<17x8xf32> -> vector<17x8xf32>
    %260 = tpu.concatenate %214, %229, %244, %259 in 1 : vector<17x8xf32>, vector<17x8xf32>, vector<17x8xf32>, vector<17x8xf32> -> vector<17x32xf32>
    %c1_112 = arith.constant 1 : index
    %c0_113 = arith.constant 0 : index
    %c0_114 = arith.constant 0 : index
    %261 = vector.load %arg10[%c1_112, %c0_113, %c0_114] : memref<2x32x32xf32, #tpu.memory_space<vmem>>, vector<1x32x32xf32>
    %262 = vector.shape_cast %261 : vector<1x32x32xf32> to vector<32x32xf32>
    %cst_115 = arith.constant dense<0.000000e+00> : vector<17x32xf32>
    %263 = tpu.matmul %260, %262, %cst_115 {dimension_numbers = #tpu.dot_dimension_numbers<[1], [0], [0], [1], [0, 0, 1, 1], [], []>} : vector<17x32xf32>, vector<32x32xf32>, vector<17x32xf32> -> vector<17x32xf32>
    %c1_116 = arith.constant 1 : index
    %c0_117 = arith.constant 0 : index
    %c0_118 = arith.constant 0 : index
    %264 = vector.load %arg11[%c1_116, %c0_117, %c0_118] : memref<2x1x32xf32, #tpu.memory_space<vmem>>, vector<1x1x32xf32>
    %265 = vector.shape_cast %264 : vector<1x1x32xf32> to vector<1x32xf32>
    %266 = vector.broadcast %265 : vector<1x32xf32> to vector<17x32xf32>
    %267 = arith.addf %263, %266 : vector<17x32xf32>
    %268 = arith.addf %166, %267 : vector<17x32xf32>
    %c1_119 = arith.constant 1 : index
    %c0_120 = arith.constant 0 : index
    %c0_121 = arith.constant 0 : index
    %269 = vector.load %arg12[%c1_119, %c0_120, %c0_121] : memref<2x1x32xf32, #tpu.memory_space<vmem>>, vector<1x1x32xf32>
    %270 = vector.shape_cast %269 : vector<1x1x32xf32> to vector<1x32xf32>
    %c1_122 = arith.constant 1 : index
    %c0_123 = arith.constant 0 : index
    %c0_124 = arith.constant 0 : index
    %271 = vector.load %arg13[%c1_122, %c0_123, %c0_124] : memref<2x1x32xf32, #tpu.memory_space<vmem>>, vector<1x1x32xf32>
    %272 = vector.shape_cast %271 : vector<1x1x32xf32> to vector<1x32xf32>
    %cst_125 = arith.constant dense<0.000000e+00> : vector<17xf32>
    %273 = vector.multi_reduction <add>, %268, %cst_125 [1] : vector<17x32xf32> to vector<17xf32>
    %274 = vector.shape_cast %273 : vector<17xf32> to vector<17x1xf32>
    %cst_126 = arith.constant 3.200000e+01 : f32
    %275 = vector.broadcast %cst_126 : f32 to vector<17x1xf32>
    %276 = arith.divf %274, %275 : vector<17x1xf32>
    %277 = vector.broadcast %276 : vector<17x1xf32> to vector<17x32xf32>
    %278 = arith.subf %268, %277 : vector<17x32xf32>
    %279 = arith.mulf %278, %278 : vector<17x32xf32>
    %cst_127 = arith.constant dense<0.000000e+00> : vector<17xf32>
    %280 = vector.multi_reduction <add>, %279, %cst_127 [1] : vector<17x32xf32> to vector<17xf32>
    %281 = vector.shape_cast %280 : vector<17xf32> to vector<17x1xf32>
    %cst_128 = arith.constant 3.200000e+01 : f32
    %282 = vector.broadcast %cst_128 : f32 to vector<17x1xf32>
    %283 = arith.divf %281, %282 : vector<17x1xf32>
    %284 = vector.broadcast %276 : vector<17x1xf32> to vector<17x32xf32>
    %285 = arith.subf %268, %284 : vector<17x32xf32>
    %cst_129 = arith.constant 9.99999997E-7 : f32
    %286 = vector.broadcast %cst_129 : f32 to vector<17x1xf32>
    %287 = arith.addf %283, %286 : vector<17x1xf32>
    %288 = math.rsqrt %287 : vector<17x1xf32>
    %289 = vector.broadcast %288 : vector<17x1xf32> to vector<17x32xf32>
    %290 = arith.mulf %285, %289 : vector<17x32xf32>
    %291 = vector.broadcast %270 : vector<1x32xf32> to vector<17x32xf32>
    %292 = arith.mulf %290, %291 : vector<17x32xf32>
    %293 = vector.broadcast %272 : vector<1x32xf32> to vector<17x32xf32>
    %294 = arith.addf %292, %293 : vector<17x32xf32>
    %c1_130 = arith.constant 1 : index
    %c0_131 = arith.constant 0 : index
    %c0_132 = arith.constant 0 : index
    %295 = vector.load %arg14[%c1_130, %c0_131, %c0_132] : memref<2x32x128xf32, #tpu.memory_space<vmem>>, vector<1x32x128xf32>
    %296 = vector.shape_cast %295 : vector<1x32x128xf32> to vector<32x128xf32>
    %cst_133 = arith.constant dense<0.000000e+00> : vector<17x128xf32>
    %297 = tpu.matmul %294, %296, %cst_133 {dimension_numbers = #tpu.dot_dimension_numbers<[1], [0], [0], [1], [0, 0, 1, 1], [], []>} : vector<17x32xf32>, vector<32x128xf32>, vector<17x128xf32> -> vector<17x128xf32>
    %c1_134 = arith.constant 1 : index
    %c0_135 = arith.constant 0 : index
    %c0_136 = arith.constant 0 : index
    %298 = vector.load %arg15[%c1_134, %c0_135, %c0_136] : memref<2x1x128xf32, #tpu.memory_space<vmem>>, vector<1x1x128xf32>
    %299 = vector.shape_cast %298 : vector<1x1x128xf32> to vector<1x128xf32>
    %300 = vector.broadcast %299 : vector<1x128xf32> to vector<17x128xf32>
    %301 = arith.addf %297, %300 : vector<17x128xf32>
    %cst_137 = arith.constant 5.000000e-01 : f32
    %302 = vector.broadcast %cst_137 : f32 to vector<17x128xf32>
    %303 = arith.mulf %302, %301 : vector<17x128xf32>
    %cst_138 = arith.constant 4.471500e-02 : f32
    %304 = vector.broadcast %cst_138 : f32 to vector<17x128xf32>
    %305 = arith.mulf %304, %301 : vector<17x128xf32>
    %306 = arith.mulf %305, %301 : vector<17x128xf32>
    %307 = arith.mulf %306, %301 : vector<17x128xf32>
    %308 = arith.addf %301, %307 : vector<17x128xf32>
    %cst_139 = arith.constant 0.797884583 : f32
    %309 = vector.broadcast %cst_139 : f32 to vector<17x128xf32>
    %310 = arith.mulf %309, %308 : vector<17x128xf32>
    %311 = math.tanh %310 : vector<17x128xf32>
    %cst_140 = arith.constant 1.000000e+00 : f32
    %312 = vector.broadcast %cst_140 : f32 to vector<17x128xf32>
    %313 = arith.addf %312, %311 : vector<17x128xf32>
    %314 = arith.mulf %303, %313 : vector<17x128xf32>
    %c1_141 = arith.constant 1 : index
    %c0_142 = arith.constant 0 : index
    %c0_143 = arith.constant 0 : index
    %315 = vector.load %arg16[%c1_141, %c0_142, %c0_143] : memref<2x128x32xf32, #tpu.memory_space<vmem>>, vector<1x128x32xf32>
    %316 = vector.shape_cast %315 : vector<1x128x32xf32> to vector<128x32xf32>
    %cst_144 = arith.constant dense<0.000000e+00> : vector<17x32xf32>
    %317 = tpu.matmul %314, %316, %cst_144 {dimension_numbers = #tpu.dot_dimension_numbers<[1], [0], [0], [1], [0, 0, 1, 1], [], []>} : vector<17x128xf32>, vector<128x32xf32>, vector<17x32xf32> -> vector<17x32xf32>
    %c1_145 = arith.constant 1 : index
    %c0_146 = arith.constant 0 : index
    %c0_147 = arith.constant 0 : index
    %318 = vector.load %arg17[%c1_145, %c0_146, %c0_147] : memref<2x1x32xf32, #tpu.memory_space<vmem>>, vector<1x1x32xf32>
    %319 = vector.shape_cast %318 : vector<1x1x32xf32> to vector<1x32xf32>
    %320 = vector.broadcast %319 : vector<1x32xf32> to vector<17x32xf32>
    %321 = arith.addf %317, %320 : vector<17x32xf32>
    %322 = arith.addf %268, %321 : vector<17x32xf32>
    %323 = vector.extract_strided_slice %322 {offsets = [0, 0], sizes = [1, 32], strides = [1, 1]} : vector<17x32xf32> to vector<1x32xf32>
    %c0_148 = arith.constant 0 : index
    %c0_149 = arith.constant 0 : index
    %324 = vector.load %arg18[%c0_148, %c0_149] : memref<1x32xf32, #tpu.memory_space<vmem>>, vector<1x32xf32>
    %c0_150 = arith.constant 0 : index
    %c0_151 = arith.constant 0 : index
    %325 = vector.load %arg19[%c0_150, %c0_151] : memref<1x32xf32, #tpu.memory_space<vmem>>, vector<1x32xf32>
    %cst_152 = arith.constant dense<0.000000e+00> : vector<1xf32>
    %326 = vector.multi_reduction <add>, %323, %cst_152 [1] : vector<1x32xf32> to vector<1xf32>
    %327 = vector.shape_cast %326 : vector<1xf32> to vector<1x1xf32>
    %cst_153 = arith.constant 3.200000e+01 : f32
    %328 = vector.broadcast %cst_153 : f32 to vector<1x1xf32>
    %329 = arith.divf %327, %328 : vector<1x1xf32>
    %330 = vector.broadcast %329 : vector<1x1xf32> to vector<1x32xf32>
    %331 = arith.subf %323, %330 : vector<1x32xf32>
    %332 = arith.mulf %331, %331 : vector<1x32xf32>
    %cst_154 = arith.constant dense<0.000000e+00> : vector<1xf32>
    %333 = vector.multi_reduction <add>, %332, %cst_154 [1] : vector<1x32xf32> to vector<1xf32>
    %334 = vector.shape_cast %333 : vector<1xf32> to vector<1x1xf32>
    %cst_155 = arith.constant 3.200000e+01 : f32
    %335 = vector.broadcast %cst_155 : f32 to vector<1x1xf32>
    %336 = arith.divf %334, %335 : vector<1x1xf32>
    %337 = vector.broadcast %329 : vector<1x1xf32> to vector<1x32xf32>
    %338 = arith.subf %323, %337 : vector<1x32xf32>
    %cst_156 = arith.constant 9.99999997E-7 : f32
    %339 = vector.broadcast %cst_156 : f32 to vector<1x1xf32>
    %340 = arith.addf %336, %339 : vector<1x1xf32>
    %341 = math.rsqrt %340 : vector<1x1xf32>
    %342 = vector.broadcast %341 : vector<1x1xf32> to vector<1x32xf32>
    %343 = arith.mulf %338, %342 : vector<1x32xf32>
    %344 = arith.mulf %343, %324 : vector<1x32xf32>
    %345 = arith.addf %344, %325 : vector<1x32xf32>
    %c0_157 = arith.constant 0 : index
    %c0_158 = arith.constant 0 : index
    %346 = vector.load %arg20[%c0_157, %c0_158] : memref<32x128xf32, #tpu.memory_space<vmem>>, vector<32x128xf32>
    %cst_159 = arith.constant dense<0.000000e+00> : vector<1x128xf32>
    %347 = tpu.matmul %345, %346, %cst_159 {dimension_numbers = #tpu.dot_dimension_numbers<[1], [0], [0], [1], [0, 0, 1, 1], [], []>} : vector<1x32xf32>, vector<32x128xf32>, vector<1x128xf32> -> vector<1x128xf32>
    %c0_160 = arith.constant 0 : index
    %c0_161 = arith.constant 0 : index
    %348 = vector.load %arg21[%c0_160, %c0_161] : memref<1x128xf32, #tpu.memory_space<vmem>>, vector<1x128xf32>
    %349 = arith.addf %347, %348 : vector<1x128xf32>
    %350 = vector.extract_strided_slice %5 {offsets = [16, 0], sizes = [16, 32], strides = [1, 1]} : vector<32x32xf32> to vector<16x32xf32>
    %351 = arith.addf %350, %7 : vector<16x32xf32>
    %352 = tpu.concatenate %6, %351 in 0 : vector<1x32xf32>, vector<16x32xf32> -> vector<17x32xf32>
    %c0_162 = arith.constant 0 : index
    %c0_163 = arith.constant 0 : index
    %c0_164 = arith.constant 0 : index
    %353 = vector.load %arg6[%c0_162, %c0_163, %c0_164] : memref<2x1x32xf32, #tpu.memory_space<vmem>>, vector<1x1x32xf32>
    %354 = vector.shape_cast %353 : vector<1x1x32xf32> to vector<1x32xf32>
    %c0_165 = arith.constant 0 : index
    %c0_166 = arith.constant 0 : index
    %c0_167 = arith.constant 0 : index
    %355 = vector.load %arg7[%c0_165, %c0_166, %c0_167] : memref<2x1x32xf32, #tpu.memory_space<vmem>>, vector<1x1x32xf32>
    %356 = vector.shape_cast %355 : vector<1x1x32xf32> to vector<1x32xf32>
    %cst_168 = arith.constant dense<0.000000e+00> : vector<17xf32>
    %357 = vector.multi_reduction <add>, %352, %cst_168 [1] : vector<17x32xf32> to vector<17xf32>
    %358 = vector.shape_cast %357 : vector<17xf32> to vector<17x1xf32>
    %cst_169 = arith.constant 3.200000e+01 : f32
    %359 = vector.broadcast %cst_169 : f32 to vector<17x1xf32>
    %360 = arith.divf %358, %359 : vector<17x1xf32>
    %361 = vector.broadcast %360 : vector<17x1xf32> to vector<17x32xf32>
    %362 = arith.subf %352, %361 : vector<17x32xf32>
    %363 = arith.mulf %362, %362 : vector<17x32xf32>
    %cst_170 = arith.constant dense<0.000000e+00> : vector<17xf32>
    %364 = vector.multi_reduction <add>, %363, %cst_170 [1] : vector<17x32xf32> to vector<17xf32>
    %365 = vector.shape_cast %364 : vector<17xf32> to vector<17x1xf32>
    %cst_171 = arith.constant 3.200000e+01 : f32
    %366 = vector.broadcast %cst_171 : f32 to vector<17x1xf32>
    %367 = arith.divf %365, %366 : vector<17x1xf32>
    %368 = vector.broadcast %360 : vector<17x1xf32> to vector<17x32xf32>
    %369 = arith.subf %352, %368 : vector<17x32xf32>
    %cst_172 = arith.constant 9.99999997E-7 : f32
    %370 = vector.broadcast %cst_172 : f32 to vector<17x1xf32>
    %371 = arith.addf %367, %370 : vector<17x1xf32>
    %372 = math.rsqrt %371 : vector<17x1xf32>
    %373 = vector.broadcast %372 : vector<17x1xf32> to vector<17x32xf32>
    %374 = arith.mulf %369, %373 : vector<17x32xf32>
    %375 = vector.broadcast %354 : vector<1x32xf32> to vector<17x32xf32>
    %376 = arith.mulf %374, %375 : vector<17x32xf32>
    %377 = vector.broadcast %356 : vector<1x32xf32> to vector<17x32xf32>
    %378 = arith.addf %376, %377 : vector<17x32xf32>
    %c0_173 = arith.constant 0 : index
    %c0_174 = arith.constant 0 : index
    %c0_175 = arith.constant 0 : index
    %379 = vector.load %arg8[%c0_173, %c0_174, %c0_175] : memref<2x32x96xf32, #tpu.memory_space<vmem>>, vector<1x32x96xf32>
    %380 = vector.shape_cast %379 : vector<1x32x96xf32> to vector<32x96xf32>
    %cst_176 = arith.constant dense<0.000000e+00> : vector<17x96xf32>
    %381 = tpu.matmul %378, %380, %cst_176 {dimension_numbers = #tpu.dot_dimension_numbers<[1], [0], [0], [1], [0, 0, 1, 1], [], []>} : vector<17x32xf32>, vector<32x96xf32>, vector<17x96xf32> -> vector<17x96xf32>
    %c0_177 = arith.constant 0 : index
    %c0_178 = arith.constant 0 : index
    %c0_179 = arith.constant 0 : index
    %382 = vector.load %arg9[%c0_177, %c0_178, %c0_179] : memref<2x1x96xf32, #tpu.memory_space<vmem>>, vector<1x1x96xf32>
    %383 = vector.shape_cast %382 : vector<1x1x96xf32> to vector<1x96xf32>
    %384 = vector.broadcast %383 : vector<1x96xf32> to vector<17x96xf32>
    %385 = arith.addf %381, %384 : vector<17x96xf32>
    %386 = vector.extract_strided_slice %385 {offsets = [0, 0], sizes = [17, 8], strides = [1, 1]} : vector<17x96xf32> to vector<17x8xf32>
    %387 = vector.extract_strided_slice %385 {offsets = [0, 32], sizes = [17, 8], strides = [1, 1]} : vector<17x96xf32> to vector<17x8xf32>
    %388 = vector.extract_strided_slice %385 {offsets = [0, 64], sizes = [17, 8], strides = [1, 1]} : vector<17x96xf32> to vector<17x8xf32>
    %cst_180 = arith.constant dense<0.000000e+00> : vector<17x17xf32>
    %389 = tpu.matmul %386, %387, %cst_180 {dimension_numbers = #tpu.dot_dimension_numbers<[1], [1], [0], [0], [0, 0, 1, 0], [], []>} : vector<17x8xf32>, vector<17x8xf32>, vector<17x17xf32> -> vector<17x17xf32>
    %cst_181 = arith.constant dense<0xFF800000> : vector<17xf32>
    %390 = vector.multi_reduction <maximumf>, %389, %cst_181 [1] : vector<17x17xf32> to vector<17xf32>
    %391 = vector.shape_cast %390 : vector<17xf32> to vector<17x1xf32>
    %392 = vector.broadcast %391 : vector<17x1xf32> to vector<17x17xf32>
    %393 = arith.subf %389, %392 : vector<17x17xf32>
    %394 = math.exp %393 : vector<17x17xf32>
    %cst_182 = arith.constant dense<0.000000e+00> : vector<17xf32>
    %395 = vector.multi_reduction <add>, %394, %cst_182 [1] : vector<17x17xf32> to vector<17xf32>
    %396 = vector.shape_cast %395 : vector<17xf32> to vector<17x1xf32>
    %397 = tpu.reciprocal %396 {approx = true} : vector<17x1xf32> -> vector<17x1xf32>
    %398 = vector.broadcast %397 : vector<17x1xf32> to vector<17x17xf32>
    %399 = arith.mulf %394, %398 : vector<17x17xf32>
    %cst_183 = arith.constant dense<0.000000e+00> : vector<17x8xf32>
    %400 = tpu.matmul %399, %388, %cst_183 {dimension_numbers = #tpu.dot_dimension_numbers<[1], [0], [0], [1], [0, 0, 1, 1], [], []>} : vector<17x17xf32>, vector<17x8xf32>, vector<17x8xf32> -> vector<17x8xf32>
    %401 = vector.extract_strided_slice %385 {offsets = [0, 8], sizes = [17, 8], strides = [1, 1]} : vector<17x96xf32> to vector<17x8xf32>
    %402 = vector.extract_strided_slice %385 {offsets = [0, 40], sizes = [17, 8], strides = [1, 1]} : vector<17x96xf32> to vector<17x8xf32>
    %403 = vector.extract_strided_slice %385 {offsets = [0, 72], sizes = [17, 8], strides = [1, 1]} : vector<17x96xf32> to vector<17x8xf32>
    %cst_184 = arith.constant dense<0.000000e+00> : vector<17x17xf32>
    %404 = tpu.matmul %401, %402, %cst_184 {dimension_numbers = #tpu.dot_dimension_numbers<[1], [1], [0], [0], [0, 0, 1, 0], [], []>} : vector<17x8xf32>, vector<17x8xf32>, vector<17x17xf32> -> vector<17x17xf32>
    %cst_185 = arith.constant dense<0xFF800000> : vector<17xf32>
    %405 = vector.multi_reduction <maximumf>, %404, %cst_185 [1] : vector<17x17xf32> to vector<17xf32>
    %406 = vector.shape_cast %405 : vector<17xf32> to vector<17x1xf32>
    %407 = vector.broadcast %406 : vector<17x1xf32> to vector<17x17xf32>
    %408 = arith.subf %404, %407 : vector<17x17xf32>
    %409 = math.exp %408 : vector<17x17xf32>
    %cst_186 = arith.constant dense<0.000000e+00> : vector<17xf32>
    %410 = vector.multi_reduction <add>, %409, %cst_186 [1] : vector<17x17xf32> to vector<17xf32>
    %411 = vector.shape_cast %410 : vector<17xf32> to vector<17x1xf32>
    %412 = tpu.reciprocal %411 {approx = true} : vector<17x1xf32> -> vector<17x1xf32>
    %413 = vector.broadcast %412 : vector<17x1xf32> to vector<17x17xf32>
    %414 = arith.mulf %409, %413 : vector<17x17xf32>
    %cst_187 = arith.constant dense<0.000000e+00> : vector<17x8xf32>
    %415 = tpu.matmul %414, %403, %cst_187 {dimension_numbers = #tpu.dot_dimension_numbers<[1], [0], [0], [1], [0, 0, 1, 1], [], []>} : vector<17x17xf32>, vector<17x8xf32>, vector<17x8xf32> -> vector<17x8xf32>
    %416 = vector.extract_strided_slice %385 {offsets = [0, 16], sizes = [17, 8], strides = [1, 1]} : vector<17x96xf32> to vector<17x8xf32>
    %417 = vector.extract_strided_slice %385 {offsets = [0, 48], sizes = [17, 8], strides = [1, 1]} : vector<17x96xf32> to vector<17x8xf32>
    %418 = vector.extract_strided_slice %385 {offsets = [0, 80], sizes = [17, 8], strides = [1, 1]} : vector<17x96xf32> to vector<17x8xf32>
    %cst_188 = arith.constant dense<0.000000e+00> : vector<17x17xf32>
    %419 = tpu.matmul %416, %417, %cst_188 {dimension_numbers = #tpu.dot_dimension_numbers<[1], [1], [0], [0], [0, 0, 1, 0], [], []>} : vector<17x8xf32>, vector<17x8xf32>, vector<17x17xf32> -> vector<17x17xf32>
    %cst_189 = arith.constant dense<0xFF800000> : vector<17xf32>
    %420 = vector.multi_reduction <maximumf>, %419, %cst_189 [1] : vector<17x17xf32> to vector<17xf32>
    %421 = vector.shape_cast %420 : vector<17xf32> to vector<17x1xf32>
    %422 = vector.broadcast %421 : vector<17x1xf32> to vector<17x17xf32>
    %423 = arith.subf %419, %422 : vector<17x17xf32>
    %424 = math.exp %423 : vector<17x17xf32>
    %cst_190 = arith.constant dense<0.000000e+00> : vector<17xf32>
    %425 = vector.multi_reduction <add>, %424, %cst_190 [1] : vector<17x17xf32> to vector<17xf32>
    %426 = vector.shape_cast %425 : vector<17xf32> to vector<17x1xf32>
    %427 = tpu.reciprocal %426 {approx = true} : vector<17x1xf32> -> vector<17x1xf32>
    %428 = vector.broadcast %427 : vector<17x1xf32> to vector<17x17xf32>
    %429 = arith.mulf %424, %428 : vector<17x17xf32>
    %cst_191 = arith.constant dense<0.000000e+00> : vector<17x8xf32>
    %430 = tpu.matmul %429, %418, %cst_191 {dimension_numbers = #tpu.dot_dimension_numbers<[1], [0], [0], [1], [0, 0, 1, 1], [], []>} : vector<17x17xf32>, vector<17x8xf32>, vector<17x8xf32> -> vector<17x8xf32>
    %431 = vector.extract_strided_slice %385 {offsets = [0, 24], sizes = [17, 8], strides = [1, 1]} : vector<17x96xf32> to vector<17x8xf32>
    %432 = vector.extract_strided_slice %385 {offsets = [0, 56], sizes = [17, 8], strides = [1, 1]} : vector<17x96xf32> to vector<17x8xf32>
    %433 = vector.extract_strided_slice %385 {offsets = [0, 88], sizes = [17, 8], strides = [1, 1]} : vector<17x96xf32> to vector<17x8xf32>
    %cst_192 = arith.constant dense<0.000000e+00> : vector<17x17xf32>
    %434 = tpu.matmul %431, %432, %cst_192 {dimension_numbers = #tpu.dot_dimension_numbers<[1], [1], [0], [0], [0, 0, 1, 0], [], []>} : vector<17x8xf32>, vector<17x8xf32>, vector<17x17xf32> -> vector<17x17xf32>
    %cst_193 = arith.constant dense<0xFF800000> : vector<17xf32>
    %435 = vector.multi_reduction <maximumf>, %434, %cst_193 [1] : vector<17x17xf32> to vector<17xf32>
    %436 = vector.shape_cast %435 : vector<17xf32> to vector<17x1xf32>
    %437 = vector.broadcast %436 : vector<17x1xf32> to vector<17x17xf32>
    %438 = arith.subf %434, %437 : vector<17x17xf32>
    %439 = math.exp %438 : vector<17x17xf32>
    %cst_194 = arith.constant dense<0.000000e+00> : vector<17xf32>
    %440 = vector.multi_reduction <add>, %439, %cst_194 [1] : vector<17x17xf32> to vector<17xf32>
    %441 = vector.shape_cast %440 : vector<17xf32> to vector<17x1xf32>
    %442 = tpu.reciprocal %441 {approx = true} : vector<17x1xf32> -> vector<17x1xf32>
    %443 = vector.broadcast %442 : vector<17x1xf32> to vector<17x17xf32>
    %444 = arith.mulf %439, %443 : vector<17x17xf32>
    %cst_195 = arith.constant dense<0.000000e+00> : vector<17x8xf32>
    %445 = tpu.matmul %444, %433, %cst_195 {dimension_numbers = #tpu.dot_dimension_numbers<[1], [0], [0], [1], [0, 0, 1, 1], [], []>} : vector<17x17xf32>, vector<17x8xf32>, vector<17x8xf32> -> vector<17x8xf32>
    %446 = tpu.concatenate %400, %415, %430, %445 in 1 : vector<17x8xf32>, vector<17x8xf32>, vector<17x8xf32>, vector<17x8xf32> -> vector<17x32xf32>
    %c0_196 = arith.constant 0 : index
    %c0_197 = arith.constant 0 : index
    %c0_198 = arith.constant 0 : index
    %447 = vector.load %arg10[%c0_196, %c0_197, %c0_198] : memref<2x32x32xf32, #tpu.memory_space<vmem>>, vector<1x32x32xf32>
    %448 = vector.shape_cast %447 : vector<1x32x32xf32> to vector<32x32xf32>
    %cst_199 = arith.constant dense<0.000000e+00> : vector<17x32xf32>
    %449 = tpu.matmul %446, %448, %cst_199 {dimension_numbers = #tpu.dot_dimension_numbers<[1], [0], [0], [1], [0, 0, 1, 1], [], []>} : vector<17x32xf32>, vector<32x32xf32>, vector<17x32xf32> -> vector<17x32xf32>
    %c0_200 = arith.constant 0 : index
    %c0_201 = arith.constant 0 : index
    %c0_202 = arith.constant 0 : index
    %450 = vector.load %arg11[%c0_200, %c0_201, %c0_202] : memref<2x1x32xf32, #tpu.memory_space<vmem>>, vector<1x1x32xf32>
    %451 = vector.shape_cast %450 : vector<1x1x32xf32> to vector<1x32xf32>
    %452 = vector.broadcast %451 : vector<1x32xf32> to vector<17x32xf32>
    %453 = arith.addf %449, %452 : vector<17x32xf32>
    %454 = arith.addf %352, %453 : vector<17x32xf32>
    %c0_203 = arith.constant 0 : index
    %c0_204 = arith.constant 0 : index
    %c0_205 = arith.constant 0 : index
    %455 = vector.load %arg12[%c0_203, %c0_204, %c0_205] : memref<2x1x32xf32, #tpu.memory_space<vmem>>, vector<1x1x32xf32>
    %456 = vector.shape_cast %455 : vector<1x1x32xf32> to vector<1x32xf32>
    %c0_206 = arith.constant 0 : index
    %c0_207 = arith.constant 0 : index
    %c0_208 = arith.constant 0 : index
    %457 = vector.load %arg13[%c0_206, %c0_207, %c0_208] : memref<2x1x32xf32, #tpu.memory_space<vmem>>, vector<1x1x32xf32>
    %458 = vector.shape_cast %457 : vector<1x1x32xf32> to vector<1x32xf32>
    %cst_209 = arith.constant dense<0.000000e+00> : vector<17xf32>
    %459 = vector.multi_reduction <add>, %454, %cst_209 [1] : vector<17x32xf32> to vector<17xf32>
    %460 = vector.shape_cast %459 : vector<17xf32> to vector<17x1xf32>
    %cst_210 = arith.constant 3.200000e+01 : f32
    %461 = vector.broadcast %cst_210 : f32 to vector<17x1xf32>
    %462 = arith.divf %460, %461 : vector<17x1xf32>
    %463 = vector.broadcast %462 : vector<17x1xf32> to vector<17x32xf32>
    %464 = arith.subf %454, %463 : vector<17x32xf32>
    %465 = arith.mulf %464, %464 : vector<17x32xf32>
    %cst_211 = arith.constant dense<0.000000e+00> : vector<17xf32>
    %466 = vector.multi_reduction <add>, %465, %cst_211 [1] : vector<17x32xf32> to vector<17xf32>
    %467 = vector.shape_cast %466 : vector<17xf32> to vector<17x1xf32>
    %cst_212 = arith.constant 3.200000e+01 : f32
    %468 = vector.broadcast %cst_212 : f32 to vector<17x1xf32>
    %469 = arith.divf %467, %468 : vector<17x1xf32>
    %470 = vector.broadcast %462 : vector<17x1xf32> to vector<17x32xf32>
    %471 = arith.subf %454, %470 : vector<17x32xf32>
    %cst_213 = arith.constant 9.99999997E-7 : f32
    %472 = vector.broadcast %cst_213 : f32 to vector<17x1xf32>
    %473 = arith.addf %469, %472 : vector<17x1xf32>
    %474 = math.rsqrt %473 : vector<17x1xf32>
    %475 = vector.broadcast %474 : vector<17x1xf32> to vector<17x32xf32>
    %476 = arith.mulf %471, %475 : vector<17x32xf32>
    %477 = vector.broadcast %456 : vector<1x32xf32> to vector<17x32xf32>
    %478 = arith.mulf %476, %477 : vector<17x32xf32>
    %479 = vector.broadcast %458 : vector<1x32xf32> to vector<17x32xf32>
    %480 = arith.addf %478, %479 : vector<17x32xf32>
    %c0_214 = arith.constant 0 : index
    %c0_215 = arith.constant 0 : index
    %c0_216 = arith.constant 0 : index
    %481 = vector.load %arg14[%c0_214, %c0_215, %c0_216] : memref<2x32x128xf32, #tpu.memory_space<vmem>>, vector<1x32x128xf32>
    %482 = vector.shape_cast %481 : vector<1x32x128xf32> to vector<32x128xf32>
    %cst_217 = arith.constant dense<0.000000e+00> : vector<17x128xf32>
    %483 = tpu.matmul %480, %482, %cst_217 {dimension_numbers = #tpu.dot_dimension_numbers<[1], [0], [0], [1], [0, 0, 1, 1], [], []>} : vector<17x32xf32>, vector<32x128xf32>, vector<17x128xf32> -> vector<17x128xf32>
    %c0_218 = arith.constant 0 : index
    %c0_219 = arith.constant 0 : index
    %c0_220 = arith.constant 0 : index
    %484 = vector.load %arg15[%c0_218, %c0_219, %c0_220] : memref<2x1x128xf32, #tpu.memory_space<vmem>>, vector<1x1x128xf32>
    %485 = vector.shape_cast %484 : vector<1x1x128xf32> to vector<1x128xf32>
    %486 = vector.broadcast %485 : vector<1x128xf32> to vector<17x128xf32>
    %487 = arith.addf %483, %486 : vector<17x128xf32>
    %cst_221 = arith.constant 5.000000e-01 : f32
    %488 = vector.broadcast %cst_221 : f32 to vector<17x128xf32>
    %489 = arith.mulf %488, %487 : vector<17x128xf32>
    %cst_222 = arith.constant 4.471500e-02 : f32
    %490 = vector.broadcast %cst_222 : f32 to vector<17x128xf32>
    %491 = arith.mulf %490, %487 : vector<17x128xf32>
    %492 = arith.mulf %491, %487 : vector<17x128xf32>
    %493 = arith.mulf %492, %487 : vector<17x128xf32>
    %494 = arith.addf %487, %493 : vector<17x128xf32>
    %cst_223 = arith.constant 0.797884583 : f32
    %495 = vector.broadcast %cst_223 : f32 to vector<17x128xf32>
    %496 = arith.mulf %495, %494 : vector<17x128xf32>
    %497 = math.tanh %496 : vector<17x128xf32>
    %cst_224 = arith.constant 1.000000e+00 : f32
    %498 = vector.broadcast %cst_224 : f32 to vector<17x128xf32>
    %499 = arith.addf %498, %497 : vector<17x128xf32>
    %500 = arith.mulf %489, %499 : vector<17x128xf32>
    %c0_225 = arith.constant 0 : index
    %c0_226 = arith.constant 0 : index
    %c0_227 = arith.constant 0 : index
    %501 = vector.load %arg16[%c0_225, %c0_226, %c0_227] : memref<2x128x32xf32, #tpu.memory_space<vmem>>, vector<1x128x32xf32>
    %502 = vector.shape_cast %501 : vector<1x128x32xf32> to vector<128x32xf32>
    %cst_228 = arith.constant dense<0.000000e+00> : vector<17x32xf32>
    %503 = tpu.matmul %500, %502, %cst_228 {dimension_numbers = #tpu.dot_dimension_numbers<[1], [0], [0], [1], [0, 0, 1, 1], [], []>} : vector<17x128xf32>, vector<128x32xf32>, vector<17x32xf32> -> vector<17x32xf32>
    %c0_229 = arith.constant 0 : index
    %c0_230 = arith.constant 0 : index
    %c0_231 = arith.constant 0 : index
    %504 = vector.load %arg17[%c0_229, %c0_230, %c0_231] : memref<2x1x32xf32, #tpu.memory_space<vmem>>, vector<1x1x32xf32>
    %505 = vector.shape_cast %504 : vector<1x1x32xf32> to vector<1x32xf32>
    %506 = vector.broadcast %505 : vector<1x32xf32> to vector<17x32xf32>
    %507 = arith.addf %503, %506 : vector<17x32xf32>
    %508 = arith.addf %454, %507 : vector<17x32xf32>
    %c1_232 = arith.constant 1 : index
    %c0_233 = arith.constant 0 : index
    %c0_234 = arith.constant 0 : index
    %509 = vector.load %arg6[%c1_232, %c0_233, %c0_234] : memref<2x1x32xf32, #tpu.memory_space<vmem>>, vector<1x1x32xf32>
    %510 = vector.shape_cast %509 : vector<1x1x32xf32> to vector<1x32xf32>
    %c1_235 = arith.constant 1 : index
    %c0_236 = arith.constant 0 : index
    %c0_237 = arith.constant 0 : index
    %511 = vector.load %arg7[%c1_235, %c0_236, %c0_237] : memref<2x1x32xf32, #tpu.memory_space<vmem>>, vector<1x1x32xf32>
    %512 = vector.shape_cast %511 : vector<1x1x32xf32> to vector<1x32xf32>
    %cst_238 = arith.constant dense<0.000000e+00> : vector<17xf32>
    %513 = vector.multi_reduction <add>, %508, %cst_238 [1] : vector<17x32xf32> to vector<17xf32>
    %514 = vector.shape_cast %513 : vector<17xf32> to vector<17x1xf32>
    %cst_239 = arith.constant 3.200000e+01 : f32
    %515 = vector.broadcast %cst_239 : f32 to vector<17x1xf32>
    %516 = arith.divf %514, %515 : vector<17x1xf32>
    %517 = vector.broadcast %516 : vector<17x1xf32> to vector<17x32xf32>
    %518 = arith.subf %508, %517 : vector<17x32xf32>
    %519 = arith.mulf %518, %518 : vector<17x32xf32>
    %cst_240 = arith.constant dense<0.000000e+00> : vector<17xf32>
    %520 = vector.multi_reduction <add>, %519, %cst_240 [1] : vector<17x32xf32> to vector<17xf32>
    %521 = vector.shape_cast %520 : vector<17xf32> to vector<17x1xf32>
    %cst_241 = arith.constant 3.200000e+01 : f32
    %522 = vector.broadcast %cst_241 : f32 to vector<17x1xf32>
    %523 = arith.divf %521, %522 : vector<17x1xf32>
    %524 = vector.broadcast %516 : vector<17x1xf32> to vector<17x32xf32>
    %525 = arith.subf %508, %524 : vector<17x32xf32>
    %cst_242 = arith.constant 9.99999997E-7 : f32
    %526 = vector.broadcast %cst_242 : f32 to vector<17x1xf32>
    %527 = arith.addf %523, %526 : vector<17x1xf32>
    %528 = math.rsqrt %527 : vector<17x1xf32>
    %529 = vector.broadcast %528 : vector<17x1xf32> to vector<17x32xf32>
    %530 = arith.mulf %525, %529 : vector<17x32xf32>
    %531 = vector.broadcast %510 : vector<1x32xf32> to vector<17x32xf32>
    %532 = arith.mulf %530, %531 : vector<17x32xf32>
    %533 = vector.broadcast %512 : vector<1x32xf32> to vector<17x32xf32>
    %534 = arith.addf %532, %533 : vector<17x32xf32>
    %c1_243 = arith.constant 1 : index
    %c0_244 = arith.constant 0 : index
    %c0_245 = arith.constant 0 : index
    %535 = vector.load %arg8[%c1_243, %c0_244, %c0_245] : memref<2x32x96xf32, #tpu.memory_space<vmem>>, vector<1x32x96xf32>
    %536 = vector.shape_cast %535 : vector<1x32x96xf32> to vector<32x96xf32>
    %cst_246 = arith.constant dense<0.000000e+00> : vector<17x96xf32>
    %537 = tpu.matmul %534, %536, %cst_246 {dimension_numbers = #tpu.dot_dimension_numbers<[1], [0], [0], [1], [0, 0, 1, 1], [], []>} : vector<17x32xf32>, vector<32x96xf32>, vector<17x96xf32> -> vector<17x96xf32>
    %c1_247 = arith.constant 1 : index
    %c0_248 = arith.constant 0 : index
    %c0_249 = arith.constant 0 : index
    %538 = vector.load %arg9[%c1_247, %c0_248, %c0_249] : memref<2x1x96xf32, #tpu.memory_space<vmem>>, vector<1x1x96xf32>
    %539 = vector.shape_cast %538 : vector<1x1x96xf32> to vector<1x96xf32>
    %540 = vector.broadcast %539 : vector<1x96xf32> to vector<17x96xf32>
    %541 = arith.addf %537, %540 : vector<17x96xf32>
    %542 = vector.extract_strided_slice %541 {offsets = [0, 0], sizes = [17, 8], strides = [1, 1]} : vector<17x96xf32> to vector<17x8xf32>
    %543 = vector.extract_strided_slice %541 {offsets = [0, 32], sizes = [17, 8], strides = [1, 1]} : vector<17x96xf32> to vector<17x8xf32>
    %544 = vector.extract_strided_slice %541 {offsets = [0, 64], sizes = [17, 8], strides = [1, 1]} : vector<17x96xf32> to vector<17x8xf32>
    %cst_250 = arith.constant dense<0.000000e+00> : vector<17x17xf32>
    %545 = tpu.matmul %542, %543, %cst_250 {dimension_numbers = #tpu.dot_dimension_numbers<[1], [1], [0], [0], [0, 0, 1, 0], [], []>} : vector<17x8xf32>, vector<17x8xf32>, vector<17x17xf32> -> vector<17x17xf32>
    %cst_251 = arith.constant dense<0xFF800000> : vector<17xf32>
    %546 = vector.multi_reduction <maximumf>, %545, %cst_251 [1] : vector<17x17xf32> to vector<17xf32>
    %547 = vector.shape_cast %546 : vector<17xf32> to vector<17x1xf32>
    %548 = vector.broadcast %547 : vector<17x1xf32> to vector<17x17xf32>
    %549 = arith.subf %545, %548 : vector<17x17xf32>
    %550 = math.exp %549 : vector<17x17xf32>
    %cst_252 = arith.constant dense<0.000000e+00> : vector<17xf32>
    %551 = vector.multi_reduction <add>, %550, %cst_252 [1] : vector<17x17xf32> to vector<17xf32>
    %552 = vector.shape_cast %551 : vector<17xf32> to vector<17x1xf32>
    %553 = tpu.reciprocal %552 {approx = true} : vector<17x1xf32> -> vector<17x1xf32>
    %554 = vector.broadcast %553 : vector<17x1xf32> to vector<17x17xf32>
    %555 = arith.mulf %550, %554 : vector<17x17xf32>
    %cst_253 = arith.constant dense<0.000000e+00> : vector<17x8xf32>
    %556 = tpu.matmul %555, %544, %cst_253 {dimension_numbers = #tpu.dot_dimension_numbers<[1], [0], [0], [1], [0, 0, 1, 1], [], []>} : vector<17x17xf32>, vector<17x8xf32>, vector<17x8xf32> -> vector<17x8xf32>
    %557 = vector.extract_strided_slice %541 {offsets = [0, 8], sizes = [17, 8], strides = [1, 1]} : vector<17x96xf32> to vector<17x8xf32>
    %558 = vector.extract_strided_slice %541 {offsets = [0, 40], sizes = [17, 8], strides = [1, 1]} : vector<17x96xf32> to vector<17x8xf32>
    %559 = vector.extract_strided_slice %541 {offsets = [0, 72], sizes = [17, 8], strides = [1, 1]} : vector<17x96xf32> to vector<17x8xf32>
    %cst_254 = arith.constant dense<0.000000e+00> : vector<17x17xf32>
    %560 = tpu.matmul %557, %558, %cst_254 {dimension_numbers = #tpu.dot_dimension_numbers<[1], [1], [0], [0], [0, 0, 1, 0], [], []>} : vector<17x8xf32>, vector<17x8xf32>, vector<17x17xf32> -> vector<17x17xf32>
    %cst_255 = arith.constant dense<0xFF800000> : vector<17xf32>
    %561 = vector.multi_reduction <maximumf>, %560, %cst_255 [1] : vector<17x17xf32> to vector<17xf32>
    %562 = vector.shape_cast %561 : vector<17xf32> to vector<17x1xf32>
    %563 = vector.broadcast %562 : vector<17x1xf32> to vector<17x17xf32>
    %564 = arith.subf %560, %563 : vector<17x17xf32>
    %565 = math.exp %564 : vector<17x17xf32>
    %cst_256 = arith.constant dense<0.000000e+00> : vector<17xf32>
    %566 = vector.multi_reduction <add>, %565, %cst_256 [1] : vector<17x17xf32> to vector<17xf32>
    %567 = vector.shape_cast %566 : vector<17xf32> to vector<17x1xf32>
    %568 = tpu.reciprocal %567 {approx = true} : vector<17x1xf32> -> vector<17x1xf32>
    %569 = vector.broadcast %568 : vector<17x1xf32> to vector<17x17xf32>
    %570 = arith.mulf %565, %569 : vector<17x17xf32>
    %cst_257 = arith.constant dense<0.000000e+00> : vector<17x8xf32>
    %571 = tpu.matmul %570, %559, %cst_257 {dimension_numbers = #tpu.dot_dimension_numbers<[1], [0], [0], [1], [0, 0, 1, 1], [], []>} : vector<17x17xf32>, vector<17x8xf32>, vector<17x8xf32> -> vector<17x8xf32>
    %572 = vector.extract_strided_slice %541 {offsets = [0, 16], sizes = [17, 8], strides = [1, 1]} : vector<17x96xf32> to vector<17x8xf32>
    %573 = vector.extract_strided_slice %541 {offsets = [0, 48], sizes = [17, 8], strides = [1, 1]} : vector<17x96xf32> to vector<17x8xf32>
    %574 = vector.extract_strided_slice %541 {offsets = [0, 80], sizes = [17, 8], strides = [1, 1]} : vector<17x96xf32> to vector<17x8xf32>
    %cst_258 = arith.constant dense<0.000000e+00> : vector<17x17xf32>
    %575 = tpu.matmul %572, %573, %cst_258 {dimension_numbers = #tpu.dot_dimension_numbers<[1], [1], [0], [0], [0, 0, 1, 0], [], []>} : vector<17x8xf32>, vector<17x8xf32>, vector<17x17xf32> -> vector<17x17xf32>
    %cst_259 = arith.constant dense<0xFF800000> : vector<17xf32>
    %576 = vector.multi_reduction <maximumf>, %575, %cst_259 [1] : vector<17x17xf32> to vector<17xf32>
    %577 = vector.shape_cast %576 : vector<17xf32> to vector<17x1xf32>
    %578 = vector.broadcast %577 : vector<17x1xf32> to vector<17x17xf32>
    %579 = arith.subf %575, %578 : vector<17x17xf32>
    %580 = math.exp %579 : vector<17x17xf32>
    %cst_260 = arith.constant dense<0.000000e+00> : vector<17xf32>
    %581 = vector.multi_reduction <add>, %580, %cst_260 [1] : vector<17x17xf32> to vector<17xf32>
    %582 = vector.shape_cast %581 : vector<17xf32> to vector<17x1xf32>
    %583 = tpu.reciprocal %582 {approx = true} : vector<17x1xf32> -> vector<17x1xf32>
    %584 = vector.broadcast %583 : vector<17x1xf32> to vector<17x17xf32>
    %585 = arith.mulf %580, %584 : vector<17x17xf32>
    %cst_261 = arith.constant dense<0.000000e+00> : vector<17x8xf32>
    %586 = tpu.matmul %585, %574, %cst_261 {dimension_numbers = #tpu.dot_dimension_numbers<[1], [0], [0], [1], [0, 0, 1, 1], [], []>} : vector<17x17xf32>, vector<17x8xf32>, vector<17x8xf32> -> vector<17x8xf32>
    %587 = vector.extract_strided_slice %541 {offsets = [0, 24], sizes = [17, 8], strides = [1, 1]} : vector<17x96xf32> to vector<17x8xf32>
    %588 = vector.extract_strided_slice %541 {offsets = [0, 56], sizes = [17, 8], strides = [1, 1]} : vector<17x96xf32> to vector<17x8xf32>
    %589 = vector.extract_strided_slice %541 {offsets = [0, 88], sizes = [17, 8], strides = [1, 1]} : vector<17x96xf32> to vector<17x8xf32>
    %cst_262 = arith.constant dense<0.000000e+00> : vector<17x17xf32>
    %590 = tpu.matmul %587, %588, %cst_262 {dimension_numbers = #tpu.dot_dimension_numbers<[1], [1], [0], [0], [0, 0, 1, 0], [], []>} : vector<17x8xf32>, vector<17x8xf32>, vector<17x17xf32> -> vector<17x17xf32>
    %cst_263 = arith.constant dense<0xFF800000> : vector<17xf32>
    %591 = vector.multi_reduction <maximumf>, %590, %cst_263 [1] : vector<17x17xf32> to vector<17xf32>
    %592 = vector.shape_cast %591 : vector<17xf32> to vector<17x1xf32>
    %593 = vector.broadcast %592 : vector<17x1xf32> to vector<17x17xf32>
    %594 = arith.subf %590, %593 : vector<17x17xf32>
    %595 = math.exp %594 : vector<17x17xf32>
    %cst_264 = arith.constant dense<0.000000e+00> : vector<17xf32>
    %596 = vector.multi_reduction <add>, %595, %cst_264 [1] : vector<17x17xf32> to vector<17xf32>
    %597 = vector.shape_cast %596 : vector<17xf32> to vector<17x1xf32>
    %598 = tpu.reciprocal %597 {approx = true} : vector<17x1xf32> -> vector<17x1xf32>
    %599 = vector.broadcast %598 : vector<17x1xf32> to vector<17x17xf32>
    %600 = arith.mulf %595, %599 : vector<17x17xf32>
    %cst_265 = arith.constant dense<0.000000e+00> : vector<17x8xf32>
    %601 = tpu.matmul %600, %589, %cst_265 {dimension_numbers = #tpu.dot_dimension_numbers<[1], [0], [0], [1], [0, 0, 1, 1], [], []>} : vector<17x17xf32>, vector<17x8xf32>, vector<17x8xf32> -> vector<17x8xf32>
    %602 = tpu.concatenate %556, %571, %586, %601 in 1 : vector<17x8xf32>, vector<17x8xf32>, vector<17x8xf32>, vector<17x8xf32> -> vector<17x32xf32>
    %c1_266 = arith.constant 1 : index
    %c0_267 = arith.constant 0 : index
    %c0_268 = arith.constant 0 : index
    %603 = vector.load %arg10[%c1_266, %c0_267, %c0_268] : memref<2x32x32xf32, #tpu.memory_space<vmem>>, vector<1x32x32xf32>
    %604 = vector.shape_cast %603 : vector<1x32x32xf32> to vector<32x32xf32>
    %cst_269 = arith.constant dense<0.000000e+00> : vector<17x32xf32>
    %605 = tpu.matmul %602, %604, %cst_269 {dimension_numbers = #tpu.dot_dimension_numbers<[1], [0], [0], [1], [0, 0, 1, 1], [], []>} : vector<17x32xf32>, vector<32x32xf32>, vector<17x32xf32> -> vector<17x32xf32>
    %c1_270 = arith.constant 1 : index
    %c0_271 = arith.constant 0 : index
    %c0_272 = arith.constant 0 : index
    %606 = vector.load %arg11[%c1_270, %c0_271, %c0_272] : memref<2x1x32xf32, #tpu.memory_space<vmem>>, vector<1x1x32xf32>
    %607 = vector.shape_cast %606 : vector<1x1x32xf32> to vector<1x32xf32>
    %608 = vector.broadcast %607 : vector<1x32xf32> to vector<17x32xf32>
    %609 = arith.addf %605, %608 : vector<17x32xf32>
    %610 = arith.addf %508, %609 : vector<17x32xf32>
    %c1_273 = arith.constant 1 : index
    %c0_274 = arith.constant 0 : index
    %c0_275 = arith.constant 0 : index
    %611 = vector.load %arg12[%c1_273, %c0_274, %c0_275] : memref<2x1x32xf32, #tpu.memory_space<vmem>>, vector<1x1x32xf32>
    %612 = vector.shape_cast %611 : vector<1x1x32xf32> to vector<1x32xf32>
    %c1_276 = arith.constant 1 : index
    %c0_277 = arith.constant 0 : index
    %c0_278 = arith.constant 0 : index
    %613 = vector.load %arg13[%c1_276, %c0_277, %c0_278] : memref<2x1x32xf32, #tpu.memory_space<vmem>>, vector<1x1x32xf32>
    %614 = vector.shape_cast %613 : vector<1x1x32xf32> to vector<1x32xf32>
    %cst_279 = arith.constant dense<0.000000e+00> : vector<17xf32>
    %615 = vector.multi_reduction <add>, %610, %cst_279 [1] : vector<17x32xf32> to vector<17xf32>
    %616 = vector.shape_cast %615 : vector<17xf32> to vector<17x1xf32>
    %cst_280 = arith.constant 3.200000e+01 : f32
    %617 = vector.broadcast %cst_280 : f32 to vector<17x1xf32>
    %618 = arith.divf %616, %617 : vector<17x1xf32>
    %619 = vector.broadcast %618 : vector<17x1xf32> to vector<17x32xf32>
    %620 = arith.subf %610, %619 : vector<17x32xf32>
    %621 = arith.mulf %620, %620 : vector<17x32xf32>
    %cst_281 = arith.constant dense<0.000000e+00> : vector<17xf32>
    %622 = vector.multi_reduction <add>, %621, %cst_281 [1] : vector<17x32xf32> to vector<17xf32>
    %623 = vector.shape_cast %622 : vector<17xf32> to vector<17x1xf32>
    %cst_282 = arith.constant 3.200000e+01 : f32
    %624 = vector.broadcast %cst_282 : f32 to vector<17x1xf32>
    %625 = arith.divf %623, %624 : vector<17x1xf32>
    %626 = vector.broadcast %618 : vector<17x1xf32> to vector<17x32xf32>
    %627 = arith.subf %610, %626 : vector<17x32xf32>
    %cst_283 = arith.constant 9.99999997E-7 : f32
    %628 = vector.broadcast %cst_283 : f32 to vector<17x1xf32>
    %629 = arith.addf %625, %628 : vector<17x1xf32>
    %630 = math.rsqrt %629 : vector<17x1xf32>
    %631 = vector.broadcast %630 : vector<17x1xf32> to vector<17x32xf32>
    %632 = arith.mulf %627, %631 : vector<17x32xf32>
    %633 = vector.broadcast %612 : vector<1x32xf32> to vector<17x32xf32>
    %634 = arith.mulf %632, %633 : vector<17x32xf32>
    %635 = vector.broadcast %614 : vector<1x32xf32> to vector<17x32xf32>
    %636 = arith.addf %634, %635 : vector<17x32xf32>
    %c1_284 = arith.constant 1 : index
    %c0_285 = arith.constant 0 : index
    %c0_286 = arith.constant 0 : index
    %637 = vector.load %arg14[%c1_284, %c0_285, %c0_286] : memref<2x32x128xf32, #tpu.memory_space<vmem>>, vector<1x32x128xf32>
    %638 = vector.shape_cast %637 : vector<1x32x128xf32> to vector<32x128xf32>
    %cst_287 = arith.constant dense<0.000000e+00> : vector<17x128xf32>
    %639 = tpu.matmul %636, %638, %cst_287 {dimension_numbers = #tpu.dot_dimension_numbers<[1], [0], [0], [1], [0, 0, 1, 1], [], []>} : vector<17x32xf32>, vector<32x128xf32>, vector<17x128xf32> -> vector<17x128xf32>
    %c1_288 = arith.constant 1 : index
    %c0_289 = arith.constant 0 : index
    %c0_290 = arith.constant 0 : index
    %640 = vector.load %arg15[%c1_288, %c0_289, %c0_290] : memref<2x1x128xf32, #tpu.memory_space<vmem>>, vector<1x1x128xf32>
    %641 = vector.shape_cast %640 : vector<1x1x128xf32> to vector<1x128xf32>
    %642 = vector.broadcast %641 : vector<1x128xf32> to vector<17x128xf32>
    %643 = arith.addf %639, %642 : vector<17x128xf32>
    %cst_291 = arith.constant 5.000000e-01 : f32
    %644 = vector.broadcast %cst_291 : f32 to vector<17x128xf32>
    %645 = arith.mulf %644, %643 : vector<17x128xf32>
    %cst_292 = arith.constant 4.471500e-02 : f32
    %646 = vector.broadcast %cst_292 : f32 to vector<17x128xf32>
    %647 = arith.mulf %646, %643 : vector<17x128xf32>
    %648 = arith.mulf %647, %643 : vector<17x128xf32>
    %649 = arith.mulf %648, %643 : vector<17x128xf32>
    %650 = arith.addf %643, %649 : vector<17x128xf32>
    %cst_293 = arith.constant 0.797884583 : f32
    %651 = vector.broadcast %cst_293 : f32 to vector<17x128xf32>
    %652 = arith.mulf %651, %650 : vector<17x128xf32>
    %653 = math.tanh %652 : vector<17x128xf32>
    %cst_294 = arith.constant 1.000000e+00 : f32
    %654 = vector.broadcast %cst_294 : f32 to vector<17x128xf32>
    %655 = arith.addf %654, %653 : vector<17x128xf32>
    %656 = arith.mulf %645, %655 : vector<17x128xf32>
    %c1_295 = arith.constant 1 : index
    %c0_296 = arith.constant 0 : index
    %c0_297 = arith.constant 0 : index
    %657 = vector.load %arg16[%c1_295, %c0_296, %c0_297] : memref<2x128x32xf32, #tpu.memory_space<vmem>>, vector<1x128x32xf32>
    %658 = vector.shape_cast %657 : vector<1x128x32xf32> to vector<128x32xf32>
    %cst_298 = arith.constant dense<0.000000e+00> : vector<17x32xf32>
    %659 = tpu.matmul %656, %658, %cst_298 {dimension_numbers = #tpu.dot_dimension_numbers<[1], [0], [0], [1], [0, 0, 1, 1], [], []>} : vector<17x128xf32>, vector<128x32xf32>, vector<17x32xf32> -> vector<17x32xf32>
    %c1_299 = arith.constant 1 : index
    %c0_300 = arith.constant 0 : index
    %c0_301 = arith.constant 0 : index
    %660 = vector.load %arg17[%c1_299, %c0_300, %c0_301] : memref<2x1x32xf32, #tpu.memory_space<vmem>>, vector<1x1x32xf32>
    %661 = vector.shape_cast %660 : vector<1x1x32xf32> to vector<1x32xf32>
    %662 = vector.broadcast %661 : vector<1x32xf32> to vector<17x32xf32>
    %663 = arith.addf %659, %662 : vector<17x32xf32>
    %664 = arith.addf %610, %663 : vector<17x32xf32>
    %665 = vector.extract_strided_slice %664 {offsets = [0, 0], sizes = [1, 32], strides = [1, 1]} : vector<17x32xf32> to vector<1x32xf32>
    %c0_302 = arith.constant 0 : index
    %c0_303 = arith.constant 0 : index
    %666 = vector.load %arg18[%c0_302, %c0_303] : memref<1x32xf32, #tpu.memory_space<vmem>>, vector<1x32xf32>
    %c0_304 = arith.constant 0 : index
    %c0_305 = arith.constant 0 : index
    %667 = vector.load %arg19[%c0_304, %c0_305] : memref<1x32xf32, #tpu.memory_space<vmem>>, vector<1x32xf32>
    %cst_306 = arith.constant dense<0.000000e+00> : vector<1xf32>
    %668 = vector.multi_reduction <add>, %665, %cst_306 [1] : vector<1x32xf32> to vector<1xf32>
    %669 = vector.shape_cast %668 : vector<1xf32> to vector<1x1xf32>
    %cst_307 = arith.constant 3.200000e+01 : f32
    %670 = vector.broadcast %cst_307 : f32 to vector<1x1xf32>
    %671 = arith.divf %669, %670 : vector<1x1xf32>
    %672 = vector.broadcast %671 : vector<1x1xf32> to vector<1x32xf32>
    %673 = arith.subf %665, %672 : vector<1x32xf32>
    %674 = arith.mulf %673, %673 : vector<1x32xf32>
    %cst_308 = arith.constant dense<0.000000e+00> : vector<1xf32>
    %675 = vector.multi_reduction <add>, %674, %cst_308 [1] : vector<1x32xf32> to vector<1xf32>
    %676 = vector.shape_cast %675 : vector<1xf32> to vector<1x1xf32>
    %cst_309 = arith.constant 3.200000e+01 : f32
    %677 = vector.broadcast %cst_309 : f32 to vector<1x1xf32>
    %678 = arith.divf %676, %677 : vector<1x1xf32>
    %679 = vector.broadcast %671 : vector<1x1xf32> to vector<1x32xf32>
    %680 = arith.subf %665, %679 : vector<1x32xf32>
    %cst_310 = arith.constant 9.99999997E-7 : f32
    %681 = vector.broadcast %cst_310 : f32 to vector<1x1xf32>
    %682 = arith.addf %678, %681 : vector<1x1xf32>
    %683 = math.rsqrt %682 : vector<1x1xf32>
    %684 = vector.broadcast %683 : vector<1x1xf32> to vector<1x32xf32>
    %685 = arith.mulf %680, %684 : vector<1x32xf32>
    %686 = arith.mulf %685, %666 : vector<1x32xf32>
    %687 = arith.addf %686, %667 : vector<1x32xf32>
    %c0_311 = arith.constant 0 : index
    %c0_312 = arith.constant 0 : index
    %688 = vector.load %arg20[%c0_311, %c0_312] : memref<32x128xf32, #tpu.memory_space<vmem>>, vector<32x128xf32>
    %cst_313 = arith.constant dense<0.000000e+00> : vector<1x128xf32>
    %689 = tpu.matmul %687, %688, %cst_313 {dimension_numbers = #tpu.dot_dimension_numbers<[1], [0], [0], [1], [0, 0, 1, 1], [], []>} : vector<1x32xf32>, vector<32x128xf32>, vector<1x128xf32> -> vector<1x128xf32>
    %c0_314 = arith.constant 0 : index
    %c0_315 = arith.constant 0 : index
    %690 = vector.load %arg21[%c0_314, %c0_315] : memref<1x128xf32, #tpu.memory_space<vmem>>, vector<1x128xf32>
    %691 = arith.addf %689, %690 : vector<1x128xf32>
    %692 = tpu.concatenate %349, %691 in 0 : vector<1x128xf32>, vector<1x128xf32> -> vector<2x128xf32>
    %c0_316 = arith.constant 0 : index
    %c0_317 = arith.constant 0 : index
    %693 = vector.load %arg22[%c0_316, %c0_317] : memref<2x128xf32, #tpu.memory_space<vmem>>, vector<2x128xf32>
    tpu.vector_store %arg22[%c0_316, %c0_317], %692 {strides = array<i32>} : memref<2x128xf32, #tpu.memory_space<vmem>>, vector<2x128xf32>,
    return
  }
  func.func @transform_0(%arg0: i32) -> (i32, i32) {
    %c0_i32 = arith.constant 0 : i32
    %c0_i32_0 = arith.constant 0 : i32
    return %arg0, %c0_i32 : i32, i32
  }
  func.func @transform_1(%arg0: i32) -> (i32, i32) {
    %c0_i32 = arith.constant 0 : i32
    %c0_i32_0 = arith.constant 0 : i32
    %c0_i32_1 = arith.constant 0 : i32
    return %c0_i32, %c0_i32_0 : i32, i32
  }
  func.func @transform_2(%arg0: i32) -> (i32, i32) {
    %c0_i32 = arith.constant 0 : i32
    %c0_i32_0 = arith.constant 0 : i32
    %c0_i32_1 = arith.constant 0 : i32
    return %c0_i32, %c0_i32_0 : i32, i32
  }
  func.func @transform_3(%arg0: i32) -> (i32, i32) {
    %c0_i32 = arith.constant 0 : i32
    %c0_i32_0 = arith.constant 0 : i32
    %c0_i32_1 = arith.constant 0 : i32
    return %c0_i32, %c0_i32_0 : i32, i32
  }
  func.func @transform_4(%arg0: i32) -> (i32, i32) {
    %c0_i32 = arith.constant 0 : i32
    %c0_i32_0 = arith.constant 0 : i32
    %c0_i32_1 = arith.constant 0 : i32
    return %c0_i32, %c0_i32_0 : i32, i32
  }
  func.func @transform_5(%arg0: i32) -> (i32, i32, i32) {
    %c0_i32 = arith.constant 0 : i32
    %c0_i32_0 = arith.constant 0 : i32
    %c0_i32_1 = arith.constant 0 : i32
    %c0_i32_2 = arith.constant 0 : i32
    return %c0_i32, %c0_i32_0, %c0_i32_1 : i32, i32, i32
  }
  func.func @transform_6(%arg0: i32) -> (i32, i32, i32) {
    %c0_i32 = arith.constant 0 : i32
    %c0_i32_0 = arith.constant 0 : i32
    %c0_i32_1 = arith.constant 0 : i32
    %c0_i32_2 = arith.constant 0 : i32
    return %c0_i32, %c0_i32_0, %c0_i32_1 : i32, i32, i32
  }
  func.func @transform_7(%arg0: i32) -> (i32, i32, i32) {
    %c0_i32 = arith.constant 0 : i32
    %c0_i32_0 = arith.constant 0 : i32
    %c0_i32_1 = arith.constant 0 : i32
    %c0_i32_2 = arith.constant 0 : i32
    return %c0_i32, %c0_i32_0, %c0_i32_1 : i32, i32, i32
  }
  func.func @transform_8(%arg0: i32) -> (i32, i32, i32) {
    %c0_i32 = arith.constant 0 : i32
    %c0_i32_0 = arith.constant 0 : i32
    %c0_i32_1 = arith.constant 0 : i32
    %c0_i32_2 = arith.constant 0 : i32
    return %c0_i32, %c0_i32_0, %c0_i32_1 : i32, i32, i32
  }
  func.func @transform_9(%arg0: i32) -> (i32, i32, i32) {
    %c0_i32 = arith.constant 0 : i32
    %c0_i32_0 = arith.constant 0 : i32
    %c0_i32_1 = arith.constant 0 : i32
    %c0_i32_2 = arith.constant 0 : i32
    return %c0_i32, %c0_i32_0, %c0_i32_1 : i32, i32, i32
  }
  func.func @transform_10(%arg0: i32) -> (i32, i32, i32) {
    %c0_i32 = arith.constant 0 : i32
    %c0_i32_0 = arith.constant 0 : i32
    %c0_i32_1 = arith.constant 0 : i32
    %c0_i32_2 = arith.constant 0 : i32
    return %c0_i32, %c0_i32_0, %c0_i32_1 : i32, i32, i32
  }
  func.func @transform_11(%arg0: i32) -> (i32, i32, i32) {
    %c0_i32 = arith.constant 0 : i32
    %c0_i32_0 = arith.constant 0 : i32
    %c0_i32_1 = arith.constant 0 : i32
    %c0_i32_2 = arith.constant 0 : i32
    return %c0_i32, %c0_i32_0, %c0_i32_1 : i32, i32, i32
  }
  func.func @transform_12(%arg0: i32) -> (i32, i32, i32) {
    %c0_i32 = arith.constant 0 : i32
    %c0_i32_0 = arith.constant 0 : i32
    %c0_i32_1 = arith.constant 0 : i32
    %c0_i32_2 = arith.constant 0 : i32
    return %c0_i32, %c0_i32_0, %c0_i32_1 : i32, i32, i32
  }
  func.func @transform_13(%arg0: i32) -> (i32, i32, i32) {
    %c0_i32 = arith.constant 0 : i32
    %c0_i32_0 = arith.constant 0 : i32
    %c0_i32_1 = arith.constant 0 : i32
    %c0_i32_2 = arith.constant 0 : i32
    return %c0_i32, %c0_i32_0, %c0_i32_1 : i32, i32, i32
  }
  func.func @transform_14(%arg0: i32) -> (i32, i32, i32) {
    %c0_i32 = arith.constant 0 : i32
    %c0_i32_0 = arith.constant 0 : i32
    %c0_i32_1 = arith.constant 0 : i32
    %c0_i32_2 = arith.constant 0 : i32
    return %c0_i32, %c0_i32_0, %c0_i32_1 : i32, i32, i32
  }
  func.func @transform_15(%arg0: i32) -> (i32, i32, i32) {
    %c0_i32 = arith.constant 0 : i32
    %c0_i32_0 = arith.constant 0 : i32
    %c0_i32_1 = arith.constant 0 : i32
    %c0_i32_2 = arith.constant 0 : i32
    return %c0_i32, %c0_i32_0, %c0_i32_1 : i32, i32, i32
  }
  func.func @transform_16(%arg0: i32) -> (i32, i32, i32) {
    %c0_i32 = arith.constant 0 : i32
    %c0_i32_0 = arith.constant 0 : i32
    %c0_i32_1 = arith.constant 0 : i32
    %c0_i32_2 = arith.constant 0 : i32
    return %c0_i32, %c0_i32_0, %c0_i32_1 : i32, i32, i32
  }
  func.func @transform_17(%arg0: i32) -> (i32, i32) {
    %c0_i32 = arith.constant 0 : i32
    %c0_i32_0 = arith.constant 0 : i32
    %c0_i32_1 = arith.constant 0 : i32
    return %c0_i32, %c0_i32_0 : i32, i32
  }
  func.func @transform_18(%arg0: i32) -> (i32, i32) {
    %c0_i32 = arith.constant 0 : i32
    %c0_i32_0 = arith.constant 0 : i32
    %c0_i32_1 = arith.constant 0 : i32
    return %c0_i32, %c0_i32_0 : i32, i32
  }
  func.func @transform_19(%arg0: i32) -> (i32, i32) {
    %c0_i32 = arith.constant 0 : i32
    %c0_i32_0 = arith.constant 0 : i32
    %c0_i32_1 = arith.constant 0 : i32
    return %c0_i32, %c0_i32_0 : i32, i32
  }
  func.func @transform_20(%arg0: i32) -> (i32, i32) {
    %c0_i32 = arith.constant 0 : i32
    %c0_i32_0 = arith.constant 0 : i32
    %c0_i32_1 = arith.constant 0 : i32
    return %c0_i32, %c0_i32_0 : i32, i32
  }
  func.func @transform_21(%arg0: i32) -> (i32, i32) {
    %c0_i32 = arith.constant 0 : i32
    %c0_i32_0 = arith.constant 0 : i32
    return %arg0, %c0_i32 : i32, i32
  }
}

</mosaic_0001>

<llo_original>
// kernel: vit_forward.1
$region0: #{vit_forward.1}
  #allocation0 [shape = 'u32[]', space=smem, size = 0x4, offset = 0x4, fixed_abs, tag = 'smem constant byte address 0x4 - core index']
  #allocation1 [shape = 'u32[144,128]{1,0:T(1,128)}', space=vmem, size = 0x12000, scoped, tag = 'internal scratch']
  %s0 = inlined_call_operand.vmem [shape: f32[32,64], index: 0, kind: input, shape index: {}]
  %s1 = inlined_call_operand.vmem [shape: f32[64,32], index: 1, kind: input, shape index: {}]
  %s2 = inlined_call_operand.vmem [shape: f32[1,32], index: 2, kind: input, shape index: {}]
  %s3 = inlined_call_operand.vmem [shape: f32[1,32], index: 3, kind: input, shape index: {}]
  %s4 = inlined_call_operand.vmem [shape: f32[16,32], index: 4, kind: input, shape index: {}]
  %s5 = inlined_call_operand.vmem [shape: f32[2,1,32], index: 5, kind: input, shape index: {}]
  %s6 = inlined_call_operand.vmem [shape: f32[2,1,32], index: 6, kind: input, shape index: {}]
  %s7 = inlined_call_operand.vmem [shape: f32[2,32,96], index: 7, kind: input, shape index: {}]
  %s8 = inlined_call_operand.vmem [shape: f32[2,1,96], index: 8, kind: input, shape index: {}]
  %s9 = inlined_call_operand.vmem [shape: f32[2,32,32], index: 9, kind: input, shape index: {}]
  %s10 = inlined_call_operand.vmem [shape: f32[2,1,32], index: 10, kind: input, shape index: {}]
  %s11 = inlined_call_operand.vmem [shape: f32[2,1,32], index: 11, kind: input, shape index: {}]
  %s12 = inlined_call_operand.vmem [shape: f32[2,1,32], index: 12, kind: input, shape index: {}]
  %s13 = inlined_call_operand.vmem [shape: f32[2,32,128], index: 13, kind: input, shape index: {}]
  %s14 = inlined_call_operand.vmem [shape: f32[2,1,128], index: 14, kind: input, shape index: {}]
  %s15 = inlined_call_operand.vmem [shape: f32[2,128,32], index: 15, kind: input, shape index: {}]
  %s16 = inlined_call_operand.vmem [shape: f32[2,1,32], index: 16, kind: input, shape index: {}]
  %s17 = inlined_call_operand.vmem [shape: f32[1,32], index: 17, kind: input, shape index: {}]
  %s18 = inlined_call_operand.vmem [shape: f32[1,32], index: 18, kind: input, shape index: {}]
  %s19 = inlined_call_operand.vmem [shape: f32[32,128], index: 19, kind: input, shape index: {}]
  %s20 = inlined_call_operand.vmem [shape: f32[1,128], index: 20, kind: input, shape index: {}]
  %s21 = inlined_call_operand.hbm [shape: f32[2,128], index: 21, kind: output, shape index: {}]
  %s22 = sld [smem:[#allocation0]]
  $region94: #{vit_forward.1} parent=0
    _
  %s24 = ssub.s32 1, %s22
  %s25 = scalar_select 0, %s24, %s22
  $region1: #{vit_forward.1} parent=0
    #allocation2 [shape = 'u8[1024]{0}', space=vmem, size = 0x400, scoped, tag = 'output window, operand 0, single buffered']
    #allocation3 [shape = 's32[1]{0}', space=sflag, size = 0x4, scoped, tag = 'scoped memory for vit_forward.1']
    %26 = vsyncpa [#allocation3], 0
    // Predicated region
    $region2: #{vit_forward.1} parent=1 // pred_check
      _
    $region3: #{vit_forward.1} parent=1 // pred_check_branch
      %28 = sbr.rel (0) target = $region5
    $region4: #{vit_forward.1} parent=1 // pred_region
      _
    $region5: #{vit_forward.1} parent=1 // pred_fallthru
      _
    // Predicated region
    $region6: #{vit_forward.1} parent=1 // pred_check
      _
    $region7: #{vit_forward.1} parent=1 // pred_check_branch
      %30 = sbr.rel (0) target = $region9
    $region8: #{vit_forward.1} parent=1 // pred_region
      _
    $region9: #{vit_forward.1} parent=1 // pred_fallthru
      _
    // Predicated region
    $region10: #{vit_forward.1} parent=1 // pred_check
      _
    $region11: #{vit_forward.1} parent=1 // pred_check_branch
      %32 = sbr.rel (0) target = $region13
    $region12: #{vit_forward.1} parent=1 // pred_region
      _
    $region13: #{vit_forward.1} parent=1 // pred_fallthru
      _
    // Predicated region
    $region14: #{vit_forward.1} parent=1 // pred_check
      _
    $region15: #{vit_forward.1} parent=1 // pred_check_branch
      %34 = sbr.rel (0) target = $region17
    $region16: #{vit_forward.1} parent=1 // pred_region
      _
    $region17: #{vit_forward.1} parent=1 // pred_fallthru
      _
    // Predicated region
    $region18: #{vit_forward.1} parent=1 // pred_check
      _
    $region19: #{vit_forward.1} parent=1 // pred_check_branch
      %36 = sbr.rel (0) target = $region21
    $region20: #{vit_forward.1} parent=1 // pred_region
      _
    $region21: #{vit_forward.1} parent=1 // pred_fallthru
      _
    // Predicated region
    $region22: #{vit_forward.1} parent=1 // pred_check
      _
    $region23: #{vit_forward.1} parent=1 // pred_check_branch
      %38 = sbr.rel (0) target = $region25
    $region24: #{vit_forward.1} parent=1 // pred_region
      _
    $region25: #{vit_forward.1} parent=1 // pred_fallthru
      _
    // Predicated region
    $region26: #{vit_forward.1} parent=1 // pred_check
      _
    $region27: #{vit_forward.1} parent=1 // pred_check_branch
      %40 = sbr.rel (0) target = $region29
    $region28: #{vit_forward.1} parent=1 // pred_region
      _
    $region29: #{vit_forward.1} parent=1 // pred_fallthru
      _
    // Predicated region
    $region30: #{vit_forward.1} parent=1 // pred_check
      _
    $region31: #{vit_forward.1} parent=1 // pred_check_branch
      %42 = sbr.rel (0) target = $region33
    $region32: #{vit_forward.1} parent=1 // pred_region
      _
    $region33: #{vit_forward.1} parent=1 // pred_fallthru
      _
    // Predicated region
    $region34: #{vit_forward.1} parent=1 // pred_check
      _
    $region35: #{vit_forward.1} parent=1 // pred_check_branch
      %44 = sbr.rel (0) target = $region37
    $region36: #{vit_forward.1} parent=1 // pred_region
      _
    $region37: #{vit_forward.1} parent=1 // pred_fallthru
      _
    // Predicated region
    $region38: #{vit_forward.1} parent=1 // pred_check
      _
    $region39: #{vit_forward.1} parent=1 // pred_check_branch
      %46 = sbr.rel (0) target = $region41
    $region40: #{vit_forward.1} parent=1 // pred_region
      _
    $region41: #{vit_forward.1} parent=1 // pred_fallthru
      _
    // Predicated region
    $region42: #{vit_forward.1} parent=1 // pred_check
      _
    $region43: #{vit_forward.1} parent=1 // pred_check_branch
      %48 = sbr.rel (0) target = $region45
    $region44: #{vit_forward.1} parent=1 // pred_region
      _
    $region45: #{vit_forward.1} parent=1 // pred_fallthru
      _
    // Predicated region
    $region46: #{vit_forward.1} parent=1 // pred_check
      _
    $region47: #{vit_forward.1} parent=1 // pred_check_branch
      %50 = sbr.rel (0) target = $region49
    $region48: #{vit_forward.1} parent=1 // pred_region
      _
    $region49: #{vit_forward.1} parent=1 // pred_fallthru
      _
    // Predicated region
    $region50: #{vit_forward.1} parent=1 // pred_check
      _
    $region51: #{vit_forward.1} parent=1 // pred_check_branch
      %52 = sbr.rel (0) target = $region53
    $region52: #{vit_forward.1} parent=1 // pred_region
      _
    $region53: #{vit_forward.1} parent=1 // pred_fallthru
      _
    // Predicated region
    $region54: #{vit_forward.1} parent=1 // pred_check
      _
    $region55: #{vit_forward.1} parent=1 // pred_check_branch
      %54 = sbr.rel (0) target = $region57
    $region56: #{vit_forward.1} parent=1 // pred_region
      _
    $region57: #{vit_forward.1} parent=1 // pred_fallthru
      _
    // Predicated region
    $region58: #{vit_forward.1} parent=1 // pred_check
      _
    $region59: #{vit_forward.1} parent=1 // pred_check_branch
      %56 = sbr.rel (0) target = $region61
    $region60: #{vit_forward.1} parent=1 // pred_region
      _
    $region61: #{vit_forward.1} parent=1 // pred_fallthru
      _
    // Predicated region
    $region62: #{vit_forward.1} parent=1 // pred_check
      _
    $region63: #{vit_forward.1} parent=1 // pred_check_branch
      %58 = sbr.rel (0) target = $region65
    $region64: #{vit_forward.1} parent=1 // pred_region
      _
    $region65: #{vit_forward.1} parent=1 // pred_fallthru
      _
    // Predicated region
    $region66: #{vit_forward.1} parent=1 // pred_check
      _
    $region67: #{vit_forward.1} parent=1 // pred_check_branch
      %60 = sbr.rel (0) target = $region69
    $region68: #{vit_forward.1} parent=1 // pred_region
      _
    $region69: #{vit_forward.1} parent=1 // pred_fallthru
      _
    // Predicated region
    $region70: #{vit_forward.1} parent=1 // pred_check
      _
    $region71: #{vit_forward.1} parent=1 // pred_check_branch
      %62 = sbr.rel (0) target = $region73
    $region72: #{vit_forward.1} parent=1 // pred_region
      _
    $region73: #{vit_forward.1} parent=1 // pred_fallthru
      _
    // Predicated region
    $region74: #{vit_forward.1} parent=1 // pred_check
      _
    $region75: #{vit_forward.1} parent=1 // pred_check_branch
      %64 = sbr.rel (0) target = $region77
    $region76: #{vit_forward.1} parent=1 // pred_region
      _
    $region77: #{vit_forward.1} parent=1 // pred_fallthru
      _
    // Predicated region
    $region78: #{vit_forward.1} parent=1 // pred_check
      _
    $region79: #{vit_forward.1} parent=1 // pred_check_branch
      %66 = sbr.rel (0) target = $region81
    $region80: #{vit_forward.1} parent=1 // pred_region
      _
    $region81: #{vit_forward.1} parent=1 // pred_fallthru
      _
    // Predicated region
    $region82: #{vit_forward.1} parent=1 // pred_check
      _
    $region83: #{vit_forward.1} parent=1 // pred_check_branch
      %68 = sbr.rel (0) target = $region85
    $region84: #{vit_forward.1} parent=1 // pred_region
      _
    $region85: #{vit_forward.1} parent=1 // pred_fallthru
      _
    %v69 = vld [vmem:[%s0] sm:$0xff]
    %v70 = vld [vmem:[%s0 + $0x8] sm:$0xff]
    %v71 = vld [vmem:[%s0 + $0x10] sm:$0xff]
    %v72 = vld [vmem:[%s0 + $0x18] sm:$0xff]
    %v73 = vld [vmem:[%s1] sm:$0xff]
    %v74 = vld [vmem:[%s1 + $0x8] sm:$0xff]
    %v75 = vld [vmem:[%s1 + $0x10] sm:$0xff]
    %v76 = vld [vmem:[%s1 + $0x18] sm:$0xff]
    %v77 = vld [vmem:[%s1 + $0x20] sm:$0xff]
    %v78 = vld [vmem:[%s1 + $0x28] sm:$0xff]
    %v79 = vld [vmem:[%s1 + $0x30] sm:$0xff]
    %v80 = vld [vmem:[%s1 + $0x38] sm:$0xff]
    %v81 = vld [vmem:[%s2] sm:$0x1]
    %v83 = vlaneseq
    %v84 = vshrl.u32 %v83, 7
    %v85 = vsub.s32 0, %v84
    %v86 = vrot.slane %v81, %v85
    %vm88 = vcmask 523264
    %v90 = vsel %vm88, %v69, 0
    %v93 = vsel %vm88, %v70, 0
    %v96 = vsel %vm88, %v71, 0
    %v99 = vsel %vm88, %v72, 0
    %101 = vmatprep.subr.mxu0 0.0
    %102 = vmatpush1.msra.mxu0 %v73
    %103 = vmatprep.subr.mxu0 0.0
    %104 = vmatpush1.msra.mxu0 %v74
    %105 = vmatprep.subr.mxu0 0.0
    %106 = vmatpush1.msra.mxu0 %v75
    %107 = vmatprep.subr.mxu0 0.0
    %108 = vmatpush1.msra.mxu0 %v76
    %109 = vmatprep.subr.mxu0 0.0
    %110 = vmatpush1.msra.mxu0 %v77
    %111 = vmatprep.subr.mxu0 0.0
    %112 = vmatpush1.msra.mxu0 %v78
    %113 = vmatprep.subr.mxu0 0.0
    %114 = vmatpush1.msra.mxu0 %v79
    %115 = vmatprep.subr.mxu0 0.0
    %116 = vmatpush1.msra.mxu0 %v80
    %117 = vmatprep.subr.mxu0 0.0
    %118 = vmatpush1.msra.mxu0 0.0
    %119 = vmatprep.subr.mxu0 0.0
    %120 = vmatpush1.msra.mxu0 0.0
    %121 = vmatprep.subr.mxu0 0.0
    %122 = vmatpush1.msra.mxu0 0.0
    %123 = vmatprep.subr.mxu0 0.0
    %124 = vmatpush1.msra.mxu0 0.0
    %125 = vmatprep.subr.mxu0 0.0
    %126 = vmatpush1.msra.mxu0 0.0
    %127 = vmatprep.subr.mxu0 0.0
    %128 = vmatpush1.msra.mxu0 0.0
    %129 = vmatprep.subr.mxu0 0.0
    %130 = vmatpush1.msra.mxu0 0.0
    %131 = vmatprep.subr.mxu0 0.0
    %132 = vmatpush1.msra.mxu0 0.0
    %133 = vmatprep.subr.mxu0 0.0
    %134 = vmatpush1.msra.mxu0 0.0
    %135 = vmatprep.subr.mxu0 0.0
    %136 = vmatpush1.msra.mxu0 0.0
    %137 = vmatprep.subr.mxu0 0.0
    %138 = vmatpush1.msra.mxu0 0.0
    %139 = vmatprep.subr.mxu0 0.0
    %140 = vmatpush1.msra.mxu0 0.0
    %141 = vmatprep.subr.mxu0 0.0
    %142 = vmatpush1.msra.mxu0 0.0
    %143 = vmatprep.subr.mxu0 0.0
    %144 = vmatpush1.msra.mxu0 0.0
    %145 = vmatprep.subr.mxu0 0.0
    %146 = vmatpush1.msra.mxu0 0.0
    %147 = vmatprep.subr.mxu0 0.0
    %148 = vmatpush1.msra.mxu0 0.0
    %149 = vmatprep.subr.mxu0 0.0
    %150 = vmatpush1.msra.mxu0 0.0
    %151 = vmatprep.subr.mxu0 0.0
    %152 = vmatpush1.msra.mxu0 0.0
    %153 = vmatprep.subr.mxu0 0.0
    %154 = vmatpush1.msra.mxu0 0.0
    %155 = vmatprep.subr.mxu0 0.0
    %156 = vmatpush1.msra.mxu0 0.0
    %157 = vmatprep.subr.mxu0 0.0
    %158 = vmatpush1.msra.mxu0 0.0
    %159 = vmatprep.subr.mxu0 0.0
    %160 = vmatpush1.msra.mxu0 0.0
    %161 = vmatprep.subr.mxu0 0.0
    %162 = vmatpush1.msra.mxu0 0.0
    %163 = vmatprep.subr.mxu0 0.0
    %164 = vmatpush1.msra.mxu0 0.0
    %165 = vmatprep.mubr.f32.mxu0 0.0
    %166 = vmatmul.mubr.f32.gmra.mrb[0].mxu0 %v90
    %v167 = vpop.f32.mrb[0].mxu0
    %v168 = vadd.f32 %v86, %v167
    %v169 = vpop.f32.mrb[0].mxu0
    %170 = vmatprep.mubr.f32.mxu0 0.0
    %171 = vmatmul.mubr.f32.gmra.mrb[0].mxu0 %v93
    %v172 = vpop.f32.mrb[0].mxu0
    %v173 = vadd.f32 %v86, %v172
    %v174 = vpop.f32.mrb[0].mxu0
    %175 = vmatprep.mubr.f32.mxu0 0.0
    %176 = vmatmul.mubr.f32.gmra.mrb[0].mxu0 %v96
    %v177 = vpop.f32.mrb[0].mxu0
    %v178 = vadd.f32 %v86, %v177
    %v179 = vpop.f32.mrb[0].mxu0
    %180 = vmatprep.mubr.f32.mxu0 0.0
    %181 = vmatmul.mubr.f32.gmra.mrb[0].mxu0 %v99
    %v182 = vpop.f32.mrb[0].mxu0
    %v183 = vadd.f32 %v86, %v182
    %v184 = vpop.f32.mrb[0].mxu0
    %185 = vdwg.mxu0
    %v186 = vld [vmem:[%s3] sm:$0x1]
    %v187 = vld [vmem:[%s4] sm:$0xff]
    %v188 = vld [vmem:[%s4 + $0x8] sm:$0xff]
    %v189 = vadd.f32 %v168, %v187
    %v190 = vadd.f32 %v173, %v188
    %vm193 = vcmask 1040384
    %v194 = vrot.slane %v189, 7
    %v195 = vrot.slane %v190, 7
    %v196 = vsel %vm193, %v194, %v195
    %v200 = vsel %vm193, %v186, %v194
    %v201 = vld [vmem:[%s5] sm:$0x1]
    %v202 = vld [vmem:[%s6] sm:$0x1]
    %vm203 = vcmask 261120
    %v204 = vsel %vm203, %v200, 0.0
    %205 = vadd.xlane.f32.xlu0 %v204
    %v206 = vpop.xlane.xlu0 %205
    %v207 = vsel %vm203, %v196, 0.0
    %208 = vadd.xlane.f32.xlu0 %v207
    %v209 = vpop.xlane.xlu0 %208
    %vm210 = vcmask 253952
    %v211 = vsel %vm210, %v195, 0.0
    %212 = vadd.xlane.f32.xlu0 %v211
    %v213 = vpop.xlane.xlu0 %212
    %v214 = vrcp.pop 32.0
    %v215 = vmul.f32 %v206, %v214
    %v216 = vmul.f32 %v209, %v214
    %v217 = vmul.f32 %v213, %v214
    %v218 = vsub.f32 %v200, %v215
    %v219 = vsub.f32 %v196, %v216
    %v220 = vsub.f32 %v195, %v217
    %v221 = vmul.f32 %v218, %v218
    %v222 = vmul.f32 %v219, %v219
    %v223 = vmul.f32 %v220, %v220
    %v224 = vsel %vm203, %v221, 0.0
    %225 = vadd.xlane.f32.xlu0 %v224
    %v226 = vpop.xlane.xlu0 %225
    %v227 = vsel %vm203, %v222, 0.0
    %228 = vadd.xlane.f32.xlu0 %v227
    %v229 = vpop.xlane.xlu0 %228
    %v230 = vsel %vm210, %v223, 0.0
    %231 = vadd.xlane.f32.xlu0 %v230
    %v232 = vpop.xlane.xlu0 %231
    %v233 = vmul.f32 %v226, %v214
    %v234 = vmul.f32 %v229, %v214
    %v235 = vmul.f32 %v232, %v214
    %v236 = vadd.f32 %v233, 1e-06
    %v237 = vadd.f32 %v234, 1e-06
    %v238 = vadd.f32 %v235, 1e-06
    %v239 = vrsqrt.pop %v236
    %v240 = vrsqrt.pop %v237
    %v241 = vrsqrt.pop %v238
    %v242 = vmul.f32 %v218, %v239
    %v243 = vmul.f32 %v219, %v240
    %v244 = vmul.f32 %v220, %v241
    %v246 = vlaneseq
    %v247 = vshrl.u32 %v246, 7
    %v248 = vsub.s32 0, %v247
    %v249 = vrot.slane %v201, %v248
    %v251 = vmul.f32 %v242, %v249
    %v252 = vmul.f32 %v243, %v249
    %v253 = vmul.f32 %v244, %v249
    %v255 = vlaneseq
    %v256 = vshrl.u32 %v255, 7
    %v257 = vsub.s32 0, %v256
    %v258 = vrot.slane %v202, %v257
    %v260 = vadd.f32 %v251, %v258
    %v261 = vadd.f32 %v252, %v258
    %v262 = vadd.f32 %v253, %v258
    %v263 = vld [vmem:[%s7] sm:$0xff]
    %v264 = vld [vmem:[%s7 + $0x8] sm:$0xff]
    %v265 = vld [vmem:[%s7 + $0x10] sm:$0xff]
    %v266 = vld [vmem:[%s7 + $0x18] sm:$0xff]
    %v267 = vld [vmem:[%s8] sm:$0x1]
    %v269 = vlaneseq
    %v270 = vshrl.u32 %v269, 7
    %v271 = vsub.s32 0, %v270
    %v272 = vrot.slane %v267, %v271
    %v275 = vsel %vm203, %v260, 0
    %v278 = vsel %vm203, %v261, 0
    %v281 = vsel %vm203, %v262, 0
    %283 = vmatprep.subr.mxu0 0.0
    %284 = vmatpush1.msra.mxu0 %v263
    %285 = vmatprep.subr.mxu0 0.0
    %286 = vmatpush1.msra.mxu0 %v264
    %287 = vmatprep.subr.mxu0 0.0
    %288 = vmatpush1.msra.mxu0 %v265
    %289 = vmatprep.subr.mxu0 0.0
    %290 = vmatpush1.msra.mxu0 %v266
    %291 = vmatprep.subr.mxu0 0.0
    %292 = vmatpush1.msra.mxu0 0.0
    %293 = vmatprep.subr.mxu0 0.0
    %294 = vmatpush1.msra.mxu0 0.0
    %295 = vmatprep.subr.mxu0 0.0
    %296 = vmatpush1.msra.mxu0 0.0
    %297 = vmatprep.subr.mxu0 0.0
    %298 = vmatpush1.msra.mxu0 0.0
    %299 = vmatprep.subr.mxu0 0.0
    %300 = vmatpush1.msra.mxu0 0.0
    %301 = vmatprep.subr.mxu0 0.0
    %302 = vmatpush1.msra.mxu0 0.0
    %303 = vmatprep.subr.mxu0 0.0
    %304 = vmatpush1.msra.mxu0 0.0
    %305 = vmatprep.subr.mxu0 0.0
    %306 = vmatpush1.msra.mxu0 0.0
    %307 = vmatprep.subr.mxu0 0.0
    %308 = vmatpush1.msra.mxu0 0.0
    %309 = vmatprep.subr.mxu0 0.0
    %310 = vmatpush1.msra.mxu0 0.0
    %311 = vmatprep.subr.mxu0 0.0
    %312 = vmatpush1.msra.mxu0 0.0
    %313 = vmatprep.subr.mxu0 0.0
    %314 = vmatpush1.msra.mxu0 0.0
    %315 = vmatprep.subr.mxu0 0.0
    %316 = vmatpush1.msra.mxu0 0.0
    %317 = vmatprep.subr.mxu0 0.0
    %318 = vmatpush1.msra.mxu0 0.0
    %319 = vmatprep.subr.mxu0 0.0
    %320 = vmatpush1.msra.mxu0 0.0
    %321 = vmatprep.subr.mxu0 0.0
    %322 = vmatpush1.msra.mxu0 0.0
    %323 = vmatprep.subr.mxu0 0.0
    %324 = vmatpush1.msra.mxu0 0.0
    %325 = vmatprep.subr.mxu0 0.0
    %326 = vmatpush1.msra.mxu0 0.0
    %327 = vmatprep.subr.mxu0 0.0
    %328 = vmatpush1.msra.mxu0 0.0
    %329 = vmatprep.subr.mxu0 0.0
    %330 = vmatpush1.msra.mxu0 0.0
    %331 = vmatprep.subr.mxu0 0.0
    %332 = vmatpush1.msra.mxu0 0.0
    %333 = vmatprep.subr.mxu0 0.0
    %334 = vmatpush1.msra.mxu0 0.0
    %335 = vmatprep.subr.mxu0 0.0
    %336 = vmatpush1.msra.mxu0 0.0
    %337 = vmatprep.subr.mxu0 0.0
    %338 = vmatpush1.msra.mxu0 0.0
    %339 = vmatprep.subr.mxu0 0.0
    %340 = vmatpush1.msra.mxu0 0.0
    %341 = vmatprep.subr.mxu0 0.0
    %342 = vmatpush1.msra.mxu0 0.0
    %343 = vmatprep.subr.mxu0 0.0
    %344 = vmatpush1.msra.mxu0 0.0
    %345 = vmatprep.subr.mxu0 0.0
    %346 = vmatpush1.msra.mxu0 0.0
    %347 = vmatprep.mubr.f32.mxu0 0.0
    %348 = vmatmul.mubr.f32.gmra.mrb[0].mxu0 %v275
    %v349 = vpop.f32.mrb[0].mxu0
    %v350 = vadd.f32 %v272, %v349
    %v351 = vpop.f32.mrb[0].mxu0
    %352 = vmatprep.mubr.f32.mxu0 0.0
    %353 = vmatmul.mubr.f32.gmra.mrb[0].mxu0 %v278
    %v354 = vpop.f32.mrb[0].mxu0
    %v355 = vadd.f32 %v272, %v354
    %v356 = vpop.f32.mrb[0].mxu0
    %357 = vmatprep.mubr.f32.mxu0 0.0
    %358 = vmatmul.mubr.f32.gmra.mrb[0].mxu0 %v281
    %v359 = vpop.f32.mrb[0].mxu0
    %v360 = vadd.f32 %v272, %v359
    %v361 = vpop.f32.mrb[0].mxu0
    %362 = vdwg.mxu0
    %366 = vrot.lane.b32.xlu0 %v350, 96
    %v367 = vpop.permute.xlu0 %366
    %368 = vrot.lane.b32.xlu0 %v355, 96
    %v369 = vpop.permute.xlu0 %368
    %370 = vrot.lane.b32.xlu0 %v360, 96
    %v371 = vpop.permute.xlu0 %370
    %vm372 = vcmask 64512
    %v373 = vsel %vm372, %v350, 0
    %v375 = vsel %vm372, %v355, 0
    %v377 = vsel %vm372, %v360, 0
    %v379 = vsel %vm372, %v367, 0
    %v381 = vsel %vm372, %v369, 0
    %v383 = vsel %vm372, %v371, 0
    %385 = vmatprep.subr.mxu0 0.0
    %386 = vmatpush1.xpose.msra.mxu0 %v379
    %387 = vmatprep.subr.mxu0 0.0
    %388 = vmatpush1.xpose.msra.mxu0 %v381
    %389 = vmatprep.subr.mxu0 0.0
    %390 = vmatpush1.xpose.msra.mxu0 %v383
    %391 = vmatprep.subr.mxu0 0.0
    %392 = vmatpush1.xpose.msra.mxu0 0.0
    %393 = vmatprep.subr.mxu0 0.0
    %394 = vmatpush1.xpose.msra.mxu0 0.0
    %395 = vmatprep.subr.mxu0 0.0
    %396 = vmatpush1.xpose.msra.mxu0 0.0
    %397 = vmatprep.subr.mxu0 0.0
    %398 = vmatpush1.xpose.msra.mxu0 0.0
    %399 = vmatprep.subr.mxu0 0.0
    %400 = vmatpush1.xpose.msra.mxu0 0.0
    %401 = vmatprep.subr.mxu0 0.0
    %402 = vmatpush1.xpose.msra.mxu0 0.0
    %403 = vmatprep.subr.mxu0 0.0
    %404 = vmatpush1.xpose.msra.mxu0 0.0
    %405 = vmatprep.subr.mxu0 0.0
    %406 = vmatpush1.xpose.msra.mxu0 0.0
    %407 = vmatprep.subr.mxu0 0.0
    %408 = vmatpush1.xpose.msra.mxu0 0.0
    %409 = vmatprep.subr.mxu0 0.0
    %410 = vmatpush1.xpose.msra.mxu0 0.0
    %411 = vmatprep.subr.mxu0 0.0
    %412 = vmatpush1.xpose.msra.mxu0 0.0
    %413 = vmatprep.subr.mxu0 0.0
    %414 = vmatpush1.xpose.msra.mxu0 0.0
    %415 = vmatprep.subr.mxu0 0.0
    %416 = vmatpush1.xpose.msra.mxu0 0.0
    %417 = vmatprep.subr.mxu0 0.0
    %418 = vmatpush1.xpose.msra.mxu0 0.0
    %419 = vmatprep.subr.mxu0 0.0
    %420 = vmatpush1.xpose.msra.mxu0 0.0
    %421 = vmatprep.subr.mxu0 0.0
    %422 = vmatpush1.xpose.msra.mxu0 0.0
    %423 = vmatprep.subr.mxu0 0.0
    %424 = vmatpush1.xpose.msra.mxu0 0.0
    %425 = vmatprep.subr.mxu0 0.0
    %426 = vmatpush1.xpose.msra.mxu0 0.0
    %427 = vmatprep.subr.mxu0 0.0
    %428 = vmatpush1.xpose.msra.mxu0 0.0
    %429 = vmatprep.subr.mxu0 0.0
    %430 = vmatpush1.xpose.msra.mxu0 0.0
    %431 = vmatprep.subr.mxu0 0.0
    %432 = vmatpush1.xpose.msra.mxu0 0.0
    %433 = vmatprep.subr.mxu0 0.0
    %434 = vmatpush1.xpose.msra.mxu0 0.0
    %435 = vmatprep.subr.mxu0 0.0
    %436 = vmatpush1.xpose.msra.mxu0 0.0
    %437 = vmatprep.subr.mxu0 0.0
    %438 = vmatpush1.xpose.msra.mxu0 0.0
    %439 = vmatprep.subr.mxu0 0.0
    %440 = vmatpush1.xpose.msra.mxu0 0.0
    %441 = vmatprep.subr.mxu0 0.0
    %442 = vmatpush1.xpose.msra.mxu0 0.0
    %443 = vmatprep.subr.mxu0 0.0
    %444 = vmatpush1.xpose.msra.mxu0 0.0
    %445 = vmatprep.subr.mxu0 0.0
    %446 = vmatpush1.xpose.msra.mxu0 0.0
    %447 = vmatprep.subr.mxu0 0.0
    %448 = vmatpush1.xpose.msra.mxu0 0.0
    %449 = vmatprep.mubr.f32.mxu0 0.0
    %450 = vmatmul.mubr.f32.gmra.mrb[0].mxu0 %v373
    %v451 = vpop.f32.mrb[0].mxu0
    %v452 = vadd.f32 0.0, %v451
    %v453 = vpop.f32.mrb[0].mxu0
    %454 = vmatprep.mubr.f32.mxu0 0.0
    %455 = vmatmul.mubr.f32.gmra.mrb[0].mxu0 %v375
    %v456 = vpop.f32.mrb[0].mxu0
    %v457 = vadd.f32 0.0, %v456
    %v458 = vpop.f32.mrb[0].mxu0
    %459 = vmatprep.mubr.f32.mxu0 0.0
    %460 = vmatmul.mubr.f32.gmra.mrb[0].mxu0 %v377
    %v461 = vpop.f32.mrb[0].mxu0
    %v462 = vadd.f32 0.0, %v461
    %v463 = vpop.f32.mrb[0].mxu0
    %464 = vdwg.mxu0
    %vm465 = vcmask 138240
    %v466 = vsel %vm465, %v452, -inf
    %467 = vmax.xlane.f32.xlu0 %v466
    %v468 = vpop.xlane.xlu0 %467
    %v469 = vsel %vm465, %v457, -inf
    %470 = vmax.xlane.f32.xlu0 %v469
    %v471 = vpop.xlane.xlu0 %470
    %vm472 = vcmask 131072
    %v473 = vsel %vm472, %v462, -inf
    %474 = vmax.xlane.f32.xlu0 %v473
    %v475 = vpop.xlane.xlu0 %474
    %v476 = vsub.f32 %v452, %v468
    %v477 = vsub.f32 %v457, %v471
    %v478 = vsub.f32 %v462, %v475
    %v479 = vmul.f32 %v476, 1.442695
    %v480 = vpow.pop %v479
    %v481 = vmul.f32 %v477, 1.442695
    %v482 = vpow.pop %v481
    %v483 = vmul.f32 %v478, 1.442695
    %v484 = vpow.pop %v483
    %v485 = vsel %vm465, %v480, 0.0
    %486 = vadd.xlane.f32.xlu0 %v485
    %v487 = vpop.xlane.xlu0 %486
    %v488 = vsel %vm465, %v482, 0.0
    %489 = vadd.xlane.f32.xlu0 %v488
    %v490 = vpop.xlane.xlu0 %489
    %v491 = vsel %vm472, %v484, 0.0
    %492 = vadd.xlane.f32.xlu0 %v491
    %v493 = vpop.xlane.xlu0 %492
    %v494 = vrcp.pop %v487
    %v495 = vrcp.pop %v490
    %v496 = vrcp.pop %v493
    %v497 = vmul.f32 %v480, %v494
    %v498 = vmul.f32 %v482, %v495
    %v499 = vmul.f32 %v484, %v496
    %500 = vrot.lane.b32.xlu0 %v350, 64
    %v501 = vpop.permute.xlu0 %500
    %502 = vrot.lane.b32.xlu0 %v355, 64
    %v503 = vpop.permute.xlu0 %502
    %504 = vrot.lane.b32.xlu0 %v360, 64
    %v505 = vpop.permute.xlu0 %504
    %v509 = vsel %vm465, %v497, 0
    %v512 = vsel %vm465, %v498, 0
    %v515 = vsel %vm465, %v499, 0
    %v517 = vsel %vm193, %v505, 0
    %519 = vmatprep.subr.mxu0 0.0
    %520 = vmatpush1.msra.mxu0 %v501
    %521 = vmatprep.subr.mxu0 0.0
    %522 = vmatpush1.msra.mxu0 %v503
    %523 = vmatprep.subr.mxu0 0.0
    %524 = vmatpush1.msra.mxu0 %v517
    %525 = vmatprep.subr.mxu0 0.0
    %526 = vmatpush1.msra.mxu0 0.0
    %527 = vmatprep.subr.mxu0 0.0
    %528 = vmatpush1.msra.mxu0 0.0
    %529 = vmatprep.subr.mxu0 0.0
    %530 = vmatpush1.msra.mxu0 0.0
    %531 = vmatprep.subr.mxu0 0.0
    %532 = vmatpush1.msra.mxu0 0.0
    %533 = vmatprep.subr.mxu0 0.0
    %534 = vmatpush1.msra.mxu0 0.0
    %535 = vmatprep.subr.mxu0 0.0
    %536 = vmatpush1.msra.mxu0 0.0
    %537 = vmatprep.subr.mxu0 0.0
    %538 = vmatpush1.msra.mxu0 0.0
    %539 = vmatprep.subr.mxu0 0.0
    %540 = vmatpush1.msra.mxu0 0.0
    %541 = vmatprep.subr.mxu0 0.0
    %542 = vmatpush1.msra.mxu0 0.0
    %543 = vmatprep.subr.mxu0 0.0
    %544 = vmatpush1.msra.mxu0 0.0
    %545 = vmatprep.subr.mxu0 0.0
    %546 = vmatpush1.msra.mxu0 0.0
    %547 = vmatprep.subr.mxu0 0.0
    %548 = vmatpush1.msra.mxu0 0.0
    %549 = vmatprep.subr.mxu0 0.0
    %550 = vmatpush1.msra.mxu0 0.0
    %551 = vmatprep.subr.mxu0 0.0
    %552 = vmatpush1.msra.mxu0 0.0
    %553 = vmatprep.subr.mxu0 0.0
    %554 = vmatpush1.msra.mxu0 0.0
    %555 = vmatprep.subr.mxu0 0.0
    %556 = vmatpush1.msra.mxu0 0.0
    %557 = vmatprep.subr.mxu0 0.0
    %558 = vmatpush1.msra.mxu0 0.0
    %559 = vmatprep.subr.mxu0 0.0
    %560 = vmatpush1.msra.mxu0 0.0
    %561 = vmatprep.subr.mxu0 0.0
    %562 = vmatpush1.msra.mxu0 0.0
    %563 = vmatprep.subr.mxu0 0.0
    %564 = vmatpush1.msra.mxu0 0.0
    %565 = vmatprep.subr.mxu0 0.0
    %566 = vmatpush1.msra.mxu0 0.0
    %567 = vmatprep.subr.mxu0 0.0
    %568 = vmatpush1.msra.mxu0 0.0
    %569 = vmatprep.subr.mxu0 0.0
    %570 = vmatpush1.msra.mxu0 0.0
    %571 = vmatprep.subr.mxu0 0.0
    %572 = vmatpush1.msra.mxu0 0.0
    %573 = vmatprep.subr.mxu0 0.0
    %574 = vmatpush1.msra.mxu0 0.0
    %575 = vmatprep.subr.mxu0 0.0
    %576 = vmatpush1.msra.mxu0 0.0
    %577 = vmatprep.subr.mxu0 0.0
    %578 = vmatpush1.msra.mxu0 0.0
    %579 = vmatprep.subr.mxu0 0.0
    %580 = vmatpush1.msra.mxu0 0.0
    %581 = vmatprep.subr.mxu0 0.0
    %582 = vmatpush1.msra.mxu0 0.0
    %583 = vmatprep.mubr.f32.mxu0 0.0
    %584 = vmatmul.mubr.f32.gmra.mrb[0].mxu0 %v509
    %v585 = vpop.f32.mrb[0].mxu0
    %v586 = vadd.f32 0.0, %v585
    %v587 = vpop.f32.mrb[0].mxu0
    %588 = vmatprep.mubr.f32.mxu0 0.0
    %589 = vmatmul.mubr.f32.gmra.mrb[0].mxu0 %v512
    %v590 = vpop.f32.mrb[0].mxu0
    %v591 = vadd.f32 0.0, %v590
    %v592 = vpop.f32.mrb[0].mxu0
    %593 = vmatprep.mubr.f32.mxu0 0.0
    %594 = vmatmul.mubr.f32.gmra.mrb[0].mxu0 %v515
    %v595 = vpop.f32.mrb[0].mxu0
    %v596 = vadd.f32 0.0, %v595
    %v597 = vpop.f32.mrb[0].mxu0
    %598 = vdwg.mxu0
    %599 = vrot.lane.b32.xlu0 %v350, 120
    %v600 = vpop.permute.xlu0 %599
    %601 = vrot.lane.b32.xlu0 %v355, 120
    %v602 = vpop.permute.xlu0 %601
    %603 = vrot.lane.b32.xlu0 %v360, 120
    %v604 = vpop.permute.xlu0 %603
    %605 = vrot.lane.b32.xlu0 %v350, 88
    %v606 = vpop.permute.xlu0 %605
    %607 = vrot.lane.b32.xlu0 %v355, 88
    %v608 = vpop.permute.xlu0 %607
    %609 = vrot.lane.b32.xlu0 %v360, 88
    %v610 = vpop.permute.xlu0 %609
    %v611 = vsel %vm372, %v600, 0
    %v613 = vsel %vm372, %v602, 0
    %v615 = vsel %vm372, %v604, 0
    %v617 = vsel %vm372, %v606, 0
    %v619 = vsel %vm372, %v608, 0
    %v621 = vsel %vm372, %v610, 0
    %623 = vmatprep.subr.mxu0 0.0
    %624 = vmatpush1.xpose.msra.mxu0 %v617
    %625 = vmatprep.subr.mxu0 0.0
    %626 = vmatpush1.xpose.msra.mxu0 %v619
    %627 = vmatprep.subr.mxu0 0.0
    %628 = vmatpush1.xpose.msra.mxu0 %v621
    %629 = vmatprep.subr.mxu0 0.0
    %630 = vmatpush1.xpose.msra.mxu0 0.0
    %631 = vmatprep.subr.mxu0 0.0
    %632 = vmatpush1.xpose.msra.mxu0 0.0
    %633 = vmatprep.subr.mxu0 0.0
    %634 = vmatpush1.xpose.msra.mxu0 0.0
    %635 = vmatprep.subr.mxu0 0.0
    %636 = vmatpush1.xpose.msra.mxu0 0.0
    %637 = vmatprep.subr.mxu0 0.0
    %638 = vmatpush1.xpose.msra.mxu0 0.0
    %639 = vmatprep.subr.mxu0 0.0
    %640 = vmatpush1.xpose.msra.mxu0 0.0
    %641 = vmatprep.subr.mxu0 0.0
    %642 = vmatpush1.xpose.msra.mxu0 0.0
    %643 = vmatprep.subr.mxu0 0.0
    %644 = vmatpush1.xpose.msra.mxu0 0.0
    %645 = vmatprep.subr.mxu0 0.0
    %646 = vmatpush1.xpose.msra.mxu0 0.0
    %647 = vmatprep.subr.mxu0 0.0
    %648 = vmatpush1.xpose.msra.mxu0 0.0
    %649 = vmatprep.subr.mxu0 0.0
    %650 = vmatpush1.xpose.msra.mxu0 0.0
    %651 = vmatprep.subr.mxu0 0.0
    %652 = vmatpush1.xpose.msra.mxu0 0.0
    %653 = vmatprep.subr.mxu0 0.0
    %654 = vmatpush1.xpose.msra.mxu0 0.0
    %655 = vmatprep.subr.mxu0 0.0
    %656 = vmatpush1.xpose.msra.mxu0 0.0
    %657 = vmatprep.subr.mxu0 0.0
    %658 = vmatpush1.xpose.msra.mxu0 0.0
    %659 = vmatprep.subr.mxu0 0.0
    %660 = vmatpush1.xpose.msra.mxu0 0.0
    %661 = vmatprep.subr.mxu0 0.0
    %662 = vmatpush1.xpose.msra.mxu0 0.0
    %663 = vmatprep.subr.mxu0 0.0
    %664 = vmatpush1.xpose.msra.mxu0 0.0
    %665 = vmatprep.subr.mxu0 0.0
    %666 = vmatpush1.xpose.msra.mxu0 0.0
    %667 = vmatprep.subr.mxu0 0.0
    %668 = vmatpush1.xpose.msra.mxu0 0.0
    %669 = vmatprep.subr.mxu0 0.0
    %670 = vmatpush1.xpose.msra.mxu0 0.0
    %671 = vmatprep.subr.mxu0 0.0
    %672 = vmatpush1.xpose.msra.mxu0 0.0
    %673 = vmatprep.subr.mxu0 0.0
    %674 = vmatpush1.xpose.msra.mxu0 0.0
    %675 = vmatprep.subr.mxu0 0.0
    %676 = vmatpush1.xpose.msra.mxu0 0.0
    %677 = vmatprep.subr.mxu0 0.0
    %678 = vmatpush1.xpose.msra.mxu0 0.0
    %679 = vmatprep.subr.mxu0 0.0
    %680 = vmatpush1.xpose.msra.mxu0 0.0
    %681 = vmatprep.subr.mxu0 0.0
    %682 = vmatpush1.xpose.msra.mxu0 0.0
    %683 = vmatprep.subr.mxu0 0.0
    %684 = vmatpush1.xpose.msra.mxu0 0.0
    %685 = vmatprep.subr.mxu0 0.0
    %686 = vmatpush1.xpose.msra.mxu0 0.0
    %687 = vmatprep.mubr.f32.mxu0 0.0
    %688 = vmatmul.mubr.f32.gmra.mrb[0].mxu0 %v611
    %v689 = vpop.f32.mrb[0].mxu0
    %v690 = vadd.f32 0.0, %v689
    %v691 = vpop.f32.mrb[0].mxu0
    %692 = vmatprep.mubr.f32.mxu0 0.0
    %693 = vmatmul.mubr.f32.gmra.mrb[0].mxu0 %v613
    %v694 = vpop.f32.mrb[0].mxu0
    %v695 = vadd.f32 0.0, %v694
    %v696 = vpop.f32.mrb[0].mxu0
    %697 = vmatprep.mubr.f32.mxu0 0.0
    %698 = vmatmul.mubr.f32.gmra.mrb[0].mxu0 %v615
    %v699 = vpop.f32.mrb[0].mxu0
    %v700 = vadd.f32 0.0, %v699
    %v701 = vpop.f32.mrb[0].mxu0
    %702 = vdwg.mxu0
    %v703 = vsel %vm465, %v690, -inf
    %704 = vmax.xlane.f32.xlu0 %v703
    %v705 = vpop.xlane.xlu0 %704
    %v706 = vsel %vm465, %v695, -inf
    %707 = vmax.xlane.f32.xlu0 %v706
    %v708 = vpop.xlane.xlu0 %707
    %v709 = vsel %vm472, %v700, -inf
    %710 = vmax.xlane.f32.xlu0 %v709
    %v711 = vpop.xlane.xlu0 %710
    %v712 = vsub.f32 %v690, %v705
    %v713 = vsub.f32 %v695, %v708
    %v714 = vsub.f32 %v700, %v711
    %v715 = vmul.f32 %v712, 1.442695
    %v716 = vpow.pop %v715
    %v717 = vmul.f32 %v713, 1.442695
    %v718 = vpow.pop %v717
    %v719 = vmul.f32 %v714, 1.442695
    %v720 = vpow.pop %v719
    %v721 = vsel %vm465, %v716, 0.0
    %722 = vadd.xlane.f32.xlu0 %v721
    %v723 = vpop.xlane.xlu0 %722
    %v724 = vsel %vm465, %v718, 0.0
    %725 = vadd.xlane.f32.xlu0 %v724
    %v726 = vpop.xlane.xlu0 %725
    %v727 = vsel %vm472, %v720, 0.0
    %728 = vadd.xlane.f32.xlu0 %v727
    %v729 = vpop.xlane.xlu0 %728
    %v730 = vrcp.pop %v723
    %v731 = vrcp.pop %v726
    %v732 = vrcp.pop %v729
    %v733 = vmul.f32 %v716, %v730
    %v734 = vmul.f32 %v718, %v731
    %v735 = vmul.f32 %v720, %v732
    %736 = vrot.lane.b32.xlu0 %v350, 56
    %v737 = vpop.permute.xlu0 %736
    %738 = vrot.lane.b32.xlu0 %v355, 56
    %v739 = vpop.permute.xlu0 %738
    %740 = vrot.lane.b32.xlu0 %v360, 56
    %v741 = vpop.permute.xlu0 %740
    %v745 = vsel %vm465, %v733, 0
    %v748 = vsel %vm465, %v734, 0
    %v751 = vsel %vm465, %v735, 0
    %v753 = vsel %vm193, %v741, 0
    %755 = vmatprep.subr.mxu0 0.0
    %756 = vmatpush1.msra.mxu0 %v737
    %757 = vmatprep.subr.mxu0 0.0
    %758 = vmatpush1.msra.mxu0 %v739
    %759 = vmatprep.subr.mxu0 0.0
    %760 = vmatpush1.msra.mxu0 %v753
    %761 = vmatprep.subr.mxu0 0.0
    %762 = vmatpush1.msra.mxu0 0.0
    %763 = vmatprep.subr.mxu0 0.0
    %764 = vmatpush1.msra.mxu0 0.0
    %765 = vmatprep.subr.mxu0 0.0
    %766 = vmatpush1.msra.mxu0 0.0
    %767 = vmatprep.subr.mxu0 0.0
    %768 = vmatpush1.msra.mxu0 0.0
    %769 = vmatprep.subr.mxu0 0.0
    %770 = vmatpush1.msra.mxu0 0.0
    %771 = vmatprep.subr.mxu0 0.0
    %772 = vmatpush1.msra.mxu0 0.0
    %773 = vmatprep.subr.mxu0 0.0
    %774 = vmatpush1.msra.mxu0 0.0
    %775 = vmatprep.subr.mxu0 0.0
    %776 = vmatpush1.msra.mxu0 0.0
    %777 = vmatprep.subr.mxu0 0.0
    %778 = vmatpush1.msra.mxu0 0.0
    %779 = vmatprep.subr.mxu0 0.0
    %780 = vmatpush1.msra.mxu0 0.0
    %781 = vmatprep.subr.mxu0 0.0
    %782 = vmatpush1.msra.mxu0 0.0
    %783 = vmatprep.subr.mxu0 0.0
    %784 = vmatpush1.msra.mxu0 0.0
    %785 = vmatprep.subr.mxu0 0.0
    %786 = vmatpush1.msra.mxu0 0.0
    %787 = vmatprep.subr.mxu0 0.0
    %788 = vmatpush1.msra.mxu0 0.0
    %789 = vmatprep.subr.mxu0 0.0
    %790 = vmatpush1.msra.mxu0 0.0
    %791 = vmatprep.subr.mxu0 0.0
    %792 = vmatpush1.msra.mxu0 0.0
    %793 = vmatprep.subr.mxu0 0.0
    %794 = vmatpush1.msra.mxu0 0.0
    %795 = vmatprep.subr.mxu0 0.0
    %796 = vmatpush1.msra.mxu0 0.0
    %797 = vmatprep.subr.mxu0 0.0
    %798 = vmatpush1.msra.mxu0 0.0
    %799 = vmatprep.subr.mxu0 0.0
    %800 = vmatpush1.msra.mxu0 0.0
    %801 = vmatprep.subr.mxu0 0.0
    %802 = vmatpush1.msra.mxu0 0.0
    %803 = vmatprep.subr.mxu0 0.0
    %804 = vmatpush1.msra.mxu0 0.0
    %805 = vmatprep.subr.mxu0 0.0
    %806 = vmatpush1.msra.mxu0 0.0
    %807 = vmatprep.subr.mxu0 0.0
    %808 = vmatpush1.msra.mxu0 0.0
    %809 = vmatprep.subr.mxu0 0.0
    %810 = vmatpush1.msra.mxu0 0.0
    %811 = vmatprep.subr.mxu0 0.0
    %812 = vmatpush1.msra.mxu0 0.0
    %813 = vmatprep.subr.mxu0 0.0
    %814 = vmatpush1.msra.mxu0 0.0
    %815 = vmatprep.subr.mxu0 0.0
    %816 = vmatpush1.msra.mxu0 0.0
    %817 = vmatprep.subr.mxu0 0.0
    %818 = vmatpush1.msra.mxu0 0.0
    %819 = vmatprep.mubr.f32.mxu0 0.0
    %820 = vmatmul.mubr.f32.gmra.mrb[0].mxu0 %v745
    %v821 = vpop.f32.mrb[0].mxu0
    %v822 = vadd.f32 0.0, %v821
    %v823 = vpop.f32.mrb[0].mxu0
    %824 = vmatprep.mubr.f32.mxu0 0.0
    %825 = vmatmul.mubr.f32.gmra.mrb[0].mxu0 %v748
    %v826 = vpop.f32.mrb[0].mxu0
    %v827 = vadd.f32 0.0, %v826
    %v828 = vpop.f32.mrb[0].mxu0
    %829 = vmatprep.mubr.f32.mxu0 0.0
    %830 = vmatmul.mubr.f32.gmra.mrb[0].mxu0 %v751
    %v831 = vpop.f32.mrb[0].mxu0
    %v832 = vadd.f32 0.0, %v831
    %v833 = vpop.f32.mrb[0].mxu0
    %834 = vdwg.mxu0
    %835 = vrot.lane.b32.xlu0 %v350, 112
    %v836 = vpop.permute.xlu0 %835
    %837 = vrot.lane.b32.xlu0 %v355, 112
    %v838 = vpop.permute.xlu0 %837
    %839 = vrot.lane.b32.xlu0 %v360, 112
    %v840 = vpop.permute.xlu0 %839
    %841 = vrot.lane.b32.xlu0 %v350, 80
    %v842 = vpop.permute.xlu0 %841
    %843 = vrot.lane.b32.xlu0 %v355, 80
    %v844 = vpop.permute.xlu0 %843
    %845 = vrot.lane.b32.xlu0 %v360, 80
    %v846 = vpop.permute.xlu0 %845
    %v847 = vsel %vm372, %v836, 0
    %v849 = vsel %vm372, %v838, 0
    %v851 = vsel %vm372, %v840, 0
    %v853 = vsel %vm372, %v842, 0
    %v855 = vsel %vm372, %v844, 0
    %v857 = vsel %vm372, %v846, 0
    %859 = vmatprep.subr.mxu0 0.0
    %860 = vmatpush1.xpose.msra.mxu0 %v853
    %861 = vmatprep.subr.mxu0 0.0
    %862 = vmatpush1.xpose.msra.mxu0 %v855
    %863 = vmatprep.subr.mxu0 0.0
    %864 = vmatpush1.xpose.msra.mxu0 %v857
    %865 = vmatprep.subr.mxu0 0.0
    %866 = vmatpush1.xpose.msra.mxu0 0.0
    %867 = vmatprep.subr.mxu0 0.0
    %868 = vmatpush1.xpose.msra.mxu0 0.0
    %869 = vmatprep.subr.mxu0 0.0
    %870 = vmatpush1.xpose.msra.mxu0 0.0
    %871 = vmatprep.subr.mxu0 0.0
    %872 = vmatpush1.xpose.msra.mxu0 0.0
    %873 = vmatprep.subr.mxu0 0.0
    %874 = vmatpush1.xpose.msra.mxu0 0.0
    %875 = vmatprep.subr.mxu0 0.0
    %876 = vmatpush1.xpose.msra.mxu0 0.0
    %877 = vmatprep.subr.mxu0 0.0
    %878 = vmatpush1.xpose.msra.mxu0 0.0
    %879 = vmatprep.subr.mxu0 0.0
    %880 = vmatpush1.xpose.msra.mxu0 0.0
    %881 = vmatprep.subr.mxu0 0.0
    %882 = vmatpush1.xpose.msra.mxu0 0.0
    %883 = vmatprep.subr.mxu0 0.0
    %884 = vmatpush1.xpose.msra.mxu0 0.0
    %885 = vmatprep.subr.mxu0 0.0
    %886 = vmatpush1.xpose.msra.mxu0 0.0
    %887 = vmatprep.subr.mxu0 0.0
    %888 = vmatpush1.xpose.msra.mxu0 0.0
    %889 = vmatprep.subr.mxu0 0.0
    %890 = vmatpush1.xpose.msra.mxu0 0.0
    %891 = vmatprep.subr.mxu0 0.0
    %892 = vmatpush1.xpose.msra.mxu0 0.0
    %893 = vmatprep.subr.mxu0 0.0
    %894 = vmatpush1.xpose.msra.mxu0 0.0
    %895 = vmatprep.subr.mxu0 0.0
    %896 = vmatpush1.xpose.msra.mxu0 0.0
    %897 = vmatprep.subr.mxu0 0.0
    %898 = vmatpush1.xpose.msra.mxu0 0.0
    %899 = vmatprep.subr.mxu0 0.0
    %900 = vmatpush1.xpose.msra.mxu0 0.0
    %901 = vmatprep.subr.mxu0 0.0
    %902 = vmatpush1.xpose.msra.mxu0 0.0
    %903 = vmatprep.subr.mxu0 0.0
    %904 = vmatpush1.xpose.msra.mxu0 0.0
    %905 = vmatprep.subr.mxu0 0.0
    %906 = vmatpush1.xpose.msra.mxu0 0.0
    %907 = vmatprep.subr.mxu0 0.0
    %908 = vmatpush1.xpose.msra.mxu0 0.0
    %909 = vmatprep.subr.mxu0 0.0
    %910 = vmatpush1.xpose.msra.mxu0 0.0
    %911 = vmatprep.subr.mxu0 0.0
    %912 = vmatpush1.xpose.msra.mxu0 0.0
    %913 = vmatprep.subr.mxu0 0.0
    %914 = vmatpush1.xpose.msra.mxu0 0.0
    %915 = vmatprep.subr.mxu0 0.0
    %916 = vmatpush1.xpose.msra.mxu0 0.0
    %917 = vmatprep.subr.mxu0 0.0
    %918 = vmatpush1.xpose.msra.mxu0 0.0
    %919 = vmatprep.subr.mxu0 0.0
    %920 = vmatpush1.xpose.msra.mxu0 0.0
    %921 = vmatprep.subr.mxu0 0.0
    %922 = vmatpush1.xpose.msra.mxu0 0.0
    %923 = vmatprep.mubr.f32.mxu0 0.0
    %924 = vmatmul.mubr.f32.gmra.mrb[0].mxu0 %v847
    %v925 = vpop.f32.mrb[0].mxu0
    %v926 = vadd.f32 0.0, %v925
    %v927 = vpop.f32.mrb[0].mxu0
    %928 = vmatprep.mubr.f32.mxu0 0.0
    %929 = vmatmul.mubr.f32.gmra.mrb[0].mxu0 %v849
    %v930 = vpop.f32.mrb[0].mxu0
    %v931 = vadd.f32 0.0, %v930
    %v932 = vpop.f32.mrb[0].mxu0
    %933 = vmatprep.mubr.f32.mxu0 0.0
    %934 = vmatmul.mubr.f32.gmra.mrb[0].mxu0 %v851
    %v935 = vpop.f32.mrb[0].mxu0
    %v936 = vadd.f32 0.0, %v935
    %v937 = vpop.f32.mrb[0].mxu0
    %938 = vdwg.mxu0
    %v939 = vsel %vm465, %v926, -inf
    %940 = vmax.xlane.f32.xlu0 %v939
    %v941 = vpop.xlane.xlu0 %940
    %v942 = vsel %vm465, %v931, -inf
    %943 = vmax.xlane.f32.xlu0 %v942
    %v944 = vpop.xlane.xlu0 %943
    %v945 = vsel %vm472, %v936, -inf
    %946 = vmax.xlane.f32.xlu0 %v945
    %v947 = vpop.xlane.xlu0 %946
    %v948 = vsub.f32 %v926, %v941
    %v949 = vsub.f32 %v931, %v944
    %v950 = vsub.f32 %v936, %v947
    %v951 = vmul.f32 %v948, 1.442695
    %v952 = vpow.pop %v951
    %v953 = vmul.f32 %v949, 1.442695
    %v954 = vpow.pop %v953
    %v955 = vmul.f32 %v950, 1.442695
    %v956 = vpow.pop %v955
    %v957 = vsel %vm465, %v952, 0.0
    %958 = vadd.xlane.f32.xlu0 %v957
    %v959 = vpop.xlane.xlu0 %958
    %v960 = vsel %vm465, %v954, 0.0
    %961 = vadd.xlane.f32.xlu0 %v960
    %v962 = vpop.xlane.xlu0 %961
    %v963 = vsel %vm472, %v956, 0.0
    %964 = vadd.xlane.f32.xlu0 %v963
    %v965 = vpop.xlane.xlu0 %964
    %v966 = vrcp.pop %v959
    %v967 = vrcp.pop %v962
    %v968 = vrcp.pop %v965
    %v969 = vmul.f32 %v952, %v966
    %v970 = vmul.f32 %v954, %v967
    %v971 = vmul.f32 %v956, %v968
    %972 = vrot.lane.b32.xlu0 %v350, 48
    %v973 = vpop.permute.xlu0 %972
    %974 = vrot.lane.b32.xlu0 %v355, 48
    %v975 = vpop.permute.xlu0 %974
    %976 = vrot.lane.b32.xlu0 %v360, 48
    %v977 = vpop.permute.xlu0 %976
    %v981 = vsel %vm465, %v969, 0
    %v984 = vsel %vm465, %v970, 0
    %v987 = vsel %vm465, %v971, 0
    %v989 = vsel %vm193, %v977, 0
    %991 = vmatprep.subr.mxu0 0.0
    %992 = vmatpush1.msra.mxu0 %v973
    %993 = vmatprep.subr.mxu0 0.0
    %994 = vmatpush1.msra.mxu0 %v975
    %995 = vmatprep.subr.mxu0 0.0
    %996 = vmatpush1.msra.mxu0 %v989
    %997 = vmatprep.subr.mxu0 0.0
    %998 = vmatpush1.msra.mxu0 0.0
    %999 = vmatprep.subr.mxu0 0.0
    %1000 = vmatpush1.msra.mxu0 0.0
    %1001 = vmatprep.subr.mxu0 0.0
    %1002 = vmatpush1.msra.mxu0 0.0
    %1003 = vmatprep.subr.mxu0 0.0
    %1004 = vmatpush1.msra.mxu0 0.0
    %1005 = vmatprep.subr.mxu0 0.0
    %1006 = vmatpush1.msra.mxu0 0.0
    %1007 = vmatprep.subr.mxu0 0.0
    %1008 = vmatpush1.msra.mxu0 0.0
    %1009 = vmatprep.subr.mxu0 0.0
    %1010 = vmatpush1.msra.mxu0 0.0
    %1011 = vmatprep.subr.mxu0 0.0
    %1012 = vmatpush1.msra.mxu0 0.0
    %1013 = vmatprep.subr.mxu0 0.0
    %1014 = vmatpush1.msra.mxu0 0.0
    %1015 = vmatprep.subr.mxu0 0.0
    %1016 = vmatpush1.msra.mxu0 0.0
    %1017 = vmatprep.subr.mxu0 0.0
    %1018 = vmatpush1.msra.mxu0 0.0
    %1019 = vmatprep.subr.mxu0 0.0
    %1020 = vmatpush1.msra.mxu0 0.0
    %1021 = vmatprep.subr.mxu0 0.0
    %1022 = vmatpush1.msra.mxu0 0.0
    %1023 = vmatprep.subr.mxu0 0.0
    %1024 = vmatpush1.msra.mxu0 0.0
    %1025 = vmatprep.subr.mxu0 0.0
    %1026 = vmatpush1.msra.mxu0 0.0
    %1027 = vmatprep.subr.mxu0 0.0
    %1028 = vmatpush1.msra.mxu0 0.0
    %1029 = vmatprep.subr.mxu0 0.0
    %1030 = vmatpush1.msra.mxu0 0.0
    %1031 = vmatprep.subr.mxu0 0.0
    %1032 = vmatpush1.msra.mxu0 0.0
    %1033 = vmatprep.subr.mxu0 0.0
    %1034 = vmatpush1.msra.mxu0 0.0
    %1035 = vmatprep.subr.mxu0 0.0
    %1036 = vmatpush1.msra.mxu0 0.0
    %1037 = vmatprep.subr.mxu0 0.0
    %1038 = vmatpush1.msra.mxu0 0.0
    %1039 = vmatprep.subr.mxu0 0.0
    %1040 = vmatpush1.msra.mxu0 0.0
    %1041 = vmatprep.subr.mxu0 0.0
    %1042 = vmatpush1.msra.mxu0 0.0
    %1043 = vmatprep.subr.mxu0 0.0
    %1044 = vmatpush1.msra.mxu0 0.0
    %1045 = vmatprep.subr.mxu0 0.0
    %1046 = vmatpush1.msra.mxu0 0.0
    %1047 = vmatprep.subr.mxu0 0.0
    %1048 = vmatpush1.msra.mxu0 0.0
    %1049 = vmatprep.subr.mxu0 0.0
    %1050 = vmatpush1.msra.mxu0 0.0
    %1051 = vmatprep.subr.mxu0 0.0
    %1052 = vmatpush1.msra.mxu0 0.0
    %1053 = vmatprep.subr.mxu0 0.0
    %1054 = vmatpush1.msra.mxu0 0.0
    %1055 = vmatprep.mubr.f32.mxu0 0.0
    %1056 = vmatmul.mubr.f32.gmra.mrb[0].mxu0 %v981
    %v1057 = vpop.f32.mrb[0].mxu0
    %v1058 = vadd.f32 0.0, %v1057
    %v1059 = vpop.f32.mrb[0].mxu0
    %1060 = vmatprep.mubr.f32.mxu0 0.0
    %1061 = vmatmul.mubr.f32.gmra.mrb[0].mxu0 %v984
    %v1062 = vpop.f32.mrb[0].mxu0
    %v1063 = vadd.f32 0.0, %v1062
    %v1064 = vpop.f32.mrb[0].mxu0
    %1065 = vmatprep.mubr.f32.mxu0 0.0
    %1066 = vmatmul.mubr.f32.gmra.mrb[0].mxu0 %v987
    %v1067 = vpop.f32.mrb[0].mxu0
    %v1068 = vadd.f32 0.0, %v1067
    %v1069 = vpop.f32.mrb[0].mxu0
    %1070 = vdwg.mxu0
    %1071 = vrot.lane.b32.xlu0 %v350, 104
    %v1072 = vpop.permute.xlu0 %1071
    %1073 = vrot.lane.b32.xlu0 %v355, 104
    %v1074 = vpop.permute.xlu0 %1073
    %1075 = vrot.lane.b32.xlu0 %v360, 104
    %v1076 = vpop.permute.xlu0 %1075
    %1077 = vrot.lane.b32.xlu0 %v350, 72
    %v1078 = vpop.permute.xlu0 %1077
    %1079 = vrot.lane.b32.xlu0 %v355, 72
    %v1080 = vpop.permute.xlu0 %1079
    %1081 = vrot.lane.b32.xlu0 %v360, 72
    %v1082 = vpop.permute.xlu0 %1081
    %v1083 = vsel %vm372, %v1072, 0
    %v1085 = vsel %vm372, %v1074, 0
    %v1087 = vsel %vm372, %v1076, 0
    %v1089 = vsel %vm372, %v1078, 0
    %v1091 = vsel %vm372, %v1080, 0
    %v1093 = vsel %vm372, %v1082, 0
    %1095 = vmatprep.subr.mxu0 0.0
    %1096 = vmatpush1.xpose.msra.mxu0 %v1089
    %1097 = vmatprep.subr.mxu0 0.0
    %1098 = vmatpush1.xpose.msra.mxu0 %v1091
    %1099 = vmatprep.subr.mxu0 0.0
    %1100 = vmatpush1.xpose.msra.mxu0 %v1093
    %1101 = vmatprep.subr.mxu0 0.0
    %1102 = vmatpush1.xpose.msra.mxu0 0.0
    %1103 = vmatprep.subr.mxu0 0.0
    %1104 = vmatpush1.xpose.msra.mxu0 0.0
    %1105 = vmatprep.subr.mxu0 0.0
    %1106 = vmatpush1.xpose.msra.mxu0 0.0
    %1107 = vmatprep.subr.mxu0 0.0
    %1108 = vmatpush1.xpose.msra.mxu0 0.0
    %1109 = vmatprep.subr.mxu0 0.0
    %1110 = vmatpush1.xpose.msra.mxu0 0.0
    %1111 = vmatprep.subr.mxu0 0.0
    %1112 = vmatpush1.xpose.msra.mxu0 0.0
    %1113 = vmatprep.subr.mxu0 0.0
    %1114 = vmatpush1.xpose.msra.mxu0 0.0
    %1115 = vmatprep.subr.mxu0 0.0
    %1116 = vmatpush1.xpose.msra.mxu0 0.0
    %1117 = vmatprep.subr.mxu0 0.0
    %1118 = vmatpush1.xpose.msra.mxu0 0.0
    %1119 = vmatprep.subr.mxu0 0.0
    %1120 = vmatpush1.xpose.msra.mxu0 0.0
    %1121 = vmatprep.subr.mxu0 0.0
    %1122 = vmatpush1.xpose.msra.mxu0 0.0
    %1123 = vmatprep.subr.mxu0 0.0
    %1124 = vmatpush1.xpose.msra.mxu0 0.0
    %1125 = vmatprep.subr.mxu0 0.0
    %1126 = vmatpush1.xpose.msra.mxu0 0.0
    %1127 = vmatprep.subr.mxu0 0.0
    %1128 = vmatpush1.xpose.msra.mxu0 0.0
    %1129 = vmatprep.subr.mxu0 0.0
    %1130 = vmatpush1.xpose.msra.mxu0 0.0
    %1131 = vmatprep.subr.mxu0 0.0
    %1132 = vmatpush1.xpose.msra.mxu0 0.0
    %1133 = vmatprep.subr.mxu0 0.0
    %1134 = vmatpush1.xpose.msra.mxu0 0.0
    %1135 = vmatprep.subr.mxu0 0.0
    %1136 = vmatpush1.xpose.msra.mxu0 0.0
    %1137 = vmatprep.subr.mxu0 0.0
    %1138 = vmatpush1.xpose.msra.mxu0 0.0
    %1139 = vmatprep.subr.mxu0 0.0
    %1140 = vmatpush1.xpose.msra.mxu0 0.0
    %1141 = vmatprep.subr.mxu0 0.0
    %1142 = vmatpush1.xpose.msra.mxu0 0.0
    %1143 = vmatprep.subr.mxu0 0.0
    %1144 = vmatpush1.xpose.msra.mxu0 0.0
    %1145 = vmatprep.subr.mxu0 0.0
    %1146 = vmatpush1.xpose.msra.mxu0 0.0
    %1147 = vmatprep.subr.mxu0 0.0
    %1148 = vmatpush1.xpose.msra.mxu0 0.0
    %1149 = vmatprep.subr.mxu0 0.0
    %1150 = vmatpush1.xpose.msra.mxu0 0.0
    %1151 = vmatprep.subr.mxu0 0.0
    %1152 = vmatpush1.xpose.msra.mxu0 0.0
    %1153 = vmatprep.subr.mxu0 0.0
    %1154 = vmatpush1.xpose.msra.mxu0 0.0
    %1155 = vmatprep.subr.mxu0 0.0
    %1156 = vmatpush1.xpose.msra.mxu0 0.0
    %1157 = vmatprep.subr.mxu0 0.0
    %1158 = vmatpush1.xpose.msra.mxu0 0.0
    %1159 = vmatprep.mubr.f32.mxu0 0.0
    %1160 = vmatmul.mubr.f32.gmra.mrb[0].mxu0 %v1083
    %v1161 = vpop.f32.mrb[0].mxu0
    %v1162 = vadd.f32 0.0, %v1161
    %v1163 = vpop.f32.mrb[0].mxu0
    %1164 = vmatprep.mubr.f32.mxu0 0.0
    %1165 = vmatmul.mubr.f32.gmra.mrb[0].mxu0 %v1085
    %v1166 = vpop.f32.mrb[0].mxu0
    %v1167 = vadd.f32 0.0, %v1166
    %v1168 = vpop.f32.mrb[0].mxu0
    %1169 = vmatprep.mubr.f32.mxu0 0.0
    %1170 = vmatmul.mubr.f32.gmra.mrb[0].mxu0 %v1087
    %v1171 = vpop.f32.mrb[0].mxu0
    %v1172 = vadd.f32 0.0, %v1171
    %v1173 = vpop.f32.mrb[0].mxu0
    %1174 = vdwg.mxu0
    %v1175 = vsel %vm465, %v1162, -inf
    %1176 = vmax.xlane.f32.xlu0 %v1175
    %v1177 = vpop.xlane.xlu0 %1176
    %v1178 = vsel %vm465, %v1167, -inf
    %1179 = vmax.xlane.f32.xlu0 %v1178
    %v1180 = vpop.xlane.xlu0 %1179
    %v1181 = vsel %vm472, %v1172, -inf
    %1182 = vmax.xlane.f32.xlu0 %v1181
    %v1183 = vpop.xlane.xlu0 %1182
    %v1184 = vsub.f32 %v1162, %v1177
    %v1185 = vsub.f32 %v1167, %v1180
    %v1186 = vsub.f32 %v1172, %v1183
    %v1187 = vmul.f32 %v1184, 1.442695
    %v1188 = vpow.pop %v1187
    %v1189 = vmul.f32 %v1185, 1.442695
    %v1190 = vpow.pop %v1189
    %v1191 = vmul.f32 %v1186, 1.442695
    %v1192 = vpow.pop %v1191
    %v1193 = vsel %vm465, %v1188, 0.0
    %1194 = vadd.xlane.f32.xlu0 %v1193
    %v1195 = vpop.xlane.xlu0 %1194
    %v1196 = vsel %vm465, %v1190, 0.0
    %1197 = vadd.xlane.f32.xlu0 %v1196
    %v1198 = vpop.xlane.xlu0 %1197
    %v1199 = vsel %vm472, %v1192, 0.0
    %1200 = vadd.xlane.f32.xlu0 %v1199
    %v1201 = vpop.xlane.xlu0 %1200
    %v1202 = vrcp.pop %v1195
    %v1203 = vrcp.pop %v1198
    %v1204 = vrcp.pop %v1201
    %v1205 = vmul.f32 %v1188, %v1202
    %v1206 = vmul.f32 %v1190, %v1203
    %v1207 = vmul.f32 %v1192, %v1204
    %1208 = vrot.lane.b32.xlu0 %v350, 40
    %v1209 = vpop.permute.xlu0 %1208
    %1210 = vrot.lane.b32.xlu0 %v355, 40
    %v1211 = vpop.permute.xlu0 %1210
    %1212 = vrot.lane.b32.xlu0 %v360, 40
    %v1213 = vpop.permute.xlu0 %1212
    %v1217 = vsel %vm465, %v1205, 0
    %v1220 = vsel %vm465, %v1206, 0
    %v1223 = vsel %vm465, %v1207, 0
    %v1225 = vsel %vm193, %v1213, 0
    %1227 = vmatprep.subr.mxu0 0.0
    %1228 = vmatpush1.msra.mxu0 %v1209
    %1229 = vmatprep.subr.mxu0 0.0
    %1230 = vmatpush1.msra.mxu0 %v1211
    %1231 = vmatprep.subr.mxu0 0.0
    %1232 = vmatpush1.msra.mxu0 %v1225
    %1233 = vmatprep.subr.mxu0 0.0
    %1234 = vmatpush1.msra.mxu0 0.0
    %1235 = vmatprep.subr.mxu0 0.0
    %1236 = vmatpush1.msra.mxu0 0.0
    %1237 = vmatprep.subr.mxu0 0.0
    %1238 = vmatpush1.msra.mxu0 0.0
    %1239 = vmatprep.subr.mxu0 0.0
    %1240 = vmatpush1.msra.mxu0 0.0
    %1241 = vmatprep.subr.mxu0 0.0
    %1242 = vmatpush1.msra.mxu0 0.0
    %1243 = vmatprep.subr.mxu0 0.0
    %1244 = vmatpush1.msra.mxu0 0.0
    %1245 = vmatprep.subr.mxu0 0.0
    %1246 = vmatpush1.msra.mxu0 0.0
    %1247 = vmatprep.subr.mxu0 0.0
    %1248 = vmatpush1.msra.mxu0 0.0
    %1249 = vmatprep.subr.mxu0 0.0
    %1250 = vmatpush1.msra.mxu0 0.0
    %1251 = vmatprep.subr.mxu0 0.0
    %1252 = vmatpush1.msra.mxu0 0.0
    %1253 = vmatprep.subr.mxu0 0.0
    %1254 = vmatpush1.msra.mxu0 0.0
    %1255 = vmatprep.subr.mxu0 0.0
    %1256 = vmatpush1.msra.mxu0 0.0
    %1257 = vmatprep.subr.mxu0 0.0
    %1258 = vmatpush1.msra.mxu0 0.0
    %1259 = vmatprep.subr.mxu0 0.0
    %1260 = vmatpush1.msra.mxu0 0.0
    %1261 = vmatprep.subr.mxu0 0.0
    %1262 = vmatpush1.msra.mxu0 0.0
    %1263 = vmatprep.subr.mxu0 0.0
    %1264 = vmatpush1.msra.mxu0 0.0
    %1265 = vmatprep.subr.mxu0 0.0
    %1266 = vmatpush1.msra.mxu0 0.0
    %1267 = vmatprep.subr.mxu0 0.0
    %1268 = vmatpush1.msra.mxu0 0.0
    %1269 = vmatprep.subr.mxu0 0.0
    %1270 = vmatpush1.msra.mxu0 0.0
    %1271 = vmatprep.subr.mxu0 0.0
    %1272 = vmatpush1.msra.mxu0 0.0
    %1273 = vmatprep.subr.mxu0 0.0
    %1274 = vmatpush1.msra.mxu0 0.0
    %1275 = vmatprep.subr.mxu0 0.0
    %1276 = vmatpush1.msra.mxu0 0.0
    %1277 = vmatprep.subr.mxu0 0.0
    %1278 = vmatpush1.msra.mxu0 0.0
    %1279 = vmatprep.subr.mxu0 0.0
    %1280 = vmatpush1.msra.mxu0 0.0
    %1281 = vmatprep.subr.mxu0 0.0
    %1282 = vmatpush1.msra.mxu0 0.0
    %1283 = vmatprep.subr.mxu0 0.0
    %1284 = vmatpush1.msra.mxu0 0.0
    %1285 = vmatprep.subr.mxu0 0.0
    %1286 = vmatpush1.msra.mxu0 0.0
    %1287 = vmatprep.subr.mxu0 0.0
    %1288 = vmatpush1.msra.mxu0 0.0
    %1289 = vmatprep.subr.mxu0 0.0
    %1290 = vmatpush1.msra.mxu0 0.0
    %1291 = vmatprep.mubr.f32.mxu0 0.0
    %1292 = vmatmul.mubr.f32.gmra.mrb[0].mxu0 %v1217
    %v1293 = vpop.f32.mrb[0].mxu0
    %v1294 = vadd.f32 0.0, %v1293
    %v1295 = vpop.f32.mrb[0].mxu0
    %1296 = vmatprep.mubr.f32.mxu0 0.0
    %1297 = vmatmul.mubr.f32.gmra.mrb[0].mxu0 %v1220
    %v1298 = vpop.f32.mrb[0].mxu0
    %v1299 = vadd.f32 0.0, %v1298
    %v1300 = vpop.f32.mrb[0].mxu0
    %1301 = vmatprep.mubr.f32.mxu0 0.0
    %1302 = vmatmul.mubr.f32.gmra.mrb[0].mxu0 %v1223
    %v1303 = vpop.f32.mrb[0].mxu0
    %v1304 = vadd.f32 0.0, %v1303
    %v1305 = vpop.f32.mrb[0].mxu0
    %1306 = vdwg.mxu0
    %1310 = vrot.lane.b32.xlu0 %v822, 8
    %v1311 = vpop.permute.xlu0 %1310
    %1312 = vrot.lane.b32.xlu0 %v827, 8
    %v1313 = vpop.permute.xlu0 %1312
    %1314 = vrot.lane.b32.xlu0 %v832, 8
    %v1315 = vpop.permute.xlu0 %1314
    %1322 = vrot.lane.b32.xlu0 %v1058, 16
    %v1323 = vpop.permute.xlu0 %1322
    %1324 = vrot.lane.b32.xlu0 %v1063, 16
    %v1325 = vpop.permute.xlu0 %1324
    %1326 = vrot.lane.b32.xlu0 %v1068, 16
    %v1327 = vpop.permute.xlu0 %1326
    %1334 = vrot.lane.b32.xlu0 %v1294, 24
    %v1335 = vpop.permute.xlu0 %1334
    %1336 = vrot.lane.b32.xlu0 %v1299, 24
    %v1337 = vpop.permute.xlu0 %1336
    %1338 = vrot.lane.b32.xlu0 %v1304, 24
    %v1339 = vpop.permute.xlu0 %1338
    %v1343 = vsel %vm372, %v586, %v1311
    %v1344 = vsel %vm372, %v591, %v1313
    %v1345 = vsel %vm372, %v596, %v1315
    %vm1346 = vcmask 130048
    %v1347 = vsel %vm1346, %v1343, %v1323
    %v1348 = vsel %vm1346, %v1344, %v1325
    %v1349 = vsel %vm1346, %v1345, %v1327
    %vm1350 = vcmask 195584
    %v1351 = vsel %vm1350, %v1347, %v1335
    %v1352 = vsel %vm1350, %v1348, %v1337
    %v1353 = vsel %vm1350, %v1349, %v1339
    %v1354 = vld [vmem:[%s9] sm:$0xff]
    %v1355 = vld [vmem:[%s9 + $0x8] sm:$0xff]
    %v1356 = vld [vmem:[%s9 + $0x10] sm:$0xff]
    %v1357 = vld [vmem:[%s9 + $0x18] sm:$0xff]
    %v1358 = vld [vmem:[%s10] sm:$0x1]
    %v1360 = vlaneseq
    %v1361 = vshrl.u32 %v1360, 7
    %v1362 = vsub.s32 0, %v1361
    %v1363 = vrot.slane %v1358, %v1362
    %v1366 = vsel %vm203, %v1351, 0
    %v1369 = vsel %vm203, %v1352, 0
    %v1372 = vsel %vm203, %v1353, 0
    %1374 = vmatprep.subr.mxu0 0.0
    %1375 = vmatpush1.msra.mxu0 %v1354
    %1376 = vmatprep.subr.mxu0 0.0
    %1377 = vmatpush1.msra.mxu0 %v1355
    %1378 = vmatprep.subr.mxu0 0.0
    %1379 = vmatpush1.msra.mxu0 %v1356
    %1380 = vmatprep.subr.mxu0 0.0
    %1381 = vmatpush1.msra.mxu0 %v1357
    %1382 = vmatprep.subr.mxu0 0.0
    %1383 = vmatpush1.msra.mxu0 0.0
    %1384 = vmatprep.subr.mxu0 0.0
    %1385 = vmatpush1.msra.mxu0 0.0
    %1386 = vmatprep.subr.mxu0 0.0
    %1387 = vmatpush1.msra.mxu0 0.0
    %1388 = vmatprep.subr.mxu0 0.0
    %1389 = vmatpush1.msra.mxu0 0.0
    %1390 = vmatprep.subr.mxu0 0.0
    %1391 = vmatpush1.msra.mxu0 0.0
    %1392 = vmatprep.subr.mxu0 0.0
    %1393 = vmatpush1.msra.mxu0 0.0
    %1394 = vmatprep.subr.mxu0 0.0
    %1395 = vmatpush1.msra.mxu0 0.0
    %1396 = vmatprep.subr.mxu0 0.0
    %1397 = vmatpush1.msra.mxu0 0.0
    %1398 = vmatprep.subr.mxu0 0.0
    %1399 = vmatpush1.msra.mxu0 0.0
    %1400 = vmatprep.subr.mxu0 0.0
    %1401 = vmatpush1.msra.mxu0 0.0
    %1402 = vmatprep.subr.mxu0 0.0
    %1403 = vmatpush1.msra.mxu0 0.0
    %1404 = vmatprep.subr.mxu0 0.0
    %1405 = vmatpush1.msra.mxu0 0.0
    %1406 = vmatprep.subr.mxu0 0.0
    %1407 = vmatpush1.msra.mxu0 0.0
    %1408 = vmatprep.subr.mxu0 0.0
    %1409 = vmatpush1.msra.mxu0 0.0
    %1410 = vmatprep.subr.mxu0 0.0
    %1411 = vmatpush1.msra.mxu0 0.0
    %1412 = vmatprep.subr.mxu0 0.0
    %1413 = vmatpush1.msra.mxu0 0.0
    %1414 = vmatprep.subr.mxu0 0.0
    %1415 = vmatpush1.msra.mxu0 0.0
    %1416 = vmatprep.subr.mxu0 0.0
    %1417 = vmatpush1.msra.mxu0 0.0
    %1418 = vmatprep.subr.mxu0 0.0
    %1419 = vmatpush1.msra.mxu0 0.0
    %1420 = vmatprep.subr.mxu0 0.0
    %1421 = vmatpush1.msra.mxu0 0.0
    %1422 = vmatprep.subr.mxu0 0.0
    %1423 = vmatpush1.msra.mxu0 0.0
    %1424 = vmatprep.subr.mxu0 0.0
    %1425 = vmatpush1.msra.mxu0 0.0
    %1426 = vmatprep.subr.mxu0 0.0
    %1427 = vmatpush1.msra.mxu0 0.0
    %1428 = vmatprep.subr.mxu0 0.0
    %1429 = vmatpush1.msra.mxu0 0.0
    %1430 = vmatprep.subr.mxu0 0.0
    %1431 = vmatpush1.msra.mxu0 0.0
    %1432 = vmatprep.subr.mxu0 0.0
    %1433 = vmatpush1.msra.mxu0 0.0
    %1434 = vmatprep.subr.mxu0 0.0
    %1435 = vmatpush1.msra.mxu0 0.0
    %1436 = vmatprep.subr.mxu0 0.0
    %1437 = vmatpush1.msra.mxu0 0.0
    %1438 = vmatprep.mubr.f32.mxu0 0.0
    %1439 = vmatmul.mubr.f32.gmra.mrb[0].mxu0 %v1366
    %v1440 = vpop.f32.mrb[0].mxu0
    %v1441 = vadd.f32 %v1363, %v1440
    %v1442 = vpop.f32.mrb[0].mxu0
    %1443 = vmatprep.mubr.f32.mxu0 0.0
    %1444 = vmatmul.mubr.f32.gmra.mrb[0].mxu0 %v1369
    %v1445 = vpop.f32.mrb[0].mxu0
    %v1446 = vadd.f32 %v1363, %v1445
    %v1447 = vpop.f32.mrb[0].mxu0
    %1448 = vmatprep.mubr.f32.mxu0 0.0
    %1449 = vmatmul.mubr.f32.gmra.mrb[0].mxu0 %v1372
    %v1450 = vpop.f32.mrb[0].mxu0
    %v1451 = vadd.f32 %v1363, %v1450
    %v1452 = vpop.f32.mrb[0].mxu0
    %1453 = vdwg.mxu0
    %v1454 = vadd.f32 %v200, %v1441
    %v1455 = vadd.f32 %v196, %v1446
    %v1456 = vadd.f32 %v195, %v1451
    %v1457 = vld [vmem:[%s11] sm:$0x1]
    %v1458 = vld [vmem:[%s12] sm:$0x1]
    %v1459 = vsel %vm203, %v1454, 0.0
    %1460 = vadd.xlane.f32.xlu0 %v1459
    %v1461 = vpop.xlane.xlu0 %1460
    %v1462 = vsel %vm203, %v1455, 0.0
    %1463 = vadd.xlane.f32.xlu0 %v1462
    %v1464 = vpop.xlane.xlu0 %1463
    %v1465 = vsel %vm210, %v1456, 0.0
    %1466 = vadd.xlane.f32.xlu0 %v1465
    %v1467 = vpop.xlane.xlu0 %1466
    %v1468 = vmul.f32 %v1461, %v214
    %v1469 = vmul.f32 %v1464, %v214
    %v1470 = vmul.f32 %v1467, %v214
    %v1471 = vsub.f32 %v1454, %v1468
    %v1472 = vsub.f32 %v1455, %v1469
    %v1473 = vsub.f32 %v1456, %v1470
    %v1474 = vmul.f32 %v1471, %v1471
    %v1475 = vmul.f32 %v1472, %v1472
    %v1476 = vmul.f32 %v1473, %v1473
    %v1477 = vsel %vm203, %v1474, 0.0
    %1478 = vadd.xlane.f32.xlu0 %v1477
    %v1479 = vpop.xlane.xlu0 %1478
    %v1480 = vsel %vm203, %v1475, 0.0
    %1481 = vadd.xlane.f32.xlu0 %v1480
    %v1482 = vpop.xlane.xlu0 %1481
    %v1483 = vsel %vm210, %v1476, 0.0
    %1484 = vadd.xlane.f32.xlu0 %v1483
    %v1485 = vpop.xlane.xlu0 %1484
    %v1486 = vmul.f32 %v1479, %v214
    %v1487 = vmul.f32 %v1482, %v214
    %v1488 = vmul.f32 %v1485, %v214
    %v1489 = vadd.f32 %v1486, 1e-06
    %v1490 = vadd.f32 %v1487, 1e-06
    %v1491 = vadd.f32 %v1488, 1e-06
    %v1492 = vrsqrt.pop %v1489
    %v1493 = vrsqrt.pop %v1490
    %v1494 = vrsqrt.pop %v1491
    %v1495 = vmul.f32 %v1471, %v1492
    %v1496 = vmul.f32 %v1472, %v1493
    %v1497 = vmul.f32 %v1473, %v1494
    %v1499 = vlaneseq
    %v1500 = vshrl.u32 %v1499, 7
    %v1501 = vsub.s32 0, %v1500
    %v1502 = vrot.slane %v1457, %v1501
    %v1504 = vmul.f32 %v1495, %v1502
    %v1505 = vmul.f32 %v1496, %v1502
    %v1506 = vmul.f32 %v1497, %v1502
    %v1508 = vlaneseq
    %v1509 = vshrl.u32 %v1508, 7
    %v1510 = vsub.s32 0, %v1509
    %v1511 = vrot.slane %v1458, %v1510
    %v1513 = vadd.f32 %v1504, %v1511
    %v1514 = vadd.f32 %v1505, %v1511
    %v1515 = vadd.f32 %v1506, %v1511
    %v1516 = vld [vmem:[%s13] sm:$0xff]
    %v1517 = vld [vmem:[%s13 + $0x8] sm:$0xff]
    %v1518 = vld [vmem:[%s13 + $0x10] sm:$0xff]
    %v1519 = vld [vmem:[%s13 + $0x18] sm:$0xff]
    %v1520 = vld [vmem:[%s14] sm:$0x1]
    %v1522 = vlaneseq
    %v1523 = vshrl.u32 %v1522, 7
    %v1524 = vsub.s32 0, %v1523
    %v1525 = vrot.slane %v1520, %v1524
    %v1528 = vsel %vm203, %v1513, 0
    %v1531 = vsel %vm203, %v1514, 0
    %v1534 = vsel %vm203, %v1515, 0
    %1536 = vmatprep.subr.mxu0 0.0
    %1537 = vmatpush1.msra.mxu0 %v1516
    %1538 = vmatprep.subr.mxu0 0.0
    %1539 = vmatpush1.msra.mxu0 %v1517
    %1540 = vmatprep.subr.mxu0 0.0
    %1541 = vmatpush1.msra.mxu0 %v1518
    %1542 = vmatprep.subr.mxu0 0.0
    %1543 = vmatpush1.msra.mxu0 %v1519
    %1544 = vmatprep.subr.mxu0 0.0
    %1545 = vmatpush1.msra.mxu0 0.0
    %1546 = vmatprep.subr.mxu0 0.0
    %1547 = vmatpush1.msra.mxu0 0.0
    %1548 = vmatprep.subr.mxu0 0.0
    %1549 = vmatpush1.msra.mxu0 0.0
    %1550 = vmatprep.subr.mxu0 0.0
    %1551 = vmatpush1.msra.mxu0 0.0
    %1552 = vmatprep.subr.mxu0 0.0
    %1553 = vmatpush1.msra.mxu0 0.0
    %1554 = vmatprep.subr.mxu0 0.0
    %1555 = vmatpush1.msra.mxu0 0.0
    %1556 = vmatprep.subr.mxu0 0.0
    %1557 = vmatpush1.msra.mxu0 0.0
    %1558 = vmatprep.subr.mxu0 0.0
    %1559 = vmatpush1.msra.mxu0 0.0
    %1560 = vmatprep.subr.mxu0 0.0
    %1561 = vmatpush1.msra.mxu0 0.0
    %1562 = vmatprep.subr.mxu0 0.0
    %1563 = vmatpush1.msra.mxu0 0.0
    %1564 = vmatprep.subr.mxu0 0.0
    %1565 = vmatpush1.msra.mxu0 0.0
    %1566 = vmatprep.subr.mxu0 0.0
    %1567 = vmatpush1.msra.mxu0 0.0
    %1568 = vmatprep.subr.mxu0 0.0
    %1569 = vmatpush1.msra.mxu0 0.0
    %1570 = vmatprep.subr.mxu0 0.0
    %1571 = vmatpush1.msra.mxu0 0.0
    %1572 = vmatprep.subr.mxu0 0.0
    %1573 = vmatpush1.msra.mxu0 0.0
    %1574 = vmatprep.subr.mxu0 0.0
    %1575 = vmatpush1.msra.mxu0 0.0
    %1576 = vmatprep.subr.mxu0 0.0
    %1577 = vmatpush1.msra.mxu0 0.0
    %1578 = vmatprep.subr.mxu0 0.0
    %1579 = vmatpush1.msra.mxu0 0.0
    %1580 = vmatprep.subr.mxu0 0.0
    %1581 = vmatpush1.msra.mxu0 0.0
    %1582 = vmatprep.subr.mxu0 0.0
    %1583 = vmatpush1.msra.mxu0 0.0
    %1584 = vmatprep.subr.mxu0 0.0
    %1585 = vmatpush1.msra.mxu0 0.0
    %1586 = vmatprep.subr.mxu0 0.0
    %1587 = vmatpush1.msra.mxu0 0.0
    %1588 = vmatprep.subr.mxu0 0.0
    %1589 = vmatpush1.msra.mxu0 0.0
    %1590 = vmatprep.subr.mxu0 0.0
    %1591 = vmatpush1.msra.mxu0 0.0
    %1592 = vmatprep.subr.mxu0 0.0
    %1593 = vmatpush1.msra.mxu0 0.0
    %1594 = vmatprep.subr.mxu0 0.0
    %1595 = vmatpush1.msra.mxu0 0.0
    %1596 = vmatprep.subr.mxu0 0.0
    %1597 = vmatpush1.msra.mxu0 0.0
    %1598 = vmatprep.subr.mxu0 0.0
    %1599 = vmatpush1.msra.mxu0 0.0
    %1600 = vmatprep.mubr.f32.mxu0 0.0
    %1601 = vmatmul.mubr.f32.gmra.mrb[0].mxu0 %v1528
    %v1602 = vpop.f32.mrb[0].mxu0
    %v1603 = vadd.f32 %v1525, %v1602
    %v1604 = vpop.f32.mrb[0].mxu0
    %1605 = vmatprep.mubr.f32.mxu0 0.0
    %1606 = vmatmul.mubr.f32.gmra.mrb[0].mxu0 %v1531
    %v1607 = vpop.f32.mrb[0].mxu0
    %v1608 = vadd.f32 %v1525, %v1607
    %v1609 = vpop.f32.mrb[0].mxu0
    %1610 = vmatprep.mubr.f32.mxu0 0.0
    %1611 = vmatmul.mubr.f32.gmra.mrb[0].mxu0 %v1534
    %v1612 = vpop.f32.mrb[0].mxu0
    %v1613 = vadd.f32 %v1525, %v1612
    %v1614 = vpop.f32.mrb[0].mxu0
    %1615 = vdwg.mxu0
    %v1616 = vmul.f32 %v1603, 0.5
    %v1617 = vmul.f32 %v1608, 0.5
    %v1618 = vmul.f32 %v1613, 0.5
    %v1619 = vmul.f32 %v1603, 0.044715
    %v1620 = vmul.f32 %v1608, 0.044715
    %v1621 = vmul.f32 %v1613, 0.044715
    %v1622 = vmul.f32 %v1619, %v1603
    %v1623 = vmul.f32 %v1620, %v1608
    %v1624 = vmul.f32 %v1621, %v1613
    %v1625 = vmul.f32 %v1622, %v1603
    %v1626 = vmul.f32 %v1623, %v1608
    %v1627 = vmul.f32 %v1624, %v1613
    %v1628 = vadd.f32 %v1603, %v1625
    %v1629 = vadd.f32 %v1608, %v1626
    %v1630 = vadd.f32 %v1613, %v1627
    %v1631 = vmul.f32 %v1628, 0.7978846
    %v1632 = vmul.f32 %v1629, 0.7978846
    %v1633 = vmul.f32 %v1630, 0.7978846
    %v1634 = vtanh.pop %v1631
    %v1635 = vtanh.pop %v1632
    %v1636 = vtanh.pop %v1633
    %v1637 = vadd.f32 %v1634, 1.0
    %v1638 = vadd.f32 %v1635, 1.0
    %v1639 = vadd.f32 %v1636, 1.0
    %v1640 = vmul.f32 %v1616, %v1637
    %v1641 = vmul.f32 %v1617, %v1638
    %v1642 = vmul.f32 %v1618, %v1639
    %v1643 = vld [vmem:[%s15] sm:$0xff]
    %v1644 = vld [vmem:[%s15 + $0x8] sm:$0xff]
    %v1645 = vld [vmem:[%s15 + $0x10] sm:$0xff]
    %v1646 = vld [vmem:[%s15 + $0x18] sm:$0xff]
    %v1647 = vld [vmem:[%s15 + $0x20] sm:$0xff]
    %v1648 = vld [vmem:[%s15 + $0x28] sm:$0xff]
    %v1649 = vld [vmem:[%s15 + $0x30] sm:$0xff]
    %v1650 = vld [vmem:[%s15 + $0x38] sm:$0xff]
    %v1651 = vld [vmem:[%s15 + $0x40] sm:$0xff]
    %v1652 = vld [vmem:[%s15 + $0x48] sm:$0xff]
    %v1653 = vld [vmem:[%s15 + $0x50] sm:$0xff]
    %v1654 = vld [vmem:[%s15 + $0x58] sm:$0xff]
    %v1655 = vld [vmem:[%s15 + $0x60] sm:$0xff]
    %v1656 = vld [vmem:[%s15 + $0x68] sm:$0xff]
    %v1657 = vld [vmem:[%s15 + $0x70] sm:$0xff]
    %v1658 = vld [vmem:[%s15 + $0x78] sm:$0xff]
    %v1659 = vld [vmem:[%s16] sm:$0x1]
    %v1661 = vlaneseq
    %v1662 = vshrl.u32 %v1661, 7
    %v1663 = vsub.s32 0, %v1662
    %v1664 = vrot.slane %v1659, %v1663
    %1666 = vmatprep.subr.mxu0 0.0
    %1667 = vmatpush1.msra.mxu0 %v1643
    %1668 = vmatprep.subr.mxu0 0.0
    %1669 = vmatpush1.msra.mxu0 %v1644
    %1670 = vmatprep.subr.mxu0 0.0
    %1671 = vmatpush1.msra.mxu0 %v1645
    %1672 = vmatprep.subr.mxu0 0.0
    %1673 = vmatpush1.msra.mxu0 %v1646
    %1674 = vmatprep.subr.mxu0 0.0
    %1675 = vmatpush1.msra.mxu0 %v1647
    %1676 = vmatprep.subr.mxu0 0.0
    %1677 = vmatpush1.msra.mxu0 %v1648
    %1678 = vmatprep.subr.mxu0 0.0
    %1679 = vmatpush1.msra.mxu0 %v1649
    %1680 = vmatprep.subr.mxu0 0.0
    %1681 = vmatpush1.msra.mxu0 %v1650
    %1682 = vmatprep.subr.mxu0 0.0
    %1683 = vmatpush1.msra.mxu0 %v1651
    %1684 = vmatprep.subr.mxu0 0.0
    %1685 = vmatpush1.msra.mxu0 %v1652
    %1686 = vmatprep.subr.mxu0 0.0
    %1687 = vmatpush1.msra.mxu0 %v1653
    %1688 = vmatprep.subr.mxu0 0.0
    %1689 = vmatpush1.msra.mxu0 %v1654
    %1690 = vmatprep.subr.mxu0 0.0
    %1691 = vmatpush1.msra.mxu0 %v1655
    %1692 = vmatprep.subr.mxu0 0.0
    %1693 = vmatpush1.msra.mxu0 %v1656
    %1694 = vmatprep.subr.mxu0 0.0
    %1695 = vmatpush1.msra.mxu0 %v1657
    %1696 = vmatprep.subr.mxu0 0.0
    %1697 = vmatpush1.msra.mxu0 %v1658
    %1698 = vmatprep.subr.mxu0 0.0
    %1699 = vmatpush1.msra.mxu0 0.0
    %1700 = vmatprep.subr.mxu0 0.0
    %1701 = vmatpush1.msra.mxu0 0.0
    %1702 = vmatprep.subr.mxu0 0.0
    %1703 = vmatpush1.msra.mxu0 0.0
    %1704 = vmatprep.subr.mxu0 0.0
    %1705 = vmatpush1.msra.mxu0 0.0
    %1706 = vmatprep.subr.mxu0 0.0
    %1707 = vmatpush1.msra.mxu0 0.0
    %1708 = vmatprep.subr.mxu0 0.0
    %1709 = vmatpush1.msra.mxu0 0.0
    %1710 = vmatprep.subr.mxu0 0.0
    %1711 = vmatpush1.msra.mxu0 0.0
    %1712 = vmatprep.subr.mxu0 0.0
    %1713 = vmatpush1.msra.mxu0 0.0
    %1714 = vmatprep.subr.mxu0 0.0
    %1715 = vmatpush1.msra.mxu0 0.0
    %1716 = vmatprep.subr.mxu0 0.0
    %1717 = vmatpush1.msra.mxu0 0.0
    %1718 = vmatprep.subr.mxu0 0.0
    %1719 = vmatpush1.msra.mxu0 0.0
    %1720 = vmatprep.subr.mxu0 0.0
    %1721 = vmatpush1.msra.mxu0 0.0
    %1722 = vmatprep.subr.mxu0 0.0
    %1723 = vmatpush1.msra.mxu0 0.0
    %1724 = vmatprep.subr.mxu0 0.0
    %1725 = vmatpush1.msra.mxu0 0.0
    %1726 = vmatprep.subr.mxu0 0.0
    %1727 = vmatpush1.msra.mxu0 0.0
    %1728 = vmatprep.subr.mxu0 0.0
    %1729 = vmatpush1.msra.mxu0 0.0
    %1730 = vmatprep.mubr.f32.mxu0 0.0
    %1731 = vmatmul.mubr.f32.gmra.mrb[0].mxu0 %v1640
    %v1732 = vpop.f32.mrb[0].mxu0
    %v1733 = vadd.f32 %v1664, %v1732
    %v1734 = vpop.f32.mrb[0].mxu0
    %1735 = vmatprep.mubr.f32.mxu0 0.0
    %1736 = vmatmul.mubr.f32.gmra.mrb[0].mxu0 %v1641
    %v1737 = vpop.f32.mrb[0].mxu0
    %v1738 = vadd.f32 %v1664, %v1737
    %v1739 = vpop.f32.mrb[0].mxu0
    %1740 = vmatprep.mubr.f32.mxu0 0.0
    %1741 = vmatmul.mubr.f32.gmra.mrb[0].mxu0 %v1642
    %v1742 = vpop.f32.mrb[0].mxu0
    %v1743 = vadd.f32 %v1664, %v1742
    %v1744 = vpop.f32.mrb[0].mxu0
    %1745 = vdwg.mxu0
    %v1746 = vadd.f32 %v1454, %v1733
    %v1747 = vadd.f32 %v1455, %v1738
    %v1748 = vadd.f32 %v1456, %v1743
    %s1749 = scalar_lea.vmem %s5, 1
    %v1750 = vld [vmem:[%s1749] sm:$0x1]
    %s1751 = scalar_lea.vmem %s6, 1
    %v1752 = vld [vmem:[%s1751] sm:$0x1]
    %v1753 = vsel %vm203, %v1746, 0.0
    %1754 = vadd.xlane.f32.xlu0 %v1753
    %v1755 = vpop.xlane.xlu0 %1754
    %v1756 = vsel %vm203, %v1747, 0.0
    %1757 = vadd.xlane.f32.xlu0 %v1756
    %v1758 = vpop.xlane.xlu0 %1757
    %v1759 = vsel %vm210, %v1748, 0.0
    %1760 = vadd.xlane.f32.xlu0 %v1759
    %v1761 = vpop.xlane.xlu0 %1760
    %v1762 = vmul.f32 %v1755, %v214
    %v1763 = vmul.f32 %v1758, %v214
    %v1764 = vmul.f32 %v1761, %v214
    %v1765 = vsub.f32 %v1746, %v1762
    %v1766 = vsub.f32 %v1747, %v1763
    %v1767 = vsub.f32 %v1748, %v1764
    %v1768 = vmul.f32 %v1765, %v1765
    %v1769 = vmul.f32 %v1766, %v1766
    %v1770 = vmul.f32 %v1767, %v1767
    %v1771 = vsel %vm203, %v1768, 0.0
    %1772 = vadd.xlane.f32.xlu0 %v1771
    %v1773 = vpop.xlane.xlu0 %1772
    %v1774 = vsel %vm203, %v1769, 0.0
    %1775 = vadd.xlane.f32.xlu0 %v1774
    %v1776 = vpop.xlane.xlu0 %1775
    %v1777 = vsel %vm210, %v1770, 0.0
    %1778 = vadd.xlane.f32.xlu0 %v1777
    %v1779 = vpop.xlane.xlu0 %1778
    %v1780 = vmul.f32 %v1773, %v214
    %v1781 = vmul.f32 %v1776, %v214
    %v1782 = vmul.f32 %v1779, %v214
    %v1783 = vadd.f32 %v1780, 1e-06
    %v1784 = vadd.f32 %v1781, 1e-06
    %v1785 = vadd.f32 %v1782, 1e-06
    %v1786 = vrsqrt.pop %v1783
    %v1787 = vrsqrt.pop %v1784
    %v1788 = vrsqrt.pop %v1785
    %v1789 = vmul.f32 %v1765, %v1786
    %v1790 = vmul.f32 %v1766, %v1787
    %v1791 = vmul.f32 %v1767, %v1788
    %v1793 = vlaneseq
    %v1794 = vshrl.u32 %v1793, 7
    %v1795 = vsub.s32 0, %v1794
    %v1796 = vrot.slane %v1750, %v1795
    %v1798 = vmul.f32 %v1789, %v1796
    %v1799 = vmul.f32 %v1790, %v1796
    %v1800 = vmul.f32 %v1791, %v1796
    %v1802 = vlaneseq
    %v1803 = vshrl.u32 %v1802, 7
    %v1804 = vsub.s32 0, %v1803
    %v1805 = vrot.slane %v1752, %v1804
    %v1807 = vadd.f32 %v1798, %v1805
    %v1808 = vadd.f32 %v1799, %v1805
    %v1809 = vadd.f32 %v1800, %v1805
    %s1810 = scalar_lea.vmem %s7, 32
    %v1811 = vld [vmem:[%s1810] sm:$0xff]
    %v1812 = vld [vmem:[%s1810 + $0x8] sm:$0xff]
    %v1813 = vld [vmem:[%s1810 + $0x10] sm:$0xff]
    %v1814 = vld [vmem:[%s1810 + $0x18] sm:$0xff]
    %s1815 = scalar_lea.vmem %s8, 1
    %v1816 = vld [vmem:[%s1815] sm:$0x1]
    %v1818 = vlaneseq
    %v1819 = vshrl.u32 %v1818, 7
    %v1820 = vsub.s32 0, %v1819
    %v1821 = vrot.slane %v1816, %v1820
    %v1824 = vsel %vm203, %v1807, 0
    %v1827 = vsel %vm203, %v1808, 0
    %v1830 = vsel %vm203, %v1809, 0
    %1832 = vmatprep.subr.mxu0 0.0
    %1833 = vmatpush1.msra.mxu0 %v1811
    %1834 = vmatprep.subr.mxu0 0.0
    %1835 = vmatpush1.msra.mxu0 %v1812
    %1836 = vmatprep.subr.mxu0 0.0
    %1837 = vmatpush1.msra.mxu0 %v1813
    %1838 = vmatprep.subr.mxu0 0.0
    %1839 = vmatpush1.msra.mxu0 %v1814
    %1840 = vmatprep.subr.mxu0 0.0
    %1841 = vmatpush1.msra.mxu0 0.0
    %1842 = vmatprep.subr.mxu0 0.0
    %1843 = vmatpush1.msra.mxu0 0.0
    %1844 = vmatprep.subr.mxu0 0.0
    %1845 = vmatpush1.msra.mxu0 0.0
    %1846 = vmatprep.subr.mxu0 0.0
    %1847 = vmatpush1.msra.mxu0 0.0
    %1848 = vmatprep.subr.mxu0 0.0
    %1849 = vmatpush1.msra.mxu0 0.0
    %1850 = vmatprep.subr.mxu0 0.0
    %1851 = vmatpush1.msra.mxu0 0.0
    %1852 = vmatprep.subr.mxu0 0.0
    %1853 = vmatpush1.msra.mxu0 0.0
    %1854 = vmatprep.subr.mxu0 0.0
    %1855 = vmatpush1.msra.mxu0 0.0
    %1856 = vmatprep.subr.mxu0 0.0
    %1857 = vmatpush1.msra.mxu0 0.0
    %1858 = vmatprep.subr.mxu0 0.0
    %1859 = vmatpush1.msra.mxu0 0.0
    %1860 = vmatprep.subr.mxu0 0.0
    %1861 = vmatpush1.msra.mxu0 0.0
    %1862 = vmatprep.subr.mxu0 0.0
    %1863 = vmatpush1.msra.mxu0 0.0
    %1864 = vmatprep.subr.mxu0 0.0
    %1865 = vmatpush1.msra.mxu0 0.0
    %1866 = vmatprep.subr.mxu0 0.0
    %1867 = vmatpush1.msra.mxu0 0.0
    %1868 = vmatprep.subr.mxu0 0.0
    %1869 = vmatpush1.msra.mxu0 0.0
    %1870 = vmatprep.subr.mxu0 0.0
    %1871 = vmatpush1.msra.mxu0 0.0
    %1872 = vmatprep.subr.mxu0 0.0
    %1873 = vmatpush1.msra.mxu0 0.0
    %1874 = vmatprep.subr.mxu0 0.0
    %1875 = vmatpush1.msra.mxu0 0.0
    %1876 = vmatprep.subr.mxu0 0.0
    %1877 = vmatpush1.msra.mxu0 0.0
    %1878 = vmatprep.subr.mxu0 0.0
    %1879 = vmatpush1.msra.mxu0 0.0
    %1880 = vmatprep.subr.mxu0 0.0
    %1881 = vmatpush1.msra.mxu0 0.0
    %1882 = vmatprep.subr.mxu0 0.0
    %1883 = vmatpush1.msra.mxu0 0.0
    %1884 = vmatprep.subr.mxu0 0.0
    %1885 = vmatpush1.msra.mxu0 0.0
    %1886 = vmatprep.subr.mxu0 0.0
    %1887 = vmatpush1.msra.mxu0 0.0
    %1888 = vmatprep.subr.mxu0 0.0
    %1889 = vmatpush1.msra.mxu0 0.0
    %1890 = vmatprep.subr.mxu0 0.0
    %1891 = vmatpush1.msra.mxu0 0.0
    %1892 = vmatprep.subr.mxu0 0.0
    %1893 = vmatpush1.msra.mxu0 0.0
    %1894 = vmatprep.subr.mxu0 0.0
    %1895 = vmatpush1.msra.mxu0 0.0
    %1896 = vmatprep.mubr.f32.mxu0 0.0
    %1897 = vmatmul.mubr.f32.gmra.mrb[0].mxu0 %v1824
    %v1898 = vpop.f32.mrb[0].mxu0
    %v1899 = vadd.f32 %v1821, %v1898
    %v1900 = vpop.f32.mrb[0].mxu0
    %1901 = vmatprep.mubr.f32.mxu0 0.0
    %1902 = vmatmul.mubr.f32.gmra.mrb[0].mxu0 %v1827
    %v1903 = vpop.f32.mrb[0].mxu0
    %v1904 = vadd.f32 %v1821, %v1903
    %v1905 = vpop.f32.mrb[0].mxu0
    %1906 = vmatprep.mubr.f32.mxu0 0.0
    %1907 = vmatmul.mubr.f32.gmra.mrb[0].mxu0 %v1830
    %v1908 = vpop.f32.mrb[0].mxu0
    %v1909 = vadd.f32 %v1821, %v1908
    %v1910 = vpop.f32.mrb[0].mxu0
    %1911 = vdwg.mxu0
    %1915 = vrot.lane.b32.xlu0 %v1899, 96
    %v1916 = vpop.permute.xlu0 %1915
    %1917 = vrot.lane.b32.xlu0 %v1904, 96
    %v1918 = vpop.permute.xlu0 %1917
    %1919 = vrot.lane.b32.xlu0 %v1909, 96
    %v1920 = vpop.permute.xlu0 %1919
    %v1921 = vsel %vm372, %v1899, 0
    %v1923 = vsel %vm372, %v1904, 0
    %v1925 = vsel %vm372, %v1909, 0
    %v1927 = vsel %vm372, %v1916, 0
    %v1929 = vsel %vm372, %v1918, 0
    %v1931 = vsel %vm372, %v1920, 0
    %1933 = vmatprep.subr.mxu0 0.0
    %1934 = vmatpush1.xpose.msra.mxu0 %v1927
    %1935 = vmatprep.subr.mxu0 0.0
    %1936 = vmatpush1.xpose.msra.mxu0 %v1929
    %1937 = vmatprep.subr.mxu0 0.0
    %1938 = vmatpush1.xpose.msra.mxu0 %v1931
    %1939 = vmatprep.subr.mxu0 0.0
    %1940 = vmatpush1.xpose.msra.mxu0 0.0
    %1941 = vmatprep.subr.mxu0 0.0
    %1942 = vmatpush1.xpose.msra.mxu0 0.0
    %1943 = vmatprep.subr.mxu0 0.0
    %1944 = vmatpush1.xpose.msra.mxu0 0.0
    %1945 = vmatprep.subr.mxu0 0.0
    %1946 = vmatpush1.xpose.msra.mxu0 0.0
    %1947 = vmatprep.subr.mxu0 0.0
    %1948 = vmatpush1.xpose.msra.mxu0 0.0
    %1949 = vmatprep.subr.mxu0 0.0
    %1950 = vmatpush1.xpose.msra.mxu0 0.0
    %1951 = vmatprep.subr.mxu0 0.0
    %1952 = vmatpush1.xpose.msra.mxu0 0.0
    %1953 = vmatprep.subr.mxu0 0.0
    %1954 = vmatpush1.xpose.msra.mxu0 0.0
    %1955 = vmatprep.subr.mxu0 0.0
    %1956 = vmatpush1.xpose.msra.mxu0 0.0
    %1957 = vmatprep.subr.mxu0 0.0
    %1958 = vmatpush1.xpose.msra.mxu0 0.0
    %1959 = vmatprep.subr.mxu0 0.0
    %1960 = vmatpush1.xpose.msra.mxu0 0.0
    %1961 = vmatprep.subr.mxu0 0.0
    %1962 = vmatpush1.xpose.msra.mxu0 0.0
    %1963 = vmatprep.subr.mxu0 0.0
    %1964 = vmatpush1.xpose.msra.mxu0 0.0
    %1965 = vmatprep.subr.mxu0 0.0
    %1966 = vmatpush1.xpose.msra.mxu0 0.0
    %1967 = vmatprep.subr.mxu0 0.0
    %1968 = vmatpush1.xpose.msra.mxu0 0.0
    %1969 = vmatprep.subr.mxu0 0.0
    %1970 = vmatpush1.xpose.msra.mxu0 0.0
    %1971 = vmatprep.subr.mxu0 0.0
    %1972 = vmatpush1.xpose.msra.mxu0 0.0
    %1973 = vmatprep.subr.mxu0 0.0
    %1974 = vmatpush1.xpose.msra.mxu0 0.0
    %1975 = vmatprep.subr.mxu0 0.0
    %1976 = vmatpush1.xpose.msra.mxu0 0.0
    %1977 = vmatprep.subr.mxu0 0.0
    %1978 = vmatpush1.xpose.msra.mxu0 0.0
    %1979 = vmatprep.subr.mxu0 0.0
    %1980 = vmatpush1.xpose.msra.mxu0 0.0
    %1981 = vmatprep.subr.mxu0 0.0
    %1982 = vmatpush1.xpose.msra.mxu0 0.0
    %1983 = vmatprep.subr.mxu0 0.0
    %1984 = vmatpush1.xpose.msra.mxu0 0.0
    %1985 = vmatprep.subr.mxu0 0.0
    %1986 = vmatpush1.xpose.msra.mxu0 0.0
    %1987 = vmatprep.subr.mxu0 0.0
    %1988 = vmatpush1.xpose.msra.mxu0 0.0
    %1989 = vmatprep.subr.mxu0 0.0
    %1990 = vmatpush1.xpose.msra.mxu0 0.0
    %1991 = vmatprep.subr.mxu0 0.0
    %1992 = vmatpush1.xpose.msra.mxu0 0.0
    %1993 = vmatprep.subr.mxu0 0.0
    %1994 = vmatpush1.xpose.msra.mxu0 0.0
    %1995 = vmatprep.subr.mxu0 0.0
    %1996 = vmatpush1.xpose.msra.mxu0 0.0
    %1997 = vmatprep.mubr.f32.mxu0 0.0
    %1998 = vmatmul.mubr.f32.gmra.mrb[0].mxu0 %v1921
    %v1999 = vpop.f32.mrb[0].mxu0
    %v2000 = vadd.f32 0.0, %v1999
    %v2001 = vpop.f32.mrb[0].mxu0
    %2002 = vmatprep.mubr.f32.mxu0 0.0
    %2003 = vmatmul.mubr.f32.gmra.mrb[0].mxu0 %v1923
    %v2004 = vpop.f32.mrb[0].mxu0
    %v2005 = vadd.f32 0.0, %v2004
    %v2006 = vpop.f32.mrb[0].mxu0
    %2007 = vmatprep.mubr.f32.mxu0 0.0
    %2008 = vmatmul.mubr.f32.gmra.mrb[0].mxu0 %v1925
    %v2009 = vpop.f32.mrb[0].mxu0
    %v2010 = vadd.f32 0.0, %v2009
    %v2011 = vpop.f32.mrb[0].mxu0
    %2012 = vdwg.mxu0
    %v2013 = vsel %vm465, %v2000, -inf
    %2014 = vmax.xlane.f32.xlu0 %v2013
    %v2015 = vpop.xlane.xlu0 %2014
    %v2016 = vsel %vm465, %v2005, -inf
    %2017 = vmax.xlane.f32.xlu0 %v2016
    %v2018 = vpop.xlane.xlu0 %2017
    %v2019 = vsel %vm472, %v2010, -inf
    %2020 = vmax.xlane.f32.xlu0 %v2019
    %v2021 = vpop.xlane.xlu0 %2020
    %v2022 = vsub.f32 %v2000, %v2015
    %v2023 = vsub.f32 %v2005, %v2018
    %v2024 = vsub.f32 %v2010, %v2021
    %v2025 = vmul.f32 %v2022, 1.442695
    %v2026 = vpow.pop %v2025
    %v2027 = vmul.f32 %v2023, 1.442695
    %v2028 = vpow.pop %v2027
    %v2029 = vmul.f32 %v2024, 1.442695
    %v2030 = vpow.pop %v2029
    %v2031 = vsel %vm465, %v2026, 0.0
    %2032 = vadd.xlane.f32.xlu0 %v2031
    %v2033 = vpop.xlane.xlu0 %2032
    %v2034 = vsel %vm465, %v2028, 0.0
    %2035 = vadd.xlane.f32.xlu0 %v2034
    %v2036 = vpop.xlane.xlu0 %2035
    %v2037 = vsel %vm472, %v2030, 0.0
    %2038 = vadd.xlane.f32.xlu0 %v2037
    %v2039 = vpop.xlane.xlu0 %2038
    %v2040 = vrcp.pop %v2033
    %v2041 = vrcp.pop %v2036
    %v2042 = vrcp.pop %v2039
    %v2043 = vmul.f32 %v2026, %v2040
    %v2044 = vmul.f32 %v2028, %v2041
    %v2045 = vmul.f32 %v2030, %v2042
    %2046 = vrot.lane.b32.xlu0 %v1899, 64
    %v2047 = vpop.permute.xlu0 %2046
    %2048 = vrot.lane.b32.xlu0 %v1904, 64
    %v2049 = vpop.permute.xlu0 %2048
    %2050 = vrot.lane.b32.xlu0 %v1909, 64
    %v2051 = vpop.permute.xlu0 %2050
    %v2055 = vsel %vm465, %v2043, 0
    %v2058 = vsel %vm465, %v2044, 0
    %v2061 = vsel %vm465, %v2045, 0
    %v2063 = vsel %vm193, %v2051, 0
    %2065 = vmatprep.subr.mxu0 0.0
    %2066 = vmatpush1.msra.mxu0 %v2047
    %2067 = vmatprep.subr.mxu0 0.0
    %2068 = vmatpush1.msra.mxu0 %v2049
    %2069 = vmatprep.subr.mxu0 0.0
    %2070 = vmatpush1.msra.mxu0 %v2063
    %2071 = vmatprep.subr.mxu0 0.0
    %2072 = vmatpush1.msra.mxu0 0.0
    %2073 = vmatprep.subr.mxu0 0.0
    %2074 = vmatpush1.msra.mxu0 0.0
    %2075 = vmatprep.subr.mxu0 0.0
    %2076 = vmatpush1.msra.mxu0 0.0
    %2077 = vmatprep.subr.mxu0 0.0
    %2078 = vmatpush1.msra.mxu0 0.0
    %2079 = vmatprep.subr.mxu0 0.0
    %2080 = vmatpush1.msra.mxu0 0.0
    %2081 = vmatprep.subr.mxu0 0.0
    %2082 = vmatpush1.msra.mxu0 0.0
    %2083 = vmatprep.subr.mxu0 0.0
    %2084 = vmatpush1.msra.mxu0 0.0
    %2085 = vmatprep.subr.mxu0 0.0
    %2086 = vmatpush1.msra.mxu0 0.0
    %2087 = vmatprep.subr.mxu0 0.0
    %2088 = vmatpush1.msra.mxu0 0.0
    %2089 = vmatprep.subr.mxu0 0.0
    %2090 = vmatpush1.msra.mxu0 0.0
    %2091 = vmatprep.subr.mxu0 0.0
    %2092 = vmatpush1.msra.mxu0 0.0
    %2093 = vmatprep.subr.mxu0 0.0
    %2094 = vmatpush1.msra.mxu0 0.0
    %2095 = vmatprep.subr.mxu0 0.0
    %2096 = vmatpush1.msra.mxu0 0.0
    %2097 = vmatprep.subr.mxu0 0.0
    %2098 = vmatpush1.msra.mxu0 0.0
    %2099 = vmatprep.subr.mxu0 0.0
    %2100 = vmatpush1.msra.mxu0 0.0
    %2101 = vmatprep.subr.mxu0 0.0
    %2102 = vmatpush1.msra.mxu0 0.0
    %2103 = vmatprep.subr.mxu0 0.0
    %2104 = vmatpush1.msra.mxu0 0.0
    %2105 = vmatprep.subr.mxu0 0.0
    %2106 = vmatpush1.msra.mxu0 0.0
    %2107 = vmatprep.subr.mxu0 0.0
    %2108 = vmatpush1.msra.mxu0 0.0
    %2109 = vmatprep.subr.mxu0 0.0
    %2110 = vmatpush1.msra.mxu0 0.0
    %2111 = vmatprep.subr.mxu0 0.0
    %2112 = vmatpush1.msra.mxu0 0.0
    %2113 = vmatprep.subr.mxu0 0.0
    %2114 = vmatpush1.msra.mxu0 0.0
    %2115 = vmatprep.subr.mxu0 0.0
    %2116 = vmatpush1.msra.mxu0 0.0
    %2117 = vmatprep.subr.mxu0 0.0
    %2118 = vmatpush1.msra.mxu0 0.0
    %2119 = vmatprep.subr.mxu0 0.0
    %2120 = vmatpush1.msra.mxu0 0.0
    %2121 = vmatprep.subr.mxu0 0.0
    %2122 = vmatpush1.msra.mxu0 0.0
    %2123 = vmatprep.subr.mxu0 0.0
    %2124 = vmatpush1.msra.mxu0 0.0
    %2125 = vmatprep.subr.mxu0 0.0
    %2126 = vmatpush1.msra.mxu0 0.0
    %2127 = vmatprep.subr.mxu0 0.0
    %2128 = vmatpush1.msra.mxu0 0.0
    %2129 = vmatprep.mubr.f32.mxu0 0.0
    %2130 = vmatmul.mubr.f32.gmra.mrb[0].mxu0 %v2055
    %v2131 = vpop.f32.mrb[0].mxu0
    %v2132 = vadd.f32 0.0, %v2131
    %v2133 = vpop.f32.mrb[0].mxu0
    %2134 = vmatprep.mubr.f32.mxu0 0.0
    %2135 = vmatmul.mubr.f32.gmra.mrb[0].mxu0 %v2058
    %v2136 = vpop.f32.mrb[0].mxu0
    %v2137 = vadd.f32 0.0, %v2136
    %v2138 = vpop.f32.mrb[0].mxu0
    %2139 = vmatprep.mubr.f32.mxu0 0.0
    %2140 = vmatmul.mubr.f32.gmra.mrb[0].mxu0 %v2061
    %v2141 = vpop.f32.mrb[0].mxu0
    %v2142 = vadd.f32 0.0, %v2141
    %v2143 = vpop.f32.mrb[0].mxu0
    %2144 = vdwg.mxu0
    %2145 = vrot.lane.b32.xlu0 %v1899, 120
    %v2146 = vpop.permute.xlu0 %2145
    %2147 = vrot.lane.b32.xlu0 %v1904, 120
    %v2148 = vpop.permute.xlu0 %2147
    %2149 = vrot.lane.b32.xlu0 %v1909, 120
    %v2150 = vpop.permute.xlu0 %2149
    %2151 = vrot.lane.b32.xlu0 %v1899, 88
    %v2152 = vpop.permute.xlu0 %2151
    %2153 = vrot.lane.b32.xlu0 %v1904, 88
    %v2154 = vpop.permute.xlu0 %2153
    %2155 = vrot.lane.b32.xlu0 %v1909, 88
    %v2156 = vpop.permute.xlu0 %2155
    %v2157 = vsel %vm372, %v2146, 0
    %v2159 = vsel %vm372, %v2148, 0
    %v2161 = vsel %vm372, %v2150, 0
    %v2163 = vsel %vm372, %v2152, 0
    %v2165 = vsel %vm372, %v2154, 0
    %v2167 = vsel %vm372, %v2156, 0
    %2169 = vmatprep.subr.mxu0 0.0
    %2170 = vmatpush1.xpose.msra.mxu0 %v2163
    %2171 = vmatprep.subr.mxu0 0.0
    %2172 = vmatpush1.xpose.msra.mxu0 %v2165
    %2173 = vmatprep.subr.mxu0 0.0
    %2174 = vmatpush1.xpose.msra.mxu0 %v2167
    %2175 = vmatprep.subr.mxu0 0.0
    %2176 = vmatpush1.xpose.msra.mxu0 0.0
    %2177 = vmatprep.subr.mxu0 0.0
    %2178 = vmatpush1.xpose.msra.mxu0 0.0
    %2179 = vmatprep.subr.mxu0 0.0
    %2180 = vmatpush1.xpose.msra.mxu0 0.0
    %2181 = vmatprep.subr.mxu0 0.0
    %2182 = vmatpush1.xpose.msra.mxu0 0.0
    %2183 = vmatprep.subr.mxu0 0.0
    %2184 = vmatpush1.xpose.msra.mxu0 0.0
    %2185 = vmatprep.subr.mxu0 0.0
    %2186 = vmatpush1.xpose.msra.mxu0 0.0
    %2187 = vmatprep.subr.mxu0 0.0
    %2188 = vmatpush1.xpose.msra.mxu0 0.0
    %2189 = vmatprep.subr.mxu0 0.0
    %2190 = vmatpush1.xpose.msra.mxu0 0.0
    %2191 = vmatprep.subr.mxu0 0.0
    %2192 = vmatpush1.xpose.msra.mxu0 0.0
    %2193 = vmatprep.subr.mxu0 0.0
    %2194 = vmatpush1.xpose.msra.mxu0 0.0
    %2195 = vmatprep.subr.mxu0 0.0
    %2196 = vmatpush1.xpose.msra.mxu0 0.0
    %2197 = vmatprep.subr.mxu0 0.0
    %2198 = vmatpush1.xpose.msra.mxu0 0.0
    %2199 = vmatprep.subr.mxu0 0.0
    %2200 = vmatpush1.xpose.msra.mxu0 0.0
    %2201 = vmatprep.subr.mxu0 0.0
    %2202 = vmatpush1.xpose.msra.mxu0 0.0
    %2203 = vmatprep.subr.mxu0 0.0
    %2204 = vmatpush1.xpose.msra.mxu0 0.0
    %2205 = vmatprep.subr.mxu0 0.0
    %2206 = vmatpush1.xpose.msra.mxu0 0.0
    %2207 = vmatprep.subr.mxu0 0.0
    %2208 = vmatpush1.xpose.msra.mxu0 0.0
    %2209 = vmatprep.subr.mxu0 0.0
    %2210 = vmatpush1.xpose.msra.mxu0 0.0
    %2211 = vmatprep.subr.mxu0 0.0
    %2212 = vmatpush1.xpose.msra.mxu0 0.0
    %2213 = vmatprep.subr.mxu0 0.0
    %2214 = vmatpush1.xpose.msra.mxu0 0.0
    %2215 = vmatprep.subr.mxu0 0.0
    %2216 = vmatpush1.xpose.msra.mxu0 0.0
    %2217 = vmatprep.subr.mxu0 0.0
    %2218 = vmatpush1.xpose.msra.mxu0 0.0
    %2219 = vmatprep.subr.mxu0 0.0
    %2220 = vmatpush1.xpose.msra.mxu0 0.0
    %2221 = vmatprep.subr.mxu0 0.0
    %2222 = vmatpush1.xpose.msra.mxu0 0.0
    %2223 = vmatprep.subr.mxu0 0.0
    %2224 = vmatpush1.xpose.msra.mxu0 0.0
    %2225 = vmatprep.subr.mxu0 0.0
    %2226 = vmatpush1.xpose.msra.mxu0 0.0
    %2227 = vmatprep.subr.mxu0 0.0
    %2228 = vmatpush1.xpose.msra.mxu0 0.0
    %2229 = vmatprep.subr.mxu0 0.0
    %2230 = vmatpush1.xpose.msra.mxu0 0.0
    %2231 = vmatprep.subr.mxu0 0.0
    %2232 = vmatpush1.xpose.msra.mxu0 0.0
    %2233 = vmatprep.mubr.f32.mxu0 0.0
    %2234 = vmatmul.mubr.f32.gmra.mrb[0].mxu0 %v2157
    %v2235 = vpop.f32.mrb[0].mxu0
    %v2236 = vadd.f32 0.0, %v2235
    %v2237 = vpop.f32.mrb[0].mxu0
    %2238 = vmatprep.mubr.f32.mxu0 0.0
    %2239 = vmatmul.mubr.f32.gmra.mrb[0].mxu0 %v2159
    %v2240 = vpop.f32.mrb[0].mxu0
    %v2241 = vadd.f32 0.0, %v2240
    %v2242 = vpop.f32.mrb[0].mxu0
    %2243 = vmatprep.mubr.f32.mxu0 0.0
    %2244 = vmatmul.mubr.f32.gmra.mrb[0].mxu0 %v2161
    %v2245 = vpop.f32.mrb[0].mxu0
    %v2246 = vadd.f32 0.0, %v2245
    %v2247 = vpop.f32.mrb[0].mxu0
    %2248 = vdwg.mxu0
    %v2249 = vsel %vm465, %v2236, -inf
    %2250 = vmax.xlane.f32.xlu0 %v2249
    %v2251 = vpop.xlane.xlu0 %2250
    %v2252 = vsel %vm465, %v2241, -inf
    %2253 = vmax.xlane.f32.xlu0 %v2252
    %v2254 = vpop.xlane.xlu0 %2253
    %v2255 = vsel %vm472, %v2246, -inf
    %2256 = vmax.xlane.f32.xlu0 %v2255
    %v2257 = vpop.xlane.xlu0 %2256
    %v2258 = vsub.f32 %v2236, %v2251
    %v2259 = vsub.f32 %v2241, %v2254
    %v2260 = vsub.f32 %v2246, %v2257
    %v2261 = vmul.f32 %v2258, 1.442695
    %v2262 = vpow.pop %v2261
    %v2263 = vmul.f32 %v2259, 1.442695
    %v2264 = vpow.pop %v2263
    %v2265 = vmul.f32 %v2260, 1.442695
    %v2266 = vpow.pop %v2265
    %v2267 = vsel %vm465, %v2262, 0.0
    %2268 = vadd.xlane.f32.xlu0 %v2267
    %v2269 = vpop.xlane.xlu0 %2268
    %v2270 = vsel %vm465, %v2264, 0.0
    %2271 = vadd.xlane.f32.xlu0 %v2270
    %v2272 = vpop.xlane.xlu0 %2271
    %v2273 = vsel %vm472, %v2266, 0.0
    %2274 = vadd.xlane.f32.xlu0 %v2273
    %v2275 = vpop.xlane.xlu0 %2274
    %v2276 = vrcp.pop %v2269
    %v2277 = vrcp.pop %v2272
    %v2278 = vrcp.pop %v2275
    %v2279 = vmul.f32 %v2262, %v2276
    %v2280 = vmul.f32 %v2264, %v2277
    %v2281 = vmul.f32 %v2266, %v2278
    %2282 = vrot.lane.b32.xlu0 %v1899, 56
    %v2283 = vpop.permute.xlu0 %2282
    %2284 = vrot.lane.b32.xlu0 %v1904, 56
    %v2285 = vpop.permute.xlu0 %2284
    %2286 = vrot.lane.b32.xlu0 %v1909, 56
    %v2287 = vpop.permute.xlu0 %2286
    %v2291 = vsel %vm465, %v2279, 0
    %v2294 = vsel %vm465, %v2280, 0
    %v2297 = vsel %vm465, %v2281, 0
    %v2299 = vsel %vm193, %v2287, 0
    %2301 = vmatprep.subr.mxu0 0.0
    %2302 = vmatpush1.msra.mxu0 %v2283
    %2303 = vmatprep.subr.mxu0 0.0
    %2304 = vmatpush1.msra.mxu0 %v2285
    %2305 = vmatprep.subr.mxu0 0.0
    %2306 = vmatpush1.msra.mxu0 %v2299
    %2307 = vmatprep.subr.mxu0 0.0
    %2308 = vmatpush1.msra.mxu0 0.0
    %2309 = vmatprep.subr.mxu0 0.0
    %2310 = vmatpush1.msra.mxu0 0.0
    %2311 = vmatprep.subr.mxu0 0.0
    %2312 = vmatpush1.msra.mxu0 0.0
    %2313 = vmatprep.subr.mxu0 0.0
    %2314 = vmatpush1.msra.mxu0 0.0
    %2315 = vmatprep.subr.mxu0 0.0
    %2316 = vmatpush1.msra.mxu0 0.0
    %2317 = vmatprep.subr.mxu0 0.0
    %2318 = vmatpush1.msra.mxu0 0.0
    %2319 = vmatprep.subr.mxu0 0.0
    %2320 = vmatpush1.msra.mxu0 0.0
    %2321 = vmatprep.subr.mxu0 0.0
    %2322 = vmatpush1.msra.mxu0 0.0
    %2323 = vmatprep.subr.mxu0 0.0
    %2324 = vmatpush1.msra.mxu0 0.0
    %2325 = vmatprep.subr.mxu0 0.0
    %2326 = vmatpush1.msra.mxu0 0.0
    %2327 = vmatprep.subr.mxu0 0.0
    %2328 = vmatpush1.msra.mxu0 0.0
    %2329 = vmatprep.subr.mxu0 0.0
    %2330 = vmatpush1.msra.mxu0 0.0
    %2331 = vmatprep.subr.mxu0 0.0
    %2332 = vmatpush1.msra.mxu0 0.0
    %2333 = vmatprep.subr.mxu0 0.0
    %2334 = vmatpush1.msra.mxu0 0.0
    %2335 = vmatprep.subr.mxu0 0.0
    %2336 = vmatpush1.msra.mxu0 0.0
    %2337 = vmatprep.subr.mxu0 0.0
    %2338 = vmatpush1.msra.mxu0 0.0
    %2339 = vmatprep.subr.mxu0 0.0
    %2340 = vmatpush1.msra.mxu0 0.0
    %2341 = vmatprep.subr.mxu0 0.0
    %2342 = vmatpush1.msra.mxu0 0.0
    %2343 = vmatprep.subr.mxu0 0.0
    %2344 = vmatpush1.msra.mxu0 0.0
    %2345 = vmatprep.subr.mxu0 0.0
    %2346 = vmatpush1.msra.mxu0 0.0
    %2347 = vmatprep.subr.mxu0 0.0
    %2348 = vmatpush1.msra.mxu0 0.0
    %2349 = vmatprep.subr.mxu0 0.0
    %2350 = vmatpush1.msra.mxu0 0.0
    %2351 = vmatprep.subr.mxu0 0.0
    %2352 = vmatpush1.msra.mxu0 0.0
    %2353 = vmatprep.subr.mxu0 0.0
    %2354 = vmatpush1.msra.mxu0 0.0
    %2355 = vmatprep.subr.mxu0 0.0
    %2356 = vmatpush1.msra.mxu0 0.0
    %2357 = vmatprep.subr.mxu0 0.0
    %2358 = vmatpush1.msra.mxu0 0.0
    %2359 = vmatprep.subr.mxu0 0.0
    %2360 = vmatpush1.msra.mxu0 0.0
    %2361 = vmatprep.subr.mxu0 0.0
    %2362 = vmatpush1.msra.mxu0 0.0
    %2363 = vmatprep.subr.mxu0 0.0
    %2364 = vmatpush1.msra.mxu0 0.0
    %2365 = vmatprep.mubr.f32.mxu0 0.0
    %2366 = vmatmul.mubr.f32.gmra.mrb[0].mxu0 %v2291
    %v2367 = vpop.f32.mrb[0].mxu0
    %v2368 = vadd.f32 0.0, %v2367
    %v2369 = vpop.f32.mrb[0].mxu0
    %2370 = vmatprep.mubr.f32.mxu0 0.0
    %2371 = vmatmul.mubr.f32.gmra.mrb[0].mxu0 %v2294
    %v2372 = vpop.f32.mrb[0].mxu0
    %v2373 = vadd.f32 0.0, %v2372
    %v2374 = vpop.f32.mrb[0].mxu0
    %2375 = vmatprep.mubr.f32.mxu0 0.0
    %2376 = vmatmul.mubr.f32.gmra.mrb[0].mxu0 %v2297
    %v2377 = vpop.f32.mrb[0].mxu0
    %v2378 = vadd.f32 0.0, %v2377
    %v2379 = vpop.f32.mrb[0].mxu0
    %2380 = vdwg.mxu0
    %2381 = vrot.lane.b32.xlu0 %v1899, 112
    %v2382 = vpop.permute.xlu0 %2381
    %2383 = vrot.lane.b32.xlu0 %v1904, 112
    %v2384 = vpop.permute.xlu0 %2383
    %2385 = vrot.lane.b32.xlu0 %v1909, 112
    %v2386 = vpop.permute.xlu0 %2385
    %2387 = vrot.lane.b32.xlu0 %v1899, 80
    %v2388 = vpop.permute.xlu0 %2387
    %2389 = vrot.lane.b32.xlu0 %v1904, 80
    %v2390 = vpop.permute.xlu0 %2389
    %2391 = vrot.lane.b32.xlu0 %v1909, 80
    %v2392 = vpop.permute.xlu0 %2391
    %v2393 = vsel %vm372, %v2382, 0
    %v2395 = vsel %vm372, %v2384, 0
    %v2397 = vsel %vm372, %v2386, 0
    %v2399 = vsel %vm372, %v2388, 0
    %v2401 = vsel %vm372, %v2390, 0
    %v2403 = vsel %vm372, %v2392, 0
    %2405 = vmatprep.subr.mxu0 0.0
    %2406 = vmatpush1.xpose.msra.mxu0 %v2399
    %2407 = vmatprep.subr.mxu0 0.0
    %2408 = vmatpush1.xpose.msra.mxu0 %v2401
    %2409 = vmatprep.subr.mxu0 0.0
    %2410 = vmatpush1.xpose.msra.mxu0 %v2403
    %2411 = vmatprep.subr.mxu0 0.0
    %2412 = vmatpush1.xpose.msra.mxu0 0.0
    %2413 = vmatprep.subr.mxu0 0.0
    %2414 = vmatpush1.xpose.msra.mxu0 0.0
    %2415 = vmatprep.subr.mxu0 0.0
    %2416 = vmatpush1.xpose.msra.mxu0 0.0
    %2417 = vmatprep.subr.mxu0 0.0
    %2418 = vmatpush1.xpose.msra.mxu0 0.0
    %2419 = vmatprep.subr.mxu0 0.0
    %2420 = vmatpush1.xpose.msra.mxu0 0.0
    %2421 = vmatprep.subr.mxu0 0.0
    %2422 = vmatpush1.xpose.msra.mxu0 0.0
    %2423 = vmatprep.subr.mxu0 0.0
    %2424 = vmatpush1.xpose.msra.mxu0 0.0
    %2425 = vmatprep.subr.mxu0 0.0
    %2426 = vmatpush1.xpose.msra.mxu0 0.0
    %2427 = vmatprep.subr.mxu0 0.0
    %2428 = vmatpush1.xpose.msra.mxu0 0.0
    %2429 = vmatprep.subr.mxu0 0.0
    %2430 = vmatpush1.xpose.msra.mxu0 0.0
    %2431 = vmatprep.subr.mxu0 0.0
    %2432 = vmatpush1.xpose.msra.mxu0 0.0
    %2433 = vmatprep.subr.mxu0 0.0
    %2434 = vmatpush1.xpose.msra.mxu0 0.0
    %2435 = vmatprep.subr.mxu0 0.0
    %2436 = vmatpush1.xpose.msra.mxu0 0.0
    %2437 = vmatprep.subr.mxu0 0.0
    %2438 = vmatpush1.xpose.msra.mxu0 0.0
    %2439 = vmatprep.subr.mxu0 0.0
    %2440 = vmatpush1.xpose.msra.mxu0 0.0
    %2441 = vmatprep.subr.mxu0 0.0
    %2442 = vmatpush1.xpose.msra.mxu0 0.0
    %2443 = vmatprep.subr.mxu0 0.0
    %2444 = vmatpush1.xpose.msra.mxu0 0.0
    %2445 = vmatprep.subr.mxu0 0.0
    %2446 = vmatpush1.xpose.msra.mxu0 0.0
    %2447 = vmatprep.subr.mxu0 0.0
    %2448 = vmatpush1.xpose.msra.mxu0 0.0
    %2449 = vmatprep.subr.mxu0 0.0
    %2450 = vmatpush1.xpose.msra.mxu0 0.0
    %2451 = vmatprep.subr.mxu0 0.0
    %2452 = vmatpush1.xpose.msra.mxu0 0.0
    %2453 = vmatprep.subr.mxu0 0.0
    %2454 = vmatpush1.xpose.msra.mxu0 0.0
    %2455 = vmatprep.subr.mxu0 0.0
    %2456 = vmatpush1.xpose.msra.mxu0 0.0
    %2457 = vmatprep.subr.mxu0 0.0
    %2458 = vmatpush1.xpose.msra.mxu0 0.0
    %2459 = vmatprep.subr.mxu0 0.0
    %2460 = vmatpush1.xpose.msra.mxu0 0.0
    %2461 = vmatprep.subr.mxu0 0.0
    %2462 = vmatpush1.xpose.msra.mxu0 0.0
    %2463 = vmatprep.subr.mxu0 0.0
    %2464 = vmatpush1.xpose.msra.mxu0 0.0
    %2465 = vmatprep.subr.mxu0 0.0
    %2466 = vmatpush1.xpose.msra.mxu0 0.0
    %2467 = vmatprep.subr.mxu0 0.0
    %2468 = vmatpush1.xpose.msra.mxu0 0.0
    %2469 = vmatprep.mubr.f32.mxu0 0.0
    %2470 = vmatmul.mubr.f32.gmra.mrb[0].mxu0 %v2393
    %v2471 = vpop.f32.mrb[0].mxu0
    %v2472 = vadd.f32 0.0, %v2471
    %v2473 = vpop.f32.mrb[0].mxu0
    %2474 = vmatprep.mubr.f32.mxu0 0.0
    %2475 = vmatmul.mubr.f32.gmra.mrb[0].mxu0 %v2395
    %v2476 = vpop.f32.mrb[0].mxu0
    %v2477 = vadd.f32 0.0, %v2476
    %v2478 = vpop.f32.mrb[0].mxu0
    %2479 = vmatprep.mubr.f32.mxu0 0.0
    %2480 = vmatmul.mubr.f32.gmra.mrb[0].mxu0 %v2397
    %v2481 = vpop.f32.mrb[0].mxu0
    %v2482 = vadd.f32 0.0, %v2481
    %v2483 = vpop.f32.mrb[0].mxu0
    %2484 = vdwg.mxu0
    %v2485 = vsel %vm465, %v2472, -inf
    %2486 = vmax.xlane.f32.xlu0 %v2485
    %v2487 = vpop.xlane.xlu0 %2486
    %v2488 = vsel %vm465, %v2477, -inf
    %2489 = vmax.xlane.f32.xlu0 %v2488
    %v2490 = vpop.xlane.xlu0 %2489
    %v2491 = vsel %vm472, %v2482, -inf
    %2492 = vmax.xlane.f32.xlu0 %v2491
    %v2493 = vpop.xlane.xlu0 %2492
    %v2494 = vsub.f32 %v2472, %v2487
    %v2495 = vsub.f32 %v2477, %v2490
    %v2496 = vsub.f32 %v2482, %v2493
    %v2497 = vmul.f32 %v2494, 1.442695
    %v2498 = vpow.pop %v2497
    %v2499 = vmul.f32 %v2495, 1.442695
    %v2500 = vpow.pop %v2499
    %v2501 = vmul.f32 %v2496, 1.442695
    %v2502 = vpow.pop %v2501
    %v2503 = vsel %vm465, %v2498, 0.0
    %2504 = vadd.xlane.f32.xlu0 %v2503
    %v2505 = vpop.xlane.xlu0 %2504
    %v2506 = vsel %vm465, %v2500, 0.0
    %2507 = vadd.xlane.f32.xlu0 %v2506
    %v2508 = vpop.xlane.xlu0 %2507
    %v2509 = vsel %vm472, %v2502, 0.0
    %2510 = vadd.xlane.f32.xlu0 %v2509
    %v2511 = vpop.xlane.xlu0 %2510
    %v2512 = vrcp.pop %v2505
    %v2513 = vrcp.pop %v2508
    %v2514 = vrcp.pop %v2511
    %v2515 = vmul.f32 %v2498, %v2512
    %v2516 = vmul.f32 %v2500, %v2513
    %v2517 = vmul.f32 %v2502, %v2514
    %2518 = vrot.lane.b32.xlu0 %v1899, 48
    %v2519 = vpop.permute.xlu0 %2518
    %2520 = vrot.lane.b32.xlu0 %v1904, 48
    %v2521 = vpop.permute.xlu0 %2520
    %2522 = vrot.lane.b32.xlu0 %v1909, 48
    %v2523 = vpop.permute.xlu0 %2522
    %v2527 = vsel %vm465, %v2515, 0
    %v2530 = vsel %vm465, %v2516, 0
    %v2533 = vsel %vm465, %v2517, 0
    %v2535 = vsel %vm193, %v2523, 0
    %2537 = vmatprep.subr.mxu0 0.0
    %2538 = vmatpush1.msra.mxu0 %v2519
    %2539 = vmatprep.subr.mxu0 0.0
    %2540 = vmatpush1.msra.mxu0 %v2521
    %2541 = vmatprep.subr.mxu0 0.0
    %2542 = vmatpush1.msra.mxu0 %v2535
    %2543 = vmatprep.subr.mxu0 0.0
    %2544 = vmatpush1.msra.mxu0 0.0
    %2545 = vmatprep.subr.mxu0 0.0
    %2546 = vmatpush1.msra.mxu0 0.0
    %2547 = vmatprep.subr.mxu0 0.0
    %2548 = vmatpush1.msra.mxu0 0.0
    %2549 = vmatprep.subr.mxu0 0.0
    %2550 = vmatpush1.msra.mxu0 0.0
    %2551 = vmatprep.subr.mxu0 0.0
    %2552 = vmatpush1.msra.mxu0 0.0
    %2553 = vmatprep.subr.mxu0 0.0
    %2554 = vmatpush1.msra.mxu0 0.0
    %2555 = vmatprep.subr.mxu0 0.0
    %2556 = vmatpush1.msra.mxu0 0.0
    %2557 = vmatprep.subr.mxu0 0.0
    %2558 = vmatpush1.msra.mxu0 0.0
    %2559 = vmatprep.subr.mxu0 0.0
    %2560 = vmatpush1.msra.mxu0 0.0
    %2561 = vmatprep.subr.mxu0 0.0
    %2562 = vmatpush1.msra.mxu0 0.0
    %2563 = vmatprep.subr.mxu0 0.0
    %2564 = vmatpush1.msra.mxu0 0.0
    %2565 = vmatprep.subr.mxu0 0.0
    %2566 = vmatpush1.msra.mxu0 0.0
    %2567 = vmatprep.subr.mxu0 0.0
    %2568 = vmatpush1.msra.mxu0 0.0
    %2569 = vmatprep.subr.mxu0 0.0
    %2570 = vmatpush1.msra.mxu0 0.0
    %2571 = vmatprep.subr.mxu0 0.0
    %2572 = vmatpush1.msra.mxu0 0.0
    %2573 = vmatprep.subr.mxu0 0.0
    %2574 = vmatpush1.msra.mxu0 0.0
    %2575 = vmatprep.subr.mxu0 0.0
    %2576 = vmatpush1.msra.mxu0 0.0
    %2577 = vmatprep.subr.mxu0 0.0
    %2578 = vmatpush1.msra.mxu0 0.0
    %2579 = vmatprep.subr.mxu0 0.0
    %2580 = vmatpush1.msra.mxu0 0.0
    %2581 = vmatprep.subr.mxu0 0.0
    %2582 = vmatpush1.msra.mxu0 0.0
    %2583 = vmatprep.subr.mxu0 0.0
    %2584 = vmatpush1.msra.mxu0 0.0
    %2585 = vmatprep.subr.mxu0 0.0
    %2586 = vmatpush1.msra.mxu0 0.0
    %2587 = vmatprep.subr.mxu0 0.0
    %2588 = vmatpush1.msra.mxu0 0.0
    %2589 = vmatprep.subr.mxu0 0.0
    %2590 = vmatpush1.msra.mxu0 0.0
    %2591 = vmatprep.subr.mxu0 0.0
    %2592 = vmatpush1.msra.mxu0 0.0
    %2593 = vmatprep.subr.mxu0 0.0
    %2594 = vmatpush1.msra.mxu0 0.0
    %2595 = vmatprep.subr.mxu0 0.0
    %2596 = vmatpush1.msra.mxu0 0.0
    %2597 = vmatprep.subr.mxu0 0.0
    %2598 = vmatpush1.msra.mxu0 0.0
    %2599 = vmatprep.subr.mxu0 0.0
    %2600 = vmatpush1.msra.mxu0 0.0
    %2601 = vmatprep.mubr.f32.mxu0 0.0
    %2602 = vmatmul.mubr.f32.gmra.mrb[0].mxu0 %v2527
    %v2603 = vpop.f32.mrb[0].mxu0
    %v2604 = vadd.f32 0.0, %v2603
    %v2605 = vpop.f32.mrb[0].mxu0
    %2606 = vmatprep.mubr.f32.mxu0 0.0
    %2607 = vmatmul.mubr.f32.gmra.mrb[0].mxu0 %v2530
    %v2608 = vpop.f32.mrb[0].mxu0
    %v2609 = vadd.f32 0.0, %v2608
    %v2610 = vpop.f32.mrb[0].mxu0
    %2611 = vmatprep.mubr.f32.mxu0 0.0
    %2612 = vmatmul.mubr.f32.gmra.mrb[0].mxu0 %v2533
    %v2613 = vpop.f32.mrb[0].mxu0
    %v2614 = vadd.f32 0.0, %v2613
    %v2615 = vpop.f32.mrb[0].mxu0
    %2616 = vdwg.mxu0
    %2617 = vrot.lane.b32.xlu0 %v1899, 104
    %v2618 = vpop.permute.xlu0 %2617
    %2619 = vrot.lane.b32.xlu0 %v1904, 104
    %v2620 = vpop.permute.xlu0 %2619
    %2621 = vrot.lane.b32.xlu0 %v1909, 104
    %v2622 = vpop.permute.xlu0 %2621
    %2623 = vrot.lane.b32.xlu0 %v1899, 72
    %v2624 = vpop.permute.xlu0 %2623
    %2625 = vrot.lane.b32.xlu0 %v1904, 72
    %v2626 = vpop.permute.xlu0 %2625
    %2627 = vrot.lane.b32.xlu0 %v1909, 72
    %v2628 = vpop.permute.xlu0 %2627
    %v2629 = vsel %vm372, %v2618, 0
    %v2631 = vsel %vm372, %v2620, 0
    %v2633 = vsel %vm372, %v2622, 0
    %v2635 = vsel %vm372, %v2624, 0
    %v2637 = vsel %vm372, %v2626, 0
    %v2639 = vsel %vm372, %v2628, 0
    %2641 = vmatprep.subr.mxu0 0.0
    %2642 = vmatpush1.xpose.msra.mxu0 %v2635
    %2643 = vmatprep.subr.mxu0 0.0
    %2644 = vmatpush1.xpose.msra.mxu0 %v2637
    %2645 = vmatprep.subr.mxu0 0.0
    %2646 = vmatpush1.xpose.msra.mxu0 %v2639
    %2647 = vmatprep.subr.mxu0 0.0
    %2648 = vmatpush1.xpose.msra.mxu0 0.0
    %2649 = vmatprep.subr.mxu0 0.0
    %2650 = vmatpush1.xpose.msra.mxu0 0.0
    %2651 = vmatprep.subr.mxu0 0.0
    %2652 = vmatpush1.xpose.msra.mxu0 0.0
    %2653 = vmatprep.subr.mxu0 0.0
    %2654 = vmatpush1.xpose.msra.mxu0 0.0
    %2655 = vmatprep.subr.mxu0 0.0
    %2656 = vmatpush1.xpose.msra.mxu0 0.0
    %2657 = vmatprep.subr.mxu0 0.0
    %2658 = vmatpush1.xpose.msra.mxu0 0.0
    %2659 = vmatprep.subr.mxu0 0.0
    %2660 = vmatpush1.xpose.msra.mxu0 0.0
    %2661 = vmatprep.subr.mxu0 0.0
    %2662 = vmatpush1.xpose.msra.mxu0 0.0
    %2663 = vmatprep.subr.mxu0 0.0
    %2664 = vmatpush1.xpose.msra.mxu0 0.0
    %2665 = vmatprep.subr.mxu0 0.0
    %2666 = vmatpush1.xpose.msra.mxu0 0.0
    %2667 = vmatprep.subr.mxu0 0.0
    %2668 = vmatpush1.xpose.msra.mxu0 0.0
    %2669 = vmatprep.subr.mxu0 0.0
    %2670 = vmatpush1.xpose.msra.mxu0 0.0
    %2671 = vmatprep.subr.mxu0 0.0
    %2672 = vmatpush1.xpose.msra.mxu0 0.0
    %2673 = vmatprep.subr.mxu0 0.0
    %2674 = vmatpush1.xpose.msra.mxu0 0.0
    %2675 = vmatprep.subr.mxu0 0.0
    %2676 = vmatpush1.xpose.msra.mxu0 0.0
    %2677 = vmatprep.subr.mxu0 0.0
    %2678 = vmatpush1.xpose.msra.mxu0 0.0
    %2679 = vmatprep.subr.mxu0 0.0
    %2680 = vmatpush1.xpose.msra.mxu0 0.0
    %2681 = vmatprep.subr.mxu0 0.0
    %2682 = vmatpush1.xpose.msra.mxu0 0.0
    %2683 = vmatprep.subr.mxu0 0.0
    %2684 = vmatpush1.xpose.msra.mxu0 0.0
    %2685 = vmatprep.subr.mxu0 0.0
    %2686 = vmatpush1.xpose.msra.mxu0 0.0
    %2687 = vmatprep.subr.mxu0 0.0
    %2688 = vmatpush1.xpose.msra.mxu0 0.0
    %2689 = vmatprep.subr.mxu0 0.0
    %2690 = vmatpush1.xpose.msra.mxu0 0.0
    %2691 = vmatprep.subr.mxu0 0.0
    %2692 = vmatpush1.xpose.msra.mxu0 0.0
    %2693 = vmatprep.subr.mxu0 0.0
    %2694 = vmatpush1.xpose.msra.mxu0 0.0
    %2695 = vmatprep.subr.mxu0 0.0
    %2696 = vmatpush1.xpose.msra.mxu0 0.0
    %2697 = vmatprep.subr.mxu0 0.0
    %2698 = vmatpush1.xpose.msra.mxu0 0.0
    %2699 = vmatprep.subr.mxu0 0.0
    %2700 = vmatpush1.xpose.msra.mxu0 0.0
    %2701 = vmatprep.subr.mxu0 0.0
    %2702 = vmatpush1.xpose.msra.mxu0 0.0
    %2703 = vmatprep.subr.mxu0 0.0
    %2704 = vmatpush1.xpose.msra.mxu0 0.0
    %2705 = vmatprep.mubr.f32.mxu0 0.0
    %2706 = vmatmul.mubr.f32.gmra.mrb[0].mxu0 %v2629
    %v2707 = vpop.f32.mrb[0].mxu0
    %v2708 = vadd.f32 0.0, %v2707
    %v2709 = vpop.f32.mrb[0].mxu0
    %2710 = vmatprep.mubr.f32.mxu0 0.0
    %2711 = vmatmul.mubr.f32.gmra.mrb[0].mxu0 %v2631
    %v2712 = vpop.f32.mrb[0].mxu0
    %v2713 = vadd.f32 0.0, %v2712
    %v2714 = vpop.f32.mrb[0].mxu0
    %2715 = vmatprep.mubr.f32.mxu0 0.0
    %2716 = vmatmul.mubr.f32.gmra.mrb[0].mxu0 %v2633
    %v2717 = vpop.f32.mrb[0].mxu0
    %v2718 = vadd.f32 0.0, %v2717
    %v2719 = vpop.f32.mrb[0].mxu0
    %2720 = vdwg.mxu0
    %v2721 = vsel %vm465, %v2708, -inf
    %2722 = vmax.xlane.f32.xlu0 %v2721
    %v2723 = vpop.xlane.xlu0 %2722
    %v2724 = vsel %vm465, %v2713, -inf
    %2725 = vmax.xlane.f32.xlu0 %v2724
    %v2726 = vpop.xlane.xlu0 %2725
    %v2727 = vsel %vm472, %v2718, -inf
    %2728 = vmax.xlane.f32.xlu0 %v2727
    %v2729 = vpop.xlane.xlu0 %2728
    %v2730 = vsub.f32 %v2708, %v2723
    %v2731 = vsub.f32 %v2713, %v2726
    %v2732 = vsub.f32 %v2718, %v2729
    %v2733 = vmul.f32 %v2730, 1.442695
    %v2734 = vpow.pop %v2733
    %v2735 = vmul.f32 %v2731, 1.442695
    %v2736 = vpow.pop %v2735
    %v2737 = vmul.f32 %v2732, 1.442695
    %v2738 = vpow.pop %v2737
    %v2739 = vsel %vm465, %v2734, 0.0
    %2740 = vadd.xlane.f32.xlu0 %v2739
    %v2741 = vpop.xlane.xlu0 %2740
    %v2742 = vsel %vm465, %v2736, 0.0
    %2743 = vadd.xlane.f32.xlu0 %v2742
    %v2744 = vpop.xlane.xlu0 %2743
    %v2745 = vsel %vm472, %v2738, 0.0
    %2746 = vadd.xlane.f32.xlu0 %v2745
    %v2747 = vpop.xlane.xlu0 %2746
    %v2748 = vrcp.pop %v2741
    %v2749 = vrcp.pop %v2744
    %v2750 = vrcp.pop %v2747
    %v2751 = vmul.f32 %v2734, %v2748
    %v2752 = vmul.f32 %v2736, %v2749
    %v2753 = vmul.f32 %v2738, %v2750
    %2754 = vrot.lane.b32.xlu0 %v1899, 40
    %v2755 = vpop.permute.xlu0 %2754
    %2756 = vrot.lane.b32.xlu0 %v1904, 40
    %v2757 = vpop.permute.xlu0 %2756
    %2758 = vrot.lane.b32.xlu0 %v1909, 40
    %v2759 = vpop.permute.xlu0 %2758
    %v2763 = vsel %vm465, %v2751, 0
    %v2766 = vsel %vm465, %v2752, 0
    %v2769 = vsel %vm465, %v2753, 0
    %v2771 = vsel %vm193, %v2759, 0
    %2773 = vmatprep.subr.mxu0 0.0
    %2774 = vmatpush1.msra.mxu0 %v2755
    %2775 = vmatprep.subr.mxu0 0.0
    %2776 = vmatpush1.msra.mxu0 %v2757
    %2777 = vmatprep.subr.mxu0 0.0
    %2778 = vmatpush1.msra.mxu0 %v2771
    %2779 = vmatprep.subr.mxu0 0.0
    %2780 = vmatpush1.msra.mxu0 0.0
    %2781 = vmatprep.subr.mxu0 0.0
    %2782 = vmatpush1.msra.mxu0 0.0
    %2783 = vmatprep.subr.mxu0 0.0
    %2784 = vmatpush1.msra.mxu0 0.0
    %2785 = vmatprep.subr.mxu0 0.0
    %2786 = vmatpush1.msra.mxu0 0.0
    %2787 = vmatprep.subr.mxu0 0.0
    %2788 = vmatpush1.msra.mxu0 0.0
    %2789 = vmatprep.subr.mxu0 0.0
    %2790 = vmatpush1.msra.mxu0 0.0
    %2791 = vmatprep.subr.mxu0 0.0
    %2792 = vmatpush1.msra.mxu0 0.0
    %2793 = vmatprep.subr.mxu0 0.0
    %2794 = vmatpush1.msra.mxu0 0.0
    %2795 = vmatprep.subr.mxu0 0.0
    %2796 = vmatpush1.msra.mxu0 0.0
    %2797 = vmatprep.subr.mxu0 0.0
    %2798 = vmatpush1.msra.mxu0 0.0
    %2799 = vmatprep.subr.mxu0 0.0
    %2800 = vmatpush1.msra.mxu0 0.0
    %2801 = vmatprep.subr.mxu0 0.0
    %2802 = vmatpush1.msra.mxu0 0.0
    %2803 = vmatprep.subr.mxu0 0.0
    %2804 = vmatpush1.msra.mxu0 0.0
    %2805 = vmatprep.subr.mxu0 0.0
    %2806 = vmatpush1.msra.mxu0 0.0
    %2807 = vmatprep.subr.mxu0 0.0
    %2808 = vmatpush1.msra.mxu0 0.0
    %2809 = vmatprep.subr.mxu0 0.0
    %2810 = vmatpush1.msra.mxu0 0.0
    %2811 = vmatprep.subr.mxu0 0.0
    %2812 = vmatpush1.msra.mxu0 0.0
    %2813 = vmatprep.subr.mxu0 0.0
    %2814 = vmatpush1.msra.mxu0 0.0
    %2815 = vmatprep.subr.mxu0 0.0
    %2816 = vmatpush1.msra.mxu0 0.0
    %2817 = vmatprep.subr.mxu0 0.0
    %2818 = vmatpush1.msra.mxu0 0.0
    %2819 = vmatprep.subr.mxu0 0.0
    %2820 = vmatpush1.msra.mxu0 0.0
    %2821 = vmatprep.subr.mxu0 0.0
    %2822 = vmatpush1.msra.mxu0 0.0
    %2823 = vmatprep.subr.mxu0 0.0
    %2824 = vmatpush1.msra.mxu0 0.0
    %2825 = vmatprep.subr.mxu0 0.0
    %2826 = vmatpush1.msra.mxu0 0.0
    %2827 = vmatprep.subr.mxu0 0.0
    %2828 = vmatpush1.msra.mxu0 0.0
    %2829 = vmatprep.subr.mxu0 0.0
    %2830 = vmatpush1.msra.mxu0 0.0
    %2831 = vmatprep.subr.mxu0 0.0
    %2832 = vmatpush1.msra.mxu0 0.0
    %2833 = vmatprep.subr.mxu0 0.0
    %2834 = vmatpush1.msra.mxu0 0.0
    %2835 = vmatprep.subr.mxu0 0.0
    %2836 = vmatpush1.msra.mxu0 0.0
    %2837 = vmatprep.mubr.f32.mxu0 0.0
    %2838 = vmatmul.mubr.f32.gmra.mrb[0].mxu0 %v2763
    %v2839 = vpop.f32.mrb[0].mxu0
    %v2840 = vadd.f32 0.0, %v2839
    %v2841 = vpop.f32.mrb[0].mxu0
    %2842 = vmatprep.mubr.f32.mxu0 0.0
    %2843 = vmatmul.mubr.f32.gmra.mrb[0].mxu0 %v2766
    %v2844 = vpop.f32.mrb[0].mxu0
    %v2845 = vadd.f32 0.0, %v2844
    %v2846 = vpop.f32.mrb[0].mxu0
    %2847 = vmatprep.mubr.f32.mxu0 0.0
    %2848 = vmatmul.mubr.f32.gmra.mrb[0].mxu0 %v2769
    %v2849 = vpop.f32.mrb[0].mxu0
    %v2850 = vadd.f32 0.0, %v2849
    %v2851 = vpop.f32.mrb[0].mxu0
    %2852 = vdwg.mxu0
    %2856 = vrot.lane.b32.xlu0 %v2368, 8
    %v2857 = vpop.permute.xlu0 %2856
    %2858 = vrot.lane.b32.xlu0 %v2373, 8
    %v2859 = vpop.permute.xlu0 %2858
    %2860 = vrot.lane.b32.xlu0 %v2378, 8
    %v2861 = vpop.permute.xlu0 %2860
    %2868 = vrot.lane.b32.xlu0 %v2604, 16
    %v2869 = vpop.permute.xlu0 %2868
    %2870 = vrot.lane.b32.xlu0 %v2609, 16
    %v2871 = vpop.permute.xlu0 %2870
    %2872 = vrot.lane.b32.xlu0 %v2614, 16
    %v2873 = vpop.permute.xlu0 %2872
    %2880 = vrot.lane.b32.xlu0 %v2840, 24
    %v2881 = vpop.permute.xlu0 %2880
    %2882 = vrot.lane.b32.xlu0 %v2845, 24
    %v2883 = vpop.permute.xlu0 %2882
    %2884 = vrot.lane.b32.xlu0 %v2850, 24
    %v2885 = vpop.permute.xlu0 %2884
    %v2889 = vsel %vm372, %v2132, %v2857
    %v2890 = vsel %vm372, %v2137, %v2859
    %v2891 = vsel %vm372, %v2142, %v2861
    %v2892 = vsel %vm1346, %v2889, %v2869
    %v2893 = vsel %vm1346, %v2890, %v2871
    %v2894 = vsel %vm1346, %v2891, %v2873
    %v2895 = vsel %vm1350, %v2892, %v2881
    %v2896 = vsel %vm1350, %v2893, %v2883
    %v2897 = vsel %vm1350, %v2894, %v2885
    %s2898 = scalar_lea.vmem %s9, 32
    %v2899 = vld [vmem:[%s2898] sm:$0xff]
    %v2900 = vld [vmem:[%s2898 + $0x8] sm:$0xff]
    %v2901 = vld [vmem:[%s2898 + $0x10] sm:$0xff]
    %v2902 = vld [vmem:[%s2898 + $0x18] sm:$0xff]
    %s2903 = scalar_lea.vmem %s10, 1
    %v2904 = vld [vmem:[%s2903] sm:$0x1]
    %v2906 = vlaneseq
    %v2907 = vshrl.u32 %v2906, 7
    %v2908 = vsub.s32 0, %v2907
    %v2909 = vrot.slane %v2904, %v2908
    %v2912 = vsel %vm203, %v2895, 0
    %v2915 = vsel %vm203, %v2896, 0
    %v2918 = vsel %vm203, %v2897, 0
    %2920 = vmatprep.subr.mxu0 0.0
    %2921 = vmatpush1.msra.mxu0 %v2899
    %2922 = vmatprep.subr.mxu0 0.0
    %2923 = vmatpush1.msra.mxu0 %v2900
    %2924 = vmatprep.subr.mxu0 0.0
    %2925 = vmatpush1.msra.mxu0 %v2901
    %2926 = vmatprep.subr.mxu0 0.0
    %2927 = vmatpush1.msra.mxu0 %v2902
    %2928 = vmatprep.subr.mxu0 0.0
    %2929 = vmatpush1.msra.mxu0 0.0
    %2930 = vmatprep.subr.mxu0 0.0
    %2931 = vmatpush1.msra.mxu0 0.0
    %2932 = vmatprep.subr.mxu0 0.0
    %2933 = vmatpush1.msra.mxu0 0.0
    %2934 = vmatprep.subr.mxu0 0.0
    %2935 = vmatpush1.msra.mxu0 0.0
    %2936 = vmatprep.subr.mxu0 0.0
    %2937 = vmatpush1.msra.mxu0 0.0
    %2938 = vmatprep.subr.mxu0 0.0
    %2939 = vmatpush1.msra.mxu0 0.0
    %2940 = vmatprep.subr.mxu0 0.0
    %2941 = vmatpush1.msra.mxu0 0.0
    %2942 = vmatprep.subr.mxu0 0.0
    %2943 = vmatpush1.msra.mxu0 0.0
    %2944 = vmatprep.subr.mxu0 0.0
    %2945 = vmatpush1.msra.mxu0 0.0
    %2946 = vmatprep.subr.mxu0 0.0
    %2947 = vmatpush1.msra.mxu0 0.0
    %2948 = vmatprep.subr.mxu0 0.0
    %2949 = vmatpush1.msra.mxu0 0.0
    %2950 = vmatprep.subr.mxu0 0.0
    %2951 = vmatpush1.msra.mxu0 0.0
    %2952 = vmatprep.subr.mxu0 0.0
    %2953 = vmatpush1.msra.mxu0 0.0
    %2954 = vmatprep.subr.mxu0 0.0
    %2955 = vmatpush1.msra.mxu0 0.0
    %2956 = vmatprep.subr.mxu0 0.0
    %2957 = vmatpush1.msra.mxu0 0.0
    %2958 = vmatprep.subr.mxu0 0.0
    %2959 = vmatpush1.msra.mxu0 0.0
    %2960 = vmatprep.subr.mxu0 0.0
    %2961 = vmatpush1.msra.mxu0 0.0
    %2962 = vmatprep.subr.mxu0 0.0
    %2963 = vmatpush1.msra.mxu0 0.0
    %2964 = vmatprep.subr.mxu0 0.0
    %2965 = vmatpush1.msra.mxu0 0.0
    %2966 = vmatprep.subr.mxu0 0.0
    %2967 = vmatpush1.msra.mxu0 0.0
    %2968 = vmatprep.subr.mxu0 0.0
    %2969 = vmatpush1.msra.mxu0 0.0
    %2970 = vmatprep.subr.mxu0 0.0
    %2971 = vmatpush1.msra.mxu0 0.0
    %2972 = vmatprep.subr.mxu0 0.0
    %2973 = vmatpush1.msra.mxu0 0.0
    %2974 = vmatprep.subr.mxu0 0.0
    %2975 = vmatpush1.msra.mxu0 0.0
    %2976 = vmatprep.subr.mxu0 0.0
    %2977 = vmatpush1.msra.mxu0 0.0
    %2978 = vmatprep.subr.mxu0 0.0
    %2979 = vmatpush1.msra.mxu0 0.0
    %2980 = vmatprep.subr.mxu0 0.0
    %2981 = vmatpush1.msra.mxu0 0.0
    %2982 = vmatprep.subr.mxu0 0.0
    %2983 = vmatpush1.msra.mxu0 0.0
    %2984 = vmatprep.mubr.f32.mxu0 0.0
    %2985 = vmatmul.mubr.f32.gmra.mrb[0].mxu0 %v2912
    %v2986 = vpop.f32.mrb[0].mxu0
    %v2987 = vadd.f32 %v2909, %v2986
    %v2988 = vpop.f32.mrb[0].mxu0
    %2989 = vmatprep.mubr.f32.mxu0 0.0
    %2990 = vmatmul.mubr.f32.gmra.mrb[0].mxu0 %v2915
    %v2991 = vpop.f32.mrb[0].mxu0
    %v2992 = vadd.f32 %v2909, %v2991
    %v2993 = vpop.f32.mrb[0].mxu0
    %2994 = vmatprep.mubr.f32.mxu0 0.0
    %2995 = vmatmul.mubr.f32.gmra.mrb[0].mxu0 %v2918
    %v2996 = vpop.f32.mrb[0].mxu0
    %v2997 = vadd.f32 %v2909, %v2996
    %v2998 = vpop.f32.mrb[0].mxu0
    %2999 = vdwg.mxu0
    %v3000 = vadd.f32 %v1746, %v2987
    %v3001 = vadd.f32 %v1747, %v2992
    %v3002 = vadd.f32 %v1748, %v2997
    %s3003 = scalar_lea.vmem %s11, 1
    %v3004 = vld [vmem:[%s3003] sm:$0x1]
    %s3005 = scalar_lea.vmem %s12, 1
    %v3006 = vld [vmem:[%s3005] sm:$0x1]
    %v3007 = vsel %vm203, %v3000, 0.0
    %3008 = vadd.xlane.f32.xlu0 %v3007
    %v3009 = vpop.xlane.xlu0 %3008
    %v3010 = vsel %vm203, %v3001, 0.0
    %3011 = vadd.xlane.f32.xlu0 %v3010
    %v3012 = vpop.xlane.xlu0 %3011
    %v3013 = vsel %vm210, %v3002, 0.0
    %3014 = vadd.xlane.f32.xlu0 %v3013
    %v3015 = vpop.xlane.xlu0 %3014
    %v3016 = vmul.f32 %v3009, %v214
    %v3017 = vmul.f32 %v3012, %v214
    %v3018 = vmul.f32 %v3015, %v214
    %v3019 = vsub.f32 %v3000, %v3016
    %v3020 = vsub.f32 %v3001, %v3017
    %v3021 = vsub.f32 %v3002, %v3018
    %v3022 = vmul.f32 %v3019, %v3019
    %v3023 = vmul.f32 %v3020, %v3020
    %v3024 = vmul.f32 %v3021, %v3021
    %v3025 = vsel %vm203, %v3022, 0.0
    %3026 = vadd.xlane.f32.xlu0 %v3025
    %v3027 = vpop.xlane.xlu0 %3026
    %v3028 = vsel %vm203, %v3023, 0.0
    %3029 = vadd.xlane.f32.xlu0 %v3028
    %v3030 = vpop.xlane.xlu0 %3029
    %v3031 = vsel %vm210, %v3024, 0.0
    %3032 = vadd.xlane.f32.xlu0 %v3031
    %v3033 = vpop.xlane.xlu0 %3032
    %v3034 = vmul.f32 %v3027, %v214
    %v3035 = vmul.f32 %v3030, %v214
    %v3036 = vmul.f32 %v3033, %v214
    %v3037 = vadd.f32 %v3034, 1e-06
    %v3038 = vadd.f32 %v3035, 1e-06
    %v3039 = vadd.f32 %v3036, 1e-06
    %v3040 = vrsqrt.pop %v3037
    %v3041 = vrsqrt.pop %v3038
    %v3042 = vrsqrt.pop %v3039
    %v3043 = vmul.f32 %v3019, %v3040
    %v3044 = vmul.f32 %v3020, %v3041
    %v3045 = vmul.f32 %v3021, %v3042
    %v3047 = vlaneseq
    %v3048 = vshrl.u32 %v3047, 7
    %v3049 = vsub.s32 0, %v3048
    %v3050 = vrot.slane %v3004, %v3049
    %v3052 = vmul.f32 %v3043, %v3050
    %v3053 = vmul.f32 %v3044, %v3050
    %v3054 = vmul.f32 %v3045, %v3050
    %v3056 = vlaneseq
    %v3057 = vshrl.u32 %v3056, 7
    %v3058 = vsub.s32 0, %v3057
    %v3059 = vrot.slane %v3006, %v3058
    %v3061 = vadd.f32 %v3052, %v3059
    %v3062 = vadd.f32 %v3053, %v3059
    %v3063 = vadd.f32 %v3054, %v3059
    %s3064 = scalar_lea.vmem %s13, 32
    %v3065 = vld [vmem:[%s3064] sm:$0xff]
    %v3066 = vld [vmem:[%s3064 + $0x8] sm:$0xff]
    %v3067 = vld [vmem:[%s3064 + $0x10] sm:$0xff]
    %v3068 = vld [vmem:[%s3064 + $0x18] sm:$0xff]
    %s3069 = scalar_lea.vmem %s14, 1
    %v3070 = vld [vmem:[%s3069] sm:$0x1]
    %v3072 = vlaneseq
    %v3073 = vshrl.u32 %v3072, 7
    %v3074 = vsub.s32 0, %v3073
    %v3075 = vrot.slane %v3070, %v3074
    %v3078 = vsel %vm203, %v3061, 0
    %v3081 = vsel %vm203, %v3062, 0
    %v3084 = vsel %vm203, %v3063, 0
    %3086 = vmatprep.subr.mxu0 0.0
    %3087 = vmatpush1.msra.mxu0 %v3065
    %3088 = vmatprep.subr.mxu0 0.0
    %3089 = vmatpush1.msra.mxu0 %v3066
    %3090 = vmatprep.subr.mxu0 0.0
    %3091 = vmatpush1.msra.mxu0 %v3067
    %3092 = vmatprep.subr.mxu0 0.0
    %3093 = vmatpush1.msra.mxu0 %v3068
    %3094 = vmatprep.subr.mxu0 0.0
    %3095 = vmatpush1.msra.mxu0 0.0
    %3096 = vmatprep.subr.mxu0 0.0
    %3097 = vmatpush1.msra.mxu0 0.0
    %3098 = vmatprep.subr.mxu0 0.0
    %3099 = vmatpush1.msra.mxu0 0.0
    %3100 = vmatprep.subr.mxu0 0.0
    %3101 = vmatpush1.msra.mxu0 0.0
    %3102 = vmatprep.subr.mxu0 0.0
    %3103 = vmatpush1.msra.mxu0 0.0
    %3104 = vmatprep.subr.mxu0 0.0
    %3105 = vmatpush1.msra.mxu0 0.0
    %3106 = vmatprep.subr.mxu0 0.0
    %3107 = vmatpush1.msra.mxu0 0.0
    %3108 = vmatprep.subr.mxu0 0.0
    %3109 = vmatpush1.msra.mxu0 0.0
    %3110 = vmatprep.subr.mxu0 0.0
    %3111 = vmatpush1.msra.mxu0 0.0
    %3112 = vmatprep.subr.mxu0 0.0
    %3113 = vmatpush1.msra.mxu0 0.0
    %3114 = vmatprep.subr.mxu0 0.0
    %3115 = vmatpush1.msra.mxu0 0.0
    %3116 = vmatprep.subr.mxu0 0.0
    %3117 = vmatpush1.msra.mxu0 0.0
    %3118 = vmatprep.subr.mxu0 0.0
    %3119 = vmatpush1.msra.mxu0 0.0
    %3120 = vmatprep.subr.mxu0 0.0
    %3121 = vmatpush1.msra.mxu0 0.0
    %3122 = vmatprep.subr.mxu0 0.0
    %3123 = vmatpush1.msra.mxu0 0.0
    %3124 = vmatprep.subr.mxu0 0.0
    %3125 = vmatpush1.msra.mxu0 0.0
    %3126 = vmatprep.subr.mxu0 0.0
    %3127 = vmatpush1.msra.mxu0 0.0
    %3128 = vmatprep.subr.mxu0 0.0
    %3129 = vmatpush1.msra.mxu0 0.0
    %3130 = vmatprep.subr.mxu0 0.0
    %3131 = vmatpush1.msra.mxu0 0.0
    %3132 = vmatprep.subr.mxu0 0.0
    %3133 = vmatpush1.msra.mxu0 0.0
    %3134 = vmatprep.subr.mxu0 0.0
    %3135 = vmatpush1.msra.mxu0 0.0
    %3136 = vmatprep.subr.mxu0 0.0
    %3137 = vmatpush1.msra.mxu0 0.0
    %3138 = vmatprep.subr.mxu0 0.0
    %3139 = vmatpush1.msra.mxu0 0.0
    %3140 = vmatprep.subr.mxu0 0.0
    %3141 = vmatpush1.msra.mxu0 0.0
    %3142 = vmatprep.subr.mxu0 0.0
    %3143 = vmatpush1.msra.mxu0 0.0
    %3144 = vmatprep.subr.mxu0 0.0
    %3145 = vmatpush1.msra.mxu0 0.0
    %3146 = vmatprep.subr.mxu0 0.0
    %3147 = vmatpush1.msra.mxu0 0.0
    %3148 = vmatprep.subr.mxu0 0.0
    %3149 = vmatpush1.msra.mxu0 0.0
    %3150 = vmatprep.mubr.f32.mxu0 0.0
    %3151 = vmatmul.mubr.f32.gmra.mrb[0].mxu0 %v3078
    %v3152 = vpop.f32.mrb[0].mxu0
    %v3153 = vadd.f32 %v3075, %v3152
    %v3154 = vpop.f32.mrb[0].mxu0
    %3155 = vmatprep.mubr.f32.mxu0 0.0
    %3156 = vmatmul.mubr.f32.gmra.mrb[0].mxu0 %v3081
    %v3157 = vpop.f32.mrb[0].mxu0
    %v3158 = vadd.f32 %v3075, %v3157
    %v3159 = vpop.f32.mrb[0].mxu0
    %3160 = vmatprep.mubr.f32.mxu0 0.0
    %3161 = vmatmul.mubr.f32.gmra.mrb[0].mxu0 %v3084
    %v3162 = vpop.f32.mrb[0].mxu0
    %v3163 = vadd.f32 %v3075, %v3162
    %v3164 = vpop.f32.mrb[0].mxu0
    %3165 = vdwg.mxu0
    %v3166 = vmul.f32 %v3153, 0.5
    %v3167 = vmul.f32 %v3158, 0.5
    %v3168 = vmul.f32 %v3163, 0.5
    %v3169 = vmul.f32 %v3153, 0.044715
    %v3170 = vmul.f32 %v3158, 0.044715
    %v3171 = vmul.f32 %v3163, 0.044715
    %v3172 = vmul.f32 %v3169, %v3153
    %v3173 = vmul.f32 %v3170, %v3158
    %v3174 = vmul.f32 %v3171, %v3163
    %v3175 = vmul.f32 %v3172, %v3153
    %v3176 = vmul.f32 %v3173, %v3158
    %v3177 = vmul.f32 %v3174, %v3163
    %v3178 = vadd.f32 %v3153, %v3175
    %v3179 = vadd.f32 %v3158, %v3176
    %v3180 = vadd.f32 %v3163, %v3177
    %v3181 = vmul.f32 %v3178, 0.7978846
    %v3182 = vmul.f32 %v3179, 0.7978846
    %v3183 = vmul.f32 %v3180, 0.7978846
    %v3184 = vtanh.pop %v3181
    %v3185 = vtanh.pop %v3182
    %v3186 = vtanh.pop %v3183
    %v3187 = vadd.f32 %v3184, 1.0
    %v3188 = vadd.f32 %v3185, 1.0
    %v3189 = vadd.f32 %v3186, 1.0
    %v3190 = vmul.f32 %v3166, %v3187
    %v3191 = vmul.f32 %v3167, %v3188
    %v3192 = vmul.f32 %v3168, %v3189
    %s3193 = scalar_lea.vmem %s15, 128
    %v3194 = vld [vmem:[%s3193] sm:$0xff]
    %v3195 = vld [vmem:[%s3193 + $0x8] sm:$0xff]
    %v3196 = vld [vmem:[%s3193 + $0x10] sm:$0xff]
    %v3197 = vld [vmem:[%s3193 + $0x18] sm:$0xff]
    %v3198 = vld [vmem:[%s3193 + $0x20] sm:$0xff]
    %v3199 = vld [vmem:[%s3193 + $0x28] sm:$0xff]
    %v3200 = vld [vmem:[%s3193 + $0x30] sm:$0xff]
    %v3201 = vld [vmem:[%s3193 + $0x38] sm:$0xff]
    %v3202 = vld [vmem:[%s3193 + $0x40] sm:$0xff]
    %v3203 = vld [vmem:[%s3193 + $0x48] sm:$0xff]
    %v3204 = vld [vmem:[%s3193 + $0x50] sm:$0xff]
    %v3205 = vld [vmem:[%s3193 + $0x58] sm:$0xff]
    %v3206 = vld [vmem:[%s3193 + $0x60] sm:$0xff]
    %v3207 = vld [vmem:[%s3193 + $0x68] sm:$0xff]
    %v3208 = vld [vmem:[%s3193 + $0x70] sm:$0xff]
    %v3209 = vld [vmem:[%s3193 + $0x78] sm:$0xff]
    %s3210 = scalar_lea.vmem %s16, 1
    %v3211 = vld [vmem:[%s3210] sm:$0x1]
    %v3213 = vlaneseq
    %v3214 = vshrl.u32 %v3213, 7
    %v3215 = vsub.s32 0, %v3214
    %v3216 = vrot.slane %v3211, %v3215
    %3218 = vmatprep.subr.mxu0 0.0
    %3219 = vmatpush1.msra.mxu0 %v3194
    %3220 = vmatprep.subr.mxu0 0.0
    %3221 = vmatpush1.msra.mxu0 %v3195
    %3222 = vmatprep.subr.mxu0 0.0
    %3223 = vmatpush1.msra.mxu0 %v3196
    %3224 = vmatprep.subr.mxu0 0.0
    %3225 = vmatpush1.msra.mxu0 %v3197
    %3226 = vmatprep.subr.mxu0 0.0
    %3227 = vmatpush1.msra.mxu0 %v3198
    %3228 = vmatprep.subr.mxu0 0.0
    %3229 = vmatpush1.msra.mxu0 %v3199
    %3230 = vmatprep.subr.mxu0 0.0
    %3231 = vmatpush1.msra.mxu0 %v3200
    %3232 = vmatprep.subr.mxu0 0.0
    %3233 = vmatpush1.msra.mxu0 %v3201
    %3234 = vmatprep.subr.mxu0 0.0
    %3235 = vmatpush1.msra.mxu0 %v3202
    %3236 = vmatprep.subr.mxu0 0.0
    %3237 = vmatpush1.msra.mxu0 %v3203
    %3238 = vmatprep.subr.mxu0 0.0
    %3239 = vmatpush1.msra.mxu0 %v3204
    %3240 = vmatprep.subr.mxu0 0.0
    %3241 = vmatpush1.msra.mxu0 %v3205
    %3242 = vmatprep.subr.mxu0 0.0
    %3243 = vmatpush1.msra.mxu0 %v3206
    %3244 = vmatprep.subr.mxu0 0.0
    %3245 = vmatpush1.msra.mxu0 %v3207
    %3246 = vmatprep.subr.mxu0 0.0
    %3247 = vmatpush1.msra.mxu0 %v3208
    %3248 = vmatprep.subr.mxu0 0.0
    %3249 = vmatpush1.msra.mxu0 %v3209
    %3250 = vmatprep.subr.mxu0 0.0
    %3251 = vmatpush1.msra.mxu0 0.0
    %3252 = vmatprep.subr.mxu0 0.0
    %3253 = vmatpush1.msra.mxu0 0.0
    %3254 = vmatprep.subr.mxu0 0.0
    %3255 = vmatpush1.msra.mxu0 0.0
    %3256 = vmatprep.subr.mxu0 0.0
    %3257 = vmatpush1.msra.mxu0 0.0
    %3258 = vmatprep.subr.mxu0 0.0
    %3259 = vmatpush1.msra.mxu0 0.0
    %3260 = vmatprep.subr.mxu0 0.0
    %3261 = vmatpush1.msra.mxu0 0.0
    %3262 = vmatprep.subr.mxu0 0.0
    %3263 = vmatpush1.msra.mxu0 0.0
    %3264 = vmatprep.subr.mxu0 0.0
    %3265 = vmatpush1.msra.mxu0 0.0
    %3266 = vmatprep.subr.mxu0 0.0
    %3267 = vmatpush1.msra.mxu0 0.0
    %3268 = vmatprep.subr.mxu0 0.0
    %3269 = vmatpush1.msra.mxu0 0.0
    %3270 = vmatprep.subr.mxu0 0.0
    %3271 = vmatpush1.msra.mxu0 0.0
    %3272 = vmatprep.subr.mxu0 0.0
    %3273 = vmatpush1.msra.mxu0 0.0
    %3274 = vmatprep.subr.mxu0 0.0
    %3275 = vmatpush1.msra.mxu0 0.0
    %3276 = vmatprep.subr.mxu0 0.0
    %3277 = vmatpush1.msra.mxu0 0.0
    %3278 = vmatprep.subr.mxu0 0.0
    %3279 = vmatpush1.msra.mxu0 0.0
    %3280 = vmatprep.subr.mxu0 0.0
    %3281 = vmatpush1.msra.mxu0 0.0
    %3282 = vmatprep.mubr.f32.mxu0 0.0
    %3283 = vmatmul.mubr.f32.gmra.mrb[0].mxu0 %v3190
    %v3284 = vpop.f32.mrb[0].mxu0
    %v3285 = vadd.f32 %v3216, %v3284
    %v3286 = vpop.f32.mrb[0].mxu0
    %3287 = vmatprep.mubr.f32.mxu0 0.0
    %3288 = vmatmul.mubr.f32.gmra.mrb[0].mxu0 %v3191
    %v3289 = vpop.f32.mrb[0].mxu0
    %v3290 = vpop.f32.mrb[0].mxu0
    %3291 = vmatprep.mubr.f32.mxu0 0.0
    %3292 = vmatmul.mubr.f32.gmra.mrb[0].mxu0 %v3192
    %v3293 = vpop.f32.mrb[0].mxu0
    %v3294 = vpop.f32.mrb[0].mxu0
    %3295 = vdwg.mxu0
    %v3296 = vadd.f32 %v3000, %v3285
    %v3297 = vld [vmem:[%s17] sm:$0x1]
    %v3298 = vld [vmem:[%s18] sm:$0x1]
    %v3299 = vsel %vm210, %v3296, 0.0
    %3300 = vadd.xlane.f32.xlu0 %v3299
    %v3301 = vpop.xlane.xlu0 %3300
    %v3302 = vmul.f32 %v3301, %v214
    %v3303 = vsub.f32 %v3296, %v3302
    %v3304 = vmul.f32 %v3303, %v3303
    %v3305 = vsel %vm210, %v3304, 0.0
    %3306 = vadd.xlane.f32.xlu0 %v3305
    %v3307 = vpop.xlane.xlu0 %3306
    %v3308 = vmul.f32 %v3307, %v214
    %v3309 = vadd.f32 %v3308, 1e-06
    %v3310 = vrsqrt.pop %v3309
    %v3311 = vmul.f32 %v3303, %v3310
    %v3312 = vmul.f32 %v3311, %v3297
    %v3313 = vadd.f32 %v3312, %v3298
    %v3314 = vld [vmem:[%s19] sm:$0xff]
    %v3315 = vld [vmem:[%s19 + $0x8] sm:$0xff]
    %v3316 = vld [vmem:[%s19 + $0x10] sm:$0xff]
    %v3317 = vld [vmem:[%s19 + $0x18] sm:$0xff]
    %v3318 = vld [vmem:[%s20] sm:$0x1]
    %v3320 = vsel %vm203, %v3313, 0
    %3322 = vmatprep.subr.mxu0 0.0
    %3323 = vmatpush1.msra.mxu0 %v3314
    %3324 = vmatprep.subr.mxu0 0.0
    %3325 = vmatpush1.msra.mxu0 %v3315
    %3326 = vmatprep.subr.mxu0 0.0
    %3327 = vmatpush1.msra.mxu0 %v3316
    %3328 = vmatprep.subr.mxu0 0.0
    %3329 = vmatpush1.msra.mxu0 %v3317
    %3330 = vmatprep.subr.mxu0 0.0
    %3331 = vmatpush1.msra.mxu0 0.0
    %3332 = vmatprep.subr.mxu0 0.0
    %3333 = vmatpush1.msra.mxu0 0.0
    %3334 = vmatprep.subr.mxu0 0.0
    %3335 = vmatpush1.msra.mxu0 0.0
    %3336 = vmatprep.subr.mxu0 0.0
    %3337 = vmatpush1.msra.mxu0 0.0
    %3338 = vmatprep.subr.mxu0 0.0
    %3339 = vmatpush1.msra.mxu0 0.0
    %3340 = vmatprep.subr.mxu0 0.0
    %3341 = vmatpush1.msra.mxu0 0.0
    %3342 = vmatprep.subr.mxu0 0.0
    %3343 = vmatpush1.msra.mxu0 0.0
    %3344 = vmatprep.subr.mxu0 0.0
    %3345 = vmatpush1.msra.mxu0 0.0
    %3346 = vmatprep.subr.mxu0 0.0
    %3347 = vmatpush1.msra.mxu0 0.0
    %3348 = vmatprep.subr.mxu0 0.0
    %3349 = vmatpush1.msra.mxu0 0.0
    %3350 = vmatprep.subr.mxu0 0.0
    %3351 = vmatpush1.msra.mxu0 0.0
    %3352 = vmatprep.subr.mxu0 0.0
    %3353 = vmatpush1.msra.mxu0 0.0
    %3354 = vmatprep.subr.mxu0 0.0
    %3355 = vmatpush1.msra.mxu0 0.0
    %3356 = vmatprep.subr.mxu0 0.0
    %3357 = vmatpush1.msra.mxu0 0.0
    %3358 = vmatprep.subr.mxu0 0.0
    %3359 = vmatpush1.msra.mxu0 0.0
    %3360 = vmatprep.subr.mxu0 0.0
    %3361 = vmatpush1.msra.mxu0 0.0
    %3362 = vmatprep.subr.mxu0 0.0
    %3363 = vmatpush1.msra.mxu0 0.0
    %3364 = vmatprep.subr.mxu0 0.0
    %3365 = vmatpush1.msra.mxu0 0.0
    %3366 = vmatprep.subr.mxu0 0.0
    %3367 = vmatpush1.msra.mxu0 0.0
    %3368 = vmatprep.subr.mxu0 0.0
    %3369 = vmatpush1.msra.mxu0 0.0
    %3370 = vmatprep.subr.mxu0 0.0
    %3371 = vmatpush1.msra.mxu0 0.0
    %3372 = vmatprep.subr.mxu0 0.0
    %3373 = vmatpush1.msra.mxu0 0.0
    %3374 = vmatprep.subr.mxu0 0.0
    %3375 = vmatpush1.msra.mxu0 0.0
    %3376 = vmatprep.subr.mxu0 0.0
    %3377 = vmatpush1.msra.mxu0 0.0
    %3378 = vmatprep.subr.mxu0 0.0
    %3379 = vmatpush1.msra.mxu0 0.0
    %3380 = vmatprep.subr.mxu0 0.0
    %3381 = vmatpush1.msra.mxu0 0.0
    %3382 = vmatprep.subr.mxu0 0.0
    %3383 = vmatpush1.msra.mxu0 0.0
    %3384 = vmatprep.subr.mxu0 0.0
    %3385 = vmatpush1.msra.mxu0 0.0
    %3386 = vmatprep.mubr.f32.mxu0 0.0
    %3387 = vmatmul.mubr.f32.gmra.mrb[0].mxu0 %v3320
    %v3388 = vpop.f32.mrb[0].mxu0
    %v3389 = vadd.f32 %v3318, %v3388
    %v3390 = vpop.f32.mrb[0].mxu0
    %3391 = vdwg.mxu0
    %v3392 = vadd.f32 %v178, %v187
    %v3393 = vadd.f32 %v183, %v188
    %v3396 = vrot.slane %v3392, 7
    %v3397 = vrot.slane %v3393, 7
    %v3398 = vsel %vm193, %v3396, %v3397
    %v3402 = vsel %vm193, %v186, %v3396
    %v3403 = vsel %vm203, %v3402, 0.0
    %3404 = vadd.xlane.f32.xlu0 %v3403
    %v3405 = vpop.xlane.xlu0 %3404
    %v3406 = vsel %vm203, %v3398, 0.0
    %3407 = vadd.xlane.f32.xlu0 %v3406
    %v3408 = vpop.xlane.xlu0 %3407
    %v3409 = vsel %vm210, %v3397, 0.0
    %3410 = vadd.xlane.f32.xlu0 %v3409
    %v3411 = vpop.xlane.xlu0 %3410
    %v3412 = vmul.f32 %v3405, %v214
    %v3413 = vmul.f32 %v3408, %v214
    %v3414 = vmul.f32 %v3411, %v214
    %v3415 = vsub.f32 %v3402, %v3412
    %v3416 = vsub.f32 %v3398, %v3413
    %v3417 = vsub.f32 %v3397, %v3414
    %v3418 = vmul.f32 %v3415, %v3415
    %v3419 = vmul.f32 %v3416, %v3416
    %v3420 = vmul.f32 %v3417, %v3417
    %v3421 = vsel %vm203, %v3418, 0.0
    %3422 = vadd.xlane.f32.xlu0 %v3421
    %v3423 = vpop.xlane.xlu0 %3422
    %v3424 = vsel %vm203, %v3419, 0.0
    %3425 = vadd.xlane.f32.xlu0 %v3424
    %v3426 = vpop.xlane.xlu0 %3425
    %v3427 = vsel %vm210, %v3420, 0.0
    %3428 = vadd.xlane.f32.xlu0 %v3427
    %v3429 = vpop.xlane.xlu0 %3428
    %v3430 = vmul.f32 %v3423, %v214
    %v3431 = vmul.f32 %v3426, %v214
    %v3432 = vmul.f32 %v3429, %v214
    %v3433 = vadd.f32 %v3430, 1e-06
    %v3434 = vadd.f32 %v3431, 1e-06
    %v3435 = vadd.f32 %v3432, 1e-06
    %v3436 = vrsqrt.pop %v3433
    %v3437 = vrsqrt.pop %v3434
    %v3438 = vrsqrt.pop %v3435
    %v3439 = vmul.f32 %v3415, %v3436
    %v3440 = vmul.f32 %v3416, %v3437
    %v3441 = vmul.f32 %v3417, %v3438
    %v3442 = vmul.f32 %v3439, %v249
    %v3443 = vmul.f32 %v3440, %v249
    %v3444 = vmul.f32 %v3441, %v249
    %v3445 = vadd.f32 %v3442, %v258
    %v3446 = vadd.f32 %v3443, %v258
    %v3447 = vadd.f32 %v3444, %v258
    %v3449 = vsel %vm203, %v3445, 0
    %v3452 = vsel %vm203, %v3446, 0
    %v3455 = vsel %vm203, %v3447, 0
    %3457 = vmatprep.subr.mxu0 0.0
    %3458 = vmatpush1.msra.mxu0 %v263
    %3459 = vmatprep.subr.mxu0 0.0
    %3460 = vmatpush1.msra.mxu0 %v264
    %3461 = vmatprep.subr.mxu0 0.0
    %3462 = vmatpush1.msra.mxu0 %v265
    %3463 = vmatprep.subr.mxu0 0.0
    %3464 = vmatpush1.msra.mxu0 %v266
    %3465 = vmatprep.subr.mxu0 0.0
    %3466 = vmatpush1.msra.mxu0 0.0
    %3467 = vmatprep.subr.mxu0 0.0
    %3468 = vmatpush1.msra.mxu0 0.0
    %3469 = vmatprep.subr.mxu0 0.0
    %3470 = vmatpush1.msra.mxu0 0.0
    %3471 = vmatprep.subr.mxu0 0.0
    %3472 = vmatpush1.msra.mxu0 0.0
    %3473 = vmatprep.subr.mxu0 0.0
    %3474 = vmatpush1.msra.mxu0 0.0
    %3475 = vmatprep.subr.mxu0 0.0
    %3476 = vmatpush1.msra.mxu0 0.0
    %3477 = vmatprep.subr.mxu0 0.0
    %3478 = vmatpush1.msra.mxu0 0.0
    %3479 = vmatprep.subr.mxu0 0.0
    %3480 = vmatpush1.msra.mxu0 0.0
    %3481 = vmatprep.subr.mxu0 0.0
    %3482 = vmatpush1.msra.mxu0 0.0
    %3483 = vmatprep.subr.mxu0 0.0
    %3484 = vmatpush1.msra.mxu0 0.0
    %3485 = vmatprep.subr.mxu0 0.0
    %3486 = vmatpush1.msra.mxu0 0.0
    %3487 = vmatprep.subr.mxu0 0.0
    %3488 = vmatpush1.msra.mxu0 0.0
    %3489 = vmatprep.subr.mxu0 0.0
    %3490 = vmatpush1.msra.mxu0 0.0
    %3491 = vmatprep.subr.mxu0 0.0
    %3492 = vmatpush1.msra.mxu0 0.0
    %3493 = vmatprep.subr.mxu0 0.0
    %3494 = vmatpush1.msra.mxu0 0.0
    %3495 = vmatprep.subr.mxu0 0.0
    %3496 = vmatpush1.msra.mxu0 0.0
    %3497 = vmatprep.subr.mxu0 0.0
    %3498 = vmatpush1.msra.mxu0 0.0
    %3499 = vmatprep.subr.mxu0 0.0
    %3500 = vmatpush1.msra.mxu0 0.0
    %3501 = vmatprep.subr.mxu0 0.0
    %3502 = vmatpush1.msra.mxu0 0.0
    %3503 = vmatprep.subr.mxu0 0.0
    %3504 = vmatpush1.msra.mxu0 0.0
    %3505 = vmatprep.subr.mxu0 0.0
    %3506 = vmatpush1.msra.mxu0 0.0
    %3507 = vmatprep.subr.mxu0 0.0
    %3508 = vmatpush1.msra.mxu0 0.0
    %3509 = vmatprep.subr.mxu0 0.0
    %3510 = vmatpush1.msra.mxu0 0.0
    %3511 = vmatprep.subr.mxu0 0.0
    %3512 = vmatpush1.msra.mxu0 0.0
    %3513 = vmatprep.subr.mxu0 0.0
    %3514 = vmatpush1.msra.mxu0 0.0
    %3515 = vmatprep.subr.mxu0 0.0
    %3516 = vmatpush1.msra.mxu0 0.0
    %3517 = vmatprep.subr.mxu0 0.0
    %3518 = vmatpush1.msra.mxu0 0.0
    %3519 = vmatprep.subr.mxu0 0.0
    %3520 = vmatpush1.msra.mxu0 0.0
    %3521 = vmatprep.mubr.f32.mxu0 0.0
    %3522 = vmatmul.mubr.f32.gmra.mrb[0].mxu0 %v3449
    %v3523 = vpop.f32.mrb[0].mxu0
    %v3524 = vadd.f32 %v272, %v3523
    %v3525 = vpop.f32.mrb[0].mxu0
    %3526 = vmatprep.mubr.f32.mxu0 0.0
    %3527 = vmatmul.mubr.f32.gmra.mrb[0].mxu0 %v3452
    %v3528 = vpop.f32.mrb[0].mxu0
    %v3529 = vadd.f32 %v272, %v3528
    %v3530 = vpop.f32.mrb[0].mxu0
    %3531 = vmatprep.mubr.f32.mxu0 0.0
    %3532 = vmatmul.mubr.f32.gmra.mrb[0].mxu0 %v3455
    %v3533 = vpop.f32.mrb[0].mxu0
    %v3534 = vadd.f32 %v272, %v3533
    %v3535 = vpop.f32.mrb[0].mxu0
    %3536 = vdwg.mxu0
    %3540 = vrot.lane.b32.xlu0 %v3524, 96
    %v3541 = vpop.permute.xlu0 %3540
    %3542 = vrot.lane.b32.xlu0 %v3529, 96
    %v3543 = vpop.permute.xlu0 %3542
    %3544 = vrot.lane.b32.xlu0 %v3534, 96
    %v3545 = vpop.permute.xlu0 %3544
    %v3546 = vsel %vm372, %v3524, 0
    %v3548 = vsel %vm372, %v3529, 0
    %v3550 = vsel %vm372, %v3534, 0
    %v3552 = vsel %vm372, %v3541, 0
    %v3554 = vsel %vm372, %v3543, 0
    %v3556 = vsel %vm372, %v3545, 0
    %3558 = vmatprep.subr.mxu0 0.0
    %3559 = vmatpush1.xpose.msra.mxu0 %v3552
    %3560 = vmatprep.subr.mxu0 0.0
    %3561 = vmatpush1.xpose.msra.mxu0 %v3554
    %3562 = vmatprep.subr.mxu0 0.0
    %3563 = vmatpush1.xpose.msra.mxu0 %v3556
    %3564 = vmatprep.subr.mxu0 0.0
    %3565 = vmatpush1.xpose.msra.mxu0 0.0
    %3566 = vmatprep.subr.mxu0 0.0
    %3567 = vmatpush1.xpose.msra.mxu0 0.0
    %3568 = vmatprep.subr.mxu0 0.0
    %3569 = vmatpush1.xpose.msra.mxu0 0.0
    %3570 = vmatprep.subr.mxu0 0.0
    %3571 = vmatpush1.xpose.msra.mxu0 0.0
    %3572 = vmatprep.subr.mxu0 0.0
    %3573 = vmatpush1.xpose.msra.mxu0 0.0
    %3574 = vmatprep.subr.mxu0 0.0
    %3575 = vmatpush1.xpose.msra.mxu0 0.0
    %3576 = vmatprep.subr.mxu0 0.0
    %3577 = vmatpush1.xpose.msra.mxu0 0.0
    %3578 = vmatprep.subr.mxu0 0.0
    %3579 = vmatpush1.xpose.msra.mxu0 0.0
    %3580 = vmatprep.subr.mxu0 0.0
    %3581 = vmatpush1.xpose.msra.mxu0 0.0
    %3582 = vmatprep.subr.mxu0 0.0
    %3583 = vmatpush1.xpose.msra.mxu0 0.0
    %3584 = vmatprep.subr.mxu0 0.0
    %3585 = vmatpush1.xpose.msra.mxu0 0.0
    %3586 = vmatprep.subr.mxu0 0.0
    %3587 = vmatpush1.xpose.msra.mxu0 0.0
    %3588 = vmatprep.subr.mxu0 0.0
    %3589 = vmatpush1.xpose.msra.mxu0 0.0
    %3590 = vmatprep.subr.mxu0 0.0
    %3591 = vmatpush1.xpose.msra.mxu0 0.0
    %3592 = vmatprep.subr.mxu0 0.0
    %3593 = vmatpush1.xpose.msra.mxu0 0.0
    %3594 = vmatprep.subr.mxu0 0.0
    %3595 = vmatpush1.xpose.msra.mxu0 0.0
    %3596 = vmatprep.subr.mxu0 0.0
    %3597 = vmatpush1.xpose.msra.mxu0 0.0
    %3598 = vmatprep.subr.mxu0 0.0
    %3599 = vmatpush1.xpose.msra.mxu0 0.0
    %3600 = vmatprep.subr.mxu0 0.0
    %3601 = vmatpush1.xpose.msra.mxu0 0.0
    %3602 = vmatprep.subr.mxu0 0.0
    %3603 = vmatpush1.xpose.msra.mxu0 0.0
    %3604 = vmatprep.subr.mxu0 0.0
    %3605 = vmatpush1.xpose.msra.mxu0 0.0
    %3606 = vmatprep.subr.mxu0 0.0
    %3607 = vmatpush1.xpose.msra.mxu0 0.0
    %3608 = vmatprep.subr.mxu0 0.0
    %3609 = vmatpush1.xpose.msra.mxu0 0.0
    %3610 = vmatprep.subr.mxu0 0.0
    %3611 = vmatpush1.xpose.msra.mxu0 0.0
    %3612 = vmatprep.subr.mxu0 0.0
    %3613 = vmatpush1.xpose.msra.mxu0 0.0
    %3614 = vmatprep.subr.mxu0 0.0
    %3615 = vmatpush1.xpose.msra.mxu0 0.0
    %3616 = vmatprep.subr.mxu0 0.0
    %3617 = vmatpush1.xpose.msra.mxu0 0.0
    %3618 = vmatprep.subr.mxu0 0.0
    %3619 = vmatpush1.xpose.msra.mxu0 0.0
    %3620 = vmatprep.subr.mxu0 0.0
    %3621 = vmatpush1.xpose.msra.mxu0 0.0
    %3622 = vmatprep.mubr.f32.mxu0 0.0
    %3623 = vmatmul.mubr.f32.gmra.mrb[0].mxu0 %v3546
    %v3624 = vpop.f32.mrb[0].mxu0
    %v3625 = vadd.f32 0.0, %v3624
    %v3626 = vpop.f32.mrb[0].mxu0
    %3627 = vmatprep.mubr.f32.mxu0 0.0
    %3628 = vmatmul.mubr.f32.gmra.mrb[0].mxu0 %v3548
    %v3629 = vpop.f32.mrb[0].mxu0
    %v3630 = vadd.f32 0.0, %v3629
    %v3631 = vpop.f32.mrb[0].mxu0
    %3632 = vmatprep.mubr.f32.mxu0 0.0
    %3633 = vmatmul.mubr.f32.gmra.mrb[0].mxu0 %v3550
    %v3634 = vpop.f32.mrb[0].mxu0
    %v3635 = vadd.f32 0.0, %v3634
    %v3636 = vpop.f32.mrb[0].mxu0
    %3637 = vdwg.mxu0
    %v3638 = vsel %vm465, %v3625, -inf
    %3639 = vmax.xlane.f32.xlu0 %v3638
    %v3640 = vpop.xlane.xlu0 %3639
    %v3641 = vsel %vm465, %v3630, -inf
    %3642 = vmax.xlane.f32.xlu0 %v3641
    %v3643 = vpop.xlane.xlu0 %3642
    %v3644 = vsel %vm472, %v3635, -inf
    %3645 = vmax.xlane.f32.xlu0 %v3644
    %v3646 = vpop.xlane.xlu0 %3645
    %v3647 = vsub.f32 %v3625, %v3640
    %v3648 = vsub.f32 %v3630, %v3643
    %v3649 = vsub.f32 %v3635, %v3646
    %v3650 = vmul.f32 %v3647, 1.442695
    %v3651 = vpow.pop %v3650
    %v3652 = vmul.f32 %v3648, 1.442695
    %v3653 = vpow.pop %v3652
    %v3654 = vmul.f32 %v3649, 1.442695
    %v3655 = vpow.pop %v3654
    %v3656 = vsel %vm465, %v3651, 0.0
    %3657 = vadd.xlane.f32.xlu0 %v3656
    %v3658 = vpop.xlane.xlu0 %3657
    %v3659 = vsel %vm465, %v3653, 0.0
    %3660 = vadd.xlane.f32.xlu0 %v3659
    %v3661 = vpop.xlane.xlu0 %3660
    %v3662 = vsel %vm472, %v3655, 0.0
    %3663 = vadd.xlane.f32.xlu0 %v3662
    %v3664 = vpop.xlane.xlu0 %3663
    %v3665 = vrcp.pop %v3658
    %v3666 = vrcp.pop %v3661
    %v3667 = vrcp.pop %v3664
    %v3668 = vmul.f32 %v3651, %v3665
    %v3669 = vmul.f32 %v3653, %v3666
    %v3670 = vmul.f32 %v3655, %v3667
    %3671 = vrot.lane.b32.xlu0 %v3524, 64
    %v3672 = vpop.permute.xlu0 %3671
    %3673 = vrot.lane.b32.xlu0 %v3529, 64
    %v3674 = vpop.permute.xlu0 %3673
    %3675 = vrot.lane.b32.xlu0 %v3534, 64
    %v3676 = vpop.permute.xlu0 %3675
    %v3680 = vsel %vm465, %v3668, 0
    %v3683 = vsel %vm465, %v3669, 0
    %v3686 = vsel %vm465, %v3670, 0
    %v3688 = vsel %vm193, %v3676, 0
    %3690 = vmatprep.subr.mxu0 0.0
    %3691 = vmatpush1.msra.mxu0 %v3672
    %3692 = vmatprep.subr.mxu0 0.0
    %3693 = vmatpush1.msra.mxu0 %v3674
    %3694 = vmatprep.subr.mxu0 0.0
    %3695 = vmatpush1.msra.mxu0 %v3688
    %3696 = vmatprep.subr.mxu0 0.0
    %3697 = vmatpush1.msra.mxu0 0.0
    %3698 = vmatprep.subr.mxu0 0.0
    %3699 = vmatpush1.msra.mxu0 0.0
    %3700 = vmatprep.subr.mxu0 0.0
    %3701 = vmatpush1.msra.mxu0 0.0
    %3702 = vmatprep.subr.mxu0 0.0
    %3703 = vmatpush1.msra.mxu0 0.0
    %3704 = vmatprep.subr.mxu0 0.0
    %3705 = vmatpush1.msra.mxu0 0.0
    %3706 = vmatprep.subr.mxu0 0.0
    %3707 = vmatpush1.msra.mxu0 0.0
    %3708 = vmatprep.subr.mxu0 0.0
    %3709 = vmatpush1.msra.mxu0 0.0
    %3710 = vmatprep.subr.mxu0 0.0
    %3711 = vmatpush1.msra.mxu0 0.0
    %3712 = vmatprep.subr.mxu0 0.0
    %3713 = vmatpush1.msra.mxu0 0.0
    %3714 = vmatprep.subr.mxu0 0.0
    %3715 = vmatpush1.msra.mxu0 0.0
    %3716 = vmatprep.subr.mxu0 0.0
    %3717 = vmatpush1.msra.mxu0 0.0
    %3718 = vmatprep.subr.mxu0 0.0
    %3719 = vmatpush1.msra.mxu0 0.0
    %3720 = vmatprep.subr.mxu0 0.0
    %3721 = vmatpush1.msra.mxu0 0.0
    %3722 = vmatprep.subr.mxu0 0.0
    %3723 = vmatpush1.msra.mxu0 0.0
    %3724 = vmatprep.subr.mxu0 0.0
    %3725 = vmatpush1.msra.mxu0 0.0
    %3726 = vmatprep.subr.mxu0 0.0
    %3727 = vmatpush1.msra.mxu0 0.0
    %3728 = vmatprep.subr.mxu0 0.0
    %3729 = vmatpush1.msra.mxu0 0.0
    %3730 = vmatprep.subr.mxu0 0.0
    %3731 = vmatpush1.msra.mxu0 0.0
    %3732 = vmatprep.subr.mxu0 0.0
    %3733 = vmatpush1.msra.mxu0 0.0
    %3734 = vmatprep.subr.mxu0 0.0
    %3735 = vmatpush1.msra.mxu0 0.0
    %3736 = vmatprep.subr.mxu0 0.0
    %3737 = vmatpush1.msra.mxu0 0.0
    %3738 = vmatprep.subr.mxu0 0.0
    %3739 = vmatpush1.msra.mxu0 0.0
    %3740 = vmatprep.subr.mxu0 0.0
    %3741 = vmatpush1.msra.mxu0 0.0
    %3742 = vmatprep.subr.mxu0 0.0
    %3743 = vmatpush1.msra.mxu0 0.0
    %3744 = vmatprep.subr.mxu0 0.0
    %3745 = vmatpush1.msra.mxu0 0.0
    %3746 = vmatprep.subr.mxu0 0.0
    %3747 = vmatpush1.msra.mxu0 0.0
    %3748 = vmatprep.subr.mxu0 0.0
    %3749 = vmatpush1.msra.mxu0 0.0
    %3750 = vmatprep.subr.mxu0 0.0
    %3751 = vmatpush1.msra.mxu0 0.0
    %3752 = vmatprep.subr.mxu0 0.0
    %3753 = vmatpush1.msra.mxu0 0.0
    %3754 = vmatprep.mubr.f32.mxu0 0.0
    %3755 = vmatmul.mubr.f32.gmra.mrb[0].mxu0 %v3680
    %v3756 = vpop.f32.mrb[0].mxu0
    %v3757 = vadd.f32 0.0, %v3756
    %v3758 = vpop.f32.mrb[0].mxu0
    %3759 = vmatprep.mubr.f32.mxu0 0.0
    %3760 = vmatmul.mubr.f32.gmra.mrb[0].mxu0 %v3683
    %v3761 = vpop.f32.mrb[0].mxu0
    %v3762 = vadd.f32 0.0, %v3761
    %v3763 = vpop.f32.mrb[0].mxu0
    %3764 = vmatprep.mubr.f32.mxu0 0.0
    %3765 = vmatmul.mubr.f32.gmra.mrb[0].mxu0 %v3686
    %v3766 = vpop.f32.mrb[0].mxu0
    %v3767 = vadd.f32 0.0, %v3766
    %v3768 = vpop.f32.mrb[0].mxu0
    %3769 = vdwg.mxu0
    %3770 = vrot.lane.b32.xlu0 %v3524, 120
    %v3771 = vpop.permute.xlu0 %3770
    %3772 = vrot.lane.b32.xlu0 %v3529, 120
    %v3773 = vpop.permute.xlu0 %3772
    %3774 = vrot.lane.b32.xlu0 %v3534, 120
    %v3775 = vpop.permute.xlu0 %3774
    %3776 = vrot.lane.b32.xlu0 %v3524, 88
    %v3777 = vpop.permute.xlu0 %3776
    %3778 = vrot.lane.b32.xlu0 %v3529, 88
    %v3779 = vpop.permute.xlu0 %3778
    %3780 = vrot.lane.b32.xlu0 %v3534, 88
    %v3781 = vpop.permute.xlu0 %3780
    %v3782 = vsel %vm372, %v3771, 0
    %v3784 = vsel %vm372, %v3773, 0
    %v3786 = vsel %vm372, %v3775, 0
    %v3788 = vsel %vm372, %v3777, 0
    %v3790 = vsel %vm372, %v3779, 0
    %v3792 = vsel %vm372, %v3781, 0
    %3794 = vmatprep.subr.mxu0 0.0
    %3795 = vmatpush1.xpose.msra.mxu0 %v3788
    %3796 = vmatprep.subr.mxu0 0.0
    %3797 = vmatpush1.xpose.msra.mxu0 %v3790
    %3798 = vmatprep.subr.mxu0 0.0
    %3799 = vmatpush1.xpose.msra.mxu0 %v3792
    %3800 = vmatprep.subr.mxu0 0.0
    %3801 = vmatpush1.xpose.msra.mxu0 0.0
    %3802 = vmatprep.subr.mxu0 0.0
    %3803 = vmatpush1.xpose.msra.mxu0 0.0
    %3804 = vmatprep.subr.mxu0 0.0
    %3805 = vmatpush1.xpose.msra.mxu0 0.0
    %3806 = vmatprep.subr.mxu0 0.0
    %3807 = vmatpush1.xpose.msra.mxu0 0.0
    %3808 = vmatprep.subr.mxu0 0.0
    %3809 = vmatpush1.xpose.msra.mxu0 0.0
    %3810 = vmatprep.subr.mxu0 0.0
    %3811 = vmatpush1.xpose.msra.mxu0 0.0
    %3812 = vmatprep.subr.mxu0 0.0
    %3813 = vmatpush1.xpose.msra.mxu0 0.0
    %3814 = vmatprep.subr.mxu0 0.0
    %3815 = vmatpush1.xpose.msra.mxu0 0.0
    %3816 = vmatprep.subr.mxu0 0.0
    %3817 = vmatpush1.xpose.msra.mxu0 0.0
    %3818 = vmatprep.subr.mxu0 0.0
    %3819 = vmatpush1.xpose.msra.mxu0 0.0
    %3820 = vmatprep.subr.mxu0 0.0
    %3821 = vmatpush1.xpose.msra.mxu0 0.0
    %3822 = vmatprep.subr.mxu0 0.0
    %3823 = vmatpush1.xpose.msra.mxu0 0.0
    %3824 = vmatprep.subr.mxu0 0.0
    %3825 = vmatpush1.xpose.msra.mxu0 0.0
    %3826 = vmatprep.subr.mxu0 0.0
    %3827 = vmatpush1.xpose.msra.mxu0 0.0
    %3828 = vmatprep.subr.mxu0 0.0
    %3829 = vmatpush1.xpose.msra.mxu0 0.0
    %3830 = vmatprep.subr.mxu0 0.0
    %3831 = vmatpush1.xpose.msra.mxu0 0.0
    %3832 = vmatprep.subr.mxu0 0.0
    %3833 = vmatpush1.xpose.msra.mxu0 0.0
    %3834 = vmatprep.subr.mxu0 0.0
    %3835 = vmatpush1.xpose.msra.mxu0 0.0
    %3836 = vmatprep.subr.mxu0 0.0
    %3837 = vmatpush1.xpose.msra.mxu0 0.0
    %3838 = vmatprep.subr.mxu0 0.0
    %3839 = vmatpush1.xpose.msra.mxu0 0.0
    %3840 = vmatprep.subr.mxu0 0.0
    %3841 = vmatpush1.xpose.msra.mxu0 0.0
    %3842 = vmatprep.subr.mxu0 0.0
    %3843 = vmatpush1.xpose.msra.mxu0 0.0
    %3844 = vmatprep.subr.mxu0 0.0
    %3845 = vmatpush1.xpose.msra.mxu0 0.0
    %3846 = vmatprep.subr.mxu0 0.0
    %3847 = vmatpush1.xpose.msra.mxu0 0.0
    %3848 = vmatprep.subr.mxu0 0.0
    %3849 = vmatpush1.xpose.msra.mxu0 0.0
    %3850 = vmatprep.subr.mxu0 0.0
    %3851 = vmatpush1.xpose.msra.mxu0 0.0
    %3852 = vmatprep.subr.mxu0 0.0
    %3853 = vmatpush1.xpose.msra.mxu0 0.0
    %3854 = vmatprep.subr.mxu0 0.0
    %3855 = vmatpush1.xpose.msra.mxu0 0.0
    %3856 = vmatprep.subr.mxu0 0.0
    %3857 = vmatpush1.xpose.msra.mxu0 0.0
    %3858 = vmatprep.mubr.f32.mxu0 0.0
    %3859 = vmatmul.mubr.f32.gmra.mrb[0].mxu0 %v3782
    %v3860 = vpop.f32.mrb[0].mxu0
    %v3861 = vadd.f32 0.0, %v3860
    %v3862 = vpop.f32.mrb[0].mxu0
    %3863 = vmatprep.mubr.f32.mxu0 0.0
    %3864 = vmatmul.mubr.f32.gmra.mrb[0].mxu0 %v3784
    %v3865 = vpop.f32.mrb[0].mxu0
    %v3866 = vadd.f32 0.0, %v3865
    %v3867 = vpop.f32.mrb[0].mxu0
    %3868 = vmatprep.mubr.f32.mxu0 0.0
    %3869 = vmatmul.mubr.f32.gmra.mrb[0].mxu0 %v3786
    %v3870 = vpop.f32.mrb[0].mxu0
    %v3871 = vadd.f32 0.0, %v3870
    %v3872 = vpop.f32.mrb[0].mxu0
    %3873 = vdwg.mxu0
    %v3874 = vsel %vm465, %v3861, -inf
    %3875 = vmax.xlane.f32.xlu0 %v3874
    %v3876 = vpop.xlane.xlu0 %3875
    %v3877 = vsel %vm465, %v3866, -inf
    %3878 = vmax.xlane.f32.xlu0 %v3877
    %v3879 = vpop.xlane.xlu0 %3878
    %v3880 = vsel %vm472, %v3871, -inf
    %3881 = vmax.xlane.f32.xlu0 %v3880
    %v3882 = vpop.xlane.xlu0 %3881
    %v3883 = vsub.f32 %v3861, %v3876
    %v3884 = vsub.f32 %v3866, %v3879
    %v3885 = vsub.f32 %v3871, %v3882
    %v3886 = vmul.f32 %v3883, 1.442695
    %v3887 = vpow.pop %v3886
    %v3888 = vmul.f32 %v3884, 1.442695
    %v3889 = vpow.pop %v3888
    %v3890 = vmul.f32 %v3885, 1.442695
    %v3891 = vpow.pop %v3890
    %v3892 = vsel %vm465, %v3887, 0.0
    %3893 = vadd.xlane.f32.xlu0 %v3892
    %v3894 = vpop.xlane.xlu0 %3893
    %v3895 = vsel %vm465, %v3889, 0.0
    %3896 = vadd.xlane.f32.xlu0 %v3895
    %v3897 = vpop.xlane.xlu0 %3896
    %v3898 = vsel %vm472, %v3891, 0.0
    %3899 = vadd.xlane.f32.xlu0 %v3898
    %v3900 = vpop.xlane.xlu0 %3899
    %v3901 = vrcp.pop %v3894
    %v3902 = vrcp.pop %v3897
    %v3903 = vrcp.pop %v3900
    %v3904 = vmul.f32 %v3887, %v3901
    %v3905 = vmul.f32 %v3889, %v3902
    %v3906 = vmul.f32 %v3891, %v3903
    %3907 = vrot.lane.b32.xlu0 %v3524, 56
    %v3908 = vpop.permute.xlu0 %3907
    %3909 = vrot.lane.b32.xlu0 %v3529, 56
    %v3910 = vpop.permute.xlu0 %3909
    %3911 = vrot.lane.b32.xlu0 %v3534, 56
    %v3912 = vpop.permute.xlu0 %3911
    %v3916 = vsel %vm465, %v3904, 0
    %v3919 = vsel %vm465, %v3905, 0
    %v3922 = vsel %vm465, %v3906, 0
    %v3924 = vsel %vm193, %v3912, 0
    %3926 = vmatprep.subr.mxu0 0.0
    %3927 = vmatpush1.msra.mxu0 %v3908
    %3928 = vmatprep.subr.mxu0 0.0
    %3929 = vmatpush1.msra.mxu0 %v3910
    %3930 = vmatprep.subr.mxu0 0.0
    %3931 = vmatpush1.msra.mxu0 %v3924
    %3932 = vmatprep.subr.mxu0 0.0
    %3933 = vmatpush1.msra.mxu0 0.0
    %3934 = vmatprep.subr.mxu0 0.0
    %3935 = vmatpush1.msra.mxu0 0.0
    %3936 = vmatprep.subr.mxu0 0.0
    %3937 = vmatpush1.msra.mxu0 0.0
    %3938 = vmatprep.subr.mxu0 0.0
    %3939 = vmatpush1.msra.mxu0 0.0
    %3940 = vmatprep.subr.mxu0 0.0
    %3941 = vmatpush1.msra.mxu0 0.0
    %3942 = vmatprep.subr.mxu0 0.0
    %3943 = vmatpush1.msra.mxu0 0.0
    %3944 = vmatprep.subr.mxu0 0.0
    %3945 = vmatpush1.msra.mxu0 0.0
    %3946 = vmatprep.subr.mxu0 0.0
    %3947 = vmatpush1.msra.mxu0 0.0
    %3948 = vmatprep.subr.mxu0 0.0
    %3949 = vmatpush1.msra.mxu0 0.0
    %3950 = vmatprep.subr.mxu0 0.0
    %3951 = vmatpush1.msra.mxu0 0.0
    %3952 = vmatprep.subr.mxu0 0.0
    %3953 = vmatpush1.msra.mxu0 0.0
    %3954 = vmatprep.subr.mxu0 0.0
    %3955 = vmatpush1.msra.mxu0 0.0
    %3956 = vmatprep.subr.mxu0 0.0
    %3957 = vmatpush1.msra.mxu0 0.0
    %3958 = vmatprep.subr.mxu0 0.0
    %3959 = vmatpush1.msra.mxu0 0.0
    %3960 = vmatprep.subr.mxu0 0.0
    %3961 = vmatpush1.msra.mxu0 0.0
    %3962 = vmatprep.subr.mxu0 0.0
    %3963 = vmatpush1.msra.mxu0 0.0
    %3964 = vmatprep.subr.mxu0 0.0
    %3965 = vmatpush1.msra.mxu0 0.0
    %3966 = vmatprep.subr.mxu0 0.0
    %3967 = vmatpush1.msra.mxu0 0.0
    %3968 = vmatprep.subr.mxu0 0.0
    %3969 = vmatpush1.msra.mxu0 0.0
    %3970 = vmatprep.subr.mxu0 0.0
    %3971 = vmatpush1.msra.mxu0 0.0
    %3972 = vmatprep.subr.mxu0 0.0
    %3973 = vmatpush1.msra.mxu0 0.0
    %3974 = vmatprep.subr.mxu0 0.0
    %3975 = vmatpush1.msra.mxu0 0.0
    %3976 = vmatprep.subr.mxu0 0.0
    %3977 = vmatpush1.msra.mxu0 0.0
    %3978 = vmatprep.subr.mxu0 0.0
    %3979 = vmatpush1.msra.mxu0 0.0
    %3980 = vmatprep.subr.mxu0 0.0
    %3981 = vmatpush1.msra.mxu0 0.0
    %3982 = vmatprep.subr.mxu0 0.0
    %3983 = vmatpush1.msra.mxu0 0.0
    %3984 = vmatprep.subr.mxu0 0.0
    %3985 = vmatpush1.msra.mxu0 0.0
    %3986 = vmatprep.subr.mxu0 0.0
    %3987 = vmatpush1.msra.mxu0 0.0
    %3988 = vmatprep.subr.mxu0 0.0
    %3989 = vmatpush1.msra.mxu0 0.0
    %3990 = vmatprep.mubr.f32.mxu0 0.0
    %3991 = vmatmul.mubr.f32.gmra.mrb[0].mxu0 %v3916
    %v3992 = vpop.f32.mrb[0].mxu0
    %v3993 = vadd.f32 0.0, %v3992
    %v3994 = vpop.f32.mrb[0].mxu0
    %3995 = vmatprep.mubr.f32.mxu0 0.0
    %3996 = vmatmul.mubr.f32.gmra.mrb[0].mxu0 %v3919
    %v3997 = vpop.f32.mrb[0].mxu0
    %v3998 = vadd.f32 0.0, %v3997
    %v3999 = vpop.f32.mrb[0].mxu0
    %4000 = vmatprep.mubr.f32.mxu0 0.0
    %4001 = vmatmul.mubr.f32.gmra.mrb[0].mxu0 %v3922
    %v4002 = vpop.f32.mrb[0].mxu0
    %v4003 = vadd.f32 0.0, %v4002
    %v4004 = vpop.f32.mrb[0].mxu0
    %4005 = vdwg.mxu0
    %4006 = vrot.lane.b32.xlu0 %v3524, 112
    %v4007 = vpop.permute.xlu0 %4006
    %4008 = vrot.lane.b32.xlu0 %v3529, 112
    %v4009 = vpop.permute.xlu0 %4008
    %4010 = vrot.lane.b32.xlu0 %v3534, 112
    %v4011 = vpop.permute.xlu0 %4010
    %4012 = vrot.lane.b32.xlu0 %v3524, 80
    %v4013 = vpop.permute.xlu0 %4012
    %4014 = vrot.lane.b32.xlu0 %v3529, 80
    %v4015 = vpop.permute.xlu0 %4014
    %4016 = vrot.lane.b32.xlu0 %v3534, 80
    %v4017 = vpop.permute.xlu0 %4016
    %v4018 = vsel %vm372, %v4007, 0
    %v4020 = vsel %vm372, %v4009, 0
    %v4022 = vsel %vm372, %v4011, 0
    %v4024 = vsel %vm372, %v4013, 0
    %v4026 = vsel %vm372, %v4015, 0
    %v4028 = vsel %vm372, %v4017, 0
    %4030 = vmatprep.subr.mxu0 0.0
    %4031 = vmatpush1.xpose.msra.mxu0 %v4024
    %4032 = vmatprep.subr.mxu0 0.0
    %4033 = vmatpush1.xpose.msra.mxu0 %v4026
    %4034 = vmatprep.subr.mxu0 0.0
    %4035 = vmatpush1.xpose.msra.mxu0 %v4028
    %4036 = vmatprep.subr.mxu0 0.0
    %4037 = vmatpush1.xpose.msra.mxu0 0.0
    %4038 = vmatprep.subr.mxu0 0.0
    %4039 = vmatpush1.xpose.msra.mxu0 0.0
    %4040 = vmatprep.subr.mxu0 0.0
    %4041 = vmatpush1.xpose.msra.mxu0 0.0
    %4042 = vmatprep.subr.mxu0 0.0
    %4043 = vmatpush1.xpose.msra.mxu0 0.0
    %4044 = vmatprep.subr.mxu0 0.0
    %4045 = vmatpush1.xpose.msra.mxu0 0.0
    %4046 = vmatprep.subr.mxu0 0.0
    %4047 = vmatpush1.xpose.msra.mxu0 0.0
    %4048 = vmatprep.subr.mxu0 0.0
    %4049 = vmatpush1.xpose.msra.mxu0 0.0
    %4050 = vmatprep.subr.mxu0 0.0
    %4051 = vmatpush1.xpose.msra.mxu0 0.0
    %4052 = vmatprep.subr.mxu0 0.0
    %4053 = vmatpush1.xpose.msra.mxu0 0.0
    %4054 = vmatprep.subr.mxu0 0.0
    %4055 = vmatpush1.xpose.msra.mxu0 0.0
    %4056 = vmatprep.subr.mxu0 0.0
    %4057 = vmatpush1.xpose.msra.mxu0 0.0
    %4058 = vmatprep.subr.mxu0 0.0
    %4059 = vmatpush1.xpose.msra.mxu0 0.0
    %4060 = vmatprep.subr.mxu0 0.0
    %4061 = vmatpush1.xpose.msra.mxu0 0.0
    %4062 = vmatprep.subr.mxu0 0.0
    %4063 = vmatpush1.xpose.msra.mxu0 0.0
    %4064 = vmatprep.subr.mxu0 0.0
    %4065 = vmatpush1.xpose.msra.mxu0 0.0
    %4066 = vmatprep.subr.mxu0 0.0
    %4067 = vmatpush1.xpose.msra.mxu0 0.0
    %4068 = vmatprep.subr.mxu0 0.0
    %4069 = vmatpush1.xpose.msra.mxu0 0.0
    %4070 = vmatprep.subr.mxu0 0.0
    %4071 = vmatpush1.xpose.msra.mxu0 0.0
    %4072 = vmatprep.subr.mxu0 0.0
    %4073 = vmatpush1.xpose.msra.mxu0 0.0
    %4074 = vmatprep.subr.mxu0 0.0
    %4075 = vmatpush1.xpose.msra.mxu0 0.0
    %4076 = vmatprep.subr.mxu0 0.0
    %4077 = vmatpush1.xpose.msra.mxu0 0.0
    %4078 = vmatprep.subr.mxu0 0.0
    %4079 = vmatpush1.xpose.msra.mxu0 0.0
    %4080 = vmatprep.subr.mxu0 0.0
    %4081 = vmatpush1.xpose.msra.mxu0 0.0
    %4082 = vmatprep.subr.mxu0 0.0
    %4083 = vmatpush1.xpose.msra.mxu0 0.0
    %4084 = vmatprep.subr.mxu0 0.0
    %4085 = vmatpush1.xpose.msra.mxu0 0.0
    %4086 = vmatprep.subr.mxu0 0.0
    %4087 = vmatpush1.xpose.msra.mxu0 0.0
    %4088 = vmatprep.subr.mxu0 0.0
    %4089 = vmatpush1.xpose.msra.mxu0 0.0
    %4090 = vmatprep.subr.mxu0 0.0
    %4091 = vmatpush1.xpose.msra.mxu0 0.0
    %4092 = vmatprep.subr.mxu0 0.0
    %4093 = vmatpush1.xpose.msra.mxu0 0.0
    %4094 = vmatprep.mubr.f32.mxu0 0.0
    %4095 = vmatmul.mubr.f32.gmra.mrb[0].mxu0 %v4018
    %v4096 = vpop.f32.mrb[0].mxu0
    %v4097 = vadd.f32 0.0, %v4096
    %v4098 = vpop.f32.mrb[0].mxu0
    %4099 = vmatprep.mubr.f32.mxu0 0.0
    %4100 = vmatmul.mubr.f32.gmra.mrb[0].mxu0 %v4020
    %v4101 = vpop.f32.mrb[0].mxu0
    %v4102 = vadd.f32 0.0, %v4101
    %v4103 = vpop.f32.mrb[0].mxu0
    %4104 = vmatprep.mubr.f32.mxu0 0.0
    %4105 = vmatmul.mubr.f32.gmra.mrb[0].mxu0 %v4022
    %v4106 = vpop.f32.mrb[0].mxu0
    %v4107 = vadd.f32 0.0, %v4106
    %v4108 = vpop.f32.mrb[0].mxu0
    %4109 = vdwg.mxu0
    %v4110 = vsel %vm465, %v4097, -inf
    %4111 = vmax.xlane.f32.xlu0 %v4110
    %v4112 = vpop.xlane.xlu0 %4111
    %v4113 = vsel %vm465, %v4102, -inf
    %4114 = vmax.xlane.f32.xlu0 %v4113
    %v4115 = vpop.xlane.xlu0 %4114
    %v4116 = vsel %vm472, %v4107, -inf
    %4117 = vmax.xlane.f32.xlu0 %v4116
    %v4118 = vpop.xlane.xlu0 %4117
    %v4119 = vsub.f32 %v4097, %v4112
    %v4120 = vsub.f32 %v4102, %v4115
    %v4121 = vsub.f32 %v4107, %v4118
    %v4122 = vmul.f32 %v4119, 1.442695
    %v4123 = vpow.pop %v4122
    %v4124 = vmul.f32 %v4120, 1.442695
    %v4125 = vpow.pop %v4124
    %v4126 = vmul.f32 %v4121, 1.442695
    %v4127 = vpow.pop %v4126
    %v4128 = vsel %vm465, %v4123, 0.0
    %4129 = vadd.xlane.f32.xlu0 %v4128
    %v4130 = vpop.xlane.xlu0 %4129
    %v4131 = vsel %vm465, %v4125, 0.0
    %4132 = vadd.xlane.f32.xlu0 %v4131
    %v4133 = vpop.xlane.xlu0 %4132
    %v4134 = vsel %vm472, %v4127, 0.0
    %4135 = vadd.xlane.f32.xlu0 %v4134
    %v4136 = vpop.xlane.xlu0 %4135
    %v4137 = vrcp.pop %v4130
    %v4138 = vrcp.pop %v4133
    %v4139 = vrcp.pop %v4136
    %v4140 = vmul.f32 %v4123, %v4137
    %v4141 = vmul.f32 %v4125, %v4138
    %v4142 = vmul.f32 %v4127, %v4139
    %4143 = vrot.lane.b32.xlu0 %v3524, 48
    %v4144 = vpop.permute.xlu0 %4143
    %4145 = vrot.lane.b32.xlu0 %v3529, 48
    %v4146 = vpop.permute.xlu0 %4145
    %4147 = vrot.lane.b32.xlu0 %v3534, 48
    %v4148 = vpop.permute.xlu0 %4147
    %v4152 = vsel %vm465, %v4140, 0
    %v4155 = vsel %vm465, %v4141, 0
    %v4158 = vsel %vm465, %v4142, 0
    %v4160 = vsel %vm193, %v4148, 0
    %4162 = vmatprep.subr.mxu0 0.0
    %4163 = vmatpush1.msra.mxu0 %v4144
    %4164 = vmatprep.subr.mxu0 0.0
    %4165 = vmatpush1.msra.mxu0 %v4146
    %4166 = vmatprep.subr.mxu0 0.0
    %4167 = vmatpush1.msra.mxu0 %v4160
    %4168 = vmatprep.subr.mxu0 0.0
    %4169 = vmatpush1.msra.mxu0 0.0
    %4170 = vmatprep.subr.mxu0 0.0
    %4171 = vmatpush1.msra.mxu0 0.0
    %4172 = vmatprep.subr.mxu0 0.0
    %4173 = vmatpush1.msra.mxu0 0.0
    %4174 = vmatprep.subr.mxu0 0.0
    %4175 = vmatpush1.msra.mxu0 0.0
    %4176 = vmatprep.subr.mxu0 0.0
    %4177 = vmatpush1.msra.mxu0 0.0
    %4178 = vmatprep.subr.mxu0 0.0
    %4179 = vmatpush1.msra.mxu0 0.0
    %4180 = vmatprep.subr.mxu0 0.0
    %4181 = vmatpush1.msra.mxu0 0.0
    %4182 = vmatprep.subr.mxu0 0.0
    %4183 = vmatpush1.msra.mxu0 0.0
    %4184 = vmatprep.subr.mxu0 0.0
    %4185 = vmatpush1.msra.mxu0 0.0
    %4186 = vmatprep.subr.mxu0 0.0
    %4187 = vmatpush1.msra.mxu0 0.0
    %4188 = vmatprep.subr.mxu0 0.0
    %4189 = vmatpush1.msra.mxu0 0.0
    %4190 = vmatprep.subr.mxu0 0.0
    %4191 = vmatpush1.msra.mxu0 0.0
    %4192 = vmatprep.subr.mxu0 0.0
    %4193 = vmatpush1.msra.mxu0 0.0
    %4194 = vmatprep.subr.mxu0 0.0
    %4195 = vmatpush1.msra.mxu0 0.0
    %4196 = vmatprep.subr.mxu0 0.0
    %4197 = vmatpush1.msra.mxu0 0.0
    %4198 = vmatprep.subr.mxu0 0.0
    %4199 = vmatpush1.msra.mxu0 0.0
    %4200 = vmatprep.subr.mxu0 0.0
    %4201 = vmatpush1.msra.mxu0 0.0
    %4202 = vmatprep.subr.mxu0 0.0
    %4203 = vmatpush1.msra.mxu0 0.0
    %4204 = vmatprep.subr.mxu0 0.0
    %4205 = vmatpush1.msra.mxu0 0.0
    %4206 = vmatprep.subr.mxu0 0.0
    %4207 = vmatpush1.msra.mxu0 0.0
    %4208 = vmatprep.subr.mxu0 0.0
    %4209 = vmatpush1.msra.mxu0 0.0
    %4210 = vmatprep.subr.mxu0 0.0
    %4211 = vmatpush1.msra.mxu0 0.0
    %4212 = vmatprep.subr.mxu0 0.0
    %4213 = vmatpush1.msra.mxu0 0.0
    %4214 = vmatprep.subr.mxu0 0.0
    %4215 = vmatpush1.msra.mxu0 0.0
    %4216 = vmatprep.subr.mxu0 0.0
    %4217 = vmatpush1.msra.mxu0 0.0
    %4218 = vmatprep.subr.mxu0 0.0
    %4219 = vmatpush1.msra.mxu0 0.0
    %4220 = vmatprep.subr.mxu0 0.0
    %4221 = vmatpush1.msra.mxu0 0.0
    %4222 = vmatprep.subr.mxu0 0.0
    %4223 = vmatpush1.msra.mxu0 0.0
    %4224 = vmatprep.subr.mxu0 0.0
    %4225 = vmatpush1.msra.mxu0 0.0
    %4226 = vmatprep.mubr.f32.mxu0 0.0
    %4227 = vmatmul.mubr.f32.gmra.mrb[0].mxu0 %v4152
    %v4228 = vpop.f32.mrb[0].mxu0
    %v4229 = vadd.f32 0.0, %v4228
    %v4230 = vpop.f32.mrb[0].mxu0
    %4231 = vmatprep.mubr.f32.mxu0 0.0
    %4232 = vmatmul.mubr.f32.gmra.mrb[0].mxu0 %v4155
    %v4233 = vpop.f32.mrb[0].mxu0
    %v4234 = vadd.f32 0.0, %v4233
    %v4235 = vpop.f32.mrb[0].mxu0
    %4236 = vmatprep.mubr.f32.mxu0 0.0
    %4237 = vmatmul.mubr.f32.gmra.mrb[0].mxu0 %v4158
    %v4238 = vpop.f32.mrb[0].mxu0
    %v4239 = vadd.f32 0.0, %v4238
    %v4240 = vpop.f32.mrb[0].mxu0
    %4241 = vdwg.mxu0
    %4242 = vrot.lane.b32.xlu0 %v3524, 104
    %v4243 = vpop.permute.xlu0 %4242
    %4244 = vrot.lane.b32.xlu0 %v3529, 104
    %v4245 = vpop.permute.xlu0 %4244
    %4246 = vrot.lane.b32.xlu0 %v3534, 104
    %v4247 = vpop.permute.xlu0 %4246
    %4248 = vrot.lane.b32.xlu0 %v3524, 72
    %v4249 = vpop.permute.xlu0 %4248
    %4250 = vrot.lane.b32.xlu0 %v3529, 72
    %v4251 = vpop.permute.xlu0 %4250
    %4252 = vrot.lane.b32.xlu0 %v3534, 72
    %v4253 = vpop.permute.xlu0 %4252
    %v4254 = vsel %vm372, %v4243, 0
    %v4256 = vsel %vm372, %v4245, 0
    %v4258 = vsel %vm372, %v4247, 0
    %v4260 = vsel %vm372, %v4249, 0
    %v4262 = vsel %vm372, %v4251, 0
    %v4264 = vsel %vm372, %v4253, 0
    %4266 = vmatprep.subr.mxu0 0.0
    %4267 = vmatpush1.xpose.msra.mxu0 %v4260
    %4268 = vmatprep.subr.mxu0 0.0
    %4269 = vmatpush1.xpose.msra.mxu0 %v4262
    %4270 = vmatprep.subr.mxu0 0.0
    %4271 = vmatpush1.xpose.msra.mxu0 %v4264
    %4272 = vmatprep.subr.mxu0 0.0
    %4273 = vmatpush1.xpose.msra.mxu0 0.0
    %4274 = vmatprep.subr.mxu0 0.0
    %4275 = vmatpush1.xpose.msra.mxu0 0.0
    %4276 = vmatprep.subr.mxu0 0.0
    %4277 = vmatpush1.xpose.msra.mxu0 0.0
    %4278 = vmatprep.subr.mxu0 0.0
    %4279 = vmatpush1.xpose.msra.mxu0 0.0
    %4280 = vmatprep.subr.mxu0 0.0
    %4281 = vmatpush1.xpose.msra.mxu0 0.0
    %4282 = vmatprep.subr.mxu0 0.0
    %4283 = vmatpush1.xpose.msra.mxu0 0.0
    %4284 = vmatprep.subr.mxu0 0.0
    %4285 = vmatpush1.xpose.msra.mxu0 0.0
    %4286 = vmatprep.subr.mxu0 0.0
    %4287 = vmatpush1.xpose.msra.mxu0 0.0
    %4288 = vmatprep.subr.mxu0 0.0
    %4289 = vmatpush1.xpose.msra.mxu0 0.0
    %4290 = vmatprep.subr.mxu0 0.0
    %4291 = vmatpush1.xpose.msra.mxu0 0.0
    %4292 = vmatprep.subr.mxu0 0.0
    %4293 = vmatpush1.xpose.msra.mxu0 0.0
    %4294 = vmatprep.subr.mxu0 0.0
    %4295 = vmatpush1.xpose.msra.mxu0 0.0
    %4296 = vmatprep.subr.mxu0 0.0
    %4297 = vmatpush1.xpose.msra.mxu0 0.0
    %4298 = vmatprep.subr.mxu0 0.0
    %4299 = vmatpush1.xpose.msra.mxu0 0.0
    %4300 = vmatprep.subr.mxu0 0.0
    %4301 = vmatpush1.xpose.msra.mxu0 0.0
    %4302 = vmatprep.subr.mxu0 0.0
    %4303 = vmatpush1.xpose.msra.mxu0 0.0
    %4304 = vmatprep.subr.mxu0 0.0
    %4305 = vmatpush1.xpose.msra.mxu0 0.0
    %4306 = vmatprep.subr.mxu0 0.0
    %4307 = vmatpush1.xpose.msra.mxu0 0.0
    %4308 = vmatprep.subr.mxu0 0.0
    %4309 = vmatpush1.xpose.msra.mxu0 0.0
    %4310 = vmatprep.subr.mxu0 0.0
    %4311 = vmatpush1.xpose.msra.mxu0 0.0
    %4312 = vmatprep.subr.mxu0 0.0
    %4313 = vmatpush1.xpose.msra.mxu0 0.0
    %4314 = vmatprep.subr.mxu0 0.0
    %4315 = vmatpush1.xpose.msra.mxu0 0.0
    %4316 = vmatprep.subr.mxu0 0.0
    %4317 = vmatpush1.xpose.msra.mxu0 0.0
    %4318 = vmatprep.subr.mxu0 0.0
    %4319 = vmatpush1.xpose.msra.mxu0 0.0
    %4320 = vmatprep.subr.mxu0 0.0
    %4321 = vmatpush1.xpose.msra.mxu0 0.0
    %4322 = vmatprep.subr.mxu0 0.0
    %4323 = vmatpush1.xpose.msra.mxu0 0.0
    %4324 = vmatprep.subr.mxu0 0.0
    %4325 = vmatpush1.xpose.msra.mxu0 0.0
    %4326 = vmatprep.subr.mxu0 0.0
    %4327 = vmatpush1.xpose.msra.mxu0 0.0
    %4328 = vmatprep.subr.mxu0 0.0
    %4329 = vmatpush1.xpose.msra.mxu0 0.0
    %4330 = vmatprep.mubr.f32.mxu0 0.0
    %4331 = vmatmul.mubr.f32.gmra.mrb[0].mxu0 %v4254
    %v4332 = vpop.f32.mrb[0].mxu0
    %v4333 = vadd.f32 0.0, %v4332
    %v4334 = vpop.f32.mrb[0].mxu0
    %4335 = vmatprep.mubr.f32.mxu0 0.0
    %4336 = vmatmul.mubr.f32.gmra.mrb[0].mxu0 %v4256
    %v4337 = vpop.f32.mrb[0].mxu0
    %v4338 = vadd.f32 0.0, %v4337
    %v4339 = vpop.f32.mrb[0].mxu0
    %4340 = vmatprep.mubr.f32.mxu0 0.0
    %4341 = vmatmul.mubr.f32.gmra.mrb[0].mxu0 %v4258
    %v4342 = vpop.f32.mrb[0].mxu0
    %v4343 = vadd.f32 0.0, %v4342
    %v4344 = vpop.f32.mrb[0].mxu0
    %4345 = vdwg.mxu0
    %v4346 = vsel %vm465, %v4333, -inf
    %4347 = vmax.xlane.f32.xlu0 %v4346
    %v4348 = vpop.xlane.xlu0 %4347
    %v4349 = vsel %vm465, %v4338, -inf
    %4350 = vmax.xlane.f32.xlu0 %v4349
    %v4351 = vpop.xlane.xlu0 %4350
    %v4352 = vsel %vm472, %v4343, -inf
    %4353 = vmax.xlane.f32.xlu0 %v4352
    %v4354 = vpop.xlane.xlu0 %4353
    %v4355 = vsub.f32 %v4333, %v4348
    %v4356 = vsub.f32 %v4338, %v4351
    %v4357 = vsub.f32 %v4343, %v4354
    %v4358 = vmul.f32 %v4355, 1.442695
    %v4359 = vpow.pop %v4358
    %v4360 = vmul.f32 %v4356, 1.442695
    %v4361 = vpow.pop %v4360
    %v4362 = vmul.f32 %v4357, 1.442695
    %v4363 = vpow.pop %v4362
    %v4364 = vsel %vm465, %v4359, 0.0
    %4365 = vadd.xlane.f32.xlu0 %v4364
    %v4366 = vpop.xlane.xlu0 %4365
    %v4367 = vsel %vm465, %v4361, 0.0
    %4368 = vadd.xlane.f32.xlu0 %v4367
    %v4369 = vpop.xlane.xlu0 %4368
    %v4370 = vsel %vm472, %v4363, 0.0
    %4371 = vadd.xlane.f32.xlu0 %v4370
    %v4372 = vpop.xlane.xlu0 %4371
    %v4373 = vrcp.pop %v4366
    %v4374 = vrcp.pop %v4369
    %v4375 = vrcp.pop %v4372
    %v4376 = vmul.f32 %v4359, %v4373
    %v4377 = vmul.f32 %v4361, %v4374
    %v4378 = vmul.f32 %v4363, %v4375
    %4379 = vrot.lane.b32.xlu0 %v3524, 40
    %v4380 = vpop.permute.xlu0 %4379
    %4381 = vrot.lane.b32.xlu0 %v3529, 40
    %v4382 = vpop.permute.xlu0 %4381
    %4383 = vrot.lane.b32.xlu0 %v3534, 40
    %v4384 = vpop.permute.xlu0 %4383
    %v4388 = vsel %vm465, %v4376, 0
    %v4391 = vsel %vm465, %v4377, 0
    %v4394 = vsel %vm465, %v4378, 0
    %v4396 = vsel %vm193, %v4384, 0
    %4398 = vmatprep.subr.mxu0 0.0
    %4399 = vmatpush1.msra.mxu0 %v4380
    %4400 = vmatprep.subr.mxu0 0.0
    %4401 = vmatpush1.msra.mxu0 %v4382
    %4402 = vmatprep.subr.mxu0 0.0
    %4403 = vmatpush1.msra.mxu0 %v4396
    %4404 = vmatprep.subr.mxu0 0.0
    %4405 = vmatpush1.msra.mxu0 0.0
    %4406 = vmatprep.subr.mxu0 0.0
    %4407 = vmatpush1.msra.mxu0 0.0
    %4408 = vmatprep.subr.mxu0 0.0
    %4409 = vmatpush1.msra.mxu0 0.0
    %4410 = vmatprep.subr.mxu0 0.0
    %4411 = vmatpush1.msra.mxu0 0.0
    %4412 = vmatprep.subr.mxu0 0.0
    %4413 = vmatpush1.msra.mxu0 0.0
    %4414 = vmatprep.subr.mxu0 0.0
    %4415 = vmatpush1.msra.mxu0 0.0
    %4416 = vmatprep.subr.mxu0 0.0
    %4417 = vmatpush1.msra.mxu0 0.0
    %4418 = vmatprep.subr.mxu0 0.0
    %4419 = vmatpush1.msra.mxu0 0.0
    %4420 = vmatprep.subr.mxu0 0.0
    %4421 = vmatpush1.msra.mxu0 0.0
    %4422 = vmatprep.subr.mxu0 0.0
    %4423 = vmatpush1.msra.mxu0 0.0
    %4424 = vmatprep.subr.mxu0 0.0
    %4425 = vmatpush1.msra.mxu0 0.0
    %4426 = vmatprep.subr.mxu0 0.0
    %4427 = vmatpush1.msra.mxu0 0.0
    %4428 = vmatprep.subr.mxu0 0.0
    %4429 = vmatpush1.msra.mxu0 0.0
    %4430 = vmatprep.subr.mxu0 0.0
    %4431 = vmatpush1.msra.mxu0 0.0
    %4432 = vmatprep.subr.mxu0 0.0
    %4433 = vmatpush1.msra.mxu0 0.0
    %4434 = vmatprep.subr.mxu0 0.0
    %4435 = vmatpush1.msra.mxu0 0.0
    %4436 = vmatprep.subr.mxu0 0.0
    %4437 = vmatpush1.msra.mxu0 0.0
    %4438 = vmatprep.subr.mxu0 0.0
    %4439 = vmatpush1.msra.mxu0 0.0
    %4440 = vmatprep.subr.mxu0 0.0
    %4441 = vmatpush1.msra.mxu0 0.0
    %4442 = vmatprep.subr.mxu0 0.0
    %4443 = vmatpush1.msra.mxu0 0.0
    %4444 = vmatprep.subr.mxu0 0.0
    %4445 = vmatpush1.msra.mxu0 0.0
    %4446 = vmatprep.subr.mxu0 0.0
    %4447 = vmatpush1.msra.mxu0 0.0
    %4448 = vmatprep.subr.mxu0 0.0
    %4449 = vmatpush1.msra.mxu0 0.0
    %4450 = vmatprep.subr.mxu0 0.0
    %4451 = vmatpush1.msra.mxu0 0.0
    %4452 = vmatprep.subr.mxu0 0.0
    %4453 = vmatpush1.msra.mxu0 0.0
    %4454 = vmatprep.subr.mxu0 0.0
    %4455 = vmatpush1.msra.mxu0 0.0
    %4456 = vmatprep.subr.mxu0 0.0
    %4457 = vmatpush1.msra.mxu0 0.0
    %4458 = vmatprep.subr.mxu0 0.0
    %4459 = vmatpush1.msra.mxu0 0.0
    %4460 = vmatprep.subr.mxu0 0.0
    %4461 = vmatpush1.msra.mxu0 0.0
    %4462 = vmatprep.mubr.f32.mxu0 0.0
    %4463 = vmatmul.mubr.f32.gmra.mrb[0].mxu0 %v4388
    %v4464 = vpop.f32.mrb[0].mxu0
    %v4465 = vadd.f32 0.0, %v4464
    %v4466 = vpop.f32.mrb[0].mxu0
    %4467 = vmatprep.mubr.f32.mxu0 0.0
    %4468 = vmatmul.mubr.f32.gmra.mrb[0].mxu0 %v4391
    %v4469 = vpop.f32.mrb[0].mxu0
    %v4470 = vadd.f32 0.0, %v4469
    %v4471 = vpop.f32.mrb[0].mxu0
    %4472 = vmatprep.mubr.f32.mxu0 0.0
    %4473 = vmatmul.mubr.f32.gmra.mrb[0].mxu0 %v4394
    %v4474 = vpop.f32.mrb[0].mxu0
    %v4475 = vadd.f32 0.0, %v4474
    %v4476 = vpop.f32.mrb[0].mxu0
    %4477 = vdwg.mxu0
    %4481 = vrot.lane.b32.xlu0 %v3993, 8
    %v4482 = vpop.permute.xlu0 %4481
    %4483 = vrot.lane.b32.xlu0 %v3998, 8
    %v4484 = vpop.permute.xlu0 %4483
    %4485 = vrot.lane.b32.xlu0 %v4003, 8
    %v4486 = vpop.permute.xlu0 %4485
    %4493 = vrot.lane.b32.xlu0 %v4229, 16
    %v4494 = vpop.permute.xlu0 %4493
    %4495 = vrot.lane.b32.xlu0 %v4234, 16
    %v4496 = vpop.permute.xlu0 %4495
    %4497 = vrot.lane.b32.xlu0 %v4239, 16
    %v4498 = vpop.permute.xlu0 %4497
    %4505 = vrot.lane.b32.xlu0 %v4465, 24
    %v4506 = vpop.permute.xlu0 %4505
    %4507 = vrot.lane.b32.xlu0 %v4470, 24
    %v4508 = vpop.permute.xlu0 %4507
    %4509 = vrot.lane.b32.xlu0 %v4475, 24
    %v4510 = vpop.permute.xlu0 %4509
    %v4514 = vsel %vm372, %v3757, %v4482
    %v4515 = vsel %vm372, %v3762, %v4484
    %v4516 = vsel %vm372, %v3767, %v4486
    %v4517 = vsel %vm1346, %v4514, %v4494
    %v4518 = vsel %vm1346, %v4515, %v4496
    %v4519 = vsel %vm1346, %v4516, %v4498
    %v4520 = vsel %vm1350, %v4517, %v4506
    %v4521 = vsel %vm1350, %v4518, %v4508
    %v4522 = vsel %vm1350, %v4519, %v4510
    %v4524 = vsel %vm203, %v4520, 0
    %v4527 = vsel %vm203, %v4521, 0
    %v4530 = vsel %vm203, %v4522, 0
    %4532 = vmatprep.subr.mxu0 0.0
    %4533 = vmatpush1.msra.mxu0 %v1354
    %4534 = vmatprep.subr.mxu0 0.0
    %4535 = vmatpush1.msra.mxu0 %v1355
    %4536 = vmatprep.subr.mxu0 0.0
    %4537 = vmatpush1.msra.mxu0 %v1356
    %4538 = vmatprep.subr.mxu0 0.0
    %4539 = vmatpush1.msra.mxu0 %v1357
    %4540 = vmatprep.subr.mxu0 0.0
    %4541 = vmatpush1.msra.mxu0 0.0
    %4542 = vmatprep.subr.mxu0 0.0
    %4543 = vmatpush1.msra.mxu0 0.0
    %4544 = vmatprep.subr.mxu0 0.0
    %4545 = vmatpush1.msra.mxu0 0.0
    %4546 = vmatprep.subr.mxu0 0.0
    %4547 = vmatpush1.msra.mxu0 0.0
    %4548 = vmatprep.subr.mxu0 0.0
    %4549 = vmatpush1.msra.mxu0 0.0
    %4550 = vmatprep.subr.mxu0 0.0
    %4551 = vmatpush1.msra.mxu0 0.0
    %4552 = vmatprep.subr.mxu0 0.0
    %4553 = vmatpush1.msra.mxu0 0.0
    %4554 = vmatprep.subr.mxu0 0.0
    %4555 = vmatpush1.msra.mxu0 0.0
    %4556 = vmatprep.subr.mxu0 0.0
    %4557 = vmatpush1.msra.mxu0 0.0
    %4558 = vmatprep.subr.mxu0 0.0
    %4559 = vmatpush1.msra.mxu0 0.0
    %4560 = vmatprep.subr.mxu0 0.0
    %4561 = vmatpush1.msra.mxu0 0.0
    %4562 = vmatprep.subr.mxu0 0.0
    %4563 = vmatpush1.msra.mxu0 0.0
    %4564 = vmatprep.subr.mxu0 0.0
    %4565 = vmatpush1.msra.mxu0 0.0
    %4566 = vmatprep.subr.mxu0 0.0
    %4567 = vmatpush1.msra.mxu0 0.0
    %4568 = vmatprep.subr.mxu0 0.0
    %4569 = vmatpush1.msra.mxu0 0.0
    %4570 = vmatprep.subr.mxu0 0.0
    %4571 = vmatpush1.msra.mxu0 0.0
    %4572 = vmatprep.subr.mxu0 0.0
    %4573 = vmatpush1.msra.mxu0 0.0
    %4574 = vmatprep.subr.mxu0 0.0
    %4575 = vmatpush1.msra.mxu0 0.0
    %4576 = vmatprep.subr.mxu0 0.0
    %4577 = vmatpush1.msra.mxu0 0.0
    %4578 = vmatprep.subr.mxu0 0.0
    %4579 = vmatpush1.msra.mxu0 0.0
    %4580 = vmatprep.subr.mxu0 0.0
    %4581 = vmatpush1.msra.mxu0 0.0
    %4582 = vmatprep.subr.mxu0 0.0
    %4583 = vmatpush1.msra.mxu0 0.0
    %4584 = vmatprep.subr.mxu0 0.0
    %4585 = vmatpush1.msra.mxu0 0.0
    %4586 = vmatprep.subr.mxu0 0.0
    %4587 = vmatpush1.msra.mxu0 0.0
    %4588 = vmatprep.subr.mxu0 0.0
    %4589 = vmatpush1.msra.mxu0 0.0
    %4590 = vmatprep.subr.mxu0 0.0
    %4591 = vmatpush1.msra.mxu0 0.0
    %4592 = vmatprep.subr.mxu0 0.0
    %4593 = vmatpush1.msra.mxu0 0.0
    %4594 = vmatprep.subr.mxu0 0.0
    %4595 = vmatpush1.msra.mxu0 0.0
    %4596 = vmatprep.mubr.f32.mxu0 0.0
    %4597 = vmatmul.mubr.f32.gmra.mrb[0].mxu0 %v4524
    %v4598 = vpop.f32.mrb[0].mxu0
    %v4599 = vadd.f32 %v1363, %v4598
    %v4600 = vpop.f32.mrb[0].mxu0
    %4601 = vmatprep.mubr.f32.mxu0 0.0
    %4602 = vmatmul.mubr.f32.gmra.mrb[0].mxu0 %v4527
    %v4603 = vpop.f32.mrb[0].mxu0
    %v4604 = vadd.f32 %v1363, %v4603
    %v4605 = vpop.f32.mrb[0].mxu0
    %4606 = vmatprep.mubr.f32.mxu0 0.0
    %4607 = vmatmul.mubr.f32.gmra.mrb[0].mxu0 %v4530
    %v4608 = vpop.f32.mrb[0].mxu0
    %v4609 = vadd.f32 %v1363, %v4608
    %v4610 = vpop.f32.mrb[0].mxu0
    %4611 = vdwg.mxu0
    %v4612 = vadd.f32 %v3402, %v4599
    %v4613 = vadd.f32 %v3398, %v4604
    %v4614 = vadd.f32 %v3397, %v4609
    %v4615 = vsel %vm203, %v4612, 0.0
    %4616 = vadd.xlane.f32.xlu0 %v4615
    %v4617 = vpop.xlane.xlu0 %4616
    %v4618 = vsel %vm203, %v4613, 0.0
    %4619 = vadd.xlane.f32.xlu0 %v4618
    %v4620 = vpop.xlane.xlu0 %4619
    %v4621 = vsel %vm210, %v4614, 0.0
    %4622 = vadd.xlane.f32.xlu0 %v4621
    %v4623 = vpop.xlane.xlu0 %4622
    %v4624 = vmul.f32 %v4617, %v214
    %v4625 = vmul.f32 %v4620, %v214
    %v4626 = vmul.f32 %v4623, %v214
    %v4627 = vsub.f32 %v4612, %v4624
    %v4628 = vsub.f32 %v4613, %v4625
    %v4629 = vsub.f32 %v4614, %v4626
    %v4630 = vmul.f32 %v4627, %v4627
    %v4631 = vmul.f32 %v4628, %v4628
    %v4632 = vmul.f32 %v4629, %v4629
    %v4633 = vsel %vm203, %v4630, 0.0
    %4634 = vadd.xlane.f32.xlu0 %v4633
    %v4635 = vpop.xlane.xlu0 %4634
    %v4636 = vsel %vm203, %v4631, 0.0
    %4637 = vadd.xlane.f32.xlu0 %v4636
    %v4638 = vpop.xlane.xlu0 %4637
    %v4639 = vsel %vm210, %v4632, 0.0
    %4640 = vadd.xlane.f32.xlu0 %v4639
    %v4641 = vpop.xlane.xlu0 %4640
    %v4642 = vmul.f32 %v4635, %v214
    %v4643 = vmul.f32 %v4638, %v214
    %v4644 = vmul.f32 %v4641, %v214
    %v4645 = vadd.f32 %v4642, 1e-06
    %v4646 = vadd.f32 %v4643, 1e-06
    %v4647 = vadd.f32 %v4644, 1e-06
    %v4648 = vrsqrt.pop %v4645
    %v4649 = vrsqrt.pop %v4646
    %v4650 = vrsqrt.pop %v4647
    %v4651 = vmul.f32 %v4627, %v4648
    %v4652 = vmul.f32 %v4628, %v4649
    %v4653 = vmul.f32 %v4629, %v4650
    %v4654 = vmul.f32 %v4651, %v1502
    %v4655 = vmul.f32 %v4652, %v1502
    %v4656 = vmul.f32 %v4653, %v1502
    %v4657 = vadd.f32 %v4654, %v1511
    %v4658 = vadd.f32 %v4655, %v1511
    %v4659 = vadd.f32 %v4656, %v1511
    %v4661 = vsel %vm203, %v4657, 0
    %v4664 = vsel %vm203, %v4658, 0
    %v4667 = vsel %vm203, %v4659, 0
    %4669 = vmatprep.subr.mxu0 0.0
    %4670 = vmatpush1.msra.mxu0 %v1516
    %4671 = vmatprep.subr.mxu0 0.0
    %4672 = vmatpush1.msra.mxu0 %v1517
    %4673 = vmatprep.subr.mxu0 0.0
    %4674 = vmatpush1.msra.mxu0 %v1518
    %4675 = vmatprep.subr.mxu0 0.0
    %4676 = vmatpush1.msra.mxu0 %v1519
    %4677 = vmatprep.subr.mxu0 0.0
    %4678 = vmatpush1.msra.mxu0 0.0
    %4679 = vmatprep.subr.mxu0 0.0
    %4680 = vmatpush1.msra.mxu0 0.0
    %4681 = vmatprep.subr.mxu0 0.0
    %4682 = vmatpush1.msra.mxu0 0.0
    %4683 = vmatprep.subr.mxu0 0.0
    %4684 = vmatpush1.msra.mxu0 0.0
    %4685 = vmatprep.subr.mxu0 0.0
    %4686 = vmatpush1.msra.mxu0 0.0
    %4687 = vmatprep.subr.mxu0 0.0
    %4688 = vmatpush1.msra.mxu0 0.0
    %4689 = vmatprep.subr.mxu0 0.0
    %4690 = vmatpush1.msra.mxu0 0.0
    %4691 = vmatprep.subr.mxu0 0.0
    %4692 = vmatpush1.msra.mxu0 0.0
    %4693 = vmatprep.subr.mxu0 0.0
    %4694 = vmatpush1.msra.mxu0 0.0
    %4695 = vmatprep.subr.mxu0 0.0
    %4696 = vmatpush1.msra.mxu0 0.0
    %4697 = vmatprep.subr.mxu0 0.0
    %4698 = vmatpush1.msra.mxu0 0.0
    %4699 = vmatprep.subr.mxu0 0.0
    %4700 = vmatpush1.msra.mxu0 0.0
    %4701 = vmatprep.subr.mxu0 0.0
    %4702 = vmatpush1.msra.mxu0 0.0
    %4703 = vmatprep.subr.mxu0 0.0
    %4704 = vmatpush1.msra.mxu0 0.0
    %4705 = vmatprep.subr.mxu0 0.0
    %4706 = vmatpush1.msra.mxu0 0.0
    %4707 = vmatprep.subr.mxu0 0.0
    %4708 = vmatpush1.msra.mxu0 0.0
    %4709 = vmatprep.subr.mxu0 0.0
    %4710 = vmatpush1.msra.mxu0 0.0
    %4711 = vmatprep.subr.mxu0 0.0
    %4712 = vmatpush1.msra.mxu0 0.0
    %4713 = vmatprep.subr.mxu0 0.0
    %4714 = vmatpush1.msra.mxu0 0.0
    %4715 = vmatprep.subr.mxu0 0.0
    %4716 = vmatpush1.msra.mxu0 0.0
    %4717 = vmatprep.subr.mxu0 0.0
    %4718 = vmatpush1.msra.mxu0 0.0
    %4719 = vmatprep.subr.mxu0 0.0
    %4720 = vmatpush1.msra.mxu0 0.0
    %4721 = vmatprep.subr.mxu0 0.0
    %4722 = vmatpush1.msra.mxu0 0.0
    %4723 = vmatprep.subr.mxu0 0.0
    %4724 = vmatpush1.msra.mxu0 0.0
    %4725 = vmatprep.subr.mxu0 0.0
    %4726 = vmatpush1.msra.mxu0 0.0
    %4727 = vmatprep.subr.mxu0 0.0
    %4728 = vmatpush1.msra.mxu0 0.0
    %4729 = vmatprep.subr.mxu0 0.0
    %4730 = vmatpush1.msra.mxu0 0.0
    %4731 = vmatprep.subr.mxu0 0.0
    %4732 = vmatpush1.msra.mxu0 0.0
    %4733 = vmatprep.mubr.f32.mxu0 0.0
    %4734 = vmatmul.mubr.f32.gmra.mrb[0].mxu0 %v4661
    %v4735 = vpop.f32.mrb[0].mxu0
    %v4736 = vadd.f32 %v1525, %v4735
    %v4737 = vpop.f32.mrb[0].mxu0
    %4738 = vmatprep.mubr.f32.mxu0 0.0
    %4739 = vmatmul.mubr.f32.gmra.mrb[0].mxu0 %v4664
    %v4740 = vpop.f32.mrb[0].mxu0
    %v4741 = vadd.f32 %v1525, %v4740
    %v4742 = vpop.f32.mrb[0].mxu0
    %4743 = vmatprep.mubr.f32.mxu0 0.0
    %4744 = vmatmul.mubr.f32.gmra.mrb[0].mxu0 %v4667
    %v4745 = vpop.f32.mrb[0].mxu0
    %v4746 = vadd.f32 %v1525, %v4745
    %v4747 = vpop.f32.mrb[0].mxu0
    %4748 = vdwg.mxu0
    %v4749 = vmul.f32 %v4736, 0.5
    %v4750 = vmul.f32 %v4741, 0.5
    %v4751 = vmul.f32 %v4746, 0.5
    %v4752 = vmul.f32 %v4736, 0.044715
    %v4753 = vmul.f32 %v4741, 0.044715
    %v4754 = vmul.f32 %v4746, 0.044715
    %v4755 = vmul.f32 %v4752, %v4736
    %v4756 = vmul.f32 %v4753, %v4741
    %v4757 = vmul.f32 %v4754, %v4746
    %v4758 = vmul.f32 %v4755, %v4736
    %v4759 = vmul.f32 %v4756, %v4741
    %v4760 = vmul.f32 %v4757, %v4746
    %v4761 = vadd.f32 %v4736, %v4758
    %v4762 = vadd.f32 %v4741, %v4759
    %v4763 = vadd.f32 %v4746, %v4760
    %v4764 = vmul.f32 %v4761, 0.7978846
    %v4765 = vmul.f32 %v4762, 0.7978846
    %v4766 = vmul.f32 %v4763, 0.7978846
    %v4767 = vtanh.pop %v4764
    %v4768 = vtanh.pop %v4765
    %v4769 = vtanh.pop %v4766
    %v4770 = vadd.f32 %v4767, 1.0
    %v4771 = vadd.f32 %v4768, 1.0
    %v4772 = vadd.f32 %v4769, 1.0
    %v4773 = vmul.f32 %v4749, %v4770
    %v4774 = vmul.f32 %v4750, %v4771
    %v4775 = vmul.f32 %v4751, %v4772
    %4776 = vmatprep.subr.mxu0 0.0
    %4777 = vmatpush1.msra.mxu0 %v1643
    %4778 = vmatprep.subr.mxu0 0.0
    %4779 = vmatpush1.msra.mxu0 %v1644
    %4780 = vmatprep.subr.mxu0 0.0
    %4781 = vmatpush1.msra.mxu0 %v1645
    %4782 = vmatprep.subr.mxu0 0.0
    %4783 = vmatpush1.msra.mxu0 %v1646
    %4784 = vmatprep.subr.mxu0 0.0
    %4785 = vmatpush1.msra.mxu0 %v1647
    %4786 = vmatprep.subr.mxu0 0.0
    %4787 = vmatpush1.msra.mxu0 %v1648
    %4788 = vmatprep.subr.mxu0 0.0
    %4789 = vmatpush1.msra.mxu0 %v1649
    %4790 = vmatprep.subr.mxu0 0.0
    %4791 = vmatpush1.msra.mxu0 %v1650
    %4792 = vmatprep.subr.mxu0 0.0
    %4793 = vmatpush1.msra.mxu0 %v1651
    %4794 = vmatprep.subr.mxu0 0.0
    %4795 = vmatpush1.msra.mxu0 %v1652
    %4796 = vmatprep.subr.mxu0 0.0
    %4797 = vmatpush1.msra.mxu0 %v1653
    %4798 = vmatprep.subr.mxu0 0.0
    %4799 = vmatpush1.msra.mxu0 %v1654
    %4800 = vmatprep.subr.mxu0 0.0
    %4801 = vmatpush1.msra.mxu0 %v1655
    %4802 = vmatprep.subr.mxu0 0.0
    %4803 = vmatpush1.msra.mxu0 %v1656
    %4804 = vmatprep.subr.mxu0 0.0
    %4805 = vmatpush1.msra.mxu0 %v1657
    %4806 = vmatprep.subr.mxu0 0.0
    %4807 = vmatpush1.msra.mxu0 %v1658
    %4808 = vmatprep.subr.mxu0 0.0
    %4809 = vmatpush1.msra.mxu0 0.0
    %4810 = vmatprep.subr.mxu0 0.0
    %4811 = vmatpush1.msra.mxu0 0.0
    %4812 = vmatprep.subr.mxu0 0.0
    %4813 = vmatpush1.msra.mxu0 0.0
    %4814 = vmatprep.subr.mxu0 0.0
    %4815 = vmatpush1.msra.mxu0 0.0
    %4816 = vmatprep.subr.mxu0 0.0
    %4817 = vmatpush1.msra.mxu0 0.0
    %4818 = vmatprep.subr.mxu0 0.0
    %4819 = vmatpush1.msra.mxu0 0.0
    %4820 = vmatprep.subr.mxu0 0.0
    %4821 = vmatpush1.msra.mxu0 0.0
    %4822 = vmatprep.subr.mxu0 0.0
    %4823 = vmatpush1.msra.mxu0 0.0
    %4824 = vmatprep.subr.mxu0 0.0
    %4825 = vmatpush1.msra.mxu0 0.0
    %4826 = vmatprep.subr.mxu0 0.0
    %4827 = vmatpush1.msra.mxu0 0.0
    %4828 = vmatprep.subr.mxu0 0.0
    %4829 = vmatpush1.msra.mxu0 0.0
    %4830 = vmatprep.subr.mxu0 0.0
    %4831 = vmatpush1.msra.mxu0 0.0
    %4832 = vmatprep.subr.mxu0 0.0
    %4833 = vmatpush1.msra.mxu0 0.0
    %4834 = vmatprep.subr.mxu0 0.0
    %4835 = vmatpush1.msra.mxu0 0.0
    %4836 = vmatprep.subr.mxu0 0.0
    %4837 = vmatpush1.msra.mxu0 0.0
    %4838 = vmatprep.subr.mxu0 0.0
    %4839 = vmatpush1.msra.mxu0 0.0
    %4840 = vmatprep.mubr.f32.mxu0 0.0
    %4841 = vmatmul.mubr.f32.gmra.mrb[0].mxu0 %v4773
    %v4842 = vpop.f32.mrb[0].mxu0
    %v4843 = vadd.f32 %v1664, %v4842
    %v4844 = vpop.f32.mrb[0].mxu0
    %4845 = vmatprep.mubr.f32.mxu0 0.0
    %4846 = vmatmul.mubr.f32.gmra.mrb[0].mxu0 %v4774
    %v4847 = vpop.f32.mrb[0].mxu0
    %v4848 = vadd.f32 %v1664, %v4847
    %v4849 = vpop.f32.mrb[0].mxu0
    %4850 = vmatprep.mubr.f32.mxu0 0.0
    %4851 = vmatmul.mubr.f32.gmra.mrb[0].mxu0 %v4775
    %v4852 = vpop.f32.mrb[0].mxu0
    %v4853 = vadd.f32 %v1664, %v4852
    %v4854 = vpop.f32.mrb[0].mxu0
    %4855 = vdwg.mxu0
    %v4856 = vadd.f32 %v4612, %v4843
    %v4857 = vadd.f32 %v4613, %v4848
    %v4858 = vadd.f32 %v4614, %v4853
    %v4859 = vsel %vm203, %v4856, 0.0
    %4860 = vadd.xlane.f32.xlu0 %v4859
    %v4861 = vpop.xlane.xlu0 %4860
    %v4862 = vsel %vm203, %v4857, 0.0
    %4863 = vadd.xlane.f32.xlu0 %v4862
    %v4864 = vpop.xlane.xlu0 %4863
    %v4865 = vsel %vm210, %v4858, 0.0
    %4866 = vadd.xlane.f32.xlu0 %v4865
    %v4867 = vpop.xlane.xlu0 %4866
    %v4868 = vmul.f32 %v4861, %v214
    %v4869 = vmul.f32 %v4864, %v214
    %v4870 = vmul.f32 %v4867, %v214
    %v4871 = vsub.f32 %v4856, %v4868
    %v4872 = vsub.f32 %v4857, %v4869
    %v4873 = vsub.f32 %v4858, %v4870
    %v4874 = vmul.f32 %v4871, %v4871
    %v4875 = vmul.f32 %v4872, %v4872
    %v4876 = vmul.f32 %v4873, %v4873
    %v4877 = vsel %vm203, %v4874, 0.0
    %4878 = vadd.xlane.f32.xlu0 %v4877
    %v4879 = vpop.xlane.xlu0 %4878
    %v4880 = vsel %vm203, %v4875, 0.0
    %4881 = vadd.xlane.f32.xlu0 %v4880
    %v4882 = vpop.xlane.xlu0 %4881
    %v4883 = vsel %vm210, %v4876, 0.0
    %4884 = vadd.xlane.f32.xlu0 %v4883
    %v4885 = vpop.xlane.xlu0 %4884
    %v4886 = vmul.f32 %v4879, %v214
    %v4887 = vmul.f32 %v4882, %v214
    %v4888 = vmul.f32 %v4885, %v214
    %v4889 = vadd.f32 %v4886, 1e-06
    %v4890 = vadd.f32 %v4887, 1e-06
    %v4891 = vadd.f32 %v4888, 1e-06
    %v4892 = vrsqrt.pop %v4889
    %v4893 = vrsqrt.pop %v4890
    %v4894 = vrsqrt.pop %v4891
    %v4895 = vmul.f32 %v4871, %v4892
    %v4896 = vmul.f32 %v4872, %v4893
    %v4897 = vmul.f32 %v4873, %v4894
    %v4898 = vmul.f32 %v4895, %v1796
    %v4899 = vmul.f32 %v4896, %v1796
    %v4900 = vmul.f32 %v4897, %v1796
    %v4901 = vadd.f32 %v4898, %v1805
    %v4902 = vadd.f32 %v4899, %v1805
    %v4903 = vadd.f32 %v4900, %v1805
    %v4905 = vsel %vm203, %v4901, 0
    %v4908 = vsel %vm203, %v4902, 0
    %v4911 = vsel %vm203, %v4903, 0
    %4913 = vmatprep.subr.mxu0 0.0
    %4914 = vmatpush1.msra.mxu0 %v1811
    %4915 = vmatprep.subr.mxu0 0.0
    %4916 = vmatpush1.msra.mxu0 %v1812
    %4917 = vmatprep.subr.mxu0 0.0
    %4918 = vmatpush1.msra.mxu0 %v1813
    %4919 = vmatprep.subr.mxu0 0.0
    %4920 = vmatpush1.msra.mxu0 %v1814
    %4921 = vmatprep.subr.mxu0 0.0
    %4922 = vmatpush1.msra.mxu0 0.0
    %4923 = vmatprep.subr.mxu0 0.0
    %4924 = vmatpush1.msra.mxu0 0.0
    %4925 = vmatprep.subr.mxu0 0.0
    %4926 = vmatpush1.msra.mxu0 0.0
    %4927 = vmatprep.subr.mxu0 0.0
    %4928 = vmatpush1.msra.mxu0 0.0
    %4929 = vmatprep.subr.mxu0 0.0
    %4930 = vmatpush1.msra.mxu0 0.0
    %4931 = vmatprep.subr.mxu0 0.0
    %4932 = vmatpush1.msra.mxu0 0.0
    %4933 = vmatprep.subr.mxu0 0.0
    %4934 = vmatpush1.msra.mxu0 0.0
    %4935 = vmatprep.subr.mxu0 0.0
    %4936 = vmatpush1.msra.mxu0 0.0
    %4937 = vmatprep.subr.mxu0 0.0
    %4938 = vmatpush1.msra.mxu0 0.0
    %4939 = vmatprep.subr.mxu0 0.0
    %4940 = vmatpush1.msra.mxu0 0.0
    %4941 = vmatprep.subr.mxu0 0.0
    %4942 = vmatpush1.msra.mxu0 0.0
    %4943 = vmatprep.subr.mxu0 0.0
    %4944 = vmatpush1.msra.mxu0 0.0
    %4945 = vmatprep.subr.mxu0 0.0
    %4946 = vmatpush1.msra.mxu0 0.0
    %4947 = vmatprep.subr.mxu0 0.0
    %4948 = vmatpush1.msra.mxu0 0.0
    %4949 = vmatprep.subr.mxu0 0.0
    %4950 = vmatpush1.msra.mxu0 0.0
    %4951 = vmatprep.subr.mxu0 0.0
    %4952 = vmatpush1.msra.mxu0 0.0
    %4953 = vmatprep.subr.mxu0 0.0
    %4954 = vmatpush1.msra.mxu0 0.0
    %4955 = vmatprep.subr.mxu0 0.0
    %4956 = vmatpush1.msra.mxu0 0.0
    %4957 = vmatprep.subr.mxu0 0.0
    %4958 = vmatpush1.msra.mxu0 0.0
    %4959 = vmatprep.subr.mxu0 0.0
    %4960 = vmatpush1.msra.mxu0 0.0
    %4961 = vmatprep.subr.mxu0 0.0
    %4962 = vmatpush1.msra.mxu0 0.0
    %4963 = vmatprep.subr.mxu0 0.0
    %4964 = vmatpush1.msra.mxu0 0.0
    %4965 = vmatprep.subr.mxu0 0.0
    %4966 = vmatpush1.msra.mxu0 0.0
    %4967 = vmatprep.subr.mxu0 0.0
    %4968 = vmatpush1.msra.mxu0 0.0
    %4969 = vmatprep.subr.mxu0 0.0
    %4970 = vmatpush1.msra.mxu0 0.0
    %4971 = vmatprep.subr.mxu0 0.0
    %4972 = vmatpush1.msra.mxu0 0.0
    %4973 = vmatprep.subr.mxu0 0.0
    %4974 = vmatpush1.msra.mxu0 0.0
    %4975 = vmatprep.subr.mxu0 0.0
    %4976 = vmatpush1.msra.mxu0 0.0
    %4977 = vmatprep.mubr.f32.mxu0 0.0
    %4978 = vmatmul.mubr.f32.gmra.mrb[0].mxu0 %v4905
    %v4979 = vpop.f32.mrb[0].mxu0
    %v4980 = vadd.f32 %v1821, %v4979
    %v4981 = vpop.f32.mrb[0].mxu0
    %4982 = vmatprep.mubr.f32.mxu0 0.0
    %4983 = vmatmul.mubr.f32.gmra.mrb[0].mxu0 %v4908
    %v4984 = vpop.f32.mrb[0].mxu0
    %v4985 = vadd.f32 %v1821, %v4984
    %v4986 = vpop.f32.mrb[0].mxu0
    %4987 = vmatprep.mubr.f32.mxu0 0.0
    %4988 = vmatmul.mubr.f32.gmra.mrb[0].mxu0 %v4911
    %v4989 = vpop.f32.mrb[0].mxu0
    %v4990 = vadd.f32 %v1821, %v4989
    %v4991 = vpop.f32.mrb[0].mxu0
    %4992 = vdwg.mxu0
    %4996 = vrot.lane.b32.xlu0 %v4980, 96
    %v4997 = vpop.permute.xlu0 %4996
    %4998 = vrot.lane.b32.xlu0 %v4985, 96
    %v4999 = vpop.permute.xlu0 %4998
    %5000 = vrot.lane.b32.xlu0 %v4990, 96
    %v5001 = vpop.permute.xlu0 %5000
    %v5002 = vsel %vm372, %v4980, 0
    %v5004 = vsel %vm372, %v4985, 0
    %v5006 = vsel %vm372, %v4990, 0
    %v5008 = vsel %vm372, %v4997, 0
    %v5010 = vsel %vm372, %v4999, 0
    %v5012 = vsel %vm372, %v5001, 0
    %5014 = vmatprep.subr.mxu0 0.0
    %5015 = vmatpush1.xpose.msra.mxu0 %v5008
    %5016 = vmatprep.subr.mxu0 0.0
    %5017 = vmatpush1.xpose.msra.mxu0 %v5010
    %5018 = vmatprep.subr.mxu0 0.0
    %5019 = vmatpush1.xpose.msra.mxu0 %v5012
    %5020 = vmatprep.subr.mxu0 0.0
    %5021 = vmatpush1.xpose.msra.mxu0 0.0
    %5022 = vmatprep.subr.mxu0 0.0
    %5023 = vmatpush1.xpose.msra.mxu0 0.0
    %5024 = vmatprep.subr.mxu0 0.0
    %5025 = vmatpush1.xpose.msra.mxu0 0.0
    %5026 = vmatprep.subr.mxu0 0.0
    %5027 = vmatpush1.xpose.msra.mxu0 0.0
    %5028 = vmatprep.subr.mxu0 0.0
    %5029 = vmatpush1.xpose.msra.mxu0 0.0
    %5030 = vmatprep.subr.mxu0 0.0
    %5031 = vmatpush1.xpose.msra.mxu0 0.0
    %5032 = vmatprep.subr.mxu0 0.0
    %5033 = vmatpush1.xpose.msra.mxu0 0.0
    %5034 = vmatprep.subr.mxu0 0.0
    %5035 = vmatpush1.xpose.msra.mxu0 0.0
    %5036 = vmatprep.subr.mxu0 0.0
    %5037 = vmatpush1.xpose.msra.mxu0 0.0
    %5038 = vmatprep.subr.mxu0 0.0
    %5039 = vmatpush1.xpose.msra.mxu0 0.0
    %5040 = vmatprep.subr.mxu0 0.0
    %5041 = vmatpush1.xpose.msra.mxu0 0.0
    %5042 = vmatprep.subr.mxu0 0.0
    %5043 = vmatpush1.xpose.msra.mxu0 0.0
    %5044 = vmatprep.subr.mxu0 0.0
    %5045 = vmatpush1.xpose.msra.mxu0 0.0
    %5046 = vmatprep.subr.mxu0 0.0
    %5047 = vmatpush1.xpose.msra.mxu0 0.0
    %5048 = vmatprep.subr.mxu0 0.0
    %5049 = vmatpush1.xpose.msra.mxu0 0.0
    %5050 = vmatprep.subr.mxu0 0.0
    %5051 = vmatpush1.xpose.msra.mxu0 0.0
    %5052 = vmatprep.subr.mxu0 0.0
    %5053 = vmatpush1.xpose.msra.mxu0 0.0
    %5054 = vmatprep.subr.mxu0 0.0
    %5055 = vmatpush1.xpose.msra.mxu0 0.0
    %5056 = vmatprep.subr.mxu0 0.0
    %5057 = vmatpush1.xpose.msra.mxu0 0.0
    %5058 = vmatprep.subr.mxu0 0.0
    %5059 = vmatpush1.xpose.msra.mxu0 0.0
    %5060 = vmatprep.subr.mxu0 0.0
    %5061 = vmatpush1.xpose.msra.mxu0 0.0
    %5062 = vmatprep.subr.mxu0 0.0
    %5063 = vmatpush1.xpose.msra.mxu0 0.0
    %5064 = vmatprep.subr.mxu0 0.0
    %5065 = vmatpush1.xpose.msra.mxu0 0.0
    %5066 = vmatprep.subr.mxu0 0.0
    %5067 = vmatpush1.xpose.msra.mxu0 0.0
    %5068 = vmatprep.subr.mxu0 0.0
    %5069 = vmatpush1.xpose.msra.mxu0 0.0
    %5070 = vmatprep.subr.mxu0 0.0
    %5071 = vmatpush1.xpose.msra.mxu0 0.0
    %5072 = vmatprep.subr.mxu0 0.0
    %5073 = vmatpush1.xpose.msra.mxu0 0.0
    %5074 = vmatprep.subr.mxu0 0.0
    %5075 = vmatpush1.xpose.msra.mxu0 0.0
    %5076 = vmatprep.subr.mxu0 0.0
    %5077 = vmatpush1.xpose.msra.mxu0 0.0
    %5078 = vmatprep.mubr.f32.mxu0 0.0
    %5079 = vmatmul.mubr.f32.gmra.mrb[0].mxu0 %v5002
    %v5080 = vpop.f32.mrb[0].mxu0
    %v5081 = vadd.f32 0.0, %v5080
    %v5082 = vpop.f32.mrb[0].mxu0
    %5083 = vmatprep.mubr.f32.mxu0 0.0
    %5084 = vmatmul.mubr.f32.gmra.mrb[0].mxu0 %v5004
    %v5085 = vpop.f32.mrb[0].mxu0
    %v5086 = vadd.f32 0.0, %v5085
    %v5087 = vpop.f32.mrb[0].mxu0
    %5088 = vmatprep.mubr.f32.mxu0 0.0
    %5089 = vmatmul.mubr.f32.gmra.mrb[0].mxu0 %v5006
    %v5090 = vpop.f32.mrb[0].mxu0
    %v5091 = vadd.f32 0.0, %v5090
    %v5092 = vpop.f32.mrb[0].mxu0
    %5093 = vdwg.mxu0
    %v5094 = vsel %vm465, %v5081, -inf
    %5095 = vmax.xlane.f32.xlu0 %v5094
    %v5096 = vpop.xlane.xlu0 %5095
    %v5097 = vsel %vm465, %v5086, -inf
    %5098 = vmax.xlane.f32.xlu0 %v5097
    %v5099 = vpop.xlane.xlu0 %5098
    %v5100 = vsel %vm472, %v5091, -inf
    %5101 = vmax.xlane.f32.xlu0 %v5100
    %v5102 = vpop.xlane.xlu0 %5101
    %v5103 = vsub.f32 %v5081, %v5096
    %v5104 = vsub.f32 %v5086, %v5099
    %v5105 = vsub.f32 %v5091, %v5102
    %v5106 = vmul.f32 %v5103, 1.442695
    %v5107 = vpow.pop %v5106
    %v5108 = vmul.f32 %v5104, 1.442695
    %v5109 = vpow.pop %v5108
    %v5110 = vmul.f32 %v5105, 1.442695
    %v5111 = vpow.pop %v5110
    %v5112 = vsel %vm465, %v5107, 0.0
    %5113 = vadd.xlane.f32.xlu0 %v5112
    %v5114 = vpop.xlane.xlu0 %5113
    %v5115 = vsel %vm465, %v5109, 0.0
    %5116 = vadd.xlane.f32.xlu0 %v5115
    %v5117 = vpop.xlane.xlu0 %5116
    %v5118 = vsel %vm472, %v5111, 0.0
    %5119 = vadd.xlane.f32.xlu0 %v5118
    %v5120 = vpop.xlane.xlu0 %5119
    %v5121 = vrcp.pop %v5114
    %v5122 = vrcp.pop %v5117
    %v5123 = vrcp.pop %v5120
    %v5124 = vmul.f32 %v5107, %v5121
    %v5125 = vmul.f32 %v5109, %v5122
    %v5126 = vmul.f32 %v5111, %v5123
    %5127 = vrot.lane.b32.xlu0 %v4980, 64
    %v5128 = vpop.permute.xlu0 %5127
    %5129 = vrot.lane.b32.xlu0 %v4985, 64
    %v5130 = vpop.permute.xlu0 %5129
    %5131 = vrot.lane.b32.xlu0 %v4990, 64
    %v5132 = vpop.permute.xlu0 %5131
    %v5136 = vsel %vm465, %v5124, 0
    %v5139 = vsel %vm465, %v5125, 0
    %v5142 = vsel %vm465, %v5126, 0
    %v5144 = vsel %vm193, %v5132, 0
    %5146 = vmatprep.subr.mxu0 0.0
    %5147 = vmatpush1.msra.mxu0 %v5128
    %5148 = vmatprep.subr.mxu0 0.0
    %5149 = vmatpush1.msra.mxu0 %v5130
    %5150 = vmatprep.subr.mxu0 0.0
    %5151 = vmatpush1.msra.mxu0 %v5144
    %5152 = vmatprep.subr.mxu0 0.0
    %5153 = vmatpush1.msra.mxu0 0.0
    %5154 = vmatprep.subr.mxu0 0.0
    %5155 = vmatpush1.msra.mxu0 0.0
    %5156 = vmatprep.subr.mxu0 0.0
    %5157 = vmatpush1.msra.mxu0 0.0
    %5158 = vmatprep.subr.mxu0 0.0
    %5159 = vmatpush1.msra.mxu0 0.0
    %5160 = vmatprep.subr.mxu0 0.0
    %5161 = vmatpush1.msra.mxu0 0.0
    %5162 = vmatprep.subr.mxu0 0.0
    %5163 = vmatpush1.msra.mxu0 0.0
    %5164 = vmatprep.subr.mxu0 0.0
    %5165 = vmatpush1.msra.mxu0 0.0
    %5166 = vmatprep.subr.mxu0 0.0
    %5167 = vmatpush1.msra.mxu0 0.0
    %5168 = vmatprep.subr.mxu0 0.0
    %5169 = vmatpush1.msra.mxu0 0.0
    %5170 = vmatprep.subr.mxu0 0.0
    %5171 = vmatpush1.msra.mxu0 0.0
    %5172 = vmatprep.subr.mxu0 0.0
    %5173 = vmatpush1.msra.mxu0 0.0
    %5174 = vmatprep.subr.mxu0 0.0
    %5175 = vmatpush1.msra.mxu0 0.0
    %5176 = vmatprep.subr.mxu0 0.0
    %5177 = vmatpush1.msra.mxu0 0.0
    %5178 = vmatprep.subr.mxu0 0.0
    %5179 = vmatpush1.msra.mxu0 0.0
    %5180 = vmatprep.subr.mxu0 0.0
    %5181 = vmatpush1.msra.mxu0 0.0
    %5182 = vmatprep.subr.mxu0 0.0
    %5183 = vmatpush1.msra.mxu0 0.0
    %5184 = vmatprep.subr.mxu0 0.0
    %5185 = vmatpush1.msra.mxu0 0.0
    %5186 = vmatprep.subr.mxu0 0.0
    %5187 = vmatpush1.msra.mxu0 0.0
    %5188 = vmatprep.subr.mxu0 0.0
    %5189 = vmatpush1.msra.mxu0 0.0
    %5190 = vmatprep.subr.mxu0 0.0
    %5191 = vmatpush1.msra.mxu0 0.0
    %5192 = vmatprep.subr.mxu0 0.0
    %5193 = vmatpush1.msra.mxu0 0.0
    %5194 = vmatprep.subr.mxu0 0.0
    %5195 = vmatpush1.msra.mxu0 0.0
    %5196 = vmatprep.subr.mxu0 0.0
    %5197 = vmatpush1.msra.mxu0 0.0
    %5198 = vmatprep.subr.mxu0 0.0
    %5199 = vmatpush1.msra.mxu0 0.0
    %5200 = vmatprep.subr.mxu0 0.0
    %5201 = vmatpush1.msra.mxu0 0.0
    %5202 = vmatprep.subr.mxu0 0.0
    %5203 = vmatpush1.msra.mxu0 0.0
    %5204 = vmatprep.subr.mxu0 0.0
    %5205 = vmatpush1.msra.mxu0 0.0
    %5206 = vmatprep.subr.mxu0 0.0
    %5207 = vmatpush1.msra.mxu0 0.0
    %5208 = vmatprep.subr.mxu0 0.0
    %5209 = vmatpush1.msra.mxu0 0.0
    %5210 = vmatprep.mubr.f32.mxu0 0.0
    %5211 = vmatmul.mubr.f32.gmra.mrb[0].mxu0 %v5136
    %v5212 = vpop.f32.mrb[0].mxu0
    %v5213 = vadd.f32 0.0, %v5212
    %v5214 = vpop.f32.mrb[0].mxu0
    %5215 = vmatprep.mubr.f32.mxu0 0.0
    %5216 = vmatmul.mubr.f32.gmra.mrb[0].mxu0 %v5139
    %v5217 = vpop.f32.mrb[0].mxu0
    %v5218 = vadd.f32 0.0, %v5217
    %v5219 = vpop.f32.mrb[0].mxu0
    %5220 = vmatprep.mubr.f32.mxu0 0.0
    %5221 = vmatmul.mubr.f32.gmra.mrb[0].mxu0 %v5142
    %v5222 = vpop.f32.mrb[0].mxu0
    %v5223 = vadd.f32 0.0, %v5222
    %v5224 = vpop.f32.mrb[0].mxu0
    %5225 = vdwg.mxu0
    %5226 = vrot.lane.b32.xlu0 %v4980, 120
    %v5227 = vpop.permute.xlu0 %5226
    %5228 = vrot.lane.b32.xlu0 %v4985, 120
    %v5229 = vpop.permute.xlu0 %5228
    %5230 = vrot.lane.b32.xlu0 %v4990, 120
    %v5231 = vpop.permute.xlu0 %5230
    %5232 = vrot.lane.b32.xlu0 %v4980, 88
    %v5233 = vpop.permute.xlu0 %5232
    %5234 = vrot.lane.b32.xlu0 %v4985, 88
    %v5235 = vpop.permute.xlu0 %5234
    %5236 = vrot.lane.b32.xlu0 %v4990, 88
    %v5237 = vpop.permute.xlu0 %5236
    %v5238 = vsel %vm372, %v5227, 0
    %v5240 = vsel %vm372, %v5229, 0
    %v5242 = vsel %vm372, %v5231, 0
    %v5244 = vsel %vm372, %v5233, 0
    %v5246 = vsel %vm372, %v5235, 0
    %v5248 = vsel %vm372, %v5237, 0
    %5250 = vmatprep.subr.mxu0 0.0
    %5251 = vmatpush1.xpose.msra.mxu0 %v5244
    %5252 = vmatprep.subr.mxu0 0.0
    %5253 = vmatpush1.xpose.msra.mxu0 %v5246
    %5254 = vmatprep.subr.mxu0 0.0
    %5255 = vmatpush1.xpose.msra.mxu0 %v5248
    %5256 = vmatprep.subr.mxu0 0.0
    %5257 = vmatpush1.xpose.msra.mxu0 0.0
    %5258 = vmatprep.subr.mxu0 0.0
    %5259 = vmatpush1.xpose.msra.mxu0 0.0
    %5260 = vmatprep.subr.mxu0 0.0
    %5261 = vmatpush1.xpose.msra.mxu0 0.0
    %5262 = vmatprep.subr.mxu0 0.0
    %5263 = vmatpush1.xpose.msra.mxu0 0.0
    %5264 = vmatprep.subr.mxu0 0.0
    %5265 = vmatpush1.xpose.msra.mxu0 0.0
    %5266 = vmatprep.subr.mxu0 0.0
    %5267 = vmatpush1.xpose.msra.mxu0 0.0
    %5268 = vmatprep.subr.mxu0 0.0
    %5269 = vmatpush1.xpose.msra.mxu0 0.0
    %5270 = vmatprep.subr.mxu0 0.0
    %5271 = vmatpush1.xpose.msra.mxu0 0.0
    %5272 = vmatprep.subr.mxu0 0.0
    %5273 = vmatpush1.xpose.msra.mxu0 0.0
    %5274 = vmatprep.subr.mxu0 0.0
    %5275 = vmatpush1.xpose.msra.mxu0 0.0
    %5276 = vmatprep.subr.mxu0 0.0
    %5277 = vmatpush1.xpose.msra.mxu0 0.0
    %5278 = vmatprep.subr.mxu0 0.0
    %5279 = vmatpush1.xpose.msra.mxu0 0.0
    %5280 = vmatprep.subr.mxu0 0.0
    %5281 = vmatpush1.xpose.msra.mxu0 0.0
    %5282 = vmatprep.subr.mxu0 0.0
    %5283 = vmatpush1.xpose.msra.mxu0 0.0
    %5284 = vmatprep.subr.mxu0 0.0
    %5285 = vmatpush1.xpose.msra.mxu0 0.0
    %5286 = vmatprep.subr.mxu0 0.0
    %5287 = vmatpush1.xpose.msra.mxu0 0.0
    %5288 = vmatprep.subr.mxu0 0.0
    %5289 = vmatpush1.xpose.msra.mxu0 0.0
    %5290 = vmatprep.subr.mxu0 0.0
    %5291 = vmatpush1.xpose.msra.mxu0 0.0
    %5292 = vmatprep.subr.mxu0 0.0
    %5293 = vmatpush1.xpose.msra.mxu0 0.0
    %5294 = vmatprep.subr.mxu0 0.0
    %5295 = vmatpush1.xpose.msra.mxu0 0.0
    %5296 = vmatprep.subr.mxu0 0.0
    %5297 = vmatpush1.xpose.msra.mxu0 0.0
    %5298 = vmatprep.subr.mxu0 0.0
    %5299 = vmatpush1.xpose.msra.mxu0 0.0
    %5300 = vmatprep.subr.mxu0 0.0
    %5301 = vmatpush1.xpose.msra.mxu0 0.0
    %5302 = vmatprep.subr.mxu0 0.0
    %5303 = vmatpush1.xpose.msra.mxu0 0.0
    %5304 = vmatprep.subr.mxu0 0.0
    %5305 = vmatpush1.xpose.msra.mxu0 0.0
    %5306 = vmatprep.subr.mxu0 0.0
    %5307 = vmatpush1.xpose.msra.mxu0 0.0
    %5308 = vmatprep.subr.mxu0 0.0
    %5309 = vmatpush1.xpose.msra.mxu0 0.0
    %5310 = vmatprep.subr.mxu0 0.0
    %5311 = vmatpush1.xpose.msra.mxu0 0.0
    %5312 = vmatprep.subr.mxu0 0.0
    %5313 = vmatpush1.xpose.msra.mxu0 0.0
    %5314 = vmatprep.mubr.f32.mxu0 0.0
    %5315 = vmatmul.mubr.f32.gmra.mrb[0].mxu0 %v5238
    %v5316 = vpop.f32.mrb[0].mxu0
    %v5317 = vadd.f32 0.0, %v5316
    %v5318 = vpop.f32.mrb[0].mxu0
    %5319 = vmatprep.mubr.f32.mxu0 0.0
    %5320 = vmatmul.mubr.f32.gmra.mrb[0].mxu0 %v5240
    %v5321 = vpop.f32.mrb[0].mxu0
    %v5322 = vadd.f32 0.0, %v5321
    %v5323 = vpop.f32.mrb[0].mxu0
    %5324 = vmatprep.mubr.f32.mxu0 0.0
    %5325 = vmatmul.mubr.f32.gmra.mrb[0].mxu0 %v5242
    %v5326 = vpop.f32.mrb[0].mxu0
    %v5327 = vadd.f32 0.0, %v5326
    %v5328 = vpop.f32.mrb[0].mxu0
    %5329 = vdwg.mxu0
    %v5330 = vsel %vm465, %v5317, -inf
    %5331 = vmax.xlane.f32.xlu0 %v5330
    %v5332 = vpop.xlane.xlu0 %5331
    %v5333 = vsel %vm465, %v5322, -inf
    %5334 = vmax.xlane.f32.xlu0 %v5333
    %v5335 = vpop.xlane.xlu0 %5334
    %v5336 = vsel %vm472, %v5327, -inf
    %5337 = vmax.xlane.f32.xlu0 %v5336
    %v5338 = vpop.xlane.xlu0 %5337
    %v5339 = vsub.f32 %v5317, %v5332
    %v5340 = vsub.f32 %v5322, %v5335
    %v5341 = vsub.f32 %v5327, %v5338
    %v5342 = vmul.f32 %v5339, 1.442695
    %v5343 = vpow.pop %v5342
    %v5344 = vmul.f32 %v5340, 1.442695
    %v5345 = vpow.pop %v5344
    %v5346 = vmul.f32 %v5341, 1.442695
    %v5347 = vpow.pop %v5346
    %v5348 = vsel %vm465, %v5343, 0.0
    %5349 = vadd.xlane.f32.xlu0 %v5348
    %v5350 = vpop.xlane.xlu0 %5349
    %v5351 = vsel %vm465, %v5345, 0.0
    %5352 = vadd.xlane.f32.xlu0 %v5351
    %v5353 = vpop.xlane.xlu0 %5352
    %v5354 = vsel %vm472, %v5347, 0.0
    %5355 = vadd.xlane.f32.xlu0 %v5354
    %v5356 = vpop.xlane.xlu0 %5355
    %v5357 = vrcp.pop %v5350
    %v5358 = vrcp.pop %v5353
    %v5359 = vrcp.pop %v5356
    %v5360 = vmul.f32 %v5343, %v5357
    %v5361 = vmul.f32 %v5345, %v5358
    %v5362 = vmul.f32 %v5347, %v5359
    %5363 = vrot.lane.b32.xlu0 %v4980, 56
    %v5364 = vpop.permute.xlu0 %5363
    %5365 = vrot.lane.b32.xlu0 %v4985, 56
    %v5366 = vpop.permute.xlu0 %5365
    %5367 = vrot.lane.b32.xlu0 %v4990, 56
    %v5368 = vpop.permute.xlu0 %5367
    %v5372 = vsel %vm465, %v5360, 0
    %v5375 = vsel %vm465, %v5361, 0
    %v5378 = vsel %vm465, %v5362, 0
    %v5380 = vsel %vm193, %v5368, 0
    %5382 = vmatprep.subr.mxu0 0.0
    %5383 = vmatpush1.msra.mxu0 %v5364
    %5384 = vmatprep.subr.mxu0 0.0
    %5385 = vmatpush1.msra.mxu0 %v5366
    %5386 = vmatprep.subr.mxu0 0.0
    %5387 = vmatpush1.msra.mxu0 %v5380
    %5388 = vmatprep.subr.mxu0 0.0
    %5389 = vmatpush1.msra.mxu0 0.0
    %5390 = vmatprep.subr.mxu0 0.0
    %5391 = vmatpush1.msra.mxu0 0.0
    %5392 = vmatprep.subr.mxu0 0.0
    %5393 = vmatpush1.msra.mxu0 0.0
    %5394 = vmatprep.subr.mxu0 0.0
    %5395 = vmatpush1.msra.mxu0 0.0
    %5396 = vmatprep.subr.mxu0 0.0
    %5397 = vmatpush1.msra.mxu0 0.0
    %5398 = vmatprep.subr.mxu0 0.0
    %5399 = vmatpush1.msra.mxu0 0.0
    %5400 = vmatprep.subr.mxu0 0.0
    %5401 = vmatpush1.msra.mxu0 0.0
    %5402 = vmatprep.subr.mxu0 0.0
    %5403 = vmatpush1.msra.mxu0 0.0
    %5404 = vmatprep.subr.mxu0 0.0
    %5405 = vmatpush1.msra.mxu0 0.0
    %5406 = vmatprep.subr.mxu0 0.0
    %5407 = vmatpush1.msra.mxu0 0.0
    %5408 = vmatprep.subr.mxu0 0.0
    %5409 = vmatpush1.msra.mxu0 0.0
    %5410 = vmatprep.subr.mxu0 0.0
    %5411 = vmatpush1.msra.mxu0 0.0
    %5412 = vmatprep.subr.mxu0 0.0
    %5413 = vmatpush1.msra.mxu0 0.0
    %5414 = vmatprep.subr.mxu0 0.0
    %5415 = vmatpush1.msra.mxu0 0.0
    %5416 = vmatprep.subr.mxu0 0.0
    %5417 = vmatpush1.msra.mxu0 0.0
    %5418 = vmatprep.subr.mxu0 0.0
    %5419 = vmatpush1.msra.mxu0 0.0
    %5420 = vmatprep.subr.mxu0 0.0
    %5421 = vmatpush1.msra.mxu0 0.0
    %5422 = vmatprep.subr.mxu0 0.0
    %5423 = vmatpush1.msra.mxu0 0.0
    %5424 = vmatprep.subr.mxu0 0.0
    %5425 = vmatpush1.msra.mxu0 0.0
    %5426 = vmatprep.subr.mxu0 0.0
    %5427 = vmatpush1.msra.mxu0 0.0
    %5428 = vmatprep.subr.mxu0 0.0
    %5429 = vmatpush1.msra.mxu0 0.0
    %5430 = vmatprep.subr.mxu0 0.0
    %5431 = vmatpush1.msra.mxu0 0.0
    %5432 = vmatprep.subr.mxu0 0.0
    %5433 = vmatpush1.msra.mxu0 0.0
    %5434 = vmatprep.subr.mxu0 0.0
    %5435 = vmatpush1.msra.mxu0 0.0
    %5436 = vmatprep.subr.mxu0 0.0
    %5437 = vmatpush1.msra.mxu0 0.0
    %5438 = vmatprep.subr.mxu0 0.0
    %5439 = vmatpush1.msra.mxu0 0.0
    %5440 = vmatprep.subr.mxu0 0.0
    %5441 = vmatpush1.msra.mxu0 0.0
    %5442 = vmatprep.subr.mxu0 0.0
    %5443 = vmatpush1.msra.mxu0 0.0
    %5444 = vmatprep.subr.mxu0 0.0
    %5445 = vmatpush1.msra.mxu0 0.0
    %5446 = vmatprep.mubr.f32.mxu0 0.0
    %5447 = vmatmul.mubr.f32.gmra.mrb[0].mxu0 %v5372
    %v5448 = vpop.f32.mrb[0].mxu0
    %v5449 = vadd.f32 0.0, %v5448
    %v5450 = vpop.f32.mrb[0].mxu0
    %5451 = vmatprep.mubr.f32.mxu0 0.0
    %5452 = vmatmul.mubr.f32.gmra.mrb[0].mxu0 %v5375
    %v5453 = vpop.f32.mrb[0].mxu0
    %v5454 = vadd.f32 0.0, %v5453
    %v5455 = vpop.f32.mrb[0].mxu0
    %5456 = vmatprep.mubr.f32.mxu0 0.0
    %5457 = vmatmul.mubr.f32.gmra.mrb[0].mxu0 %v5378
    %v5458 = vpop.f32.mrb[0].mxu0
    %v5459 = vadd.f32 0.0, %v5458
    %v5460 = vpop.f32.mrb[0].mxu0
    %5461 = vdwg.mxu0
    %5462 = vrot.lane.b32.xlu0 %v4980, 112
    %v5463 = vpop.permute.xlu0 %5462
    %5464 = vrot.lane.b32.xlu0 %v4985, 112
    %v5465 = vpop.permute.xlu0 %5464
    %5466 = vrot.lane.b32.xlu0 %v4990, 112
    %v5467 = vpop.permute.xlu0 %5466
    %5468 = vrot.lane.b32.xlu0 %v4980, 80
    %v5469 = vpop.permute.xlu0 %5468
    %5470 = vrot.lane.b32.xlu0 %v4985, 80
    %v5471 = vpop.permute.xlu0 %5470
    %5472 = vrot.lane.b32.xlu0 %v4990, 80
    %v5473 = vpop.permute.xlu0 %5472
    %v5474 = vsel %vm372, %v5463, 0
    %v5476 = vsel %vm372, %v5465, 0
    %v5478 = vsel %vm372, %v5467, 0
    %v5480 = vsel %vm372, %v5469, 0
    %v5482 = vsel %vm372, %v5471, 0
    %v5484 = vsel %vm372, %v5473, 0
    %5486 = vmatprep.subr.mxu0 0.0
    %5487 = vmatpush1.xpose.msra.mxu0 %v5480
    %5488 = vmatprep.subr.mxu0 0.0
    %5489 = vmatpush1.xpose.msra.mxu0 %v5482
    %5490 = vmatprep.subr.mxu0 0.0
    %5491 = vmatpush1.xpose.msra.mxu0 %v5484
    %5492 = vmatprep.subr.mxu0 0.0
    %5493 = vmatpush1.xpose.msra.mxu0 0.0
    %5494 = vmatprep.subr.mxu0 0.0
    %5495 = vmatpush1.xpose.msra.mxu0 0.0
    %5496 = vmatprep.subr.mxu0 0.0
    %5497 = vmatpush1.xpose.msra.mxu0 0.0
    %5498 = vmatprep.subr.mxu0 0.0
    %5499 = vmatpush1.xpose.msra.mxu0 0.0
    %5500 = vmatprep.subr.mxu0 0.0
    %5501 = vmatpush1.xpose.msra.mxu0 0.0
    %5502 = vmatprep.subr.mxu0 0.0
    %5503 = vmatpush1.xpose.msra.mxu0 0.0
    %5504 = vmatprep.subr.mxu0 0.0
    %5505 = vmatpush1.xpose.msra.mxu0 0.0
    %5506 = vmatprep.subr.mxu0 0.0
    %5507 = vmatpush1.xpose.msra.mxu0 0.0
    %5508 = vmatprep.subr.mxu0 0.0
    %5509 = vmatpush1.xpose.msra.mxu0 0.0
    %5510 = vmatprep.subr.mxu0 0.0
    %5511 = vmatpush1.xpose.msra.mxu0 0.0
    %5512 = vmatprep.subr.mxu0 0.0
    %5513 = vmatpush1.xpose.msra.mxu0 0.0
    %5514 = vmatprep.subr.mxu0 0.0
    %5515 = vmatpush1.xpose.msra.mxu0 0.0
    %5516 = vmatprep.subr.mxu0 0.0
    %5517 = vmatpush1.xpose.msra.mxu0 0.0
    %5518 = vmatprep.subr.mxu0 0.0
    %5519 = vmatpush1.xpose.msra.mxu0 0.0
    %5520 = vmatprep.subr.mxu0 0.0
    %5521 = vmatpush1.xpose.msra.mxu0 0.0
    %5522 = vmatprep.subr.mxu0 0.0
    %5523 = vmatpush1.xpose.msra.mxu0 0.0
    %5524 = vmatprep.subr.mxu0 0.0
    %5525 = vmatpush1.xpose.msra.mxu0 0.0
    %5526 = vmatprep.subr.mxu0 0.0
    %5527 = vmatpush1.xpose.msra.mxu0 0.0
    %5528 = vmatprep.subr.mxu0 0.0
    %5529 = vmatpush1.xpose.msra.mxu0 0.0
    %5530 = vmatprep.subr.mxu0 0.0
    %5531 = vmatpush1.xpose.msra.mxu0 0.0
    %5532 = vmatprep.subr.mxu0 0.0
    %5533 = vmatpush1.xpose.msra.mxu0 0.0
    %5534 = vmatprep.subr.mxu0 0.0
    %5535 = vmatpush1.xpose.msra.mxu0 0.0
    %5536 = vmatprep.subr.mxu0 0.0
    %5537 = vmatpush1.xpose.msra.mxu0 0.0
    %5538 = vmatprep.subr.mxu0 0.0
    %5539 = vmatpush1.xpose.msra.mxu0 0.0
    %5540 = vmatprep.subr.mxu0 0.0
    %5541 = vmatpush1.xpose.msra.mxu0 0.0
    %5542 = vmatprep.subr.mxu0 0.0
    %5543 = vmatpush1.xpose.msra.mxu0 0.0
    %5544 = vmatprep.subr.mxu0 0.0
    %5545 = vmatpush1.xpose.msra.mxu0 0.0
    %5546 = vmatprep.subr.mxu0 0.0
    %5547 = vmatpush1.xpose.msra.mxu0 0.0
    %5548 = vmatprep.subr.mxu0 0.0
    %5549 = vmatpush1.xpose.msra.mxu0 0.0
    %5550 = vmatprep.mubr.f32.mxu0 0.0
    %5551 = vmatmul.mubr.f32.gmra.mrb[0].mxu0 %v5474
    %v5552 = vpop.f32.mrb[0].mxu0
    %v5553 = vadd.f32 0.0, %v5552
    %v5554 = vpop.f32.mrb[0].mxu0
    %5555 = vmatprep.mubr.f32.mxu0 0.0
    %5556 = vmatmul.mubr.f32.gmra.mrb[0].mxu0 %v5476
    %v5557 = vpop.f32.mrb[0].mxu0
    %v5558 = vadd.f32 0.0, %v5557
    %v5559 = vpop.f32.mrb[0].mxu0
    %5560 = vmatprep.mubr.f32.mxu0 0.0
    %5561 = vmatmul.mubr.f32.gmra.mrb[0].mxu0 %v5478
    %v5562 = vpop.f32.mrb[0].mxu0
    %v5563 = vadd.f32 0.0, %v5562
    %v5564 = vpop.f32.mrb[0].mxu0
    %5565 = vdwg.mxu0
    %v5566 = vsel %vm465, %v5553, -inf
    %5567 = vmax.xlane.f32.xlu0 %v5566
    %v5568 = vpop.xlane.xlu0 %5567
    %v5569 = vsel %vm465, %v5558, -inf
    %5570 = vmax.xlane.f32.xlu0 %v5569
    %v5571 = vpop.xlane.xlu0 %5570
    %v5572 = vsel %vm472, %v5563, -inf
    %5573 = vmax.xlane.f32.xlu0 %v5572
    %v5574 = vpop.xlane.xlu0 %5573
    %v5575 = vsub.f32 %v5553, %v5568
    %v5576 = vsub.f32 %v5558, %v5571
    %v5577 = vsub.f32 %v5563, %v5574
    %v5578 = vmul.f32 %v5575, 1.442695
    %v5579 = vpow.pop %v5578
    %v5580 = vmul.f32 %v5576, 1.442695
    %v5581 = vpow.pop %v5580
    %v5582 = vmul.f32 %v5577, 1.442695
    %v5583 = vpow.pop %v5582
    %v5584 = vsel %vm465, %v5579, 0.0
    %5585 = vadd.xlane.f32.xlu0 %v5584
    %v5586 = vpop.xlane.xlu0 %5585
    %v5587 = vsel %vm465, %v5581, 0.0
    %5588 = vadd.xlane.f32.xlu0 %v5587
    %v5589 = vpop.xlane.xlu0 %5588
    %v5590 = vsel %vm472, %v5583, 0.0
    %5591 = vadd.xlane.f32.xlu0 %v5590
    %v5592 = vpop.xlane.xlu0 %5591
    %v5593 = vrcp.pop %v5586
    %v5594 = vrcp.pop %v5589
    %v5595 = vrcp.pop %v5592
    %v5596 = vmul.f32 %v5579, %v5593
    %v5597 = vmul.f32 %v5581, %v5594
    %v5598 = vmul.f32 %v5583, %v5595
    %5599 = vrot.lane.b32.xlu0 %v4980, 48
    %v5600 = vpop.permute.xlu0 %5599
    %5601 = vrot.lane.b32.xlu0 %v4985, 48
    %v5602 = vpop.permute.xlu0 %5601
    %5603 = vrot.lane.b32.xlu0 %v4990, 48
    %v5604 = vpop.permute.xlu0 %5603
    %v5608 = vsel %vm465, %v5596, 0
    %v5611 = vsel %vm465, %v5597, 0
    %v5614 = vsel %vm465, %v5598, 0
    %v5616 = vsel %vm193, %v5604, 0
    %5618 = vmatprep.subr.mxu0 0.0
    %5619 = vmatpush1.msra.mxu0 %v5600
    %5620 = vmatprep.subr.mxu0 0.0
    %5621 = vmatpush1.msra.mxu0 %v5602
    %5622 = vmatprep.subr.mxu0 0.0
    %5623 = vmatpush1.msra.mxu0 %v5616
    %5624 = vmatprep.subr.mxu0 0.0
    %5625 = vmatpush1.msra.mxu0 0.0
    %5626 = vmatprep.subr.mxu0 0.0
    %5627 = vmatpush1.msra.mxu0 0.0
    %5628 = vmatprep.subr.mxu0 0.0
    %5629 = vmatpush1.msra.mxu0 0.0
    %5630 = vmatprep.subr.mxu0 0.0
    %5631 = vmatpush1.msra.mxu0 0.0
    %5632 = vmatprep.subr.mxu0 0.0
    %5633 = vmatpush1.msra.mxu0 0.0
    %5634 = vmatprep.subr.mxu0 0.0
    %5635 = vmatpush1.msra.mxu0 0.0
    %5636 = vmatprep.subr.mxu0 0.0
    %5637 = vmatpush1.msra.mxu0 0.0
    %5638 = vmatprep.subr.mxu0 0.0
    %5639 = vmatpush1.msra.mxu0 0.0
    %5640 = vmatprep.subr.mxu0 0.0
    %5641 = vmatpush1.msra.mxu0 0.0
    %5642 = vmatprep.subr.mxu0 0.0
    %5643 = vmatpush1.msra.mxu0 0.0
    %5644 = vmatprep.subr.mxu0 0.0
    %5645 = vmatpush1.msra.mxu0 0.0
    %5646 = vmatprep.subr.mxu0 0.0
    %5647 = vmatpush1.msra.mxu0 0.0
    %5648 = vmatprep.subr.mxu0 0.0
    %5649 = vmatpush1.msra.mxu0 0.0
    %5650 = vmatprep.subr.mxu0 0.0
    %5651 = vmatpush1.msra.mxu0 0.0
    %5652 = vmatprep.subr.mxu0 0.0
    %5653 = vmatpush1.msra.mxu0 0.0
    %5654 = vmatprep.subr.mxu0 0.0
    %5655 = vmatpush1.msra.mxu0 0.0
    %5656 = vmatprep.subr.mxu0 0.0
    %5657 = vmatpush1.msra.mxu0 0.0
    %5658 = vmatprep.subr.mxu0 0.0
    %5659 = vmatpush1.msra.mxu0 0.0
    %5660 = vmatprep.subr.mxu0 0.0
    %5661 = vmatpush1.msra.mxu0 0.0
    %5662 = vmatprep.subr.mxu0 0.0
    %5663 = vmatpush1.msra.mxu0 0.0
    %5664 = vmatprep.subr.mxu0 0.0
    %5665 = vmatpush1.msra.mxu0 0.0
    %5666 = vmatprep.subr.mxu0 0.0
    %5667 = vmatpush1.msra.mxu0 0.0
    %5668 = vmatprep.subr.mxu0 0.0
    %5669 = vmatpush1.msra.mxu0 0.0
    %5670 = vmatprep.subr.mxu0 0.0
    %5671 = vmatpush1.msra.mxu0 0.0
    %5672 = vmatprep.subr.mxu0 0.0
    %5673 = vmatpush1.msra.mxu0 0.0
    %5674 = vmatprep.subr.mxu0 0.0
    %5675 = vmatpush1.msra.mxu0 0.0
    %5676 = vmatprep.subr.mxu0 0.0
    %5677 = vmatpush1.msra.mxu0 0.0
    %5678 = vmatprep.subr.mxu0 0.0
    %5679 = vmatpush1.msra.mxu0 0.0
    %5680 = vmatprep.subr.mxu0 0.0
    %5681 = vmatpush1.msra.mxu0 0.0
    %5682 = vmatprep.mubr.f32.mxu0 0.0
    %5683 = vmatmul.mubr.f32.gmra.mrb[0].mxu0 %v5608
    %v5684 = vpop.f32.mrb[0].mxu0
    %v5685 = vadd.f32 0.0, %v5684
    %v5686 = vpop.f32.mrb[0].mxu0
    %5687 = vmatprep.mubr.f32.mxu0 0.0
    %5688 = vmatmul.mubr.f32.gmra.mrb[0].mxu0 %v5611
    %v5689 = vpop.f32.mrb[0].mxu0
    %v5690 = vadd.f32 0.0, %v5689
    %v5691 = vpop.f32.mrb[0].mxu0
    %5692 = vmatprep.mubr.f32.mxu0 0.0
    %5693 = vmatmul.mubr.f32.gmra.mrb[0].mxu0 %v5614
    %v5694 = vpop.f32.mrb[0].mxu0
    %v5695 = vadd.f32 0.0, %v5694
    %v5696 = vpop.f32.mrb[0].mxu0
    %5697 = vdwg.mxu0
    %5698 = vrot.lane.b32.xlu0 %v4980, 104
    %v5699 = vpop.permute.xlu0 %5698
    %5700 = vrot.lane.b32.xlu0 %v4985, 104
    %v5701 = vpop.permute.xlu0 %5700
    %5702 = vrot.lane.b32.xlu0 %v4990, 104
    %v5703 = vpop.permute.xlu0 %5702
    %5704 = vrot.lane.b32.xlu0 %v4980, 72
    %v5705 = vpop.permute.xlu0 %5704
    %5706 = vrot.lane.b32.xlu0 %v4985, 72
    %v5707 = vpop.permute.xlu0 %5706
    %5708 = vrot.lane.b32.xlu0 %v4990, 72
    %v5709 = vpop.permute.xlu0 %5708
    %v5710 = vsel %vm372, %v5699, 0
    %v5712 = vsel %vm372, %v5701, 0
    %v5714 = vsel %vm372, %v5703, 0
    %v5716 = vsel %vm372, %v5705, 0
    %v5718 = vsel %vm372, %v5707, 0
    %v5720 = vsel %vm372, %v5709, 0
    %5722 = vmatprep.subr.mxu0 0.0
    %5723 = vmatpush1.xpose.msra.mxu0 %v5716
    %5724 = vmatprep.subr.mxu0 0.0
    %5725 = vmatpush1.xpose.msra.mxu0 %v5718
    %5726 = vmatprep.subr.mxu0 0.0
    %5727 = vmatpush1.xpose.msra.mxu0 %v5720
    %5728 = vmatprep.subr.mxu0 0.0
    %5729 = vmatpush1.xpose.msra.mxu0 0.0
    %5730 = vmatprep.subr.mxu0 0.0
    %5731 = vmatpush1.xpose.msra.mxu0 0.0
    %5732 = vmatprep.subr.mxu0 0.0
    %5733 = vmatpush1.xpose.msra.mxu0 0.0
    %5734 = vmatprep.subr.mxu0 0.0
    %5735 = vmatpush1.xpose.msra.mxu0 0.0
    %5736 = vmatprep.subr.mxu0 0.0
    %5737 = vmatpush1.xpose.msra.mxu0 0.0
    %5738 = vmatprep.subr.mxu0 0.0
    %5739 = vmatpush1.xpose.msra.mxu0 0.0
    %5740 = vmatprep.subr.mxu0 0.0
    %5741 = vmatpush1.xpose.msra.mxu0 0.0
    %5742 = vmatprep.subr.mxu0 0.0
    %5743 = vmatpush1.xpose.msra.mxu0 0.0
    %5744 = vmatprep.subr.mxu0 0.0
    %5745 = vmatpush1.xpose.msra.mxu0 0.0
    %5746 = vmatprep.subr.mxu0 0.0
    %5747 = vmatpush1.xpose.msra.mxu0 0.0
    %5748 = vmatprep.subr.mxu0 0.0
    %5749 = vmatpush1.xpose.msra.mxu0 0.0
    %5750 = vmatprep.subr.mxu0 0.0
    %5751 = vmatpush1.xpose.msra.mxu0 0.0
    %5752 = vmatprep.subr.mxu0 0.0
    %5753 = vmatpush1.xpose.msra.mxu0 0.0
    %5754 = vmatprep.subr.mxu0 0.0
    %5755 = vmatpush1.xpose.msra.mxu0 0.0
    %5756 = vmatprep.subr.mxu0 0.0
    %5757 = vmatpush1.xpose.msra.mxu0 0.0
    %5758 = vmatprep.subr.mxu0 0.0
    %5759 = vmatpush1.xpose.msra.mxu0 0.0
    %5760 = vmatprep.subr.mxu0 0.0
    %5761 = vmatpush1.xpose.msra.mxu0 0.0
    %5762 = vmatprep.subr.mxu0 0.0
    %5763 = vmatpush1.xpose.msra.mxu0 0.0
    %5764 = vmatprep.subr.mxu0 0.0
    %5765 = vmatpush1.xpose.msra.mxu0 0.0
    %5766 = vmatprep.subr.mxu0 0.0
    %5767 = vmatpush1.xpose.msra.mxu0 0.0
    %5768 = vmatprep.subr.mxu0 0.0
    %5769 = vmatpush1.xpose.msra.mxu0 0.0
    %5770 = vmatprep.subr.mxu0 0.0
    %5771 = vmatpush1.xpose.msra.mxu0 0.0
    %5772 = vmatprep.subr.mxu0 0.0
    %5773 = vmatpush1.xpose.msra.mxu0 0.0
    %5774 = vmatprep.subr.mxu0 0.0
    %5775 = vmatpush1.xpose.msra.mxu0 0.0
    %5776 = vmatprep.subr.mxu0 0.0
    %5777 = vmatpush1.xpose.msra.mxu0 0.0
    %5778 = vmatprep.subr.mxu0 0.0
    %5779 = vmatpush1.xpose.msra.mxu0 0.0
    %5780 = vmatprep.subr.mxu0 0.0
    %5781 = vmatpush1.xpose.msra.mxu0 0.0
    %5782 = vmatprep.subr.mxu0 0.0
    %5783 = vmatpush1.xpose.msra.mxu0 0.0
    %5784 = vmatprep.subr.mxu0 0.0
    %5785 = vmatpush1.xpose.msra.mxu0 0.0
    %5786 = vmatprep.mubr.f32.mxu0 0.0
    %5787 = vmatmul.mubr.f32.gmra.mrb[0].mxu0 %v5710
    %v5788 = vpop.f32.mrb[0].mxu0
    %v5789 = vadd.f32 0.0, %v5788
    %v5790 = vpop.f32.mrb[0].mxu0
    %5791 = vmatprep.mubr.f32.mxu0 0.0
    %5792 = vmatmul.mubr.f32.gmra.mrb[0].mxu0 %v5712
    %v5793 = vpop.f32.mrb[0].mxu0
    %v5794 = vadd.f32 0.0, %v5793
    %v5795 = vpop.f32.mrb[0].mxu0
    %5796 = vmatprep.mubr.f32.mxu0 0.0
    %5797 = vmatmul.mubr.f32.gmra.mrb[0].mxu0 %v5714
    %v5798 = vpop.f32.mrb[0].mxu0
    %v5799 = vadd.f32 0.0, %v5798
    %v5800 = vpop.f32.mrb[0].mxu0
    %5801 = vdwg.mxu0
    %v5802 = vsel %vm465, %v5789, -inf
    %5803 = vmax.xlane.f32.xlu0 %v5802
    %v5804 = vpop.xlane.xlu0 %5803
    %v5805 = vsel %vm465, %v5794, -inf
    %5806 = vmax.xlane.f32.xlu0 %v5805
    %v5807 = vpop.xlane.xlu0 %5806
    %v5808 = vsel %vm472, %v5799, -inf
    %5809 = vmax.xlane.f32.xlu0 %v5808
    %v5810 = vpop.xlane.xlu0 %5809
    %v5811 = vsub.f32 %v5789, %v5804
    %v5812 = vsub.f32 %v5794, %v5807
    %v5813 = vsub.f32 %v5799, %v5810
    %v5814 = vmul.f32 %v5811, 1.442695
    %v5815 = vpow.pop %v5814
    %v5816 = vmul.f32 %v5812, 1.442695
    %v5817 = vpow.pop %v5816
    %v5818 = vmul.f32 %v5813, 1.442695
    %v5819 = vpow.pop %v5818
    %v5820 = vsel %vm465, %v5815, 0.0
    %5821 = vadd.xlane.f32.xlu0 %v5820
    %v5822 = vpop.xlane.xlu0 %5821
    %v5823 = vsel %vm465, %v5817, 0.0
    %5824 = vadd.xlane.f32.xlu0 %v5823
    %v5825 = vpop.xlane.xlu0 %5824
    %v5826 = vsel %vm472, %v5819, 0.0
    %5827 = vadd.xlane.f32.xlu0 %v5826
    %v5828 = vpop.xlane.xlu0 %5827
    %v5829 = vrcp.pop %v5822
    %v5830 = vrcp.pop %v5825
    %v5831 = vrcp.pop %v5828
    %v5832 = vmul.f32 %v5815, %v5829
    %v5833 = vmul.f32 %v5817, %v5830
    %v5834 = vmul.f32 %v5819, %v5831
    %5835 = vrot.lane.b32.xlu0 %v4980, 40
    %v5836 = vpop.permute.xlu0 %5835
    %5837 = vrot.lane.b32.xlu0 %v4985, 40
    %v5838 = vpop.permute.xlu0 %5837
    %5839 = vrot.lane.b32.xlu0 %v4990, 40
    %v5840 = vpop.permute.xlu0 %5839
    %v5844 = vsel %vm465, %v5832, 0
    %v5847 = vsel %vm465, %v5833, 0
    %v5850 = vsel %vm465, %v5834, 0
    %v5852 = vsel %vm193, %v5840, 0
    %5854 = vmatprep.subr.mxu0 0.0
    %5855 = vmatpush1.msra.mxu0 %v5836
    %5856 = vmatprep.subr.mxu0 0.0
    %5857 = vmatpush1.msra.mxu0 %v5838
    %5858 = vmatprep.subr.mxu0 0.0
    %5859 = vmatpush1.msra.mxu0 %v5852
    %5860 = vmatprep.subr.mxu0 0.0
    %5861 = vmatpush1.msra.mxu0 0.0
    %5862 = vmatprep.subr.mxu0 0.0
    %5863 = vmatpush1.msra.mxu0 0.0
    %5864 = vmatprep.subr.mxu0 0.0
    %5865 = vmatpush1.msra.mxu0 0.0
    %5866 = vmatprep.subr.mxu0 0.0
    %5867 = vmatpush1.msra.mxu0 0.0
    %5868 = vmatprep.subr.mxu0 0.0
    %5869 = vmatpush1.msra.mxu0 0.0
    %5870 = vmatprep.subr.mxu0 0.0
    %5871 = vmatpush1.msra.mxu0 0.0
    %5872 = vmatprep.subr.mxu0 0.0
    %5873 = vmatpush1.msra.mxu0 0.0
    %5874 = vmatprep.subr.mxu0 0.0
    %5875 = vmatpush1.msra.mxu0 0.0
    %5876 = vmatprep.subr.mxu0 0.0
    %5877 = vmatpush1.msra.mxu0 0.0
    %5878 = vmatprep.subr.mxu0 0.0
    %5879 = vmatpush1.msra.mxu0 0.0
    %5880 = vmatprep.subr.mxu0 0.0
    %5881 = vmatpush1.msra.mxu0 0.0
    %5882 = vmatprep.subr.mxu0 0.0
    %5883 = vmatpush1.msra.mxu0 0.0
    %5884 = vmatprep.subr.mxu0 0.0
    %5885 = vmatpush1.msra.mxu0 0.0
    %5886 = vmatprep.subr.mxu0 0.0
    %5887 = vmatpush1.msra.mxu0 0.0
    %5888 = vmatprep.subr.mxu0 0.0
    %5889 = vmatpush1.msra.mxu0 0.0
    %5890 = vmatprep.subr.mxu0 0.0
    %5891 = vmatpush1.msra.mxu0 0.0
    %5892 = vmatprep.subr.mxu0 0.0
    %5893 = vmatpush1.msra.mxu0 0.0
    %5894 = vmatprep.subr.mxu0 0.0
    %5895 = vmatpush1.msra.mxu0 0.0
    %5896 = vmatprep.subr.mxu0 0.0
    %5897 = vmatpush1.msra.mxu0 0.0
    %5898 = vmatprep.subr.mxu0 0.0
    %5899 = vmatpush1.msra.mxu0 0.0
    %5900 = vmatprep.subr.mxu0 0.0
    %5901 = vmatpush1.msra.mxu0 0.0
    %5902 = vmatprep.subr.mxu0 0.0
    %5903 = vmatpush1.msra.mxu0 0.0
    %5904 = vmatprep.subr.mxu0 0.0
    %5905 = vmatpush1.msra.mxu0 0.0
    %5906 = vmatprep.subr.mxu0 0.0
    %5907 = vmatpush1.msra.mxu0 0.0
    %5908 = vmatprep.subr.mxu0 0.0
    %5909 = vmatpush1.msra.mxu0 0.0
    %5910 = vmatprep.subr.mxu0 0.0
    %5911 = vmatpush1.msra.mxu0 0.0
    %5912 = vmatprep.subr.mxu0 0.0
    %5913 = vmatpush1.msra.mxu0 0.0
    %5914 = vmatprep.subr.mxu0 0.0
    %5915 = vmatpush1.msra.mxu0 0.0
    %5916 = vmatprep.subr.mxu0 0.0
    %5917 = vmatpush1.msra.mxu0 0.0
    %5918 = vmatprep.mubr.f32.mxu0 0.0
    %5919 = vmatmul.mubr.f32.gmra.mrb[0].mxu0 %v5844
    %v5920 = vpop.f32.mrb[0].mxu0
    %v5921 = vadd.f32 0.0, %v5920
    %v5922 = vpop.f32.mrb[0].mxu0
    %5923 = vmatprep.mubr.f32.mxu0 0.0
    %5924 = vmatmul.mubr.f32.gmra.mrb[0].mxu0 %v5847
    %v5925 = vpop.f32.mrb[0].mxu0
    %v5926 = vadd.f32 0.0, %v5925
    %v5927 = vpop.f32.mrb[0].mxu0
    %5928 = vmatprep.mubr.f32.mxu0 0.0
    %5929 = vmatmul.mubr.f32.gmra.mrb[0].mxu0 %v5850
    %v5930 = vpop.f32.mrb[0].mxu0
    %v5931 = vadd.f32 0.0, %v5930
    %v5932 = vpop.f32.mrb[0].mxu0
    %5933 = vdwg.mxu0
    %5937 = vrot.lane.b32.xlu0 %v5449, 8
    %v5938 = vpop.permute.xlu0 %5937
    %5939 = vrot.lane.b32.xlu0 %v5454, 8
    %v5940 = vpop.permute.xlu0 %5939
    %5941 = vrot.lane.b32.xlu0 %v5459, 8
    %v5942 = vpop.permute.xlu0 %5941
    %5949 = vrot.lane.b32.xlu0 %v5685, 16
    %v5950 = vpop.permute.xlu0 %5949
    %5951 = vrot.lane.b32.xlu0 %v5690, 16
    %v5952 = vpop.permute.xlu0 %5951
    %5953 = vrot.lane.b32.xlu0 %v5695, 16
    %v5954 = vpop.permute.xlu0 %5953
    %5961 = vrot.lane.b32.xlu0 %v5921, 24
    %v5962 = vpop.permute.xlu0 %5961
    %5963 = vrot.lane.b32.xlu0 %v5926, 24
    %v5964 = vpop.permute.xlu0 %5963
    %5965 = vrot.lane.b32.xlu0 %v5931, 24
    %v5966 = vpop.permute.xlu0 %5965
    %v5970 = vsel %vm372, %v5213, %v5938
    %v5971 = vsel %vm372, %v5218, %v5940
    %v5972 = vsel %vm372, %v5223, %v5942
    %v5973 = vsel %vm1346, %v5970, %v5950
    %v5974 = vsel %vm1346, %v5971, %v5952
    %v5975 = vsel %vm1346, %v5972, %v5954
    %v5976 = vsel %vm1350, %v5973, %v5962
    %v5977 = vsel %vm1350, %v5974, %v5964
    %v5978 = vsel %vm1350, %v5975, %v5966
    %v5980 = vsel %vm203, %v5976, 0
    %v5983 = vsel %vm203, %v5977, 0
    %v5986 = vsel %vm203, %v5978, 0
    %5988 = vmatprep.subr.mxu0 0.0
    %5989 = vmatpush1.msra.mxu0 %v2899
    %5990 = vmatprep.subr.mxu0 0.0
    %5991 = vmatpush1.msra.mxu0 %v2900
    %5992 = vmatprep.subr.mxu0 0.0
    %5993 = vmatpush1.msra.mxu0 %v2901
    %5994 = vmatprep.subr.mxu0 0.0
    %5995 = vmatpush1.msra.mxu0 %v2902
    %5996 = vmatprep.subr.mxu0 0.0
    %5997 = vmatpush1.msra.mxu0 0.0
    %5998 = vmatprep.subr.mxu0 0.0
    %5999 = vmatpush1.msra.mxu0 0.0
    %6000 = vmatprep.subr.mxu0 0.0
    %6001 = vmatpush1.msra.mxu0 0.0
    %6002 = vmatprep.subr.mxu0 0.0
    %6003 = vmatpush1.msra.mxu0 0.0
    %6004 = vmatprep.subr.mxu0 0.0
    %6005 = vmatpush1.msra.mxu0 0.0
    %6006 = vmatprep.subr.mxu0 0.0
    %6007 = vmatpush1.msra.mxu0 0.0
    %6008 = vmatprep.subr.mxu0 0.0
    %6009 = vmatpush1.msra.mxu0 0.0
    %6010 = vmatprep.subr.mxu0 0.0
    %6011 = vmatpush1.msra.mxu0 0.0
    %6012 = vmatprep.subr.mxu0 0.0
    %6013 = vmatpush1.msra.mxu0 0.0
    %6014 = vmatprep.subr.mxu0 0.0
    %6015 = vmatpush1.msra.mxu0 0.0
    %6016 = vmatprep.subr.mxu0 0.0
    %6017 = vmatpush1.msra.mxu0 0.0
    %6018 = vmatprep.subr.mxu0 0.0
    %6019 = vmatpush1.msra.mxu0 0.0
    %6020 = vmatprep.subr.mxu0 0.0
    %6021 = vmatpush1.msra.mxu0 0.0
    %6022 = vmatprep.subr.mxu0 0.0
    %6023 = vmatpush1.msra.mxu0 0.0
    %6024 = vmatprep.subr.mxu0 0.0
    %6025 = vmatpush1.msra.mxu0 0.0
    %6026 = vmatprep.subr.mxu0 0.0
    %6027 = vmatpush1.msra.mxu0 0.0
    %6028 = vmatprep.subr.mxu0 0.0
    %6029 = vmatpush1.msra.mxu0 0.0
    %6030 = vmatprep.subr.mxu0 0.0
    %6031 = vmatpush1.msra.mxu0 0.0
    %6032 = vmatprep.subr.mxu0 0.0
    %6033 = vmatpush1.msra.mxu0 0.0
    %6034 = vmatprep.subr.mxu0 0.0
    %6035 = vmatpush1.msra.mxu0 0.0
    %6036 = vmatprep.subr.mxu0 0.0
    %6037 = vmatpush1.msra.mxu0 0.0
    %6038 = vmatprep.subr.mxu0 0.0
    %6039 = vmatpush1.msra.mxu0 0.0
    %6040 = vmatprep.subr.mxu0 0.0
    %6041 = vmatpush1.msra.mxu0 0.0
    %6042 = vmatprep.subr.mxu0 0.0
    %6043 = vmatpush1.msra.mxu0 0.0
    %6044 = vmatprep.subr.mxu0 0.0
    %6045 = vmatpush1.msra.mxu0 0.0
    %6046 = vmatprep.subr.mxu0 0.0
    %6047 = vmatpush1.msra.mxu0 0.0
    %6048 = vmatprep.subr.mxu0 0.0
    %6049 = vmatpush1.msra.mxu0 0.0
    %6050 = vmatprep.subr.mxu0 0.0
    %6051 = vmatpush1.msra.mxu0 0.0
    %6052 = vmatprep.mubr.f32.mxu0 0.0
    %6053 = vmatmul.mubr.f32.gmra.mrb[0].mxu0 %v5980
    %v6054 = vpop.f32.mrb[0].mxu0
    %v6055 = vadd.f32 %v2909, %v6054
    %v6056 = vpop.f32.mrb[0].mxu0
    %6057 = vmatprep.mubr.f32.mxu0 0.0
    %6058 = vmatmul.mubr.f32.gmra.mrb[0].mxu0 %v5983
    %v6059 = vpop.f32.mrb[0].mxu0
    %v6060 = vadd.f32 %v2909, %v6059
    %v6061 = vpop.f32.mrb[0].mxu0
    %6062 = vmatprep.mubr.f32.mxu0 0.0
    %6063 = vmatmul.mubr.f32.gmra.mrb[0].mxu0 %v5986
    %v6064 = vpop.f32.mrb[0].mxu0
    %v6065 = vadd.f32 %v2909, %v6064
    %v6066 = vpop.f32.mrb[0].mxu0
    %6067 = vdwg.mxu0
    %v6068 = vadd.f32 %v4856, %v6055
    %v6069 = vadd.f32 %v4857, %v6060
    %v6070 = vadd.f32 %v4858, %v6065
    %v6071 = vsel %vm203, %v6068, 0.0
    %6072 = vadd.xlane.f32.xlu0 %v6071
    %v6073 = vpop.xlane.xlu0 %6072
    %v6074 = vsel %vm203, %v6069, 0.0
    %6075 = vadd.xlane.f32.xlu0 %v6074
    %v6076 = vpop.xlane.xlu0 %6075
    %v6077 = vsel %vm210, %v6070, 0.0
    %6078 = vadd.xlane.f32.xlu0 %v6077
    %v6079 = vpop.xlane.xlu0 %6078
    %v6080 = vmul.f32 %v6073, %v214
    %v6081 = vmul.f32 %v6076, %v214
    %v6082 = vmul.f32 %v6079, %v214
    %v6083 = vsub.f32 %v6068, %v6080
    %v6084 = vsub.f32 %v6069, %v6081
    %v6085 = vsub.f32 %v6070, %v6082
    %v6086 = vmul.f32 %v6083, %v6083
    %v6087 = vmul.f32 %v6084, %v6084
    %v6088 = vmul.f32 %v6085, %v6085
    %v6089 = vsel %vm203, %v6086, 0.0
    %6090 = vadd.xlane.f32.xlu0 %v6089
    %v6091 = vpop.xlane.xlu0 %6090
    %v6092 = vsel %vm203, %v6087, 0.0
    %6093 = vadd.xlane.f32.xlu0 %v6092
    %v6094 = vpop.xlane.xlu0 %6093
    %v6095 = vsel %vm210, %v6088, 0.0
    %6096 = vadd.xlane.f32.xlu0 %v6095
    %v6097 = vpop.xlane.xlu0 %6096
    %v6098 = vmul.f32 %v6091, %v214
    %v6099 = vmul.f32 %v6094, %v214
    %v6100 = vmul.f32 %v6097, %v214
    %v6101 = vadd.f32 %v6098, 1e-06
    %v6102 = vadd.f32 %v6099, 1e-06
    %v6103 = vadd.f32 %v6100, 1e-06
    %v6104 = vrsqrt.pop %v6101
    %v6105 = vrsqrt.pop %v6102
    %v6106 = vrsqrt.pop %v6103
    %v6107 = vmul.f32 %v6083, %v6104
    %v6108 = vmul.f32 %v6084, %v6105
    %v6109 = vmul.f32 %v6085, %v6106
    %v6110 = vmul.f32 %v6107, %v3050
    %v6111 = vmul.f32 %v6108, %v3050
    %v6112 = vmul.f32 %v6109, %v3050
    %v6113 = vadd.f32 %v6110, %v3059
    %v6114 = vadd.f32 %v6111, %v3059
    %v6115 = vadd.f32 %v6112, %v3059
    %v6117 = vsel %vm203, %v6113, 0
    %v6120 = vsel %vm203, %v6114, 0
    %v6123 = vsel %vm203, %v6115, 0
    %6125 = vmatprep.subr.mxu0 0.0
    %6126 = vmatpush1.msra.mxu0 %v3065
    %6127 = vmatprep.subr.mxu0 0.0
    %6128 = vmatpush1.msra.mxu0 %v3066
    %6129 = vmatprep.subr.mxu0 0.0
    %6130 = vmatpush1.msra.mxu0 %v3067
    %6131 = vmatprep.subr.mxu0 0.0
    %6132 = vmatpush1.msra.mxu0 %v3068
    %6133 = vmatprep.subr.mxu0 0.0
    %6134 = vmatpush1.msra.mxu0 0.0
    %6135 = vmatprep.subr.mxu0 0.0
    %6136 = vmatpush1.msra.mxu0 0.0
    %6137 = vmatprep.subr.mxu0 0.0
    %6138 = vmatpush1.msra.mxu0 0.0
    %6139 = vmatprep.subr.mxu0 0.0
    %6140 = vmatpush1.msra.mxu0 0.0
    %6141 = vmatprep.subr.mxu0 0.0
    %6142 = vmatpush1.msra.mxu0 0.0
    %6143 = vmatprep.subr.mxu0 0.0
    %6144 = vmatpush1.msra.mxu0 0.0
    %6145 = vmatprep.subr.mxu0 0.0
    %6146 = vmatpush1.msra.mxu0 0.0
    %6147 = vmatprep.subr.mxu0 0.0
    %6148 = vmatpush1.msra.mxu0 0.0
    %6149 = vmatprep.subr.mxu0 0.0
    %6150 = vmatpush1.msra.mxu0 0.0
    %6151 = vmatprep.subr.mxu0 0.0
    %6152 = vmatpush1.msra.mxu0 0.0
    %6153 = vmatprep.subr.mxu0 0.0
    %6154 = vmatpush1.msra.mxu0 0.0
    %6155 = vmatprep.subr.mxu0 0.0
    %6156 = vmatpush1.msra.mxu0 0.0
    %6157 = vmatprep.subr.mxu0 0.0
    %6158 = vmatpush1.msra.mxu0 0.0
    %6159 = vmatprep.subr.mxu0 0.0
    %6160 = vmatpush1.msra.mxu0 0.0
    %6161 = vmatprep.subr.mxu0 0.0
    %6162 = vmatpush1.msra.mxu0 0.0
    %6163 = vmatprep.subr.mxu0 0.0
    %6164 = vmatpush1.msra.mxu0 0.0
    %6165 = vmatprep.subr.mxu0 0.0
    %6166 = vmatpush1.msra.mxu0 0.0
    %6167 = vmatprep.subr.mxu0 0.0
    %6168 = vmatpush1.msra.mxu0 0.0
    %6169 = vmatprep.subr.mxu0 0.0
    %6170 = vmatpush1.msra.mxu0 0.0
    %6171 = vmatprep.subr.mxu0 0.0
    %6172 = vmatpush1.msra.mxu0 0.0
    %6173 = vmatprep.subr.mxu0 0.0
    %6174 = vmatpush1.msra.mxu0 0.0
    %6175 = vmatprep.subr.mxu0 0.0
    %6176 = vmatpush1.msra.mxu0 0.0
    %6177 = vmatprep.subr.mxu0 0.0
    %6178 = vmatpush1.msra.mxu0 0.0
    %6179 = vmatprep.subr.mxu0 0.0
    %6180 = vmatpush1.msra.mxu0 0.0
    %6181 = vmatprep.subr.mxu0 0.0
    %6182 = vmatpush1.msra.mxu0 0.0
    %6183 = vmatprep.subr.mxu0 0.0
    %6184 = vmatpush1.msra.mxu0 0.0
    %6185 = vmatprep.subr.mxu0 0.0
    %6186 = vmatpush1.msra.mxu0 0.0
    %6187 = vmatprep.subr.mxu0 0.0
    %6188 = vmatpush1.msra.mxu0 0.0
    %6189 = vmatprep.mubr.f32.mxu0 0.0
    %6190 = vmatmul.mubr.f32.gmra.mrb[0].mxu0 %v6117
    %v6191 = vpop.f32.mrb[0].mxu0
    %v6192 = vadd.f32 %v3075, %v6191
    %v6193 = vpop.f32.mrb[0].mxu0
    %6194 = vmatprep.mubr.f32.mxu0 0.0
    %6195 = vmatmul.mubr.f32.gmra.mrb[0].mxu0 %v6120
    %v6196 = vpop.f32.mrb[0].mxu0
    %v6197 = vadd.f32 %v3075, %v6196
    %v6198 = vpop.f32.mrb[0].mxu0
    %6199 = vmatprep.mubr.f32.mxu0 0.0
    %6200 = vmatmul.mubr.f32.gmra.mrb[0].mxu0 %v6123
    %v6201 = vpop.f32.mrb[0].mxu0
    %v6202 = vadd.f32 %v3075, %v6201
    %v6203 = vpop.f32.mrb[0].mxu0
    %6204 = vdwg.mxu0
    %v6205 = vmul.f32 %v6192, 0.5
    %v6206 = vmul.f32 %v6197, 0.5
    %v6207 = vmul.f32 %v6202, 0.5
    %v6208 = vmul.f32 %v6192, 0.044715
    %v6209 = vmul.f32 %v6197, 0.044715
    %v6210 = vmul.f32 %v6202, 0.044715
    %v6211 = vmul.f32 %v6208, %v6192
    %v6212 = vmul.f32 %v6209, %v6197
    %v6213 = vmul.f32 %v6210, %v6202
    %v6214 = vmul.f32 %v6211, %v6192
    %v6215 = vmul.f32 %v6212, %v6197
    %v6216 = vmul.f32 %v6213, %v6202
    %v6217 = vadd.f32 %v6192, %v6214
    %v6218 = vadd.f32 %v6197, %v6215
    %v6219 = vadd.f32 %v6202, %v6216
    %v6220 = vmul.f32 %v6217, 0.7978846
    %v6221 = vmul.f32 %v6218, 0.7978846
    %v6222 = vmul.f32 %v6219, 0.7978846
    %v6223 = vtanh.pop %v6220
    %v6224 = vtanh.pop %v6221
    %v6225 = vtanh.pop %v6222
    %v6226 = vadd.f32 %v6223, 1.0
    %v6227 = vadd.f32 %v6224, 1.0
    %v6228 = vadd.f32 %v6225, 1.0
    %v6229 = vmul.f32 %v6205, %v6226
    %v6230 = vmul.f32 %v6206, %v6227
    %v6231 = vmul.f32 %v6207, %v6228
    %6232 = vmatprep.subr.mxu0 0.0
    %6233 = vmatpush1.msra.mxu0 %v3194
    %6234 = vmatprep.subr.mxu0 0.0
    %6235 = vmatpush1.msra.mxu0 %v3195
    %6236 = vmatprep.subr.mxu0 0.0
    %6237 = vmatpush1.msra.mxu0 %v3196
    %6238 = vmatprep.subr.mxu0 0.0
    %6239 = vmatpush1.msra.mxu0 %v3197
    %6240 = vmatprep.subr.mxu0 0.0
    %6241 = vmatpush1.msra.mxu0 %v3198
    %6242 = vmatprep.subr.mxu0 0.0
    %6243 = vmatpush1.msra.mxu0 %v3199
    %6244 = vmatprep.subr.mxu0 0.0
    %6245 = vmatpush1.msra.mxu0 %v3200
    %6246 = vmatprep.subr.mxu0 0.0
    %6247 = vmatpush1.msra.mxu0 %v3201
    %6248 = vmatprep.subr.mxu0 0.0
    %6249 = vmatpush1.msra.mxu0 %v3202
    %6250 = vmatprep.subr.mxu0 0.0
    %6251 = vmatpush1.msra.mxu0 %v3203
    %6252 = vmatprep.subr.mxu0 0.0
    %6253 = vmatpush1.msra.mxu0 %v3204
    %6254 = vmatprep.subr.mxu0 0.0
    %6255 = vmatpush1.msra.mxu0 %v3205
    %6256 = vmatprep.subr.mxu0 0.0
    %6257 = vmatpush1.msra.mxu0 %v3206
    %6258 = vmatprep.subr.mxu0 0.0
    %6259 = vmatpush1.msra.mxu0 %v3207
    %6260 = vmatprep.subr.mxu0 0.0
    %6261 = vmatpush1.msra.mxu0 %v3208
    %6262 = vmatprep.subr.mxu0 0.0
    %6263 = vmatpush1.msra.mxu0 %v3209
    %6264 = vmatprep.subr.mxu0 0.0
    %6265 = vmatpush1.msra.mxu0 0.0
    %6266 = vmatprep.subr.mxu0 0.0
    %6267 = vmatpush1.msra.mxu0 0.0
    %6268 = vmatprep.subr.mxu0 0.0
    %6269 = vmatpush1.msra.mxu0 0.0
    %6270 = vmatprep.subr.mxu0 0.0
    %6271 = vmatpush1.msra.mxu0 0.0
    %6272 = vmatprep.subr.mxu0 0.0
    %6273 = vmatpush1.msra.mxu0 0.0
    %6274 = vmatprep.subr.mxu0 0.0
    %6275 = vmatpush1.msra.mxu0 0.0
    %6276 = vmatprep.subr.mxu0 0.0
    %6277 = vmatpush1.msra.mxu0 0.0
    %6278 = vmatprep.subr.mxu0 0.0
    %6279 = vmatpush1.msra.mxu0 0.0
    %6280 = vmatprep.subr.mxu0 0.0
    %6281 = vmatpush1.msra.mxu0 0.0
    %6282 = vmatprep.subr.mxu0 0.0
    %6283 = vmatpush1.msra.mxu0 0.0
    %6284 = vmatprep.subr.mxu0 0.0
    %6285 = vmatpush1.msra.mxu0 0.0
    %6286 = vmatprep.subr.mxu0 0.0
    %6287 = vmatpush1.msra.mxu0 0.0
    %6288 = vmatprep.subr.mxu0 0.0
    %6289 = vmatpush1.msra.mxu0 0.0
    %6290 = vmatprep.subr.mxu0 0.0
    %6291 = vmatpush1.msra.mxu0 0.0
    %6292 = vmatprep.subr.mxu0 0.0
    %6293 = vmatpush1.msra.mxu0 0.0
    %6294 = vmatprep.subr.mxu0 0.0
    %6295 = vmatpush1.msra.mxu0 0.0
    %6296 = vmatprep.mubr.f32.mxu0 0.0
    %6297 = vmatmul.mubr.f32.gmra.mrb[0].mxu0 %v6229
    %v6298 = vpop.f32.mrb[0].mxu0
    %v6299 = vadd.f32 %v3216, %v6298
    %v6300 = vpop.f32.mrb[0].mxu0
    %6301 = vmatprep.mubr.f32.mxu0 0.0
    %6302 = vmatmul.mubr.f32.gmra.mrb[0].mxu0 %v6230
    %v6303 = vpop.f32.mrb[0].mxu0
    %v6304 = vpop.f32.mrb[0].mxu0
    %6305 = vmatprep.mubr.f32.mxu0 0.0
    %6306 = vmatmul.mubr.f32.gmra.mrb[0].mxu0 %v6231
    %v6307 = vpop.f32.mrb[0].mxu0
    %v6308 = vpop.f32.mrb[0].mxu0
    %6309 = vdwg.mxu0
    %v6310 = vadd.f32 %v6068, %v6299
    %v6311 = vsel %vm210, %v6310, 0.0
    %6312 = vadd.xlane.f32.xlu0 %v6311
    %v6313 = vpop.xlane.xlu0 %6312
    %v6314 = vmul.f32 %v6313, %v214
    %v6315 = vsub.f32 %v6310, %v6314
    %v6316 = vmul.f32 %v6315, %v6315
    %v6317 = vsel %vm210, %v6316, 0.0
    %6318 = vadd.xlane.f32.xlu0 %v6317
    %v6319 = vpop.xlane.xlu0 %6318
    %v6320 = vmul.f32 %v6319, %v214
    %v6321 = vadd.f32 %v6320, 1e-06
    %v6322 = vrsqrt.pop %v6321
    %v6323 = vmul.f32 %v6315, %v6322
    %v6324 = vmul.f32 %v6323, %v3297
    %v6325 = vadd.f32 %v6324, %v3298
    %v6327 = vsel %vm203, %v6325, 0
    %6329 = vmatprep.subr.mxu0 0.0
    %6330 = vmatpush1.msra.mxu0 %v3314
    %6331 = vmatprep.subr.mxu0 0.0
    %6332 = vmatpush1.msra.mxu0 %v3315
    %6333 = vmatprep.subr.mxu0 0.0
    %6334 = vmatpush1.msra.mxu0 %v3316
    %6335 = vmatprep.subr.mxu0 0.0
    %6336 = vmatpush1.msra.mxu0 %v3317
    %6337 = vmatprep.subr.mxu0 0.0
    %6338 = vmatpush1.msra.mxu0 0.0
    %6339 = vmatprep.subr.mxu0 0.0
    %6340 = vmatpush1.msra.mxu0 0.0
    %6341 = vmatprep.subr.mxu0 0.0
    %6342 = vmatpush1.msra.mxu0 0.0
    %6343 = vmatprep.subr.mxu0 0.0
    %6344 = vmatpush1.msra.mxu0 0.0
    %6345 = vmatprep.subr.mxu0 0.0
    %6346 = vmatpush1.msra.mxu0 0.0
    %6347 = vmatprep.subr.mxu0 0.0
    %6348 = vmatpush1.msra.mxu0 0.0
    %6349 = vmatprep.subr.mxu0 0.0
    %6350 = vmatpush1.msra.mxu0 0.0
    %6351 = vmatprep.subr.mxu0 0.0
    %6352 = vmatpush1.msra.mxu0 0.0
    %6353 = vmatprep.subr.mxu0 0.0
    %6354 = vmatpush1.msra.mxu0 0.0
    %6355 = vmatprep.subr.mxu0 0.0
    %6356 = vmatpush1.msra.mxu0 0.0
    %6357 = vmatprep.subr.mxu0 0.0
    %6358 = vmatpush1.msra.mxu0 0.0
    %6359 = vmatprep.subr.mxu0 0.0
    %6360 = vmatpush1.msra.mxu0 0.0
    %6361 = vmatprep.subr.mxu0 0.0
    %6362 = vmatpush1.msra.mxu0 0.0
    %6363 = vmatprep.subr.mxu0 0.0
    %6364 = vmatpush1.msra.mxu0 0.0
    %6365 = vmatprep.subr.mxu0 0.0
    %6366 = vmatpush1.msra.mxu0 0.0
    %6367 = vmatprep.subr.mxu0 0.0
    %6368 = vmatpush1.msra.mxu0 0.0
    %6369 = vmatprep.subr.mxu0 0.0
    %6370 = vmatpush1.msra.mxu0 0.0
    %6371 = vmatprep.subr.mxu0 0.0
    %6372 = vmatpush1.msra.mxu0 0.0
    %6373 = vmatprep.subr.mxu0 0.0
    %6374 = vmatpush1.msra.mxu0 0.0
    %6375 = vmatprep.subr.mxu0 0.0
    %6376 = vmatpush1.msra.mxu0 0.0
    %6377 = vmatprep.subr.mxu0 0.0
    %6378 = vmatpush1.msra.mxu0 0.0
    %6379 = vmatprep.subr.mxu0 0.0
    %6380 = vmatpush1.msra.mxu0 0.0
    %6381 = vmatprep.subr.mxu0 0.0
    %6382 = vmatpush1.msra.mxu0 0.0
    %6383 = vmatprep.subr.mxu0 0.0
    %6384 = vmatpush1.msra.mxu0 0.0
    %6385 = vmatprep.subr.mxu0 0.0
    %6386 = vmatpush1.msra.mxu0 0.0
    %6387 = vmatprep.subr.mxu0 0.0
    %6388 = vmatpush1.msra.mxu0 0.0
    %6389 = vmatprep.subr.mxu0 0.0
    %6390 = vmatpush1.msra.mxu0 0.0
    %6391 = vmatprep.subr.mxu0 0.0
    %6392 = vmatpush1.msra.mxu0 0.0
    %6393 = vmatprep.mubr.f32.mxu0 0.0
    %6394 = vmatmul.mubr.f32.gmra.mrb[0].mxu0 %v6327
    %v6395 = vpop.f32.mrb[0].mxu0
    %v6396 = vadd.f32 %v3318, %v6395
    %v6397 = vpop.f32.mrb[0].mxu0
    %6398 = vdwg.mxu0
    %v6400 = vrot.slane %v6396, 7
    %v6402 = vsel %vm193, %v3389, %v6400
    %6403 = vst [vmem:[#allocation2] sm:$0x3] %v6402
    // Predicated region
    $region86: #{vit_forward.1} parent=1 // pred_check
      _
    $region87: #{vit_forward.1} parent=1 // pred_check_branch
      %6405 = sbr.rel (0) target = $region89
    $region88: #{vit_forward.1} parent=1 // pred_region
      %s6407 = ssub.s32 32, 32
      %6408 = vsyncadd [#allocation3], %s6407
      %s6410 = sshll.u32 [#allocation2], 4
      %s6411 = int_to_ptr.vmem [resolvable:$true] %s6410
      %6413 = dma.vmem_to_hbm [thread:$0]  %s6411, 32, %s21, [#allocation3]
    $region89: #{vit_forward.1} parent=1 // pred_fallthru
      _
    // Predicated region
    $region90: #{vit_forward.1} parent=1 // pred_check
      _
    $region91: #{vit_forward.1} parent=1 // pred_check_branch
      %6415 = sbr.rel (0) target = $region93
    $region92: #{vit_forward.1} parent=1 // pred_region
      %6416 = dma.done [#allocation3], 32
    $region93: #{vit_forward.1} parent=1 // pred_fallthru
      _
    %6417 = vsyncpa [#allocation3], 1

</llo_original>
